<compile_context>
chip_gen: v7x
topology: tpu7x:2x2x1
jax: 0.10.0
libtpu: 0.0.40
codegen_flags: <defaults>
</compile_context>

<pallas_src>
import functools

import numpy as np
import jax
import jax.numpy as jnp
from jax.experimental import pallas as pl
from jax.experimental.pallas import tpu as pltpu


_ACT_DTYPE = jnp.bfloat16            # HBM activations / MXU inputs
_VMEM_LIMIT = 32 * 1024 * 1024       # explicit scoped-VMEM cap (safe on v5e/v6e/v7x)
_MAX_L_TILE = 1024                   # max rows per conv tile (multiple of 8)


# ----------------------------------------------------------------------------
# shared in-kernel helper: 3-tap conv as three shifted MXU matmuls
# ----------------------------------------------------------------------------
def _conv3_taps(x, left, right, w, b, lrelu):
    """out[i] = x[i-1] @ w[0] + x[i] @ w[1] + x[i+1] @ w[2] + b (+LeakyReLU 0.2).

    x: (T, Cin) bf16; left/right: (1, Cin) bf16 rows just outside the tile
    (zeros at the true sequence boundary); w: (3, Cin, Cout) bf16; b: (1, Cout)
    f32.  Returns f32 (T, Cout).
    """
    T = x.shape[0]
    x_prev = jnp.concatenate([left, x[:T - 1, :]], axis=0)
    x_next = jnp.concatenate([x[1:, :], right], axis=0)
    acc = jnp.dot(x_prev, w[0], preferred_element_type=jnp.float32)
    acc = acc + jnp.dot(x, w[1], preferred_element_type=jnp.float32)
    acc = acc + jnp.dot(x_next, w[2], preferred_element_type=jnp.float32)
    acc = acc + b
    if lrelu:
        acc = jnp.where(acc >= 0, acc, 0.2 * acc)
    return acc


# ----------------------------------------------------------------------------
# Standalone Conv1d(k=3, s=1, p=1) kernel, L-tiled with BlockSpec-fetched halo
# ----------------------------------------------------------------------------
def _conv1d_kernel(x_ref, xm_ref, xp_ref, w_ref, b_ref, o_ref, *,
                   lrelu, n_l, halo):
    l = pl.program_id(1)
    x = x_ref[0]                                   # (T, Cin) bf16
    xm = xm_ref[0]                                 # (halo, Cin) block containing row (tile_start-1)
    xp = xp_ref[0]                                 # (halo, Cin) block containing row (tile_end)
    mask_l = jnp.where(l > 0, 1.0, 0.0).astype(x.dtype)
    mask_r = jnp.where(l < n_l - 1, 1.0, 0.0).astype(x.dtype)
    left = xm[halo - 1:halo, :] * mask_l           # zero at the sequence start
    right = xp[0:1, :] * mask_r                    # zero at the sequence end
    acc = _conv3_taps(x, left, right, w_ref[...], b_ref[...], lrelu)
    o_ref[0] = acc.astype(o_ref.dtype)


def _choose_l_tile(L):
    if L <= _MAX_L_TILE or L % 8 != 0:
        return L
    for t in range(_MAX_L_TILE, 7, -8):            # largest multiple-of-8 divisor
        if L % t == 0:
            return t
    return L


def conv1d(x_nlc, p, *, lrelu):
    """Conv1d(kernel=3, stride=1, pad=1) (+ optional LeakyReLU 0.2).

    x_nlc: (B, L, Cin) bf16; p["w"]: (3, Cin, Cout) bf16; p["b"]: (1, Cout) f32.
    """
    B, L, Cin = x_nlc.shape
    w, b = p["w"], p["b"]
    Cout = w.shape[-1]

    T = _choose_l_tile(L)                          # VMEM stays bounded for any L
    n_l = L // T
    halo = 8 if T % 8 == 0 else T                  # rows per halo block
    bpt = T // halo                                # halo-blocks per L-tile
    lb = L // halo                                 # halo-blocks in the full row

    kern = functools.partial(_conv1d_kernel, lrelu=lrelu, n_l=n_l, halo=halo)
    return pl.pallas_call(
        kern,
        out_shape=jax.ShapeDtypeStruct((B, L, Cout), _ACT_DTYPE),
        grid_spec=pltpu.PrefetchScalarGridSpec(
            num_scalar_prefetch=0,
            grid=(B, n_l),
            in_specs=[
                pl.BlockSpec((1, T, Cin), lambda bi, li: (bi, li, 0)),
                # tiny blocks holding the row just before / just after the tile
                pl.BlockSpec((1, halo, Cin),
                             lambda bi, li: (bi, jnp.maximum(li * bpt - 1, 0), 0)),
                pl.BlockSpec((1, halo, Cin),
                             lambda bi, li: (bi, jnp.minimum((li + 1) * bpt, lb - 1), 0)),
                pl.BlockSpec((3, Cin, Cout), lambda bi, li: (0, 0, 0)),
                pl.BlockSpec((1, Cout), lambda bi, li: (0, 0)),
            ],
            out_specs=pl.BlockSpec((1, T, Cout), lambda bi, li: (bi, li, 0)),
        ),
        compiler_params=pltpu.CompilerParams(
            dimension_semantics=("parallel", "parallel"),
            vmem_limit_bytes=_VMEM_LIMIT),
    )(x_nlc, x_nlc, x_nlc, w, b)


# ----------------------------------------------------------------------------
# Fused ResidualDenseBlock_5C kernel (dense growth kept in VMEM scratch)
# ----------------------------------------------------------------------------
def _rdb_kernel(x_ref, w1, b1, w2, b2, w3, b3, w4, b4, w5, b5,
                o_ref, buf_ref, *, nf, gc):
    # buf_ref: (L, nf + 4*gc) bf16 scratch holding [x | x1 | x2 | x3 | x4].
    buf_ref[:, 0:nf] = x_ref[0]

    def dense_conv(cin, w_ref, b_ref, lrelu):
        xin = buf_ref[:, 0:cin]                    # "concat" == contiguous prefix read
        zero = jnp.zeros((1, cin), xin.dtype)      # k=3 zero padding at both ends
        return _conv3_taps(xin, zero, zero, w_ref[...], b_ref[...], lrelu)

    y1 = dense_conv(nf, w1, b1, True)
    buf_ref[:, nf:nf + gc] = y1.astype(_ACT_DTYPE)
    y2 = dense_conv(nf + gc, w2, b2, True)
    buf_ref[:, nf + gc:nf + 2 * gc] = y2.astype(_ACT_DTYPE)
    y3 = dense_conv(nf + 2 * gc, w3, b3, True)
    buf_ref[:, nf + 2 * gc:nf + 3 * gc] = y3.astype(_ACT_DTYPE)
    y4 = dense_conv(nf + 3 * gc, w4, b4, True)
    buf_ref[:, nf + 3 * gc:nf + 4 * gc] = y4.astype(_ACT_DTYPE)
    y5 = dense_conv(nf + 4 * gc, w5, b5, False)

    # residual: x5 * 0.2 + x (x is still sitting in the scratch prefix)
    o_ref[0] = (y5 * 0.2 + buf_ref[:, 0:nf]).astype(o_ref.dtype)


def rdb_block(x_nlc, p):
    """Fused ResidualDenseBlock_5C forward (one pallas_call per block)."""
    B, L, nf = x_nlc.shape
    gc = p["conv1"]["w"].shape[-1]

    in_specs = [pl.BlockSpec((1, L, nf), lambda b: (b, 0, 0))]
    args = [x_nlc]
    for name in ("conv1", "conv2", "conv3", "conv4", "conv5"):
        w, bias = p[name]["w"], p[name]["b"]
        in_specs.append(pl.BlockSpec(w.shape, lambda b: (0, 0, 0)))
        in_specs.append(pl.BlockSpec(bias.shape, lambda b: (0, 0)))
        args += [w, bias]

    kern = functools.partial(_rdb_kernel, nf=nf, gc=gc)
    return pl.pallas_call(
        kern,
        out_shape=jax.ShapeDtypeStruct((B, L, nf), _ACT_DTYPE),
        grid_spec=pltpu.PrefetchScalarGridSpec(
            num_scalar_prefetch=0,
            grid=(B,),
            in_specs=in_specs,
            out_specs=pl.BlockSpec((1, L, nf), lambda b: (b, 0, 0)),
            scratch_shapes=[pltpu.VMEM((L, nf + 4 * gc), _ACT_DTYPE)],
        ),
        compiler_params=pltpu.CompilerParams(
            dimension_semantics=("parallel",),
            vmem_limit_bytes=_VMEM_LIMIT),
    )(*args)


# ----------------------------------------------------------------------------
# Fused Upsample(scale=3, nearest) + adaptive_avg_pool1d(841) as one matmul
# ----------------------------------------------------------------------------
def _pool_kernel(p_ref, x_ref, o_ref):
    x = x_ref[0].astype(jnp.float32)               # (L_pre, C)
    o_ref[0] = jnp.dot(p_ref[...], x,
                       preferred_element_type=jnp.float32).astype(o_ref.dtype)


def _upsample_pool_matrix(l_pre, scale, l_out):
    """P_eff with adaptive_avg_pool1d(nearest_upsample(x, scale), l_out) == P_eff @ x."""
    l_in = l_pre * scale
    P = np.zeros((l_out, l_pre), np.float32)
    for i in range(l_out):
        s = (i * l_in) // l_out
        e = -((-(i + 1) * l_in) // l_out)          # ceil((i+1)*l_in / l_out)
        inv = 1.0 / (e - s)
        for r in range(s, e):
            P[i, r // scale] += inv
    return jnp.asarray(P)


def upsample3_avgpool(x_nlc, l_out):
    B, L, C = x_nlc.shape
    P = _upsample_pool_matrix(L, 3, l_out)
    return pl.pallas_call(
        _pool_kernel,
        out_shape=jax.ShapeDtypeStruct((B, l_out, C), jnp.float32),
        grid_spec=pltpu.PrefetchScalarGridSpec(
            num_scalar_prefetch=0,
            grid=(B,),
            in_specs=[
                pl.BlockSpec((l_out, L), lambda b: (0, 0)),
                pl.BlockSpec((1, L, C), lambda b: (b, 0, 0)),
            ],
            out_specs=pl.BlockSpec((1, l_out, C), lambda b: (b, 0, 0)),
        ),
        compiler_params=pltpu.CompilerParams(
            dimension_semantics=("parallel",),
            vmem_limit_bytes=_VMEM_LIMIT),
    )(P, x_nlc)


# ----------------------------------------------------------------------------
# Parameter construction (deterministic, synthetic) + one-time kernel-layout prep
# ----------------------------------------------------------------------------
def _conv_params(key, cout, cin):
    kw, kb = jax.random.split(key)
    w = jax.random.normal(kw, (cout, cin, 3), jnp.float32) * 0.05   # PyTorch layout
    b = jax.random.normal(kb, (cout,), jnp.float32) * 0.05
    return {"w": w, "b": b}


def _rdb_params(key, nf, gc):
    ks = jax.random.split(key, 5)
    return {
        "conv1": _conv_params(ks[0], gc, nf),
        "conv2": _conv_params(ks[1], gc, nf + gc),
        "conv3": _conv_params(ks[2], gc, nf + 2 * gc),
        "conv4": _conv_params(ks[3], gc, nf + 3 * gc),
        "conv5": _conv_params(ks[4], nf, nf + 4 * gc),
    }


def _rrdb_params(key, nf, gc):
    ks = jax.random.split(key, 3)
    return {"RDB1": _rdb_params(ks[0], nf, gc),
            "RDB2": _rdb_params(ks[1], nf, gc),
            "RDB3": _rdb_params(ks[2], nf, gc)}


def init_rrdbnet_params(key, in_nc, out_nc, nf, nb, gc=32):
    del out_nc  # conv_last in the reference code outputs nf channels, not out_nc
    ks = jax.random.split(key, 9 + nb)
    return {
        "conv_first": _conv_params(ks[0], nf, in_nc),
        "RRDB_trunk": [_rrdb_params(ks[1 + i], nf, gc) for i in range(nb)],
        "trunk_conv": _conv_params(ks[1 + nb], nf, nf),
        "upconv1": _conv_params(ks[2 + nb], nf, nf),
        "upconv2": _conv_params(ks[3 + nb], nf, nf),
        "upconv3": _conv_params(ks[4 + nb], nf, nf),
        "upconv4": _conv_params(ks[5 + nb], nf, nf),
        "HRconv": _conv_params(ks[6 + nb], nf, nf),
        "conv_last": _conv_params(ks[7 + nb], nf, nf),
    }


def _prep_conv(p):
    # (Cout, Cin, 3) f32 -> tap-stacked (3, Cin, Cout) bf16; bias -> (1, Cout) f32.
    return {"w": jnp.transpose(p["w"], (2, 1, 0)).astype(_ACT_DTYPE),
            "b": p["b"].reshape(1, -1).astype(jnp.float32)}


def prepare_params(params):
    """One-time layout/dtype prep, done OUTSIDE the jitted forward."""
    prep_rdb = lambda p: {k: _prep_conv(v) for k, v in p.items()}
    prep_rrdb = lambda p: {k: prep_rdb(v) for k, v in p.items()}
    out = {k: _prep_conv(v) for k, v in params.items() if k != "RRDB_trunk"}
    out["RRDB_trunk"] = [prep_rrdb(b) for b in params["RRDB_trunk"]]
    return out


# ----------------------------------------------------------------------------
# Forward pass (NLC internally)
# ----------------------------------------------------------------------------
def _rrdb_forward(x, p):
    out = rdb_block(x, p["RDB1"])
    out = rdb_block(out, p["RDB2"])
    out = rdb_block(out, p["RDB3"])
    return out * 0.2 + x


def rrdbnet_forward(params, x_ncl):
    # PyTorch NCL -> NLC (channels on lanes, length on sublanes), bf16 activations.
    x = jnp.transpose(x_ncl, (0, 2, 1)).astype(_ACT_DTYPE)

    fea = conv1d(x, params["conv_first"], lrelu=False)
    trunk = fea
    for blk in params["RRDB_trunk"]:
        trunk = _rrdb_forward(trunk, blk)
    trunk = conv1d(trunk, params["trunk_conv"], lrelu=False)
    fea = fea + trunk

    for name in ("upconv1", "upconv2", "upconv3", "upconv4"):
        # F.interpolate(mode='nearest', scale=2) == integer repeat along L (JAX glue).
        fea = jnp.repeat(fea, 2, axis=1)
        fea = conv1d(fea, params[name], lrelu=True)

    fea = conv1d(fea, params["HRconv"], lrelu=True)
    out = conv1d(fea, params["conv_last"], lrelu=False)

    # Upsample(scale_factor=3) + Downsample(output_size=841), fused into one matmul;
    # the 3x-repeated tensor never touches HBM.
    out = upsample3_avgpool(out, 841)              # (B, 841, nf) f32

    # Back to PyTorch NCL layout: (B, nf, 841)
    return jnp.transpose(out, (0, 2, 1))


# ----------------------------------------------------------------------------
# Demo
# ----------------------------------------------------------------------------
if __name__ == "__main__":
    # Small synthetic configuration (module defaults are nf=64, gc=32, nb=23).
    B, in_nc, out_nc, nf, nb, gc, L = 2, 4, 4, 16, 1, 8, 16

    key = jax.random.PRNGKey(0)
    kp, kx = jax.random.split(key)
    raw_params = init_rrdbnet_params(kp, in_nc, out_nc, nf, nb, gc)
    params = prepare_params(raw_params)            # kernel layout, once, outside jit
    x = jax.random.normal(kx, (B, in_nc, L), jnp.float32)   # PyTorch-style NCL

    fwd = jax.jit(rrdbnet_forward)
    y = jax.block_until_ready(fwd(params, x))

    assert y.shape == (B, nf, 841), y.shape
    assert jnp.all(jnp.isfinite(y))
    print("KERNEL_OK")
</pallas_src>

<mosaic_0001>
module attributes {stable_mosaic.version = 11 : i64} {
  func.func @_conv1d_kernel(%arg0: i32, %arg1: i32, %arg2: memref<1x16x4xbf16, #tpu.memory_space<vmem>>, %arg3: memref<1x8x4xbf16, #tpu.memory_space<vmem>>, %arg4: memref<1x8x4xbf16, #tpu.memory_space<vmem>>, %arg5: memref<3x4x16xbf16, #tpu.memory_space<vmem>>, %arg6: memref<1x16xf32, #tpu.memory_space<vmem>>, %arg7: memref<1x16x16xbf16, #tpu.memory_space<vmem>>) attributes {dimension_semantics = [#tpu.dimension_semantics<parallel>, #tpu.dimension_semantics<parallel>], iteration_bounds = array<i64: 2, 1>, scalar_prefetch = 0 : i64, scratch_operands = 0 : i64, tpu.core_type = #tpu.core_type<tc>, window_params = [{transform_indices = @transform_0, window_bounds = array<i64: 1, 16, 4>}, {transform_indices = @transform_1, window_bounds = array<i64: 1, 8, 4>}, {transform_indices = @transform_2, window_bounds = array<i64: 1, 8, 4>}, {pipeline_mode = #tpu.pipeline_mode<synchronous>, transform_indices = @transform_3, window_bounds = array<i64: 3, 4, 16>}, {pipeline_mode = #tpu.pipeline_mode<synchronous>, transform_indices = @transform_4, window_bounds = array<i64: 1, 16>}, {transform_indices = @transform_5, window_bounds = array<i64: 1, 16, 16>}]} {
    %c0 = arith.constant 0 : index
    %c0_0 = arith.constant 0 : index
    %c0_1 = arith.constant 0 : index
    %0 = vector.load %arg2[%c0, %c0_0, %c0_1] : memref<1x16x4xbf16, #tpu.memory_space<vmem>>, vector<1x16x4xbf16>
    %1 = vector.shape_cast %0 : vector<1x16x4xbf16> to vector<16x4xbf16>
    %c0_2 = arith.constant 0 : index
    %c0_3 = arith.constant 0 : index
    %c0_4 = arith.constant 0 : index
    %2 = vector.load %arg3[%c0_2, %c0_3, %c0_4] : memref<1x8x4xbf16, #tpu.memory_space<vmem>>, vector<1x8x4xbf16>
    %3 = vector.shape_cast %2 : vector<1x8x4xbf16> to vector<8x4xbf16>
    %c0_5 = arith.constant 0 : index
    %c0_6 = arith.constant 0 : index
    %c0_7 = arith.constant 0 : index
    %4 = vector.load %arg4[%c0_5, %c0_6, %c0_7] : memref<1x8x4xbf16, #tpu.memory_space<vmem>>, vector<1x8x4xbf16>
    %5 = vector.shape_cast %4 : vector<1x8x4xbf16> to vector<8x4xbf16>
    %c0_i32 = arith.constant 0 : i32
    %6 = arith.cmpi sgt, %arg1, %c0_i32 : i32
    %cst = arith.constant 1.000000e+00 : f32
    %cst_8 = arith.constant 0.000000e+00 : f32
    %7 = arith.select %6, %cst, %cst_8 : f32
    %8 = arith.truncf %7 : f32 to bf16
    %c0_i32_9 = arith.constant 0 : i32
    %9 = arith.cmpi slt, %arg1, %c0_i32_9 : i32
    %cst_10 = arith.constant 1.000000e+00 : f32
    %cst_11 = arith.constant 0.000000e+00 : f32
    %10 = arith.select %9, %cst_10, %cst_11 : f32
    %11 = arith.truncf %10 : f32 to bf16
    %12 = vector.extract_strided_slice %3 {offsets = [7, 0], sizes = [1, 4], strides = [1, 1]} : vector<8x4xbf16> to vector<1x4xbf16>
    %13 = vector.broadcast %8 : bf16 to vector<1x4xbf16>
    %14 = arith.mulf %12, %13 : vector<1x4xbf16>
    %15 = vector.extract_strided_slice %5 {offsets = [0, 0], sizes = [1, 4], strides = [1, 1]} : vector<8x4xbf16> to vector<1x4xbf16>
    %16 = vector.broadcast %11 : bf16 to vector<1x4xbf16>
    %17 = arith.mulf %15, %16 : vector<1x4xbf16>
    %c0_12 = arith.constant 0 : index
    %c0_13 = arith.constant 0 : index
    %c0_14 = arith.constant 0 : index
    %18 = vector.load %arg5[%c0_12, %c0_13, %c0_14] : memref<3x4x16xbf16, #tpu.memory_space<vmem>>, vector<3x4x16xbf16>
    %c0_15 = arith.constant 0 : index
    %c0_16 = arith.constant 0 : index
    %19 = vector.load %arg6[%c0_15, %c0_16] : memref<1x16xf32, #tpu.memory_space<vmem>>, vector<1x16xf32>
    %20 = vector.extract_strided_slice %1 {offsets = [0, 0], sizes = [15, 4], strides = [1, 1]} : vector<16x4xbf16> to vector<15x4xbf16>
    %21 = tpu.concatenate %14, %20 in 0 : vector<1x4xbf16>, vector<15x4xbf16> -> vector<16x4xbf16>
    %22 = vector.extract_strided_slice %1 {offsets = [1, 0], sizes = [15, 4], strides = [1, 1]} : vector<16x4xbf16> to vector<15x4xbf16>
    %23 = tpu.concatenate %22, %17 in 0 : vector<15x4xbf16>, vector<1x4xbf16> -> vector<16x4xbf16>
    %24 = vector.extract_strided_slice %18 {offsets = [0, 0, 0], sizes = [1, 4, 16], strides = [1, 1, 1]} : vector<3x4x16xbf16> to vector<1x4x16xbf16>
    %25 = vector.shape_cast %24 : vector<1x4x16xbf16> to vector<4x16xbf16>
    %cst_17 = arith.constant dense<0.000000e+00> : vector<16x16xf32>
    %26 = tpu.matmul %21, %25, %cst_17 {dimension_numbers = #tpu.dot_dimension_numbers<[1], [0], [0], [1], [0, 0, 1, 1], [], []>} : vector<16x4xbf16>, vector<4x16xbf16>, vector<16x16xf32> -> vector<16x16xf32>
    %27 = vector.extract_strided_slice %18 {offsets = [1, 0, 0], sizes = [1, 4, 16], strides = [1, 1, 1]} : vector<3x4x16xbf16> to vector<1x4x16xbf16>
    %28 = vector.shape_cast %27 : vector<1x4x16xbf16> to vector<4x16xbf16>
    %cst_18 = arith.constant dense<0.000000e+00> : vector<16x16xf32>
    %29 = tpu.matmul %1, %28, %cst_18 {dimension_numbers = #tpu.dot_dimension_numbers<[1], [0], [0], [1], [0, 0, 1, 1], [], []>} : vector<16x4xbf16>, vector<4x16xbf16>, vector<16x16xf32> -> vector<16x16xf32>
    %30 = arith.addf %26, %29 : vector<16x16xf32>
    %31 = vector.extract_strided_slice %18 {offsets = [2, 0, 0], sizes = [1, 4, 16], strides = [1, 1, 1]} : vector<3x4x16xbf16> to vector<1x4x16xbf16>
    %32 = vector.shape_cast %31 : vector<1x4x16xbf16> to vector<4x16xbf16>
    %cst_19 = arith.constant dense<0.000000e+00> : vector<16x16xf32>
    %33 = tpu.matmul %23, %32, %cst_19 {dimension_numbers = #tpu.dot_dimension_numbers<[1], [0], [0], [1], [0, 0, 1, 1], [], []>} : vector<16x4xbf16>, vector<4x16xbf16>, vector<16x16xf32> -> vector<16x16xf32>
    %34 = arith.addf %30, %33 : vector<16x16xf32>
    %35 = vector.broadcast %19 : vector<1x16xf32> to vector<16x16xf32>
    %36 = arith.addf %34, %35 : vector<16x16xf32>
    %37 = arith.truncf %36 : vector<16x16xf32> to vector<16x16xbf16>
    %c0_20 = arith.constant 0 : index
    %c0_21 = arith.constant 0 : index
    %c0_22 = arith.constant 0 : index
    %38 = vector.load %arg7[%c0_20, %c0_21, %c0_22] : memref<1x16x16xbf16, #tpu.memory_space<vmem>>, vector<1x16x16xbf16>
    %39 = vector.shape_cast %38 : vector<1x16x16xbf16> to vector<16x16xbf16>
    %40 = vector.shape_cast %37 : vector<16x16xbf16> to vector<1x16x16xbf16>
    tpu.vector_store %arg7[%c0_20, %c0_21, %c0_22], %40 {strides = array<i32>} : memref<1x16x16xbf16, #tpu.memory_space<vmem>>, vector<1x16x16xbf16>,
    return
  }
  func.func @transform_0(%arg0: i32, %arg1: i32) -> (i32, i32, i32) {
    %c0_i32 = arith.constant 0 : i32
    %c0_i32_0 = arith.constant 0 : i32
    return %arg0, %arg1, %c0_i32 : i32, i32, i32
  }
  func.func @transform_1(%arg0: i32, %arg1: i32) -> (i32, i32, i32) {
    %c2_i32 = arith.constant 2 : i32
    %0 = arith.muli %arg1, %c2_i32 : i32
    %c1_i32 = arith.constant 1 : i32
    %1 = arith.subi %0, %c1_i32 : i32
    %c0_i32 = arith.constant 0 : i32
    %2 = arith.maxsi %1, %c0_i32 : i32
    %c0_i32_0 = arith.constant 0 : i32
    %c0_i32_1 = arith.constant 0 : i32
    return %arg0, %2, %c0_i32_0 : i32, i32, i32
  }
  func.func @transform_2(%arg0: i32, %arg1: i32) -> (i32, i32, i32) {
    %c1_i32 = arith.constant 1 : i32
    %0 = arith.addi %arg1, %c1_i32 : i32
    %c2_i32 = arith.constant 2 : i32
    %1 = arith.muli %0, %c2_i32 : i32
    %c1_i32_0 = arith.constant 1 : i32
    %2 = arith.minsi %1, %c1_i32_0 : i32
    %c0_i32 = arith.constant 0 : i32
    %c0_i32_1 = arith.constant 0 : i32
    return %arg0, %2, %c0_i32 : i32, i32, i32
  }
  func.func @transform_3(%arg0: i32, %arg1: i32) -> (i32, i32, i32) {
    %c0_i32 = arith.constant 0 : i32
    %c0_i32_0 = arith.constant 0 : i32
    %c0_i32_1 = arith.constant 0 : i32
    %c0_i32_2 = arith.constant 0 : i32
    return %c0_i32, %c0_i32_0, %c0_i32_1 : i32, i32, i32
  }
  func.func @transform_4(%arg0: i32, %arg1: i32) -> (i32, i32) {
    %c0_i32 = arith.constant 0 : i32
    %c0_i32_0 = arith.constant 0 : i32
    %c0_i32_1 = arith.constant 0 : i32
    return %c0_i32, %c0_i32_0 : i32, i32
  }
  func.func @transform_5(%arg0: i32, %arg1: i32) -> (i32, i32, i32) {
    %c0_i32 = arith.constant 0 : i32
    %c0_i32_0 = arith.constant 0 : i32
    return %arg0, %arg1, %c0_i32 : i32, i32, i32
  }
}

module attributes {stable_mosaic.version = 11 : i64} {
  func.func @_rdb_kernel(%arg0: i32, %arg1: memref<1x16x16xbf16, #tpu.memory_space<vmem>>, %arg2: memref<3x16x8xbf16, #tpu.memory_space<vmem>>, %arg3: memref<1x8xf32, #tpu.memory_space<vmem>>, %arg4: memref<3x24x8xbf16, #tpu.memory_space<vmem>>, %arg5: memref<1x8xf32, #tpu.memory_space<vmem>>, %arg6: memref<3x32x8xbf16, #tpu.memory_space<vmem>>, %arg7: memref<1x8xf32, #tpu.memory_space<vmem>>, %arg8: memref<3x40x8xbf16, #tpu.memory_space<vmem>>, %arg9: memref<1x8xf32, #tpu.memory_space<vmem>>, %arg10: memref<3x48x16xbf16, #tpu.memory_space<vmem>>, %arg11: memref<1x16xf32, #tpu.memory_space<vmem>>, %arg12: memref<1x16x16xbf16, #tpu.memory_space<vmem>>, %arg13: memref<16x48xbf16, #tpu.memory_space<vmem>>) attributes {dimension_semantics = [#tpu.dimension_semantics<parallel>], iteration_bounds = array<i64: 2>, scalar_prefetch = 0 : i64, scratch_operands = 1 : i64, tpu.core_type = #tpu.core_type<tc>, window_params = [{transform_indices = @transform_0, window_bounds = array<i64: 1, 16, 16>}, {pipeline_mode = #tpu.pipeline_mode<synchronous>, transform_indices = @transform_1, window_bounds = array<i64: 3, 16, 8>}, {pipeline_mode = #tpu.pipeline_mode<synchronous>, transform_indices = @transform_2, window_bounds = array<i64: 1, 8>}, {pipeline_mode = #tpu.pipeline_mode<synchronous>, transform_indices = @transform_3, window_bounds = array<i64: 3, 24, 8>}, {pipeline_mode = #tpu.pipeline_mode<synchronous>, transform_indices = @transform_4, window_bounds = array<i64: 1, 8>}, {pipeline_mode = #tpu.pipeline_mode<synchronous>, transform_indices = @transform_5, window_bounds = array<i64: 3, 32, 8>}, {pipeline_mode = #tpu.pipeline_mode<synchronous>, transform_indices = @transform_6, window_bounds = array<i64: 1, 8>}, {pipeline_mode = #tpu.pipeline_mode<synchronous>, transform_indices = @transform_7, window_bounds = array<i64: 3, 40, 8>}, {pipeline_mode = #tpu.pipeline_mode<synchronous>, transform_indices = @transform_8, window_bounds = array<i64: 1, 8>}, {pipeline_mode = #tpu.pipeline_mode<synchronous>, transform_indices = @transform_9, window_bounds = array<i64: 3, 48, 16>}, {pipeline_mode = #tpu.pipeline_mode<synchronous>, transform_indices = @transform_10, window_bounds = array<i64: 1, 16>}, {transform_indices = @transform_11, window_bounds = array<i64: 1, 16, 16>}]} {
    %c0 = arith.constant 0 : index
    %c0_0 = arith.constant 0 : index
    %c0_1 = arith.constant 0 : index
    %0 = vector.load %arg1[%c0, %c0_0, %c0_1] : memref<1x16x16xbf16, #tpu.memory_space<vmem>>, vector<1x16x16xbf16>
    %1 = vector.shape_cast %0 : vector<1x16x16xbf16> to vector<16x16xbf16>
    %c0_2 = arith.constant 0 : index
    %c0_3 = arith.constant 0 : index
    %2 = vector.load %arg13[%c0_2, %c0_3] : memref<16x48xbf16, #tpu.memory_space<vmem>>, vector<16x16xbf16>
    tpu.vector_store %arg13[%c0_2, %c0_3], %1 {strides = array<i32>} : memref<16x48xbf16, #tpu.memory_space<vmem>>, vector<16x16xbf16>,
    %c0_4 = arith.constant 0 : index
    %c0_5 = arith.constant 0 : index
    %3 = vector.load %arg13[%c0_4, %c0_5] : memref<16x48xbf16, #tpu.memory_space<vmem>>, vector<16x16xbf16>
    %cst = arith.constant 0.000000e+00 : bf16
    %4 = vector.broadcast %cst : bf16 to vector<1x16xbf16>
    %c0_6 = arith.constant 0 : index
    %c0_7 = arith.constant 0 : index
    %c0_8 = arith.constant 0 : index
    %5 = vector.load %arg2[%c0_6, %c0_7, %c0_8] : memref<3x16x8xbf16, #tpu.memory_space<vmem>>, vector<3x16x8xbf16>
    %c0_9 = arith.constant 0 : index
    %c0_10 = arith.constant 0 : index
    %6 = vector.load %arg3[%c0_9, %c0_10] : memref<1x8xf32, #tpu.memory_space<vmem>>, vector<1x8xf32>
    %7 = vector.extract_strided_slice %3 {offsets = [0, 0], sizes = [15, 16], strides = [1, 1]} : vector<16x16xbf16> to vector<15x16xbf16>
    %8 = tpu.concatenate %4, %7 in 0 : vector<1x16xbf16>, vector<15x16xbf16> -> vector<16x16xbf16>
    %9 = vector.extract_strided_slice %3 {offsets = [1, 0], sizes = [15, 16], strides = [1, 1]} : vector<16x16xbf16> to vector<15x16xbf16>
    %10 = tpu.concatenate %9, %4 in 0 : vector<15x16xbf16>, vector<1x16xbf16> -> vector<16x16xbf16>
    %11 = vector.extract_strided_slice %5 {offsets = [0, 0, 0], sizes = [1, 16, 8], strides = [1, 1, 1]} : vector<3x16x8xbf16> to vector<1x16x8xbf16>
    %12 = vector.shape_cast %11 : vector<1x16x8xbf16> to vector<16x8xbf16>
    %cst_11 = arith.constant dense<0.000000e+00> : vector<16x8xf32>
    %13 = tpu.matmul %8, %12, %cst_11 {dimension_numbers = #tpu.dot_dimension_numbers<[1], [0], [0], [1], [0, 0, 1, 1], [], []>} : vector<16x16xbf16>, vector<16x8xbf16>, vector<16x8xf32> -> vector<16x8xf32>
    %14 = vector.extract_strided_slice %5 {offsets = [1, 0, 0], sizes = [1, 16, 8], strides = [1, 1, 1]} : vector<3x16x8xbf16> to vector<1x16x8xbf16>
    %15 = vector.shape_cast %14 : vector<1x16x8xbf16> to vector<16x8xbf16>
    %cst_12 = arith.constant dense<0.000000e+00> : vector<16x8xf32>
    %16 = tpu.matmul %3, %15, %cst_12 {dimension_numbers = #tpu.dot_dimension_numbers<[1], [0], [0], [1], [0, 0, 1, 1], [], []>} : vector<16x16xbf16>, vector<16x8xbf16>, vector<16x8xf32> -> vector<16x8xf32>
    %17 = arith.addf %13, %16 : vector<16x8xf32>
    %18 = vector.extract_strided_slice %5 {offsets = [2, 0, 0], sizes = [1, 16, 8], strides = [1, 1, 1]} : vector<3x16x8xbf16> to vector<1x16x8xbf16>
    %19 = vector.shape_cast %18 : vector<1x16x8xbf16> to vector<16x8xbf16>
    %cst_13 = arith.constant dense<0.000000e+00> : vector<16x8xf32>
    %20 = tpu.matmul %10, %19, %cst_13 {dimension_numbers = #tpu.dot_dimension_numbers<[1], [0], [0], [1], [0, 0, 1, 1], [], []>} : vector<16x16xbf16>, vector<16x8xbf16>, vector<16x8xf32> -> vector<16x8xf32>
    %21 = arith.addf %17, %20 : vector<16x8xf32>
    %22 = vector.broadcast %6 : vector<1x8xf32> to vector<16x8xf32>
    %23 = arith.addf %21, %22 : vector<16x8xf32>
    %cst_14 = arith.constant 0.000000e+00 : f32
    %24 = vector.broadcast %cst_14 : f32 to vector<16x8xf32>
    %25 = arith.cmpf oge, %23, %24 : vector<16x8xf32>
    %cst_15 = arith.constant 2.000000e-01 : f32
    %26 = vector.broadcast %cst_15 : f32 to vector<16x8xf32>
    %27 = arith.mulf %26, %23 : vector<16x8xf32>
    %28 = arith.select %25, %23, %27 : vector<16x8xi1>, vector<16x8xf32>
    %29 = arith.truncf %28 : vector<16x8xf32> to vector<16x8xbf16>
    %c0_16 = arith.constant 0 : index
    %c16 = arith.constant 16 : index
    %30 = vector.load %arg13[%c0_16, %c16] : memref<16x48xbf16, #tpu.memory_space<vmem>>, vector<16x8xbf16>
    tpu.vector_store %arg13[%c0_16, %c16], %29 {strides = array<i32>} : memref<16x48xbf16, #tpu.memory_space<vmem>>, vector<16x8xbf16>,
    %c0_17 = arith.constant 0 : index
    %c0_18 = arith.constant 0 : index
    %31 = vector.load %arg13[%c0_17, %c0_18] : memref<16x48xbf16, #tpu.memory_space<vmem>>, vector<16x24xbf16>
    %cst_19 = arith.constant 0.000000e+00 : bf16
    %32 = vector.broadcast %cst_19 : bf16 to vector<1x24xbf16>
    %c0_20 = arith.constant 0 : index
    %c0_21 = arith.constant 0 : index
    %c0_22 = arith.constant 0 : index
    %33 = vector.load %arg4[%c0_20, %c0_21, %c0_22] : memref<3x24x8xbf16, #tpu.memory_space<vmem>>, vector<3x24x8xbf16>
    %c0_23 = arith.constant 0 : index
    %c0_24 = arith.constant 0 : index
    %34 = vector.load %arg5[%c0_23, %c0_24] : memref<1x8xf32, #tpu.memory_space<vmem>>, vector<1x8xf32>
    %35 = vector.extract_strided_slice %31 {offsets = [0, 0], sizes = [15, 24], strides = [1, 1]} : vector<16x24xbf16> to vector<15x24xbf16>
    %36 = tpu.concatenate %32, %35 in 0 : vector<1x24xbf16>, vector<15x24xbf16> -> vector<16x24xbf16>
    %37 = vector.extract_strided_slice %31 {offsets = [1, 0], sizes = [15, 24], strides = [1, 1]} : vector<16x24xbf16> to vector<15x24xbf16>
    %38 = tpu.concatenate %37, %32 in 0 : vector<15x24xbf16>, vector<1x24xbf16> -> vector<16x24xbf16>
    %39 = vector.extract_strided_slice %33 {offsets = [0, 0, 0], sizes = [1, 24, 8], strides = [1, 1, 1]} : vector<3x24x8xbf16> to vector<1x24x8xbf16>
    %40 = vector.shape_cast %39 : vector<1x24x8xbf16> to vector<24x8xbf16>
    %cst_25 = arith.constant dense<0.000000e+00> : vector<16x8xf32>
    %41 = tpu.matmul %36, %40, %cst_25 {dimension_numbers = #tpu.dot_dimension_numbers<[1], [0], [0], [1], [0, 0, 1, 1], [], []>} : vector<16x24xbf16>, vector<24x8xbf16>, vector<16x8xf32> -> vector<16x8xf32>
    %42 = vector.extract_strided_slice %33 {offsets = [1, 0, 0], sizes = [1, 24, 8], strides = [1, 1, 1]} : vector<3x24x8xbf16> to vector<1x24x8xbf16>
    %43 = vector.shape_cast %42 : vector<1x24x8xbf16> to vector<24x8xbf16>
    %cst_26 = arith.constant dense<0.000000e+00> : vector<16x8xf32>
    %44 = tpu.matmul %31, %43, %cst_26 {dimension_numbers = #tpu.dot_dimension_numbers<[1], [0], [0], [1], [0, 0, 1, 1], [], []>} : vector<16x24xbf16>, vector<24x8xbf16>, vector<16x8xf32> -> vector<16x8xf32>
    %45 = arith.addf %41, %44 : vector<16x8xf32>
    %46 = vector.extract_strided_slice %33 {offsets = [2, 0, 0], sizes = [1, 24, 8], strides = [1, 1, 1]} : vector<3x24x8xbf16> to vector<1x24x8xbf16>
    %47 = vector.shape_cast %46 : vector<1x24x8xbf16> to vector<24x8xbf16>
    %cst_27 = arith.constant dense<0.000000e+00> : vector<16x8xf32>
    %48 = tpu.matmul %38, %47, %cst_27 {dimension_numbers = #tpu.dot_dimension_numbers<[1], [0], [0], [1], [0, 0, 1, 1], [], []>} : vector<16x24xbf16>, vector<24x8xbf16>, vector<16x8xf32> -> vector<16x8xf32>
    %49 = arith.addf %45, %48 : vector<16x8xf32>
    %50 = vector.broadcast %34 : vector<1x8xf32> to vector<16x8xf32>
    %51 = arith.addf %49, %50 : vector<16x8xf32>
    %cst_28 = arith.constant 0.000000e+00 : f32
    %52 = vector.broadcast %cst_28 : f32 to vector<16x8xf32>
    %53 = arith.cmpf oge, %51, %52 : vector<16x8xf32>
    %cst_29 = arith.constant 2.000000e-01 : f32
    %54 = vector.broadcast %cst_29 : f32 to vector<16x8xf32>
    %55 = arith.mulf %54, %51 : vector<16x8xf32>
    %56 = arith.select %53, %51, %55 : vector<16x8xi1>, vector<16x8xf32>
    %57 = arith.truncf %56 : vector<16x8xf32> to vector<16x8xbf16>
    %c0_30 = arith.constant 0 : index
    %c24 = arith.constant 24 : index
    %58 = vector.load %arg13[%c0_30, %c24] : memref<16x48xbf16, #tpu.memory_space<vmem>>, vector<16x8xbf16>
    tpu.vector_store %arg13[%c0_30, %c24], %57 {strides = array<i32>} : memref<16x48xbf16, #tpu.memory_space<vmem>>, vector<16x8xbf16>,
    %c0_31 = arith.constant 0 : index
    %c0_32 = arith.constant 0 : index
    %59 = vector.load %arg13[%c0_31, %c0_32] : memref<16x48xbf16, #tpu.memory_space<vmem>>, vector<16x32xbf16>
    %cst_33 = arith.constant 0.000000e+00 : bf16
    %60 = vector.broadcast %cst_33 : bf16 to vector<1x32xbf16>
    %c0_34 = arith.constant 0 : index
    %c0_35 = arith.constant 0 : index
    %c0_36 = arith.constant 0 : index
    %61 = vector.load %arg6[%c0_34, %c0_35, %c0_36] : memref<3x32x8xbf16, #tpu.memory_space<vmem>>, vector<3x32x8xbf16>
    %c0_37 = arith.constant 0 : index
    %c0_38 = arith.constant 0 : index
    %62 = vector.load %arg7[%c0_37, %c0_38] : memref<1x8xf32, #tpu.memory_space<vmem>>, vector<1x8xf32>
    %63 = vector.extract_strided_slice %59 {offsets = [0, 0], sizes = [15, 32], strides = [1, 1]} : vector<16x32xbf16> to vector<15x32xbf16>
    %64 = tpu.concatenate %60, %63 in 0 : vector<1x32xbf16>, vector<15x32xbf16> -> vector<16x32xbf16>
    %65 = vector.extract_strided_slice %59 {offsets = [1, 0], sizes = [15, 32], strides = [1, 1]} : vector<16x32xbf16> to vector<15x32xbf16>
    %66 = tpu.concatenate %65, %60 in 0 : vector<15x32xbf16>, vector<1x32xbf16> -> vector<16x32xbf16>
    %67 = vector.extract_strided_slice %61 {offsets = [0, 0, 0], sizes = [1, 32, 8], strides = [1, 1, 1]} : vector<3x32x8xbf16> to vector<1x32x8xbf16>
    %68 = vector.shape_cast %67 : vector<1x32x8xbf16> to vector<32x8xbf16>
    %cst_39 = arith.constant dense<0.000000e+00> : vector<16x8xf32>
    %69 = tpu.matmul %64, %68, %cst_39 {dimension_numbers = #tpu.dot_dimension_numbers<[1], [0], [0], [1], [0, 0, 1, 1], [], []>} : vector<16x32xbf16>, vector<32x8xbf16>, vector<16x8xf32> -> vector<16x8xf32>
    %70 = vector.extract_strided_slice %61 {offsets = [1, 0, 0], sizes = [1, 32, 8], strides = [1, 1, 1]} : vector<3x32x8xbf16> to vector<1x32x8xbf16>
    %71 = vector.shape_cast %70 : vector<1x32x8xbf16> to vector<32x8xbf16>
    %cst_40 = arith.constant dense<0.000000e+00> : vector<16x8xf32>
    %72 = tpu.matmul %59, %71, %cst_40 {dimension_numbers = #tpu.dot_dimension_numbers<[1], [0], [0], [1], [0, 0, 1, 1], [], []>} : vector<16x32xbf16>, vector<32x8xbf16>, vector<16x8xf32> -> vector<16x8xf32>
    %73 = arith.addf %69, %72 : vector<16x8xf32>
    %74 = vector.extract_strided_slice %61 {offsets = [2, 0, 0], sizes = [1, 32, 8], strides = [1, 1, 1]} : vector<3x32x8xbf16> to vector<1x32x8xbf16>
    %75 = vector.shape_cast %74 : vector<1x32x8xbf16> to vector<32x8xbf16>
    %cst_41 = arith.constant dense<0.000000e+00> : vector<16x8xf32>
    %76 = tpu.matmul %66, %75, %cst_41 {dimension_numbers = #tpu.dot_dimension_numbers<[1], [0], [0], [1], [0, 0, 1, 1], [], []>} : vector<16x32xbf16>, vector<32x8xbf16>, vector<16x8xf32> -> vector<16x8xf32>
    %77 = arith.addf %73, %76 : vector<16x8xf32>
    %78 = vector.broadcast %62 : vector<1x8xf32> to vector<16x8xf32>
    %79 = arith.addf %77, %78 : vector<16x8xf32>
    %cst_42 = arith.constant 0.000000e+00 : f32
    %80 = vector.broadcast %cst_42 : f32 to vector<16x8xf32>
    %81 = arith.cmpf oge, %79, %80 : vector<16x8xf32>
    %cst_43 = arith.constant 2.000000e-01 : f32
    %82 = vector.broadcast %cst_43 : f32 to vector<16x8xf32>
    %83 = arith.mulf %82, %79 : vector<16x8xf32>
    %84 = arith.select %81, %79, %83 : vector<16x8xi1>, vector<16x8xf32>
    %85 = arith.truncf %84 : vector<16x8xf32> to vector<16x8xbf16>
    %c0_44 = arith.constant 0 : index
    %c32 = arith.constant 32 : index
    %86 = vector.load %arg13[%c0_44, %c32] : memref<16x48xbf16, #tpu.memory_space<vmem>>, vector<16x8xbf16>
    tpu.vector_store %arg13[%c0_44, %c32], %85 {strides = array<i32>} : memref<16x48xbf16, #tpu.memory_space<vmem>>, vector<16x8xbf16>,
    %c0_45 = arith.constant 0 : index
    %c0_46 = arith.constant 0 : index
    %87 = vector.load %arg13[%c0_45, %c0_46] : memref<16x48xbf16, #tpu.memory_space<vmem>>, vector<16x40xbf16>
    %cst_47 = arith.constant 0.000000e+00 : bf16
    %88 = vector.broadcast %cst_47 : bf16 to vector<1x40xbf16>
    %c0_48 = arith.constant 0 : index
    %c0_49 = arith.constant 0 : index
    %c0_50 = arith.constant 0 : index
    %89 = vector.load %arg8[%c0_48, %c0_49, %c0_50] : memref<3x40x8xbf16, #tpu.memory_space<vmem>>, vector<3x40x8xbf16>
    %c0_51 = arith.constant 0 : index
    %c0_52 = arith.constant 0 : index
    %90 = vector.load %arg9[%c0_51, %c0_52] : memref<1x8xf32, #tpu.memory_space<vmem>>, vector<1x8xf32>
    %91 = vector.extract_strided_slice %87 {offsets = [0, 0], sizes = [15, 40], strides = [1, 1]} : vector<16x40xbf16> to vector<15x40xbf16>
    %92 = tpu.concatenate %88, %91 in 0 : vector<1x40xbf16>, vector<15x40xbf16> -> vector<16x40xbf16>
    %93 = vector.extract_strided_slice %87 {offsets = [1, 0], sizes = [15, 40], strides = [1, 1]} : vector<16x40xbf16> to vector<15x40xbf16>
    %94 = tpu.concatenate %93, %88 in 0 : vector<15x40xbf16>, vector<1x40xbf16> -> vector<16x40xbf16>
    %95 = vector.extract_strided_slice %89 {offsets = [0, 0, 0], sizes = [1, 40, 8], strides = [1, 1, 1]} : vector<3x40x8xbf16> to vector<1x40x8xbf16>
    %96 = vector.shape_cast %95 : vector<1x40x8xbf16> to vector<40x8xbf16>
    %cst_53 = arith.constant dense<0.000000e+00> : vector<16x8xf32>
    %97 = tpu.matmul %92, %96, %cst_53 {dimension_numbers = #tpu.dot_dimension_numbers<[1], [0], [0], [1], [0, 0, 1, 1], [], []>} : vector<16x40xbf16>, vector<40x8xbf16>, vector<16x8xf32> -> vector<16x8xf32>
    %98 = vector.extract_strided_slice %89 {offsets = [1, 0, 0], sizes = [1, 40, 8], strides = [1, 1, 1]} : vector<3x40x8xbf16> to vector<1x40x8xbf16>
    %99 = vector.shape_cast %98 : vector<1x40x8xbf16> to vector<40x8xbf16>
    %cst_54 = arith.constant dense<0.000000e+00> : vector<16x8xf32>
    %100 = tpu.matmul %87, %99, %cst_54 {dimension_numbers = #tpu.dot_dimension_numbers<[1], [0], [0], [1], [0, 0, 1, 1], [], []>} : vector<16x40xbf16>, vector<40x8xbf16>, vector<16x8xf32> -> vector<16x8xf32>
    %101 = arith.addf %97, %100 : vector<16x8xf32>
    %102 = vector.extract_strided_slice %89 {offsets = [2, 0, 0], sizes = [1, 40, 8], strides = [1, 1, 1]} : vector<3x40x8xbf16> to vector<1x40x8xbf16>
    %103 = vector.shape_cast %102 : vector<1x40x8xbf16> to vector<40x8xbf16>
    %cst_55 = arith.constant dense<0.000000e+00> : vector<16x8xf32>
    %104 = tpu.matmul %94, %103, %cst_55 {dimension_numbers = #tpu.dot_dimension_numbers<[1], [0], [0], [1], [0, 0, 1, 1], [], []>} : vector<16x40xbf16>, vector<40x8xbf16>, vector<16x8xf32> -> vector<16x8xf32>
    %105 = arith.addf %101, %104 : vector<16x8xf32>
    %106 = vector.broadcast %90 : vector<1x8xf32> to vector<16x8xf32>
    %107 = arith.addf %105, %106 : vector<16x8xf32>
    %cst_56 = arith.constant 0.000000e+00 : f32
    %108 = vector.broadcast %cst_56 : f32 to vector<16x8xf32>
    %109 = arith.cmpf oge, %107, %108 : vector<16x8xf32>
    %cst_57 = arith.constant 2.000000e-01 : f32
    %110 = vector.broadcast %cst_57 : f32 to vector<16x8xf32>
    %111 = arith.mulf %110, %107 : vector<16x8xf32>
    %112 = arith.select %109, %107, %111 : vector<16x8xi1>, vector<16x8xf32>
    %113 = arith.truncf %112 : vector<16x8xf32> to vector<16x8xbf16>
    %c0_58 = arith.constant 0 : index
    %c40 = arith.constant 40 : index
    %114 = vector.load %arg13[%c0_58, %c40] : memref<16x48xbf16, #tpu.memory_space<vmem>>, vector<16x8xbf16>
    tpu.vector_store %arg13[%c0_58, %c40], %113 {strides = array<i32>} : memref<16x48xbf16, #tpu.memory_space<vmem>>, vector<16x8xbf16>,
    %c0_59 = arith.constant 0 : index
    %c0_60 = arith.constant 0 : index
    %115 = vector.load %arg13[%c0_59, %c0_60] : memref<16x48xbf16, #tpu.memory_space<vmem>>, vector<16x48xbf16>
    %cst_61 = arith.constant 0.000000e+00 : bf16
    %116 = vector.broadcast %cst_61 : bf16 to vector<1x48xbf16>
    %c0_62 = arith.constant 0 : index
    %c0_63 = arith.constant 0 : index
    %c0_64 = arith.constant 0 : index
    %117 = vector.load %arg10[%c0_62, %c0_63, %c0_64] : memref<3x48x16xbf16, #tpu.memory_space<vmem>>, vector<3x48x16xbf16>
    %c0_65 = arith.constant 0 : index
    %c0_66 = arith.constant 0 : index
    %118 = vector.load %arg11[%c0_65, %c0_66] : memref<1x16xf32, #tpu.memory_space<vmem>>, vector<1x16xf32>
    %119 = vector.extract_strided_slice %115 {offsets = [0, 0], sizes = [15, 48], strides = [1, 1]} : vector<16x48xbf16> to vector<15x48xbf16>
    %120 = tpu.concatenate %116, %119 in 0 : vector<1x48xbf16>, vector<15x48xbf16> -> vector<16x48xbf16>
    %121 = vector.extract_strided_slice %115 {offsets = [1, 0], sizes = [15, 48], strides = [1, 1]} : vector<16x48xbf16> to vector<15x48xbf16>
    %122 = tpu.concatenate %121, %116 in 0 : vector<15x48xbf16>, vector<1x48xbf16> -> vector<16x48xbf16>
    %123 = vector.extract_strided_slice %117 {offsets = [0, 0, 0], sizes = [1, 48, 16], strides = [1, 1, 1]} : vector<3x48x16xbf16> to vector<1x48x16xbf16>
    %124 = vector.shape_cast %123 : vector<1x48x16xbf16> to vector<48x16xbf16>
    %cst_67 = arith.constant dense<0.000000e+00> : vector<16x16xf32>
    %125 = tpu.matmul %120, %124, %cst_67 {dimension_numbers = #tpu.dot_dimension_numbers<[1], [0], [0], [1], [0, 0, 1, 1], [], []>} : vector<16x48xbf16>, vector<48x16xbf16>, vector<16x16xf32> -> vector<16x16xf32>
    %126 = vector.extract_strided_slice %117 {offsets = [1, 0, 0], sizes = [1, 48, 16], strides = [1, 1, 1]} : vector<3x48x16xbf16> to vector<1x48x16xbf16>
    %127 = vector.shape_cast %126 : vector<1x48x16xbf16> to vector<48x16xbf16>
    %cst_68 = arith.constant dense<0.000000e+00> : vector<16x16xf32>
    %128 = tpu.matmul %115, %127, %cst_68 {dimension_numbers = #tpu.dot_dimension_numbers<[1], [0], [0], [1], [0, 0, 1, 1], [], []>} : vector<16x48xbf16>, vector<48x16xbf16>, vector<16x16xf32> -> vector<16x16xf32>
    %129 = arith.addf %125, %128 : vector<16x16xf32>
    %130 = vector.extract_strided_slice %117 {offsets = [2, 0, 0], sizes = [1, 48, 16], strides = [1, 1, 1]} : vector<3x48x16xbf16> to vector<1x48x16xbf16>
    %131 = vector.shape_cast %130 : vector<1x48x16xbf16> to vector<48x16xbf16>
    %cst_69 = arith.constant dense<0.000000e+00> : vector<16x16xf32>
    %132 = tpu.matmul %122, %131, %cst_69 {dimension_numbers = #tpu.dot_dimension_numbers<[1], [0], [0], [1], [0, 0, 1, 1], [], []>} : vector<16x48xbf16>, vector<48x16xbf16>, vector<16x16xf32> -> vector<16x16xf32>
    %133 = arith.addf %129, %132 : vector<16x16xf32>
    %134 = vector.broadcast %118 : vector<1x16xf32> to vector<16x16xf32>
    %135 = arith.addf %133, %134 : vector<16x16xf32>
    %cst_70 = arith.constant 2.000000e-01 : f32
    %136 = vector.broadcast %cst_70 : f32 to vector<16x16xf32>
    %137 = arith.mulf %135, %136 : vector<16x16xf32>
    %c0_71 = arith.constant 0 : index
    %c0_72 = arith.constant 0 : index
    %138 = vector.load %arg13[%c0_71, %c0_72] : memref<16x48xbf16, #tpu.memory_space<vmem>>, vector<16x16xbf16>
    %139 = arith.extf %138 : vector<16x16xbf16> to vector<16x16xf32>
    %140 = arith.addf %137, %139 : vector<16x16xf32>
    %141 = arith.truncf %140 : vector<16x16xf32> to vector<16x16xbf16>
    %c0_73 = arith.constant 0 : index
    %c0_74 = arith.constant 0 : index
    %c0_75 = arith.constant 0 : index
    %142 = vector.load %arg12[%c0_73, %c0_74, %c0_75] : memref<1x16x16xbf16, #tpu.memory_space<vmem>>, vector<1x16x16xbf16>
    %143 = vector.shape_cast %142 : vector<1x16x16xbf16> to vector<16x16xbf16>
    %144 = vector.shape_cast %141 : vector<16x16xbf16> to vector<1x16x16xbf16>
    tpu.vector_store %arg12[%c0_73, %c0_74, %c0_75], %144 {strides = array<i32>} : memref<1x16x16xbf16, #tpu.memory_space<vmem>>, vector<1x16x16xbf16>,
    return
  }
  func.func @transform_0(%arg0: i32) -> (i32, i32, i32) {
    %c0_i32 = arith.constant 0 : i32
    %c0_i32_0 = arith.constant 0 : i32
    %c0_i32_1 = arith.constant 0 : i32
    return %arg0, %c0_i32, %c0_i32_0 : i32, i32, i32
  }
  func.func @transform_1(%arg0: i32) -> (i32, i32, i32) {
    %c0_i32 = arith.constant 0 : i32
    %c0_i32_0 = arith.constant 0 : i32
    %c0_i32_1 = arith.constant 0 : i32
    %c0_i32_2 = arith.constant 0 : i32
    return %c0_i32, %c0_i32_0, %c0_i32_1 : i32, i32, i32
  }
  func.func @transform_2(%arg0: i32) -> (i32, i32) {
    %c0_i32 = arith.constant 0 : i32
    %c0_i32_0 = arith.constant 0 : i32
    %c0_i32_1 = arith.constant 0 : i32
    return %c0_i32, %c0_i32_0 : i32, i32
  }
  func.func @transform_3(%arg0: i32) -> (i32, i32, i32) {
    %c0_i32 = arith.constant 0 : i32
    %c0_i32_0 = arith.constant 0 : i32
    %c0_i32_1 = arith.constant 0 : i32
    %c0_i32_2 = arith.constant 0 : i32
    return %c0_i32, %c0_i32_0, %c0_i32_1 : i32, i32, i32
  }
  func.func @transform_4(%arg0: i32) -> (i32, i32) {
    %c0_i32 = arith.constant 0 : i32
    %c0_i32_0 = arith.constant 0 : i32
    %c0_i32_1 = arith.constant 0 : i32
    return %c0_i32, %c0_i32_0 : i32, i32
  }
  func.func @transform_5(%arg0: i32) -> (i32, i32, i32) {
    %c0_i32 = arith.constant 0 : i32
    %c0_i32_0 = arith.constant 0 : i32
    %c0_i32_1 = arith.constant 0 : i32
    %c0_i32_2 = arith.constant 0 : i32
    return %c0_i32, %c0_i32_0, %c0_i32_1 : i32, i32, i32
  }
  func.func @transform_6(%arg0: i32) -> (i32, i32) {
    %c0_i32 = arith.constant 0 : i32
    %c0_i32_0 = arith.constant 0 : i32
    %c0_i32_1 = arith.constant 0 : i32
    return %c0_i32, %c0_i32_0 : i32, i32
  }
  func.func @transform_7(%arg0: i32) -> (i32, i32, i32) {
    %c0_i32 = arith.constant 0 : i32
    %c0_i32_0 = arith.constant 0 : i32
    %c0_i32_1 = arith.constant 0 : i32
    %c0_i32_2 = arith.constant 0 : i32
    return %c0_i32, %c0_i32_0, %c0_i32_1 : i32, i32, i32
  }
  func.func @transform_8(%arg0: i32) -> (i32, i32) {
    %c0_i32 = arith.constant 0 : i32
    %c0_i32_0 = arith.constant 0 : i32
    %c0_i32_1 = arith.constant 0 : i32
    return %c0_i32, %c0_i32_0 : i32, i32
  }
  func.func @transform_9(%arg0: i32) -> (i32, i32, i32) {
    %c0_i32 = arith.constant 0 : i32
    %c0_i32_0 = arith.constant 0 : i32
    %c0_i32_1 = arith.constant 0 : i32
    %c0_i32_2 = arith.constant 0 : i32
    return %c0_i32, %c0_i32_0, %c0_i32_1 : i32, i32, i32
  }
  func.func @transform_10(%arg0: i32) -> (i32, i32) {
    %c0_i32 = arith.constant 0 : i32
    %c0_i32_0 = arith.constant 0 : i32
    %c0_i32_1 = arith.constant 0 : i32
    return %c0_i32, %c0_i32_0 : i32, i32
  }
  func.func @transform_11(%arg0: i32) -> (i32, i32, i32) {
    %c0_i32 = arith.constant 0 : i32
    %c0_i32_0 = arith.constant 0 : i32
    %c0_i32_1 = arith.constant 0 : i32
    return %arg0, %c0_i32, %c0_i32_0 : i32, i32, i32
  }
}

module attributes {stable_mosaic.version = 11 : i64} {
  func.func @_conv1d_kernel(%arg0: i32, %arg1: i32, %arg2: memref<1x16x16xbf16, #tpu.memory_space<vmem>>, %arg3: memref<1x8x16xbf16, #tpu.memory_space<vmem>>, %arg4: memref<1x8x16xbf16, #tpu.memory_space<vmem>>, %arg5: memref<3x16x16xbf16, #tpu.memory_space<vmem>>, %arg6: memref<1x16xf32, #tpu.memory_space<vmem>>, %arg7: memref<1x16x16xbf16, #tpu.memory_space<vmem>>) attributes {dimension_semantics = [#tpu.dimension_semantics<parallel>, #tpu.dimension_semantics<parallel>], iteration_bounds = array<i64: 2, 1>, scalar_prefetch = 0 : i64, scratch_operands = 0 : i64, tpu.core_type = #tpu.core_type<tc>, window_params = [{transform_indices = @transform_0, window_bounds = array<i64: 1, 16, 16>}, {transform_indices = @transform_1, window_bounds = array<i64: 1, 8, 16>}, {transform_indices = @transform_2, window_bounds = array<i64: 1, 8, 16>}, {pipeline_mode = #tpu.pipeline_mode<synchronous>, transform_indices = @transform_3, window_bounds = array<i64: 3, 16, 16>}, {pipeline_mode = #tpu.pipeline_mode<synchronous>, transform_indices = @transform_4, window_bounds = array<i64: 1, 16>}, {transform_indices = @transform_5, window_bounds = array<i64: 1, 16, 16>}]} {
    %c0 = arith.constant 0 : index
    %c0_0 = arith.constant 0 : index
    %c0_1 = arith.constant 0 : index
    %0 = vector.load %arg2[%c0, %c0_0, %c0_1] : memref<1x16x16xbf16, #tpu.memory_space<vmem>>, vector<1x16x16xbf16>
    %1 = vector.shape_cast %0 : vector<1x16x16xbf16> to vector<16x16xbf16>
    %c0_2 = arith.constant 0 : index
    %c0_3 = arith.constant 0 : index
    %c0_4 = arith.constant 0 : index
    %2 = vector.load %arg3[%c0_2, %c0_3, %c0_4] : memref<1x8x16xbf16, #tpu.memory_space<vmem>>, vector<1x8x16xbf16>
    %3 = vector.shape_cast %2 : vector<1x8x16xbf16> to vector<8x16xbf16>
    %c0_5 = arith.constant 0 : index
    %c0_6 = arith.constant 0 : index
    %c0_7 = arith.constant 0 : index
    %4 = vector.load %arg4[%c0_5, %c0_6, %c0_7] : memref<1x8x16xbf16, #tpu.memory_space<vmem>>, vector<1x8x16xbf16>
    %5 = vector.shape_cast %4 : vector<1x8x16xbf16> to vector<8x16xbf16>
    %c0_i32 = arith.constant 0 : i32
    %6 = arith.cmpi sgt, %arg1, %c0_i32 : i32
    %cst = arith.constant 1.000000e+00 : f32
    %cst_8 = arith.constant 0.000000e+00 : f32
    %7 = arith.select %6, %cst, %cst_8 : f32
    %8 = arith.truncf %7 : f32 to bf16
    %c0_i32_9 = arith.constant 0 : i32
    %9 = arith.cmpi slt, %arg1, %c0_i32_9 : i32
    %cst_10 = arith.constant 1.000000e+00 : f32
    %cst_11 = arith.constant 0.000000e+00 : f32
    %10 = arith.select %9, %cst_10, %cst_11 : f32
    %11 = arith.truncf %10 : f32 to bf16
    %12 = vector.extract_strided_slice %3 {offsets = [7, 0], sizes = [1, 16], strides = [1, 1]} : vector<8x16xbf16> to vector<1x16xbf16>
    %13 = vector.broadcast %8 : bf16 to vector<1x16xbf16>
    %14 = arith.mulf %12, %13 : vector<1x16xbf16>
    %15 = vector.extract_strided_slice %5 {offsets = [0, 0], sizes = [1, 16], strides = [1, 1]} : vector<8x16xbf16> to vector<1x16xbf16>
    %16 = vector.broadcast %11 : bf16 to vector<1x16xbf16>
    %17 = arith.mulf %15, %16 : vector<1x16xbf16>
    %c0_12 = arith.constant 0 : index
    %c0_13 = arith.constant 0 : index
    %c0_14 = arith.constant 0 : index
    %18 = vector.load %arg5[%c0_12, %c0_13, %c0_14] : memref<3x16x16xbf16, #tpu.memory_space<vmem>>, vector<3x16x16xbf16>
    %c0_15 = arith.constant 0 : index
    %c0_16 = arith.constant 0 : index
    %19 = vector.load %arg6[%c0_15, %c0_16] : memref<1x16xf32, #tpu.memory_space<vmem>>, vector<1x16xf32>
    %20 = vector.extract_strided_slice %1 {offsets = [0, 0], sizes = [15, 16], strides = [1, 1]} : vector<16x16xbf16> to vector<15x16xbf16>
    %21 = tpu.concatenate %14, %20 in 0 : vector<1x16xbf16>, vector<15x16xbf16> -> vector<16x16xbf16>
    %22 = vector.extract_strided_slice %1 {offsets = [1, 0], sizes = [15, 16], strides = [1, 1]} : vector<16x16xbf16> to vector<15x16xbf16>
    %23 = tpu.concatenate %22, %17 in 0 : vector<15x16xbf16>, vector<1x16xbf16> -> vector<16x16xbf16>
    %24 = vector.extract_strided_slice %18 {offsets = [0, 0, 0], sizes = [1, 16, 16], strides = [1, 1, 1]} : vector<3x16x16xbf16> to vector<1x16x16xbf16>
    %25 = vector.shape_cast %24 : vector<1x16x16xbf16> to vector<16x16xbf16>
    %cst_17 = arith.constant dense<0.000000e+00> : vector<16x16xf32>
    %26 = tpu.matmul %21, %25, %cst_17 {dimension_numbers = #tpu.dot_dimension_numbers<[1], [0], [0], [1], [0, 0, 1, 1], [], []>} : vector<16x16xbf16>, vector<16x16xbf16>, vector<16x16xf32> -> vector<16x16xf32>
    %27 = vector.extract_strided_slice %18 {offsets = [1, 0, 0], sizes = [1, 16, 16], strides = [1, 1, 1]} : vector<3x16x16xbf16> to vector<1x16x16xbf16>
    %28 = vector.shape_cast %27 : vector<1x16x16xbf16> to vector<16x16xbf16>
    %cst_18 = arith.constant dense<0.000000e+00> : vector<16x16xf32>
    %29 = tpu.matmul %1, %28, %cst_18 {dimension_numbers = #tpu.dot_dimension_numbers<[1], [0], [0], [1], [0, 0, 1, 1], [], []>} : vector<16x16xbf16>, vector<16x16xbf16>, vector<16x16xf32> -> vector<16x16xf32>
    %30 = arith.addf %26, %29 : vector<16x16xf32>
    %31 = vector.extract_strided_slice %18 {offsets = [2, 0, 0], sizes = [1, 16, 16], strides = [1, 1, 1]} : vector<3x16x16xbf16> to vector<1x16x16xbf16>
    %32 = vector.shape_cast %31 : vector<1x16x16xbf16> to vector<16x16xbf16>
    %cst_19 = arith.constant dense<0.000000e+00> : vector<16x16xf32>
    %33 = tpu.matmul %23, %32, %cst_19 {dimension_numbers = #tpu.dot_dimension_numbers<[1], [0], [0], [1], [0, 0, 1, 1], [], []>} : vector<16x16xbf16>, vector<16x16xbf16>, vector<16x16xf32> -> vector<16x16xf32>
    %34 = arith.addf %30, %33 : vector<16x16xf32>
    %35 = vector.broadcast %19 : vector<1x16xf32> to vector<16x16xf32>
    %36 = arith.addf %34, %35 : vector<16x16xf32>
    %37 = arith.truncf %36 : vector<16x16xf32> to vector<16x16xbf16>
    %c0_20 = arith.constant 0 : index
    %c0_21 = arith.constant 0 : index
    %c0_22 = arith.constant 0 : index
    %38 = vector.load %arg7[%c0_20, %c0_21, %c0_22] : memref<1x16x16xbf16, #tpu.memory_space<vmem>>, vector<1x16x16xbf16>
    %39 = vector.shape_cast %38 : vector<1x16x16xbf16> to vector<16x16xbf16>
    %40 = vector.shape_cast %37 : vector<16x16xbf16> to vector<1x16x16xbf16>
    tpu.vector_store %arg7[%c0_20, %c0_21, %c0_22], %40 {strides = array<i32>} : memref<1x16x16xbf16, #tpu.memory_space<vmem>>, vector<1x16x16xbf16>,
    return
  }
  func.func @transform_0(%arg0: i32, %arg1: i32) -> (i32, i32, i32) {
    %c0_i32 = arith.constant 0 : i32
    %c0_i32_0 = arith.constant 0 : i32
    return %arg0, %arg1, %c0_i32 : i32, i32, i32
  }
  func.func @transform_1(%arg0: i32, %arg1: i32) -> (i32, i32, i32) {
    %c2_i32 = arith.constant 2 : i32
    %0 = arith.muli %arg1, %c2_i32 : i32
    %c1_i32 = arith.constant 1 : i32
    %1 = arith.subi %0, %c1_i32 : i32
    %c0_i32 = arith.constant 0 : i32
    %2 = arith.maxsi %1, %c0_i32 : i32
    %c0_i32_0 = arith.constant 0 : i32
    %c0_i32_1 = arith.constant 0 : i32
    return %arg0, %2, %c0_i32_0 : i32, i32, i32
  }
  func.func @transform_2(%arg0: i32, %arg1: i32) -> (i32, i32, i32) {
    %c1_i32 = arith.constant 1 : i32
    %0 = arith.addi %arg1, %c1_i32 : i32
    %c2_i32 = arith.constant 2 : i32
    %1 = arith.muli %0, %c2_i32 : i32
    %c1_i32_0 = arith.constant 1 : i32
    %2 = arith.minsi %1, %c1_i32_0 : i32
    %c0_i32 = arith.constant 0 : i32
    %c0_i32_1 = arith.constant 0 : i32
    return %arg0, %2, %c0_i32 : i32, i32, i32
  }
  func.func @transform_3(%arg0: i32, %arg1: i32) -> (i32, i32, i32) {
    %c0_i32 = arith.constant 0 : i32
    %c0_i32_0 = arith.constant 0 : i32
    %c0_i32_1 = arith.constant 0 : i32
    %c0_i32_2 = arith.constant 0 : i32
    return %c0_i32, %c0_i32_0, %c0_i32_1 : i32, i32, i32
  }
  func.func @transform_4(%arg0: i32, %arg1: i32) -> (i32, i32) {
    %c0_i32 = arith.constant 0 : i32
    %c0_i32_0 = arith.constant 0 : i32
    %c0_i32_1 = arith.constant 0 : i32
    return %c0_i32, %c0_i32_0 : i32, i32
  }
  func.func @transform_5(%arg0: i32, %arg1: i32) -> (i32, i32, i32) {
    %c0_i32 = arith.constant 0 : i32
    %c0_i32_0 = arith.constant 0 : i32
    return %arg0, %arg1, %c0_i32 : i32, i32, i32
  }
}

module attributes {stable_mosaic.version = 11 : i64} {
  func.func @_conv1d_kernel(%arg0: i32, %arg1: i32, %arg2: memref<1x32x16xbf16, #tpu.memory_space<vmem>>, %arg3: memref<1x8x16xbf16, #tpu.memory_space<vmem>>, %arg4: memref<1x8x16xbf16, #tpu.memory_space<vmem>>, %arg5: memref<3x16x16xbf16, #tpu.memory_space<vmem>>, %arg6: memref<1x16xf32, #tpu.memory_space<vmem>>, %arg7: memref<1x32x16xbf16, #tpu.memory_space<vmem>>) attributes {dimension_semantics = [#tpu.dimension_semantics<parallel>, #tpu.dimension_semantics<parallel>], iteration_bounds = array<i64: 2, 1>, scalar_prefetch = 0 : i64, scratch_operands = 0 : i64, tpu.core_type = #tpu.core_type<tc>, window_params = [{transform_indices = @transform_0, window_bounds = array<i64: 1, 32, 16>}, {transform_indices = @transform_1, window_bounds = array<i64: 1, 8, 16>}, {transform_indices = @transform_2, window_bounds = array<i64: 1, 8, 16>}, {pipeline_mode = #tpu.pipeline_mode<synchronous>, transform_indices = @transform_3, window_bounds = array<i64: 3, 16, 16>}, {pipeline_mode = #tpu.pipeline_mode<synchronous>, transform_indices = @transform_4, window_bounds = array<i64: 1, 16>}, {transform_indices = @transform_5, window_bounds = array<i64: 1, 32, 16>}]} {
    %c0 = arith.constant 0 : index
    %c0_0 = arith.constant 0 : index
    %c0_1 = arith.constant 0 : index
    %0 = vector.load %arg2[%c0, %c0_0, %c0_1] : memref<1x32x16xbf16, #tpu.memory_space<vmem>>, vector<1x32x16xbf16>
    %1 = vector.shape_cast %0 : vector<1x32x16xbf16> to vector<32x16xbf16>
    %c0_2 = arith.constant 0 : index
    %c0_3 = arith.constant 0 : index
    %c0_4 = arith.constant 0 : index
    %2 = vector.load %arg3[%c0_2, %c0_3, %c0_4] : memref<1x8x16xbf16, #tpu.memory_space<vmem>>, vector<1x8x16xbf16>
    %3 = vector.shape_cast %2 : vector<1x8x16xbf16> to vector<8x16xbf16>
    %c0_5 = arith.constant 0 : index
    %c0_6 = arith.constant 0 : index
    %c0_7 = arith.constant 0 : index
    %4 = vector.load %arg4[%c0_5, %c0_6, %c0_7] : memref<1x8x16xbf16, #tpu.memory_space<vmem>>, vector<1x8x16xbf16>
    %5 = vector.shape_cast %4 : vector<1x8x16xbf16> to vector<8x16xbf16>
    %c0_i32 = arith.constant 0 : i32
    %6 = arith.cmpi sgt, %arg1, %c0_i32 : i32
    %cst = arith.constant 1.000000e+00 : f32
    %cst_8 = arith.constant 0.000000e+00 : f32
    %7 = arith.select %6, %cst, %cst_8 : f32
    %8 = arith.truncf %7 : f32 to bf16
    %c0_i32_9 = arith.constant 0 : i32
    %9 = arith.cmpi slt, %arg1, %c0_i32_9 : i32
    %cst_10 = arith.constant 1.000000e+00 : f32
    %cst_11 = arith.constant 0.000000e+00 : f32
    %10 = arith.select %9, %cst_10, %cst_11 : f32
    %11 = arith.truncf %10 : f32 to bf16
    %12 = vector.extract_strided_slice %3 {offsets = [7, 0], sizes = [1, 16], strides = [1, 1]} : vector<8x16xbf16> to vector<1x16xbf16>
    %13 = vector.broadcast %8 : bf16 to vector<1x16xbf16>
    %14 = arith.mulf %12, %13 : vector<1x16xbf16>
    %15 = vector.extract_strided_slice %5 {offsets = [0, 0], sizes = [1, 16], strides = [1, 1]} : vector<8x16xbf16> to vector<1x16xbf16>
    %16 = vector.broadcast %11 : bf16 to vector<1x16xbf16>
    %17 = arith.mulf %15, %16 : vector<1x16xbf16>
    %c0_12 = arith.constant 0 : index
    %c0_13 = arith.constant 0 : index
    %c0_14 = arith.constant 0 : index
    %18 = vector.load %arg5[%c0_12, %c0_13, %c0_14] : memref<3x16x16xbf16, #tpu.memory_space<vmem>>, vector<3x16x16xbf16>
    %c0_15 = arith.constant 0 : index
    %c0_16 = arith.constant 0 : index
    %19 = vector.load %arg6[%c0_15, %c0_16] : memref<1x16xf32, #tpu.memory_space<vmem>>, vector<1x16xf32>
    %20 = vector.extract_strided_slice %1 {offsets = [0, 0], sizes = [31, 16], strides = [1, 1]} : vector<32x16xbf16> to vector<31x16xbf16>
    %21 = tpu.concatenate %14, %20 in 0 : vector<1x16xbf16>, vector<31x16xbf16> -> vector<32x16xbf16>
    %22 = vector.extract_strided_slice %1 {offsets = [1, 0], sizes = [31, 16], strides = [1, 1]} : vector<32x16xbf16> to vector<31x16xbf16>
    %23 = tpu.concatenate %22, %17 in 0 : vector<31x16xbf16>, vector<1x16xbf16> -> vector<32x16xbf16>
    %24 = vector.extract_strided_slice %18 {offsets = [0, 0, 0], sizes = [1, 16, 16], strides = [1, 1, 1]} : vector<3x16x16xbf16> to vector<1x16x16xbf16>
    %25 = vector.shape_cast %24 : vector<1x16x16xbf16> to vector<16x16xbf16>
    %cst_17 = arith.constant dense<0.000000e+00> : vector<32x16xf32>
    %26 = tpu.matmul %21, %25, %cst_17 {dimension_numbers = #tpu.dot_dimension_numbers<[1], [0], [0], [1], [0, 0, 1, 1], [], []>} : vector<32x16xbf16>, vector<16x16xbf16>, vector<32x16xf32> -> vector<32x16xf32>
    %27 = vector.extract_strided_slice %18 {offsets = [1, 0, 0], sizes = [1, 16, 16], strides = [1, 1, 1]} : vector<3x16x16xbf16> to vector<1x16x16xbf16>
    %28 = vector.shape_cast %27 : vector<1x16x16xbf16> to vector<16x16xbf16>
    %cst_18 = arith.constant dense<0.000000e+00> : vector<32x16xf32>
    %29 = tpu.matmul %1, %28, %cst_18 {dimension_numbers = #tpu.dot_dimension_numbers<[1], [0], [0], [1], [0, 0, 1, 1], [], []>} : vector<32x16xbf16>, vector<16x16xbf16>, vector<32x16xf32> -> vector<32x16xf32>
    %30 = arith.addf %26, %29 : vector<32x16xf32>
    %31 = vector.extract_strided_slice %18 {offsets = [2, 0, 0], sizes = [1, 16, 16], strides = [1, 1, 1]} : vector<3x16x16xbf16> to vector<1x16x16xbf16>
    %32 = vector.shape_cast %31 : vector<1x16x16xbf16> to vector<16x16xbf16>
    %cst_19 = arith.constant dense<0.000000e+00> : vector<32x16xf32>
    %33 = tpu.matmul %23, %32, %cst_19 {dimension_numbers = #tpu.dot_dimension_numbers<[1], [0], [0], [1], [0, 0, 1, 1], [], []>} : vector<32x16xbf16>, vector<16x16xbf16>, vector<32x16xf32> -> vector<32x16xf32>
    %34 = arith.addf %30, %33 : vector<32x16xf32>
    %35 = vector.broadcast %19 : vector<1x16xf32> to vector<32x16xf32>
    %36 = arith.addf %34, %35 : vector<32x16xf32>
    %cst_20 = arith.constant 0.000000e+00 : f32
    %37 = vector.broadcast %cst_20 : f32 to vector<32x16xf32>
    %38 = arith.cmpf oge, %36, %37 : vector<32x16xf32>
    %cst_21 = arith.constant 2.000000e-01 : f32
    %39 = vector.broadcast %cst_21 : f32 to vector<32x16xf32>
    %40 = arith.mulf %39, %36 : vector<32x16xf32>
    %41 = arith.select %38, %36, %40 : vector<32x16xi1>, vector<32x16xf32>
    %42 = arith.truncf %41 : vector<32x16xf32> to vector<32x16xbf16>
    %c0_22 = arith.constant 0 : index
    %c0_23 = arith.constant 0 : index
    %c0_24 = arith.constant 0 : index
    %43 = vector.load %arg7[%c0_22, %c0_23, %c0_24] : memref<1x32x16xbf16, #tpu.memory_space<vmem>>, vector<1x32x16xbf16>
    %44 = vector.shape_cast %43 : vector<1x32x16xbf16> to vector<32x16xbf16>
    %45 = vector.shape_cast %42 : vector<32x16xbf16> to vector<1x32x16xbf16>
    tpu.vector_store %arg7[%c0_22, %c0_23, %c0_24], %45 {strides = array<i32>} : memref<1x32x16xbf16, #tpu.memory_space<vmem>>, vector<1x32x16xbf16>,
    return
  }
  func.func @transform_0(%arg0: i32, %arg1: i32) -> (i32, i32, i32) {
    %c0_i32 = arith.constant 0 : i32
    %c0_i32_0 = arith.constant 0 : i32
    return %arg0, %arg1, %c0_i32 : i32, i32, i32
  }
  func.func @transform_1(%arg0: i32, %arg1: i32) -> (i32, i32, i32) {
    %c4_i32 = arith.constant 4 : i32
    %0 = arith.muli %arg1, %c4_i32 : i32
    %c1_i32 = arith.constant 1 : i32
    %1 = arith.subi %0, %c1_i32 : i32
    %c0_i32 = arith.constant 0 : i32
    %2 = arith.maxsi %1, %c0_i32 : i32
    %c0_i32_0 = arith.constant 0 : i32
    %c0_i32_1 = arith.constant 0 : i32
    return %arg0, %2, %c0_i32_0 : i32, i32, i32
  }
  func.func @transform_2(%arg0: i32, %arg1: i32) -> (i32, i32, i32) {
    %c1_i32 = arith.constant 1 : i32
    %0 = arith.addi %arg1, %c1_i32 : i32
    %c4_i32 = arith.constant 4 : i32
    %1 = arith.muli %0, %c4_i32 : i32
    %c3_i32 = arith.constant 3 : i32
    %2 = arith.minsi %1, %c3_i32 : i32
    %c0_i32 = arith.constant 0 : i32
    %c0_i32_0 = arith.constant 0 : i32
    return %arg0, %2, %c0_i32 : i32, i32, i32
  }
  func.func @transform_3(%arg0: i32, %arg1: i32) -> (i32, i32, i32) {
    %c0_i32 = arith.constant 0 : i32
    %c0_i32_0 = arith.constant 0 : i32
    %c0_i32_1 = arith.constant 0 : i32
    %c0_i32_2 = arith.constant 0 : i32
    return %c0_i32, %c0_i32_0, %c0_i32_1 : i32, i32, i32
  }
  func.func @transform_4(%arg0: i32, %arg1: i32) -> (i32, i32) {
    %c0_i32 = arith.constant 0 : i32
    %c0_i32_0 = arith.constant 0 : i32
    %c0_i32_1 = arith.constant 0 : i32
    return %c0_i32, %c0_i32_0 : i32, i32
  }
  func.func @transform_5(%arg0: i32, %arg1: i32) -> (i32, i32, i32) {
    %c0_i32 = arith.constant 0 : i32
    %c0_i32_0 = arith.constant 0 : i32
    return %arg0, %arg1, %c0_i32 : i32, i32, i32
  }
}

module attributes {stable_mosaic.version = 11 : i64} {
  func.func @_conv1d_kernel(%arg0: i32, %arg1: i32, %arg2: memref<1x64x16xbf16, #tpu.memory_space<vmem>>, %arg3: memref<1x8x16xbf16, #tpu.memory_space<vmem>>, %arg4: memref<1x8x16xbf16, #tpu.memory_space<vmem>>, %arg5: memref<3x16x16xbf16, #tpu.memory_space<vmem>>, %arg6: memref<1x16xf32, #tpu.memory_space<vmem>>, %arg7: memref<1x64x16xbf16, #tpu.memory_space<vmem>>) attributes {dimension_semantics = [#tpu.dimension_semantics<parallel>, #tpu.dimension_semantics<parallel>], iteration_bounds = array<i64: 2, 1>, scalar_prefetch = 0 : i64, scratch_operands = 0 : i64, tpu.core_type = #tpu.core_type<tc>, window_params = [{transform_indices = @transform_0, window_bounds = array<i64: 1, 64, 16>}, {transform_indices = @transform_1, window_bounds = array<i64: 1, 8, 16>}, {transform_indices = @transform_2, window_bounds = array<i64: 1, 8, 16>}, {pipeline_mode = #tpu.pipeline_mode<synchronous>, transform_indices = @transform_3, window_bounds = array<i64: 3, 16, 16>}, {pipeline_mode = #tpu.pipeline_mode<synchronous>, transform_indices = @transform_4, window_bounds = array<i64: 1, 16>}, {transform_indices = @transform_5, window_bounds = array<i64: 1, 64, 16>}]} {
    %c0 = arith.constant 0 : index
    %c0_0 = arith.constant 0 : index
    %c0_1 = arith.constant 0 : index
    %0 = vector.load %arg2[%c0, %c0_0, %c0_1] : memref<1x64x16xbf16, #tpu.memory_space<vmem>>, vector<1x64x16xbf16>
    %1 = vector.shape_cast %0 : vector<1x64x16xbf16> to vector<64x16xbf16>
    %c0_2 = arith.constant 0 : index
    %c0_3 = arith.constant 0 : index
    %c0_4 = arith.constant 0 : index
    %2 = vector.load %arg3[%c0_2, %c0_3, %c0_4] : memref<1x8x16xbf16, #tpu.memory_space<vmem>>, vector<1x8x16xbf16>
    %3 = vector.shape_cast %2 : vector<1x8x16xbf16> to vector<8x16xbf16>
    %c0_5 = arith.constant 0 : index
    %c0_6 = arith.constant 0 : index
    %c0_7 = arith.constant 0 : index
    %4 = vector.load %arg4[%c0_5, %c0_6, %c0_7] : memref<1x8x16xbf16, #tpu.memory_space<vmem>>, vector<1x8x16xbf16>
    %5 = vector.shape_cast %4 : vector<1x8x16xbf16> to vector<8x16xbf16>
    %c0_i32 = arith.constant 0 : i32
    %6 = arith.cmpi sgt, %arg1, %c0_i32 : i32
    %cst = arith.constant 1.000000e+00 : f32
    %cst_8 = arith.constant 0.000000e+00 : f32
    %7 = arith.select %6, %cst, %cst_8 : f32
    %8 = arith.truncf %7 : f32 to bf16
    %c0_i32_9 = arith.constant 0 : i32
    %9 = arith.cmpi slt, %arg1, %c0_i32_9 : i32
    %cst_10 = arith.constant 1.000000e+00 : f32
    %cst_11 = arith.constant 0.000000e+00 : f32
    %10 = arith.select %9, %cst_10, %cst_11 : f32
    %11 = arith.truncf %10 : f32 to bf16
    %12 = vector.extract_strided_slice %3 {offsets = [7, 0], sizes = [1, 16], strides = [1, 1]} : vector<8x16xbf16> to vector<1x16xbf16>
    %13 = vector.broadcast %8 : bf16 to vector<1x16xbf16>
    %14 = arith.mulf %12, %13 : vector<1x16xbf16>
    %15 = vector.extract_strided_slice %5 {offsets = [0, 0], sizes = [1, 16], strides = [1, 1]} : vector<8x16xbf16> to vector<1x16xbf16>
    %16 = vector.broadcast %11 : bf16 to vector<1x16xbf16>
    %17 = arith.mulf %15, %16 : vector<1x16xbf16>
    %c0_12 = arith.constant 0 : index
    %c0_13 = arith.constant 0 : index
    %c0_14 = arith.constant 0 : index
    %18 = vector.load %arg5[%c0_12, %c0_13, %c0_14] : memref<3x16x16xbf16, #tpu.memory_space<vmem>>, vector<3x16x16xbf16>
    %c0_15 = arith.constant 0 : index
    %c0_16 = arith.constant 0 : index
    %19 = vector.load %arg6[%c0_15, %c0_16] : memref<1x16xf32, #tpu.memory_space<vmem>>, vector<1x16xf32>
    %20 = vector.extract_strided_slice %1 {offsets = [0, 0], sizes = [63, 16], strides = [1, 1]} : vector<64x16xbf16> to vector<63x16xbf16>
    %21 = tpu.concatenate %14, %20 in 0 : vector<1x16xbf16>, vector<63x16xbf16> -> vector<64x16xbf16>
    %22 = vector.extract_strided_slice %1 {offsets = [1, 0], sizes = [63, 16], strides = [1, 1]} : vector<64x16xbf16> to vector<63x16xbf16>
    %23 = tpu.concatenate %22, %17 in 0 : vector<63x16xbf16>, vector<1x16xbf16> -> vector<64x16xbf16>
    %24 = vector.extract_strided_slice %18 {offsets = [0, 0, 0], sizes = [1, 16, 16], strides = [1, 1, 1]} : vector<3x16x16xbf16> to vector<1x16x16xbf16>
    %25 = vector.shape_cast %24 : vector<1x16x16xbf16> to vector<16x16xbf16>
    %cst_17 = arith.constant dense<0.000000e+00> : vector<64x16xf32>
    %26 = tpu.matmul %21, %25, %cst_17 {dimension_numbers = #tpu.dot_dimension_numbers<[1], [0], [0], [1], [0, 0, 1, 1], [], []>} : vector<64x16xbf16>, vector<16x16xbf16>, vector<64x16xf32> -> vector<64x16xf32>
    %27 = vector.extract_strided_slice %18 {offsets = [1, 0, 0], sizes = [1, 16, 16], strides = [1, 1, 1]} : vector<3x16x16xbf16> to vector<1x16x16xbf16>
    %28 = vector.shape_cast %27 : vector<1x16x16xbf16> to vector<16x16xbf16>
    %cst_18 = arith.constant dense<0.000000e+00> : vector<64x16xf32>
    %29 = tpu.matmul %1, %28, %cst_18 {dimension_numbers = #tpu.dot_dimension_numbers<[1], [0], [0], [1], [0, 0, 1, 1], [], []>} : vector<64x16xbf16>, vector<16x16xbf16>, vector<64x16xf32> -> vector<64x16xf32>
    %30 = arith.addf %26, %29 : vector<64x16xf32>
    %31 = vector.extract_strided_slice %18 {offsets = [2, 0, 0], sizes = [1, 16, 16], strides = [1, 1, 1]} : vector<3x16x16xbf16> to vector<1x16x16xbf16>
    %32 = vector.shape_cast %31 : vector<1x16x16xbf16> to vector<16x16xbf16>
    %cst_19 = arith.constant dense<0.000000e+00> : vector<64x16xf32>
    %33 = tpu.matmul %23, %32, %cst_19 {dimension_numbers = #tpu.dot_dimension_numbers<[1], [0], [0], [1], [0, 0, 1, 1], [], []>} : vector<64x16xbf16>, vector<16x16xbf16>, vector<64x16xf32> -> vector<64x16xf32>
    %34 = arith.addf %30, %33 : vector<64x16xf32>
    %35 = vector.broadcast %19 : vector<1x16xf32> to vector<64x16xf32>
    %36 = arith.addf %34, %35 : vector<64x16xf32>
    %cst_20 = arith.constant 0.000000e+00 : f32
    %37 = vector.broadcast %cst_20 : f32 to vector<64x16xf32>
    %38 = arith.cmpf oge, %36, %37 : vector<64x16xf32>
    %cst_21 = arith.constant 2.000000e-01 : f32
    %39 = vector.broadcast %cst_21 : f32 to vector<64x16xf32>
    %40 = arith.mulf %39, %36 : vector<64x16xf32>
    %41 = arith.select %38, %36, %40 : vector<64x16xi1>, vector<64x16xf32>
    %42 = arith.truncf %41 : vector<64x16xf32> to vector<64x16xbf16>
    %c0_22 = arith.constant 0 : index
    %c0_23 = arith.constant 0 : index
    %c0_24 = arith.constant 0 : index
    %43 = vector.load %arg7[%c0_22, %c0_23, %c0_24] : memref<1x64x16xbf16, #tpu.memory_space<vmem>>, vector<1x64x16xbf16>
    %44 = vector.shape_cast %43 : vector<1x64x16xbf16> to vector<64x16xbf16>
    %45 = vector.shape_cast %42 : vector<64x16xbf16> to vector<1x64x16xbf16>
    tpu.vector_store %arg7[%c0_22, %c0_23, %c0_24], %45 {strides = array<i32>} : memref<1x64x16xbf16, #tpu.memory_space<vmem>>, vector<1x64x16xbf16>,
    return
  }
  func.func @transform_0(%arg0: i32, %arg1: i32) -> (i32, i32, i32) {
    %c0_i32 = arith.constant 0 : i32
    %c0_i32_0 = arith.constant 0 : i32
    return %arg0, %arg1, %c0_i32 : i32, i32, i32
  }
  func.func @transform_1(%arg0: i32, %arg1: i32) -> (i32, i32, i32) {
    %c8_i32 = arith.constant 8 : i32
    %0 = arith.muli %arg1, %c8_i32 : i32
    %c1_i32 = arith.constant 1 : i32
    %1 = arith.subi %0, %c1_i32 : i32
    %c0_i32 = arith.constant 0 : i32
    %2 = arith.maxsi %1, %c0_i32 : i32
    %c0_i32_0 = arith.constant 0 : i32
    %c0_i32_1 = arith.constant 0 : i32
    return %arg0, %2, %c0_i32_0 : i32, i32, i32
  }
  func.func @transform_2(%arg0: i32, %arg1: i32) -> (i32, i32, i32) {
    %c1_i32 = arith.constant 1 : i32
    %0 = arith.addi %arg1, %c1_i32 : i32
    %c8_i32 = arith.constant 8 : i32
    %1 = arith.muli %0, %c8_i32 : i32
    %c7_i32 = arith.constant 7 : i32
    %2 = arith.minsi %1, %c7_i32 : i32
    %c0_i32 = arith.constant 0 : i32
    %c0_i32_0 = arith.constant 0 : i32
    return %arg0, %2, %c0_i32 : i32, i32, i32
  }
  func.func @transform_3(%arg0: i32, %arg1: i32) -> (i32, i32, i32) {
    %c0_i32 = arith.constant 0 : i32
    %c0_i32_0 = arith.constant 0 : i32
    %c0_i32_1 = arith.constant 0 : i32
    %c0_i32_2 = arith.constant 0 : i32
    return %c0_i32, %c0_i32_0, %c0_i32_1 : i32, i32, i32
  }
  func.func @transform_4(%arg0: i32, %arg1: i32) -> (i32, i32) {
    %c0_i32 = arith.constant 0 : i32
    %c0_i32_0 = arith.constant 0 : i32
    %c0_i32_1 = arith.constant 0 : i32
    return %c0_i32, %c0_i32_0 : i32, i32
  }
  func.func @transform_5(%arg0: i32, %arg1: i32) -> (i32, i32, i32) {
    %c0_i32 = arith.constant 0 : i32
    %c0_i32_0 = arith.constant 0 : i32
    return %arg0, %arg1, %c0_i32 : i32, i32, i32
  }
}

module attributes {stable_mosaic.version = 11 : i64} {
  func.func @_conv1d_kernel(%arg0: i32, %arg1: i32, %arg2: memref<1x128x16xbf16, #tpu.memory_space<vmem>>, %arg3: memref<1x8x16xbf16, #tpu.memory_space<vmem>>, %arg4: memref<1x8x16xbf16, #tpu.memory_space<vmem>>, %arg5: memref<3x16x16xbf16, #tpu.memory_space<vmem>>, %arg6: memref<1x16xf32, #tpu.memory_space<vmem>>, %arg7: memref<1x128x16xbf16, #tpu.memory_space<vmem>>) attributes {dimension_semantics = [#tpu.dimension_semantics<parallel>, #tpu.dimension_semantics<parallel>], iteration_bounds = array<i64: 2, 1>, scalar_prefetch = 0 : i64, scratch_operands = 0 : i64, tpu.core_type = #tpu.core_type<tc>, window_params = [{transform_indices = @transform_0, window_bounds = array<i64: 1, 128, 16>}, {transform_indices = @transform_1, window_bounds = array<i64: 1, 8, 16>}, {transform_indices = @transform_2, window_bounds = array<i64: 1, 8, 16>}, {pipeline_mode = #tpu.pipeline_mode<synchronous>, transform_indices = @transform_3, window_bounds = array<i64: 3, 16, 16>}, {pipeline_mode = #tpu.pipeline_mode<synchronous>, transform_indices = @transform_4, window_bounds = array<i64: 1, 16>}, {transform_indices = @transform_5, window_bounds = array<i64: 1, 128, 16>}]} {
    %c0 = arith.constant 0 : index
    %c0_0 = arith.constant 0 : index
    %c0_1 = arith.constant 0 : index
    %0 = vector.load %arg2[%c0, %c0_0, %c0_1] : memref<1x128x16xbf16, #tpu.memory_space<vmem>>, vector<1x128x16xbf16>
    %1 = vector.shape_cast %0 : vector<1x128x16xbf16> to vector<128x16xbf16>
    %c0_2 = arith.constant 0 : index
    %c0_3 = arith.constant 0 : index
    %c0_4 = arith.constant 0 : index
    %2 = vector.load %arg3[%c0_2, %c0_3, %c0_4] : memref<1x8x16xbf16, #tpu.memory_space<vmem>>, vector<1x8x16xbf16>
    %3 = vector.shape_cast %2 : vector<1x8x16xbf16> to vector<8x16xbf16>
    %c0_5 = arith.constant 0 : index
    %c0_6 = arith.constant 0 : index
    %c0_7 = arith.constant 0 : index
    %4 = vector.load %arg4[%c0_5, %c0_6, %c0_7] : memref<1x8x16xbf16, #tpu.memory_space<vmem>>, vector<1x8x16xbf16>
    %5 = vector.shape_cast %4 : vector<1x8x16xbf16> to vector<8x16xbf16>
    %c0_i32 = arith.constant 0 : i32
    %6 = arith.cmpi sgt, %arg1, %c0_i32 : i32
    %cst = arith.constant 1.000000e+00 : f32
    %cst_8 = arith.constant 0.000000e+00 : f32
    %7 = arith.select %6, %cst, %cst_8 : f32
    %8 = arith.truncf %7 : f32 to bf16
    %c0_i32_9 = arith.constant 0 : i32
    %9 = arith.cmpi slt, %arg1, %c0_i32_9 : i32
    %cst_10 = arith.constant 1.000000e+00 : f32
    %cst_11 = arith.constant 0.000000e+00 : f32
    %10 = arith.select %9, %cst_10, %cst_11 : f32
    %11 = arith.truncf %10 : f32 to bf16
    %12 = vector.extract_strided_slice %3 {offsets = [7, 0], sizes = [1, 16], strides = [1, 1]} : vector<8x16xbf16> to vector<1x16xbf16>
    %13 = vector.broadcast %8 : bf16 to vector<1x16xbf16>
    %14 = arith.mulf %12, %13 : vector<1x16xbf16>
    %15 = vector.extract_strided_slice %5 {offsets = [0, 0], sizes = [1, 16], strides = [1, 1]} : vector<8x16xbf16> to vector<1x16xbf16>
    %16 = vector.broadcast %11 : bf16 to vector<1x16xbf16>
    %17 = arith.mulf %15, %16 : vector<1x16xbf16>
    %c0_12 = arith.constant 0 : index
    %c0_13 = arith.constant 0 : index
    %c0_14 = arith.constant 0 : index
    %18 = vector.load %arg5[%c0_12, %c0_13, %c0_14] : memref<3x16x16xbf16, #tpu.memory_space<vmem>>, vector<3x16x16xbf16>
    %c0_15 = arith.constant 0 : index
    %c0_16 = arith.constant 0 : index
    %19 = vector.load %arg6[%c0_15, %c0_16] : memref<1x16xf32, #tpu.memory_space<vmem>>, vector<1x16xf32>
    %20 = vector.extract_strided_slice %1 {offsets = [0, 0], sizes = [127, 16], strides = [1, 1]} : vector<128x16xbf16> to vector<127x16xbf16>
    %21 = tpu.concatenate %14, %20 in 0 : vector<1x16xbf16>, vector<127x16xbf16> -> vector<128x16xbf16>
    %22 = vector.extract_strided_slice %1 {offsets = [1, 0], sizes = [127, 16], strides = [1, 1]} : vector<128x16xbf16> to vector<127x16xbf16>
    %23 = tpu.concatenate %22, %17 in 0 : vector<127x16xbf16>, vector<1x16xbf16> -> vector<128x16xbf16>
    %24 = vector.extract_strided_slice %18 {offsets = [0, 0, 0], sizes = [1, 16, 16], strides = [1, 1, 1]} : vector<3x16x16xbf16> to vector<1x16x16xbf16>
    %25 = vector.shape_cast %24 : vector<1x16x16xbf16> to vector<16x16xbf16>
    %cst_17 = arith.constant dense<0.000000e+00> : vector<128x16xf32>
    %26 = tpu.matmul %21, %25, %cst_17 {dimension_numbers = #tpu.dot_dimension_numbers<[1], [0], [0], [1], [0, 0, 1, 1], [], []>} : vector<128x16xbf16>, vector<16x16xbf16>, vector<128x16xf32> -> vector<128x16xf32>
    %27 = vector.extract_strided_slice %18 {offsets = [1, 0, 0], sizes = [1, 16, 16], strides = [1, 1, 1]} : vector<3x16x16xbf16> to vector<1x16x16xbf16>
    %28 = vector.shape_cast %27 : vector<1x16x16xbf16> to vector<16x16xbf16>
    %cst_18 = arith.constant dense<0.000000e+00> : vector<128x16xf32>
    %29 = tpu.matmul %1, %28, %cst_18 {dimension_numbers = #tpu.dot_dimension_numbers<[1], [0], [0], [1], [0, 0, 1, 1], [], []>} : vector<128x16xbf16>, vector<16x16xbf16>, vector<128x16xf32> -> vector<128x16xf32>
    %30 = arith.addf %26, %29 : vector<128x16xf32>
    %31 = vector.extract_strided_slice %18 {offsets = [2, 0, 0], sizes = [1, 16, 16], strides = [1, 1, 1]} : vector<3x16x16xbf16> to vector<1x16x16xbf16>
    %32 = vector.shape_cast %31 : vector<1x16x16xbf16> to vector<16x16xbf16>
    %cst_19 = arith.constant dense<0.000000e+00> : vector<128x16xf32>
    %33 = tpu.matmul %23, %32, %cst_19 {dimension_numbers = #tpu.dot_dimension_numbers<[1], [0], [0], [1], [0, 0, 1, 1], [], []>} : vector<128x16xbf16>, vector<16x16xbf16>, vector<128x16xf32> -> vector<128x16xf32>
    %34 = arith.addf %30, %33 : vector<128x16xf32>
    %35 = vector.broadcast %19 : vector<1x16xf32> to vector<128x16xf32>
    %36 = arith.addf %34, %35 : vector<128x16xf32>
    %cst_20 = arith.constant 0.000000e+00 : f32
    %37 = vector.broadcast %cst_20 : f32 to vector<128x16xf32>
    %38 = arith.cmpf oge, %36, %37 : vector<128x16xf32>
    %cst_21 = arith.constant 2.000000e-01 : f32
    %39 = vector.broadcast %cst_21 : f32 to vector<128x16xf32>
    %40 = arith.mulf %39, %36 : vector<128x16xf32>
    %41 = arith.select %38, %36, %40 : vector<128x16xi1>, vector<128x16xf32>
    %42 = arith.truncf %41 : vector<128x16xf32> to vector<128x16xbf16>
    %c0_22 = arith.constant 0 : index
    %c0_23 = arith.constant 0 : index
    %c0_24 = arith.constant 0 : index
    %43 = vector.load %arg7[%c0_22, %c0_23, %c0_24] : memref<1x128x16xbf16, #tpu.memory_space<vmem>>, vector<1x128x16xbf16>
    %44 = vector.shape_cast %43 : vector<1x128x16xbf16> to vector<128x16xbf16>
    %45 = vector.shape_cast %42 : vector<128x16xbf16> to vector<1x128x16xbf16>
    tpu.vector_store %arg7[%c0_22, %c0_23, %c0_24], %45 {strides = array<i32>} : memref<1x128x16xbf16, #tpu.memory_space<vmem>>, vector<1x128x16xbf16>,
    return
  }
  func.func @transform_0(%arg0: i32, %arg1: i32) -> (i32, i32, i32) {
    %c0_i32 = arith.constant 0 : i32
    %c0_i32_0 = arith.constant 0 : i32
    return %arg0, %arg1, %c0_i32 : i32, i32, i32
  }
  func.func @transform_1(%arg0: i32, %arg1: i32) -> (i32, i32, i32) {
    %c16_i32 = arith.constant 16 : i32
    %0 = arith.muli %arg1, %c16_i32 : i32
    %c1_i32 = arith.constant 1 : i32
    %1 = arith.subi %0, %c1_i32 : i32
    %c0_i32 = arith.constant 0 : i32
    %2 = arith.maxsi %1, %c0_i32 : i32
    %c0_i32_0 = arith.constant 0 : i32
    %c0_i32_1 = arith.constant 0 : i32
    return %arg0, %2, %c0_i32_0 : i32, i32, i32
  }
  func.func @transform_2(%arg0: i32, %arg1: i32) -> (i32, i32, i32) {
    %c1_i32 = arith.constant 1 : i32
    %0 = arith.addi %arg1, %c1_i32 : i32
    %c16_i32 = arith.constant 16 : i32
    %1 = arith.muli %0, %c16_i32 : i32
    %c15_i32 = arith.constant 15 : i32
    %2 = arith.minsi %1, %c15_i32 : i32
    %c0_i32 = arith.constant 0 : i32
    %c0_i32_0 = arith.constant 0 : i32
    return %arg0, %2, %c0_i32 : i32, i32, i32
  }
  func.func @transform_3(%arg0: i32, %arg1: i32) -> (i32, i32, i32) {
    %c0_i32 = arith.constant 0 : i32
    %c0_i32_0 = arith.constant 0 : i32
    %c0_i32_1 = arith.constant 0 : i32
    %c0_i32_2 = arith.constant 0 : i32
    return %c0_i32, %c0_i32_0, %c0_i32_1 : i32, i32, i32
  }
  func.func @transform_4(%arg0: i32, %arg1: i32) -> (i32, i32) {
    %c0_i32 = arith.constant 0 : i32
    %c0_i32_0 = arith.constant 0 : i32
    %c0_i32_1 = arith.constant 0 : i32
    return %c0_i32, %c0_i32_0 : i32, i32
  }
  func.func @transform_5(%arg0: i32, %arg1: i32) -> (i32, i32, i32) {
    %c0_i32 = arith.constant 0 : i32
    %c0_i32_0 = arith.constant 0 : i32
    return %arg0, %arg1, %c0_i32 : i32, i32, i32
  }
}

module attributes {stable_mosaic.version = 11 : i64} {
  func.func @_conv1d_kernel(%arg0: i32, %arg1: i32, %arg2: memref<1x256x16xbf16, #tpu.memory_space<vmem>>, %arg3: memref<1x8x16xbf16, #tpu.memory_space<vmem>>, %arg4: memref<1x8x16xbf16, #tpu.memory_space<vmem>>, %arg5: memref<3x16x16xbf16, #tpu.memory_space<vmem>>, %arg6: memref<1x16xf32, #tpu.memory_space<vmem>>, %arg7: memref<1x256x16xbf16, #tpu.memory_space<vmem>>) attributes {dimension_semantics = [#tpu.dimension_semantics<parallel>, #tpu.dimension_semantics<parallel>], iteration_bounds = array<i64: 2, 1>, scalar_prefetch = 0 : i64, scratch_operands = 0 : i64, tpu.core_type = #tpu.core_type<tc>, window_params = [{transform_indices = @transform_0, window_bounds = array<i64: 1, 256, 16>}, {transform_indices = @transform_1, window_bounds = array<i64: 1, 8, 16>}, {transform_indices = @transform_2, window_bounds = array<i64: 1, 8, 16>}, {pipeline_mode = #tpu.pipeline_mode<synchronous>, transform_indices = @transform_3, window_bounds = array<i64: 3, 16, 16>}, {pipeline_mode = #tpu.pipeline_mode<synchronous>, transform_indices = @transform_4, window_bounds = array<i64: 1, 16>}, {transform_indices = @transform_5, window_bounds = array<i64: 1, 256, 16>}]} {
    %c0 = arith.constant 0 : index
    %c0_0 = arith.constant 0 : index
    %c0_1 = arith.constant 0 : index
    %0 = vector.load %arg2[%c0, %c0_0, %c0_1] : memref<1x256x16xbf16, #tpu.memory_space<vmem>>, vector<1x256x16xbf16>
    %1 = vector.shape_cast %0 : vector<1x256x16xbf16> to vector<256x16xbf16>
    %c0_2 = arith.constant 0 : index
    %c0_3 = arith.constant 0 : index
    %c0_4 = arith.constant 0 : index
    %2 = vector.load %arg3[%c0_2, %c0_3, %c0_4] : memref<1x8x16xbf16, #tpu.memory_space<vmem>>, vector<1x8x16xbf16>
    %3 = vector.shape_cast %2 : vector<1x8x16xbf16> to vector<8x16xbf16>
    %c0_5 = arith.constant 0 : index
    %c0_6 = arith.constant 0 : index
    %c0_7 = arith.constant 0 : index
    %4 = vector.load %arg4[%c0_5, %c0_6, %c0_7] : memref<1x8x16xbf16, #tpu.memory_space<vmem>>, vector<1x8x16xbf16>
    %5 = vector.shape_cast %4 : vector<1x8x16xbf16> to vector<8x16xbf16>
    %c0_i32 = arith.constant 0 : i32
    %6 = arith.cmpi sgt, %arg1, %c0_i32 : i32
    %cst = arith.constant 1.000000e+00 : f32
    %cst_8 = arith.constant 0.000000e+00 : f32
    %7 = arith.select %6, %cst, %cst_8 : f32
    %8 = arith.truncf %7 : f32 to bf16
    %c0_i32_9 = arith.constant 0 : i32
    %9 = arith.cmpi slt, %arg1, %c0_i32_9 : i32
    %cst_10 = arith.constant 1.000000e+00 : f32
    %cst_11 = arith.constant 0.000000e+00 : f32
    %10 = arith.select %9, %cst_10, %cst_11 : f32
    %11 = arith.truncf %10 : f32 to bf16
    %12 = vector.extract_strided_slice %3 {offsets = [7, 0], sizes = [1, 16], strides = [1, 1]} : vector<8x16xbf16> to vector<1x16xbf16>
    %13 = vector.broadcast %8 : bf16 to vector<1x16xbf16>
    %14 = arith.mulf %12, %13 : vector<1x16xbf16>
    %15 = vector.extract_strided_slice %5 {offsets = [0, 0], sizes = [1, 16], strides = [1, 1]} : vector<8x16xbf16> to vector<1x16xbf16>
    %16 = vector.broadcast %11 : bf16 to vector<1x16xbf16>
    %17 = arith.mulf %15, %16 : vector<1x16xbf16>
    %c0_12 = arith.constant 0 : index
    %c0_13 = arith.constant 0 : index
    %c0_14 = arith.constant 0 : index
    %18 = vector.load %arg5[%c0_12, %c0_13, %c0_14] : memref<3x16x16xbf16, #tpu.memory_space<vmem>>, vector<3x16x16xbf16>
    %c0_15 = arith.constant 0 : index
    %c0_16 = arith.constant 0 : index
    %19 = vector.load %arg6[%c0_15, %c0_16] : memref<1x16xf32, #tpu.memory_space<vmem>>, vector<1x16xf32>
    %20 = vector.extract_strided_slice %1 {offsets = [0, 0], sizes = [255, 16], strides = [1, 1]} : vector<256x16xbf16> to vector<255x16xbf16>
    %21 = tpu.concatenate %14, %20 in 0 : vector<1x16xbf16>, vector<255x16xbf16> -> vector<256x16xbf16>
    %22 = vector.extract_strided_slice %1 {offsets = [1, 0], sizes = [255, 16], strides = [1, 1]} : vector<256x16xbf16> to vector<255x16xbf16>
    %23 = tpu.concatenate %22, %17 in 0 : vector<255x16xbf16>, vector<1x16xbf16> -> vector<256x16xbf16>
    %24 = vector.extract_strided_slice %18 {offsets = [0, 0, 0], sizes = [1, 16, 16], strides = [1, 1, 1]} : vector<3x16x16xbf16> to vector<1x16x16xbf16>
    %25 = vector.shape_cast %24 : vector<1x16x16xbf16> to vector<16x16xbf16>
    %cst_17 = arith.constant dense<0.000000e+00> : vector<256x16xf32>
    %26 = tpu.matmul %21, %25, %cst_17 {dimension_numbers = #tpu.dot_dimension_numbers<[1], [0], [0], [1], [0, 0, 1, 1], [], []>} : vector<256x16xbf16>, vector<16x16xbf16>, vector<256x16xf32> -> vector<256x16xf32>
    %27 = vector.extract_strided_slice %18 {offsets = [1, 0, 0], sizes = [1, 16, 16], strides = [1, 1, 1]} : vector<3x16x16xbf16> to vector<1x16x16xbf16>
    %28 = vector.shape_cast %27 : vector<1x16x16xbf16> to vector<16x16xbf16>
    %cst_18 = arith.constant dense<0.000000e+00> : vector<256x16xf32>
    %29 = tpu.matmul %1, %28, %cst_18 {dimension_numbers = #tpu.dot_dimension_numbers<[1], [0], [0], [1], [0, 0, 1, 1], [], []>} : vector<256x16xbf16>, vector<16x16xbf16>, vector<256x16xf32> -> vector<256x16xf32>
    %30 = arith.addf %26, %29 : vector<256x16xf32>
    %31 = vector.extract_strided_slice %18 {offsets = [2, 0, 0], sizes = [1, 16, 16], strides = [1, 1, 1]} : vector<3x16x16xbf16> to vector<1x16x16xbf16>
    %32 = vector.shape_cast %31 : vector<1x16x16xbf16> to vector<16x16xbf16>
    %cst_19 = arith.constant dense<0.000000e+00> : vector<256x16xf32>
    %33 = tpu.matmul %23, %32, %cst_19 {dimension_numbers = #tpu.dot_dimension_numbers<[1], [0], [0], [1], [0, 0, 1, 1], [], []>} : vector<256x16xbf16>, vector<16x16xbf16>, vector<256x16xf32> -> vector<256x16xf32>
    %34 = arith.addf %30, %33 : vector<256x16xf32>
    %35 = vector.broadcast %19 : vector<1x16xf32> to vector<256x16xf32>
    %36 = arith.addf %34, %35 : vector<256x16xf32>
    %cst_20 = arith.constant 0.000000e+00 : f32
    %37 = vector.broadcast %cst_20 : f32 to vector<256x16xf32>
    %38 = arith.cmpf oge, %36, %37 : vector<256x16xf32>
    %cst_21 = arith.constant 2.000000e-01 : f32
    %39 = vector.broadcast %cst_21 : f32 to vector<256x16xf32>
    %40 = arith.mulf %39, %36 : vector<256x16xf32>
    %41 = arith.select %38, %36, %40 : vector<256x16xi1>, vector<256x16xf32>
    %42 = arith.truncf %41 : vector<256x16xf32> to vector<256x16xbf16>
    %c0_22 = arith.constant 0 : index
    %c0_23 = arith.constant 0 : index
    %c0_24 = arith.constant 0 : index
    %43 = vector.load %arg7[%c0_22, %c0_23, %c0_24] : memref<1x256x16xbf16, #tpu.memory_space<vmem>>, vector<1x256x16xbf16>
    %44 = vector.shape_cast %43 : vector<1x256x16xbf16> to vector<256x16xbf16>
    %45 = vector.shape_cast %42 : vector<256x16xbf16> to vector<1x256x16xbf16>
    tpu.vector_store %arg7[%c0_22, %c0_23, %c0_24], %45 {strides = array<i32>} : memref<1x256x16xbf16, #tpu.memory_space<vmem>>, vector<1x256x16xbf16>,
    return
  }
  func.func @transform_0(%arg0: i32, %arg1: i32) -> (i32, i32, i32) {
    %c0_i32 = arith.constant 0 : i32
    %c0_i32_0 = arith.constant 0 : i32
    return %arg0, %arg1, %c0_i32 : i32, i32, i32
  }
  func.func @transform_1(%arg0: i32, %arg1: i32) -> (i32, i32, i32) {
    %c32_i32 = arith.constant 32 : i32
    %0 = arith.muli %arg1, %c32_i32 : i32
    %c1_i32 = arith.constant 1 : i32
    %1 = arith.subi %0, %c1_i32 : i32
    %c0_i32 = arith.constant 0 : i32
    %2 = arith.maxsi %1, %c0_i32 : i32
    %c0_i32_0 = arith.constant 0 : i32
    %c0_i32_1 = arith.constant 0 : i32
    return %arg0, %2, %c0_i32_0 : i32, i32, i32
  }
  func.func @transform_2(%arg0: i32, %arg1: i32) -> (i32, i32, i32) {
    %c1_i32 = arith.constant 1 : i32
    %0 = arith.addi %arg1, %c1_i32 : i32
    %c32_i32 = arith.constant 32 : i32
    %1 = arith.muli %0, %c32_i32 : i32
    %c31_i32 = arith.constant 31 : i32
    %2 = arith.minsi %1, %c31_i32 : i32
    %c0_i32 = arith.constant 0 : i32
    %c0_i32_0 = arith.constant 0 : i32
    return %arg0, %2, %c0_i32 : i32, i32, i32
  }
  func.func @transform_3(%arg0: i32, %arg1: i32) -> (i32, i32, i32) {
    %c0_i32 = arith.constant 0 : i32
    %c0_i32_0 = arith.constant 0 : i32
    %c0_i32_1 = arith.constant 0 : i32
    %c0_i32_2 = arith.constant 0 : i32
    return %c0_i32, %c0_i32_0, %c0_i32_1 : i32, i32, i32
  }
  func.func @transform_4(%arg0: i32, %arg1: i32) -> (i32, i32) {
    %c0_i32 = arith.constant 0 : i32
    %c0_i32_0 = arith.constant 0 : i32
    %c0_i32_1 = arith.constant 0 : i32
    return %c0_i32, %c0_i32_0 : i32, i32
  }
  func.func @transform_5(%arg0: i32, %arg1: i32) -> (i32, i32, i32) {
    %c0_i32 = arith.constant 0 : i32
    %c0_i32_0 = arith.constant 0 : i32
    return %arg0, %arg1, %c0_i32 : i32, i32, i32
  }
}

module attributes {stable_mosaic.version = 11 : i64} {
  func.func @_conv1d_kernel(%arg0: i32, %arg1: i32, %arg2: memref<1x256x16xbf16, #tpu.memory_space<vmem>>, %arg3: memref<1x8x16xbf16, #tpu.memory_space<vmem>>, %arg4: memref<1x8x16xbf16, #tpu.memory_space<vmem>>, %arg5: memref<3x16x16xbf16, #tpu.memory_space<vmem>>, %arg6: memref<1x16xf32, #tpu.memory_space<vmem>>, %arg7: memref<1x256x16xbf16, #tpu.memory_space<vmem>>) attributes {dimension_semantics = [#tpu.dimension_semantics<parallel>, #tpu.dimension_semantics<parallel>], iteration_bounds = array<i64: 2, 1>, scalar_prefetch = 0 : i64, scratch_operands = 0 : i64, tpu.core_type = #tpu.core_type<tc>, window_params = [{transform_indices = @transform_0, window_bounds = array<i64: 1, 256, 16>}, {transform_indices = @transform_1, window_bounds = array<i64: 1, 8, 16>}, {transform_indices = @transform_2, window_bounds = array<i64: 1, 8, 16>}, {pipeline_mode = #tpu.pipeline_mode<synchronous>, transform_indices = @transform_3, window_bounds = array<i64: 3, 16, 16>}, {pipeline_mode = #tpu.pipeline_mode<synchronous>, transform_indices = @transform_4, window_bounds = array<i64: 1, 16>}, {transform_indices = @transform_5, window_bounds = array<i64: 1, 256, 16>}]} {
    %c0 = arith.constant 0 : index
    %c0_0 = arith.constant 0 : index
    %c0_1 = arith.constant 0 : index
    %0 = vector.load %arg2[%c0, %c0_0, %c0_1] : memref<1x256x16xbf16, #tpu.memory_space<vmem>>, vector<1x256x16xbf16>
    %1 = vector.shape_cast %0 : vector<1x256x16xbf16> to vector<256x16xbf16>
    %c0_2 = arith.constant 0 : index
    %c0_3 = arith.constant 0 : index
    %c0_4 = arith.constant 0 : index
    %2 = vector.load %arg3[%c0_2, %c0_3, %c0_4] : memref<1x8x16xbf16, #tpu.memory_space<vmem>>, vector<1x8x16xbf16>
    %3 = vector.shape_cast %2 : vector<1x8x16xbf16> to vector<8x16xbf16>
    %c0_5 = arith.constant 0 : index
    %c0_6 = arith.constant 0 : index
    %c0_7 = arith.constant 0 : index
    %4 = vector.load %arg4[%c0_5, %c0_6, %c0_7] : memref<1x8x16xbf16, #tpu.memory_space<vmem>>, vector<1x8x16xbf16>
    %5 = vector.shape_cast %4 : vector<1x8x16xbf16> to vector<8x16xbf16>
    %c0_i32 = arith.constant 0 : i32
    %6 = arith.cmpi sgt, %arg1, %c0_i32 : i32
    %cst = arith.constant 1.000000e+00 : f32
    %cst_8 = arith.constant 0.000000e+00 : f32
    %7 = arith.select %6, %cst, %cst_8 : f32
    %8 = arith.truncf %7 : f32 to bf16
    %c0_i32_9 = arith.constant 0 : i32
    %9 = arith.cmpi slt, %arg1, %c0_i32_9 : i32
    %cst_10 = arith.constant 1.000000e+00 : f32
    %cst_11 = arith.constant 0.000000e+00 : f32
    %10 = arith.select %9, %cst_10, %cst_11 : f32
    %11 = arith.truncf %10 : f32 to bf16
    %12 = vector.extract_strided_slice %3 {offsets = [7, 0], sizes = [1, 16], strides = [1, 1]} : vector<8x16xbf16> to vector<1x16xbf16>
    %13 = vector.broadcast %8 : bf16 to vector<1x16xbf16>
    %14 = arith.mulf %12, %13 : vector<1x16xbf16>
    %15 = vector.extract_strided_slice %5 {offsets = [0, 0], sizes = [1, 16], strides = [1, 1]} : vector<8x16xbf16> to vector<1x16xbf16>
    %16 = vector.broadcast %11 : bf16 to vector<1x16xbf16>
    %17 = arith.mulf %15, %16 : vector<1x16xbf16>
    %c0_12 = arith.constant 0 : index
    %c0_13 = arith.constant 0 : index
    %c0_14 = arith.constant 0 : index
    %18 = vector.load %arg5[%c0_12, %c0_13, %c0_14] : memref<3x16x16xbf16, #tpu.memory_space<vmem>>, vector<3x16x16xbf16>
    %c0_15 = arith.constant 0 : index
    %c0_16 = arith.constant 0 : index
    %19 = vector.load %arg6[%c0_15, %c0_16] : memref<1x16xf32, #tpu.memory_space<vmem>>, vector<1x16xf32>
    %20 = vector.extract_strided_slice %1 {offsets = [0, 0], sizes = [255, 16], strides = [1, 1]} : vector<256x16xbf16> to vector<255x16xbf16>
    %21 = tpu.concatenate %14, %20 in 0 : vector<1x16xbf16>, vector<255x16xbf16> -> vector<256x16xbf16>
    %22 = vector.extract_strided_slice %1 {offsets = [1, 0], sizes = [255, 16], strides = [1, 1]} : vector<256x16xbf16> to vector<255x16xbf16>
    %23 = tpu.concatenate %22, %17 in 0 : vector<255x16xbf16>, vector<1x16xbf16> -> vector<256x16xbf16>
    %24 = vector.extract_strided_slice %18 {offsets = [0, 0, 0], sizes = [1, 16, 16], strides = [1, 1, 1]} : vector<3x16x16xbf16> to vector<1x16x16xbf16>
    %25 = vector.shape_cast %24 : vector<1x16x16xbf16> to vector<16x16xbf16>
    %cst_17 = arith.constant dense<0.000000e+00> : vector<256x16xf32>
    %26 = tpu.matmul %21, %25, %cst_17 {dimension_numbers = #tpu.dot_dimension_numbers<[1], [0], [0], [1], [0, 0, 1, 1], [], []>} : vector<256x16xbf16>, vector<16x16xbf16>, vector<256x16xf32> -> vector<256x16xf32>
    %27 = vector.extract_strided_slice %18 {offsets = [1, 0, 0], sizes = [1, 16, 16], strides = [1, 1, 1]} : vector<3x16x16xbf16> to vector<1x16x16xbf16>
    %28 = vector.shape_cast %27 : vector<1x16x16xbf16> to vector<16x16xbf16>
    %cst_18 = arith.constant dense<0.000000e+00> : vector<256x16xf32>
    %29 = tpu.matmul %1, %28, %cst_18 {dimension_numbers = #tpu.dot_dimension_numbers<[1], [0], [0], [1], [0, 0, 1, 1], [], []>} : vector<256x16xbf16>, vector<16x16xbf16>, vector<256x16xf32> -> vector<256x16xf32>
    %30 = arith.addf %26, %29 : vector<256x16xf32>
    %31 = vector.extract_strided_slice %18 {offsets = [2, 0, 0], sizes = [1, 16, 16], strides = [1, 1, 1]} : vector<3x16x16xbf16> to vector<1x16x16xbf16>
    %32 = vector.shape_cast %31 : vector<1x16x16xbf16> to vector<16x16xbf16>
    %cst_19 = arith.constant dense<0.000000e+00> : vector<256x16xf32>
    %33 = tpu.matmul %23, %32, %cst_19 {dimension_numbers = #tpu.dot_dimension_numbers<[1], [0], [0], [1], [0, 0, 1, 1], [], []>} : vector<256x16xbf16>, vector<16x16xbf16>, vector<256x16xf32> -> vector<256x16xf32>
    %34 = arith.addf %30, %33 : vector<256x16xf32>
    %35 = vector.broadcast %19 : vector<1x16xf32> to vector<256x16xf32>
    %36 = arith.addf %34, %35 : vector<256x16xf32>
    %37 = arith.truncf %36 : vector<256x16xf32> to vector<256x16xbf16>
    %c0_20 = arith.constant 0 : index
    %c0_21 = arith.constant 0 : index
    %c0_22 = arith.constant 0 : index
    %38 = vector.load %arg7[%c0_20, %c0_21, %c0_22] : memref<1x256x16xbf16, #tpu.memory_space<vmem>>, vector<1x256x16xbf16>
    %39 = vector.shape_cast %38 : vector<1x256x16xbf16> to vector<256x16xbf16>
    %40 = vector.shape_cast %37 : vector<256x16xbf16> to vector<1x256x16xbf16>
    tpu.vector_store %arg7[%c0_20, %c0_21, %c0_22], %40 {strides = array<i32>} : memref<1x256x16xbf16, #tpu.memory_space<vmem>>, vector<1x256x16xbf16>,
    return
  }
  func.func @transform_0(%arg0: i32, %arg1: i32) -> (i32, i32, i32) {
    %c0_i32 = arith.constant 0 : i32
    %c0_i32_0 = arith.constant 0 : i32
    return %arg0, %arg1, %c0_i32 : i32, i32, i32
  }
  func.func @transform_1(%arg0: i32, %arg1: i32) -> (i32, i32, i32) {
    %c32_i32 = arith.constant 32 : i32
    %0 = arith.muli %arg1, %c32_i32 : i32
    %c1_i32 = arith.constant 1 : i32
    %1 = arith.subi %0, %c1_i32 : i32
    %c0_i32 = arith.constant 0 : i32
    %2 = arith.maxsi %1, %c0_i32 : i32
    %c0_i32_0 = arith.constant 0 : i32
    %c0_i32_1 = arith.constant 0 : i32
    return %arg0, %2, %c0_i32_0 : i32, i32, i32
  }
  func.func @transform_2(%arg0: i32, %arg1: i32) -> (i32, i32, i32) {
    %c1_i32 = arith.constant 1 : i32
    %0 = arith.addi %arg1, %c1_i32 : i32
    %c32_i32 = arith.constant 32 : i32
    %1 = arith.muli %0, %c32_i32 : i32
    %c31_i32 = arith.constant 31 : i32
    %2 = arith.minsi %1, %c31_i32 : i32
    %c0_i32 = arith.constant 0 : i32
    %c0_i32_0 = arith.constant 0 : i32
    return %arg0, %2, %c0_i32 : i32, i32, i32
  }
  func.func @transform_3(%arg0: i32, %arg1: i32) -> (i32, i32, i32) {
    %c0_i32 = arith.constant 0 : i32
    %c0_i32_0 = arith.constant 0 : i32
    %c0_i32_1 = arith.constant 0 : i32
    %c0_i32_2 = arith.constant 0 : i32
    return %c0_i32, %c0_i32_0, %c0_i32_1 : i32, i32, i32
  }
  func.func @transform_4(%arg0: i32, %arg1: i32) -> (i32, i32) {
    %c0_i32 = arith.constant 0 : i32
    %c0_i32_0 = arith.constant 0 : i32
    %c0_i32_1 = arith.constant 0 : i32
    return %c0_i32, %c0_i32_0 : i32, i32
  }
  func.func @transform_5(%arg0: i32, %arg1: i32) -> (i32, i32, i32) {
    %c0_i32 = arith.constant 0 : i32
    %c0_i32_0 = arith.constant 0 : i32
    return %arg0, %arg1, %c0_i32 : i32, i32, i32
  }
}

module attributes {stable_mosaic.version = 11 : i64} {
  func.func @_pool_kernel(%arg0: i32, %arg1: memref<841x256xf32, #tpu.memory_space<vmem>>, %arg2: memref<1x256x16xbf16, #tpu.memory_space<vmem>>, %arg3: memref<1x841x16xf32, #tpu.memory_space<vmem>>) attributes {dimension_semantics = [#tpu.dimension_semantics<parallel>], iteration_bounds = array<i64: 2>, scalar_prefetch = 0 : i64, scratch_operands = 0 : i64, tpu.core_type = #tpu.core_type<tc>, window_params = [{pipeline_mode = #tpu.pipeline_mode<synchronous>, transform_indices = @transform_0, window_bounds = array<i64: 841, 256>}, {transform_indices = @transform_1, window_bounds = array<i64: 1, 256, 16>}, {transform_indices = @transform_2, window_bounds = array<i64: 1, 841, 16>}]} {
    %c0 = arith.constant 0 : index
    %c0_0 = arith.constant 0 : index
    %c0_1 = arith.constant 0 : index
    %0 = vector.load %arg2[%c0, %c0_0, %c0_1] : memref<1x256x16xbf16, #tpu.memory_space<vmem>>, vector<1x256x16xbf16>
    %1 = vector.shape_cast %0 : vector<1x256x16xbf16> to vector<256x16xbf16>
    %2 = arith.extf %1 : vector<256x16xbf16> to vector<256x16xf32>
    %c0_2 = arith.constant 0 : index
    %c0_3 = arith.constant 0 : index
    %3 = vector.load %arg1[%c0_2, %c0_3] : memref<841x256xf32, #tpu.memory_space<vmem>>, vector<841x256xf32>
    %cst = arith.constant dense<0.000000e+00> : vector<841x16xf32>
    %4 = tpu.matmul %3, %2, %cst {dimension_numbers = #tpu.dot_dimension_numbers<[1], [0], [0], [1], [0, 0, 1, 1], [], []>} : vector<841x256xf32>, vector<256x16xf32>, vector<841x16xf32> -> vector<841x16xf32>
    %c0_4 = arith.constant 0 : index
    %c0_5 = arith.constant 0 : index
    %c0_6 = arith.constant 0 : index
    %5 = vector.load %arg3[%c0_4, %c0_5, %c0_6] : memref<1x841x16xf32, #tpu.memory_space<vmem>>, vector<1x841x16xf32>
    %6 = vector.shape_cast %5 : vector<1x841x16xf32> to vector<841x16xf32>
    %7 = vector.shape_cast %4 : vector<841x16xf32> to vector<1x841x16xf32>
    tpu.vector_store %arg3[%c0_4, %c0_5, %c0_6], %7 {strides = array<i32>} : memref<1x841x16xf32, #tpu.memory_space<vmem>>, vector<1x841x16xf32>,
    return
  }
  func.func @transform_0(%arg0: i32) -> (i32, i32) {
    %c0_i32 = arith.constant 0 : i32
    %c0_i32_0 = arith.constant 0 : i32
    %c0_i32_1 = arith.constant 0 : i32
    return %c0_i32, %c0_i32_0 : i32, i32
  }
  func.func @transform_1(%arg0: i32) -> (i32, i32, i32) {
    %c0_i32 = arith.constant 0 : i32
    %c0_i32_0 = arith.constant 0 : i32
    %c0_i32_1 = arith.constant 0 : i32
    return %arg0, %c0_i32, %c0_i32_0 : i32, i32, i32
  }
  func.func @transform_2(%arg0: i32) -> (i32, i32, i32) {
    %c0_i32 = arith.constant 0 : i32
    %c0_i32_0 = arith.constant 0 : i32
    %c0_i32_1 = arith.constant 0 : i32
    return %arg0, %c0_i32, %c0_i32_0 : i32, i32, i32
  }
}

</mosaic_0001>

<llo_original>
// kernel: rrdbnet_forward.12
$region0: #{rrdbnet_forward.12}
  #allocation0 [shape = 'u32[]', space=smem, size = 0x4, offset = 0x4, fixed_abs, tag = 'smem constant byte address 0x4 - core index']
  #allocation1 [shape = 'u32[144,128]{1,0:T(1,128)}', space=vmem, size = 0x12000, scoped, tag = 'internal scratch']
  %s0 = inlined_call_operand.vmem [shape: bf16[2,16,4], index: 0, kind: input, shape index: {}, may-alias: {0,1,2}]
  %s1 = inlined_call_operand.vmem [shape: bf16[2,16,4], index: 1, kind: input, shape index: {}, may-alias: {0,1,2}]
  %s2 = inlined_call_operand.vmem [shape: bf16[2,16,4], index: 2, kind: input, shape index: {}, may-alias: {0,1,2}]
  %s3 = inlined_call_operand.vmem [shape: bf16[3,4,16], index: 3, kind: input, shape index: {}]
  %s4 = inlined_call_operand.vmem [shape: f32[1,16], index: 4, kind: input, shape index: {}]
  %s5 = inlined_call_operand.vmem [shape: bf16[2,16,16], index: 5, kind: output, shape index: {}]
  %s6 = sld [smem:[#allocation0]]
  $region53: #{rrdbnet_forward.12} parent=0
    _
  %s8 = ssub.s32 1, %s6
  %s9 = scalar_select 0, %s8, %s6
  loop: start=0, step=1, limit=4
  $region2: #{rrdbnet_forward.12} parent=0 // loop_pre_header
    _
  $region3: #{rrdbnet_forward.12} parent=0 // loop_header
    %s11 = sphi 0, %s15
    %p12 = scmp.ge.s32.totalorder %s11, 4
    %s18 = sphi 0, %s30
    %s19 = sphi 0, %s26
    %s20 = sphi 0, %s18
    %s21 = sphi 0, %s19
    %s22 = sphi 0, %s20
    %s23 = sphi 0, %s21
    %s35 = sphi 0, %s37
    %s38 = sphi 0, %s35
    %s39 = sphi 0, %s38
    %s55 = sphi 0, %s39
    %s71 = sphi 0, %s73
    %s74 = sphi 0, %s71
    %s75 = sphi 0, %s74
    %s91 = sphi 0, %s75
    %s107 = sphi 0, %s109
    %s110 = sphi 0, %s107
    %s111 = sphi 0, %s110
    %s127 = sphi 0, %s111
    %s131 = sphi 0, %s131
    %s133 = sphi 0, %s131
    %s134 = sphi 0, %s133
    %s148 = sphi 0, %s134
    %s152 = sphi 0, %s152
    %s154 = sphi 0, %s152
    %s155 = sphi 0, %s154
    %s169 = sphi 0, %s155
    %s177 = sphi 0, %s179
    %s180 = sphi 0, %s177
    %s181 = sphi 0, %s180
    %s197 = sphi 0, %s181
  $region4: #{rrdbnet_forward.12} parent=0 // loop_header_branch
    %14 = sbr.rel (%p12) target = $region8
  $region5: #{rrdbnet_forward.12} parent=0 // loop_body
    %s16 = ssub.s32 %s11, 1
    %s17 = ssub.s32 %s11, 2
    %s24 = sadd.s32 1, %s19
    %p25 = scmp.ge.s32.totalorder %s24, 1
    %s26 = scalar_select %p25, 0, %s24
    %s27 = sadd.s32 1, %s18
    %s28 = scalar_select %p25, %s27, %s18
    %p29 = scmp.ge.s32.totalorder %s28, 2
    %s30 = scalar_select %p29, 0, %s28
    %s31 = ssub.s32 %s18, %s30
    %s32 = ssub.s32 %s19, %s26
    %s33 = sor.u32 %s31, %s32
    %p34 = scmp.eq.s32.totalorder %s33, 0
    %s36 = sadd.s32 %s35, 1
    %s37 = scalar_select %p34, %s35, %s36
    %p40 = pneg %p34
    %p41 = scmp.eq.s32.totalorder %s11, 1
    %p42 = por %p40, %p41
    %p43 = scmp.ne.s32.totalorder %s35, %s38
    %p44 = scmp.eq.s32.totalorder %s11, 0
    %p45 = por %p43, %p44
    %p46 = scmp.ne.s32.totalorder %s35, %s38
    %p47 = scmp.eq.s32.totalorder %s16, 1
    %p48 = por %p46, %p47
    %p49 = scmp.ne.s32.totalorder %s38, %s39
    %p50 = scmp.eq.s32.totalorder %s16, 0
    %p51 = por %p49, %p50
    %p52 = scmp.ne.s32.totalorder %s38, %s39
    %p53 = scmp.eq.s32.totalorder %s17, 1
    %p54 = por %p52, %p53
    %p56 = scmp.ne.s32.totalorder %s39, %s55
    %p57 = scmp.eq.s32.totalorder %s17, 0
    %p58 = por %p56, %p57
    %s59 = smul.u32 %s19, 2
    %s60 = ssub.s32 %s59, 1
    %p61 = scmp.gt.s32.totalorder %s60, 0
    %s62 = scalar_select %p61, %s60, 0
    %s63 = smul.u32 %s26, 2
    %s64 = ssub.s32 %s63, 1
    %p65 = scmp.gt.s32.totalorder %s64, 0
    %s66 = scalar_select %p65, %s64, 0
    %s67 = ssub.s32 %s18, %s30
    %s68 = ssub.s32 %s62, %s66
    %s69 = sor.u32 %s67, %s68
    %p70 = scmp.eq.s32.totalorder %s69, 0
    %s72 = sadd.s32 %s71, 1
    %s73 = scalar_select %p70, %s71, %s72
    %p76 = pneg %p70
    %p77 = scmp.eq.s32.totalorder %s11, 1
    %p78 = por %p76, %p77
    %p79 = scmp.ne.s32.totalorder %s71, %s74
    %p80 = scmp.eq.s32.totalorder %s11, 0
    %p81 = por %p79, %p80
    %p82 = scmp.ne.s32.totalorder %s71, %s74
    %p83 = scmp.eq.s32.totalorder %s16, 1
    %p84 = por %p82, %p83
    %p85 = scmp.ne.s32.totalorder %s74, %s75
    %p86 = scmp.eq.s32.totalorder %s16, 0
    %p87 = por %p85, %p86
    %p88 = scmp.ne.s32.totalorder %s74, %s75
    %p89 = scmp.eq.s32.totalorder %s17, 1
    %p90 = por %p88, %p89
    %p92 = scmp.ne.s32.totalorder %s75, %s91
    %p93 = scmp.eq.s32.totalorder %s17, 0
    %p94 = por %p92, %p93
    %s95 = sadd.s32 %s19, 1
    %s96 = smul.u32 %s95, 2
    %p97 = scmp.lt.s32.totalorder %s96, 1
    %s98 = scalar_select %p97, %s96, 1
    %s99 = sadd.s32 %s26, 1
    %s100 = smul.u32 %s99, 2
    %p101 = scmp.lt.s32.totalorder %s100, 1
    %s102 = scalar_select %p101, %s100, 1
    %s103 = ssub.s32 %s18, %s30
    %s104 = ssub.s32 %s98, %s102
    %s105 = sor.u32 %s103, %s104
    %p106 = scmp.eq.s32.totalorder %s105, 0
    %s108 = sadd.s32 %s107, 1
    %s109 = scalar_select %p106, %s107, %s108
    %p112 = pneg %p106
    %p113 = scmp.eq.s32.totalorder %s11, 1
    %p114 = por %p112, %p113
    %p115 = scmp.ne.s32.totalorder %s107, %s110
    %p116 = scmp.eq.s32.totalorder %s11, 0
    %p117 = por %p115, %p116
    %p118 = scmp.ne.s32.totalorder %s107, %s110
    %p119 = scmp.eq.s32.totalorder %s16, 1
    %p120 = por %p118, %p119
    %p121 = scmp.ne.s32.totalorder %s110, %s111
    %p122 = scmp.eq.s32.totalorder %s16, 0
    %p123 = por %p121, %p122
    %p124 = scmp.ne.s32.totalorder %s110, %s111
    %p125 = scmp.eq.s32.totalorder %s17, 1
    %p126 = por %p124, %p125
    %p128 = scmp.ne.s32.totalorder %s111, %s127
    %p129 = scmp.eq.s32.totalorder %s17, 0
    %p130 = por %p128, %p129
    %s132 = sadd.s32 %s131, 1
    %p135 = scmp.eq.s32.totalorder %s11, 1
    %p136 = scmp.ne.s32.totalorder %s131, %s133
    %p137 = scmp.eq.s32.totalorder %s11, 0
    %p138 = por %p136, %p137
    %p139 = scmp.ne.s32.totalorder %s131, %s133
    %p140 = scmp.eq.s32.totalorder %s16, 1
    %p141 = por %p139, %p140
    %p142 = scmp.ne.s32.totalorder %s133, %s134
    %p143 = scmp.eq.s32.totalorder %s16, 0
    %p144 = por %p142, %p143
    %p145 = scmp.ne.s32.totalorder %s133, %s134
    %p146 = scmp.eq.s32.totalorder %s17, 1
    %p147 = por %p145, %p146
    %p149 = scmp.ne.s32.totalorder %s134, %s148
    %p150 = scmp.eq.s32.totalorder %s17, 0
    %p151 = por %p149, %p150
    %s153 = sadd.s32 %s152, 1
    %p156 = scmp.eq.s32.totalorder %s11, 1
    %p157 = scmp.ne.s32.totalorder %s152, %s154
    %p158 = scmp.eq.s32.totalorder %s11, 0
    %p159 = por %p157, %p158
    %p160 = scmp.ne.s32.totalorder %s152, %s154
    %p161 = scmp.eq.s32.totalorder %s16, 1
    %p162 = por %p160, %p161
    %p163 = scmp.ne.s32.totalorder %s154, %s155
    %p164 = scmp.eq.s32.totalorder %s16, 0
    %p165 = por %p163, %p164
    %p166 = scmp.ne.s32.totalorder %s154, %s155
    %p167 = scmp.eq.s32.totalorder %s17, 1
    %p168 = por %p166, %p167
    %p170 = scmp.ne.s32.totalorder %s155, %s169
    %p171 = scmp.eq.s32.totalorder %s17, 0
    %p172 = por %p170, %p171
    %s173 = ssub.s32 %s18, %s30
    %s174 = ssub.s32 %s19, %s26
    %s175 = sor.u32 %s173, %s174
    %p176 = scmp.eq.s32.totalorder %s175, 0
    %s178 = sadd.s32 %s177, 1
    %s179 = scalar_select %p176, %s177, %s178
    %p182 = pneg %p176
    %p183 = scmp.eq.s32.totalorder %s11, 1
    %p184 = por %p182, %p183
    %p185 = scmp.ne.s32.totalorder %s177, %s180
    %p186 = scmp.eq.s32.totalorder %s11, 0
    %p187 = por %p185, %p186
    %p188 = scmp.ne.s32.totalorder %s177, %s180
    %p189 = scmp.eq.s32.totalorder %s16, 1
    %p190 = por %p188, %p189
    %p191 = scmp.ne.s32.totalorder %s180, %s181
    %p192 = scmp.eq.s32.totalorder %s16, 0
    %p193 = por %p191, %p192
    %p194 = scmp.ne.s32.totalorder %s180, %s181
    %p195 = scmp.eq.s32.totalorder %s17, 1
    %p196 = por %p194, %p195
    %p198 = scmp.ne.s32.totalorder %s181, %s197
    %p199 = scmp.eq.s32.totalorder %s17, 0
    %p200 = por %p198, %p199
    %p201 = scmp.le.s32.totalorder 1, %s11
    %p202 = scmp.lt.s32.totalorder %s11, 3
    %p203 = pnand %p201, %p202
    %p204 = pneg %p203
    // Predicated region
    $region9: #{rrdbnet_forward.12} parent=5 // pred_check
      _
    $region10: #{rrdbnet_forward.12} parent=5 // pred_check_branch
      %206 = sbr.rel (%p203) target = $region12
    $region11: #{rrdbnet_forward.12} parent=5 // pred_region
      %s207 = ssub.s32 %s11, 1
      // Predicated region
      $region13: #{rrdbnet_forward.12} parent=11 // pred_check
        %p208 = pneg %p144
      $region14: #{rrdbnet_forward.12} parent=11 // pred_check_branch
        %210 = sbr.rel (%p208) target = $region16
      $region15: #{rrdbnet_forward.12} parent=11 // pred_region
        _
      $region16: #{rrdbnet_forward.12} parent=11 // pred_fallthru
        _
      // Predicated region
      $region17: #{rrdbnet_forward.12} parent=11 // pred_check
        %p211 = pneg %p165
      $region18: #{rrdbnet_forward.12} parent=11 // pred_check_branch
        %213 = sbr.rel (%p211) target = $region20
      $region19: #{rrdbnet_forward.12} parent=11 // pred_region
        _
      $region20: #{rrdbnet_forward.12} parent=11 // pred_fallthru
        _
    $region12: #{rrdbnet_forward.12} parent=5 // pred_fallthru
      _
    %p214 = scmp.lt.s32.totalorder %s11, 2
    // Predicated region
    $region21: #{rrdbnet_forward.12} parent=5 // pred_check
      %p215 = pneg %p214
    $region22: #{rrdbnet_forward.12} parent=5 // pred_check_branch
      %217 = sbr.rel (%p215) target = $region24
    $region23: #{rrdbnet_forward.12} parent=5 // pred_region
      // Predicated region
      $region25: #{rrdbnet_forward.12} parent=23 // pred_check
        %p218 = pneg %p45
      $region26: #{rrdbnet_forward.12} parent=23 // pred_check_branch
        %220 = sbr.rel (%p218) target = $region28
      $region27: #{rrdbnet_forward.12} parent=23 // pred_region
        %s221 = smul.u32 2, %s19
        %p222 = scmp.lt.s32.totalorder %s18, 1
        %s223 = scalar_select %p222, %s18, 1
        %p224 = scmp.lt.s32.totalorder %s221, 1
        %s225 = scalar_select %p224, %s221, 1
        %s226 = smul.addr %s223, 2
        %s227 = sadd.s32 %s225, %s226
        %s228 = smul.addr %s227, 4
        %s229 = scalar_lea.vmem %s0, %s228
        %s230 = smul.u32 2, %s19
      $region28: #{rrdbnet_forward.12} parent=23 // pred_fallthru
        _
      // Predicated region
      $region29: #{rrdbnet_forward.12} parent=23 // pred_check
        %p231 = pneg %p81
      $region30: #{rrdbnet_forward.12} parent=23 // pred_check_branch
        %233 = sbr.rel (%p231) target = $region32
      $region31: #{rrdbnet_forward.12} parent=23 // pred_region
        %s234 = smul.u32 %s19, 2
        %s235 = ssub.s32 %s234, 1
        %p236 = scmp.gt.s32.totalorder %s235, 0
        %s237 = scalar_select %p236, %s235, 0
        %p238 = scmp.lt.s32.totalorder %s18, 1
        %s239 = scalar_select %p238, %s18, 1
        %p240 = scmp.lt.s32.totalorder %s237, 1
        %s241 = scalar_select %p240, %s237, 1
        %s242 = smul.addr %s239, 2
        %s243 = sadd.s32 %s241, %s242
        %s244 = smul.addr %s243, 4
        %s245 = scalar_lea.vmem %s1, %s244
        %s246 = smul.u32 %s19, 2
        %s247 = ssub.s32 %s246, 1
        %p248 = scmp.gt.s32.totalorder %s247, 0
        %s249 = scalar_select %p248, %s247, 0
      $region32: #{rrdbnet_forward.12} parent=23 // pred_fallthru
        _
      // Predicated region
      $region33: #{rrdbnet_forward.12} parent=23 // pred_check
        %p250 = pneg %p117
      $region34: #{rrdbnet_forward.12} parent=23 // pred_check_branch
        %252 = sbr.rel (%p250) target = $region36
      $region35: #{rrdbnet_forward.12} parent=23 // pred_region
        %s253 = sadd.s32 %s19, 1
        %s254 = smul.u32 %s253, 2
        %p255 = scmp.lt.s32.totalorder %s254, 1
        %s256 = scalar_select %p255, %s254, 1
        %p257 = scmp.lt.s32.totalorder %s18, 1
        %s258 = scalar_select %p257, %s18, 1
        %p259 = scmp.lt.s32.totalorder %s256, 1
        %s260 = scalar_select %p259, %s256, 1
        %s261 = smul.addr %s258, 2
        %s262 = sadd.s32 %s260, %s261
        %s263 = smul.addr %s262, 4
        %s264 = scalar_lea.vmem %s2, %s263
        %s265 = sadd.s32 %s19, 1
        %s266 = smul.u32 %s265, 2
        %p267 = scmp.lt.s32.totalorder %s266, 1
        %s268 = scalar_select %p267, %s266, 1
      $region36: #{rrdbnet_forward.12} parent=23 // pred_fallthru
        _
    $region24: #{rrdbnet_forward.12} parent=5 // pred_fallthru
      _
    %p269 = scmp.le.s32.totalorder 1, %s11
    %p270 = scmp.lt.s32.totalorder %s11, 3
    %p271 = pnand %p269, %p270
    %p272 = pneg %p271
    // Predicated region
    $region37: #{rrdbnet_forward.12} parent=5 // pred_check
      _
    $region38: #{rrdbnet_forward.12} parent=5 // pred_check_branch
      %274 = sbr.rel (%p271) target = $region40
    $region39: #{rrdbnet_forward.12} parent=5 // pred_region
      %s275 = ssub.s32 %s11, 1
      %s276 = smul.u32 2, %s21
      %p277 = scmp.lt.s32.totalorder %s20, 1
      %s278 = scalar_select %p277, %s20, 1
      %p279 = scmp.lt.s32.totalorder %s276, 1
      %s280 = scalar_select %p279, %s276, 1
      %s281 = smul.addr %s278, 2
      %s282 = sadd.s32 %s280, %s281
      %s283 = smul.addr %s282, 4
      %s284 = scalar_lea.vmem %s0, %s283
      %p285 = pneg %p51
      %p286 = pneg %p48
      %s287 = smul.u32 %s21, 2
      %s288 = ssub.s32 %s287, 1
      %p289 = scmp.gt.s32.totalorder %s288, 0
      %s290 = scalar_select %p289, %s288, 0
      %p291 = scmp.lt.s32.totalorder %s20, 1
      %s292 = scalar_select %p291, %s20, 1
      %p293 = scmp.lt.s32.totalorder %s290, 1
      %s294 = scalar_select %p293, %s290, 1
      %s295 = smul.addr %s292, 2
      %s296 = sadd.s32 %s294, %s295
      %s297 = smul.addr %s296, 4
      %s298 = scalar_lea.vmem %s1, %s297
      %p299 = pneg %p87
      %p300 = pneg %p84
      %s301 = sadd.s32 %s21, 1
      %s302 = smul.u32 %s301, 2
      %p303 = scmp.lt.s32.totalorder %s302, 1
      %s304 = scalar_select %p303, %s302, 1
      %p305 = scmp.lt.s32.totalorder %s20, 1
      %s306 = scalar_select %p305, %s20, 1
      %p307 = scmp.lt.s32.totalorder %s304, 1
      %s308 = scalar_select %p307, %s304, 1
      %s309 = smul.addr %s306, 2
      %s310 = sadd.s32 %s308, %s309
      %s311 = smul.addr %s310, 4
      %s312 = scalar_lea.vmem %s2, %s311
      %p313 = pneg %p123
      %p314 = pneg %p120
      %p315 = pneg %p144
      %p316 = pneg %p141
      %p317 = pneg %p165
      %p318 = pneg %p162
      %p319 = pneg %p193
      %p320 = pneg %p190
      %s321 = smul.u32 2, %s21
      %p322 = scmp.lt.s32.totalorder %s20, 1
      %s323 = scalar_select %p322, %s20, 1
      %p324 = scmp.lt.s32.totalorder %s321, 1
      %s325 = scalar_select %p324, %s321, 1
      %s326 = smul.addr %s323, 2
      %s327 = sadd.s32 %s325, %s326
      %s328 = smul.addr %s327, 4
      %s329 = scalar_lea.vmem %s5, %s328
      %s330 = smul.u32 2, %s21
      %p331 = scmp.lt.s32.totalorder %s20, 1
      %s332 = scalar_select %p331, %s20, 1
      %p333 = scmp.lt.s32.totalorder %s330, 1
      %s334 = scalar_select %p333, %s330, 1
      %s335 = smul.addr %s332, 2
      %s336 = sadd.s32 %s334, %s335
      %s337 = smul.addr %s336, 4
      %s338 = scalar_lea.vmem %s0, %s337
      %s339 = smul.u32 2, %s21
      %s340 = smul.u32 %s21, 2
      %s341 = ssub.s32 %s340, 1
      %p342 = scmp.gt.s32.totalorder %s341, 0
      %s343 = scalar_select %p342, %s341, 0
      %p344 = scmp.lt.s32.totalorder %s20, 1
      %s345 = scalar_select %p344, %s20, 1
      %p346 = scmp.lt.s32.totalorder %s343, 1
      %s347 = scalar_select %p346, %s343, 1
      %s348 = smul.addr %s345, 2
      %s349 = sadd.s32 %s347, %s348
      %s350 = smul.addr %s349, 4
      %s351 = scalar_lea.vmem %s1, %s350
      %s352 = smul.u32 %s21, 2
      %s353 = ssub.s32 %s352, 1
      %p354 = scmp.gt.s32.totalorder %s353, 0
      %s355 = scalar_select %p354, %s353, 0
      %s356 = sadd.s32 %s21, 1
      %s357 = smul.u32 %s356, 2
      %p358 = scmp.lt.s32.totalorder %s357, 1
      %s359 = scalar_select %p358, %s357, 1
      %p360 = scmp.lt.s32.totalorder %s20, 1
      %s361 = scalar_select %p360, %s20, 1
      %p362 = scmp.lt.s32.totalorder %s359, 1
      %s363 = scalar_select %p362, %s359, 1
      %s364 = smul.addr %s361, 2
      %s365 = sadd.s32 %s363, %s364
      %s366 = smul.addr %s365, 4
      %s367 = scalar_lea.vmem %s2, %s366
      %s368 = sadd.s32 %s21, 1
      %s369 = smul.u32 %s368, 2
      %p370 = scmp.lt.s32.totalorder %s369, 1
      %s371 = scalar_select %p370, %s369, 1
      %s372 = smul.u32 2, %s21
      %p373 = scmp.lt.s32.totalorder %s20, 1
      %s374 = scalar_select %p373, %s20, 1
      %p375 = scmp.lt.s32.totalorder %s372, 1
      %s376 = scalar_select %p375, %s372, 1
      %s377 = smul.addr %s374, 2
      %s378 = sadd.s32 %s376, %s377
      %s379 = smul.addr %s378, 4
      %s380 = scalar_lea.vmem %s5, %s379
      %s381 = smul.u32 2, %s21
      %v383 = vld [vmem:[%s338] sm:$0xf]
      %v384 = vld [vmem:[%s338 + $0x4] sm:$0xf]
      %v385 = vld [vmem:[%s351] sm:$0xf]
      %v386 = vld [vmem:[%s367] sm:$0xf]
      %p387 = scmp.gt.s32.totalorder %s21, 0
      %s388 = scalar_select %p387, 1.0, 0.0
      %p390 = scmp.ne.f32.partialorder %s388, %s388
      %s391 = sshrl.u32 %s388, 16
      %s392 = sand.u32 %s391, 1
      %s393 = sadd.s32 32767, %s392
      %s394 = sadd.s32 %s388, %s393
      %s395 = sand.u32 %s394, 4294901760
      %s396 = scalar_select %p390, 2143289344, %s395
      %s398 = sshrl.u32 %s396, 16
      %p399 = scmp.lt.s32.totalorder %s21, 0
      %s400 = scalar_select %p399, 1.0, 0.0
      %p402 = scmp.ne.f32.partialorder %s400, %s400
      %s403 = sshrl.u32 %s400, 16
      %s404 = sand.u32 %s403, 1
      %s405 = sadd.s32 32767, %s404
      %s406 = sadd.s32 %s400, %s405
      %s407 = sand.u32 %s406, 4294901760
      %s408 = scalar_select %p402, 2143289344, %s407
      %s410 = sshrl.u32 %s408, 16
      %s411 = sshll.u32 %s398, 16
      %s412 = sor.u32 %s398, %s411
      %v413 = vstv %s412
      %v415 = vmul.bf16 %v385, %v413
      %s416 = sshll.u32 %s410, 16
      %s417 = sor.u32 %s410, %s416
      %v418 = vstv %s417
      %v420 = vmul.bf16 %v386, %v418
      %v421 = vld [vmem:[%s3] sm:$0x3]
      %v422 = vld [vmem:[%s3 + $0x2] sm:$0x3]
      %v423 = vld [vmem:[%s3 + $0x4] sm:$0x3]
      %v424 = vld [vmem:[%s4] sm:$0x1]
      %v426 = vunpack.c.l.b16 %v415
      %v427 = vpack.c.b16 %v426, %v426
      %v429 = vshrl.u32 %v427, 16
      %v431 = vrot.slane %v429, 3
      %v435 = vunpack.c.l.b16 %v383
      %v436 = vunpack.c.l.b16 %v384
      %v437 = vpack.c.b16 %v436, %v435
      %v439 = vshrl.u32 %v437, 16
      %v441 = vrot.slane %v439, 7
      %v442 = vshll.u32 %v437, 16
      %v444 = vor.u32 %v441, %v442
      %vm446 = vcmask 1040384
      %vm447 = vsmask.f32 256
      %vm448 = vmand %vm446, %vm447
      %v449 = vsel %vm448, %v431, %v444
      %v450 = vrot.slane %v442, 1
      %v451 = vor.u32 %v439, %v450
      %v454 = vunpack.c.l.b16 %v420
      %v455 = vpack.c.b16 %v454, %v454
      %v457 = vshll.u32 %v455, 16
      %v459 = vrot.slane %v457, 1
      %vm461 = vcmask 1047552
      %vm462 = vsmask.f32 7424
      %vm463 = vmand %vm461, %vm462
      %v464 = vsel %vm463, %v451, %v459
      %vm465 = vcmask 31744
      %v466 = vsel %vm465, %v437, 0
      %vm468 = vcmask 1041408
      %v470 = vsel %vm468, %v422, 0
      %472 = vmatprep.subr.bf16.mxu0 0
      %473 = vmatpush1.bf16.msra.mxu0 %v470
      %474 = vmatprep.subr.bf16.mxu0 0
      %475 = vmatpush1.bf16.msra.mxu0 0
      %476 = vmatprep.subr.bf16.mxu0 0
      %477 = vmatpush1.bf16.msra.mxu0 0
      %478 = vmatprep.subr.bf16.mxu0 0
      %479 = vmatpush1.bf16.msra.mxu0 0
      %480 = vmatprep.subr.bf16.mxu0 0
      %481 = vmatpush1.bf16.msra.mxu0 0
      %482 = vmatprep.subr.bf16.mxu0 0
      %483 = vmatpush1.bf16.msra.mxu0 0
      %484 = vmatprep.subr.bf16.mxu0 0
      %485 = vmatpush1.bf16.msra.mxu0 0
      %486 = vmatprep.subr.bf16.mxu0 0
      %487 = vmatpush1.bf16.msra.mxu0 0
      %488 = vmatprep.subr.bf16.mxu0 0
      %489 = vmatpush1.bf16.msra.mxu0 0
      %490 = vmatprep.subr.bf16.mxu0 0
      %491 = vmatpush1.bf16.msra.mxu0 0
      %492 = vmatprep.subr.bf16.mxu0 0
      %493 = vmatpush1.bf16.msra.mxu0 0
      %494 = vmatprep.subr.bf16.mxu0 0
      %495 = vmatpush1.bf16.msra.mxu0 0
      %496 = vmatprep.subr.bf16.mxu0 0
      %497 = vmatpush1.bf16.msra.mxu0 0
      %498 = vmatprep.subr.bf16.mxu0 0
      %499 = vmatpush1.bf16.msra.mxu0 0
      %500 = vmatprep.subr.bf16.mxu0 0
      %501 = vmatpush1.bf16.msra.mxu0 0
      %502 = vmatprep.subr.bf16.mxu0 0
      %503 = vmatpush1.bf16.msra.mxu0 0
      %504 = vmatprep.mubr.bf16.mxu0 0
      %505 = vmatmul.mubr.bf16.gmra.mrb[0].mxu0 %v466
      %v506 = vpop.f32.mrb[0].mxu0
      %v507 = vadd.f32 0.0, %v506
      %v508 = vpop.f32.mrb[0].mxu0
      %v509 = vpop.f32.mrb[0].mxu0
      %v510 = vadd.f32 0.0, %v509
      %v511 = vpop.f32.mrb[0].mxu0
      %512 = vdwg.mxu0
      %v514 = vsel %vm465, %v449, 0
      %v517 = vsel %vm468, %v421, 0
      %519 = vmatprep.subr.bf16.mxu0 0
      %520 = vmatpush1.bf16.msra.mxu0 %v517
      %521 = vmatprep.subr.bf16.mxu0 0
      %522 = vmatpush1.bf16.msra.mxu0 0
      %523 = vmatprep.subr.bf16.mxu0 0
      %524 = vmatpush1.bf16.msra.mxu0 0
      %525 = vmatprep.subr.bf16.mxu0 0
      %526 = vmatpush1.bf16.msra.mxu0 0
      %527 = vmatprep.subr.bf16.mxu0 0
      %528 = vmatpush1.bf16.msra.mxu0 0
      %529 = vmatprep.subr.bf16.mxu0 0
      %530 = vmatpush1.bf16.msra.mxu0 0
      %531 = vmatprep.subr.bf16.mxu0 0
      %532 = vmatpush1.bf16.msra.mxu0 0
      %533 = vmatprep.subr.bf16.mxu0 0
      %534 = vmatpush1.bf16.msra.mxu0 0
      %535 = vmatprep.subr.bf16.mxu0 0
      %536 = vmatpush1.bf16.msra.mxu0 0
      %537 = vmatprep.subr.bf16.mxu0 0
      %538 = vmatpush1.bf16.msra.mxu0 0
      %539 = vmatprep.subr.bf16.mxu0 0
      %540 = vmatpush1.bf16.msra.mxu0 0
      %541 = vmatprep.subr.bf16.mxu0 0
      %542 = vmatpush1.bf16.msra.mxu0 0
      %543 = vmatprep.subr.bf16.mxu0 0
      %544 = vmatpush1.bf16.msra.mxu0 0
      %545 = vmatprep.subr.bf16.mxu0 0
      %546 = vmatpush1.bf16.msra.mxu0 0
      %547 = vmatprep.subr.bf16.mxu0 0
      %548 = vmatpush1.bf16.msra.mxu0 0
      %549 = vmatprep.subr.bf16.mxu0 0
      %550 = vmatpush1.bf16.msra.mxu0 0
      %551 = vmatprep.mubr.bf16.mxu0 0
      %552 = vmatmul.mubr.bf16.gmra.mrb[0].mxu0 %v514
      %v553 = vpop.f32.mrb[0].mxu0
      %v554 = vadd.f32 %v507, %v553
      %v555 = vpop.f32.mrb[0].mxu0
      %v556 = vpop.f32.mrb[0].mxu0
      %v557 = vadd.f32 %v510, %v556
      %v558 = vpop.f32.mrb[0].mxu0
      %559 = vdwg.mxu0
      %v561 = vsel %vm465, %v464, 0
      %v564 = vsel %vm468, %v423, 0
      %566 = vmatprep.subr.bf16.mxu0 0
      %567 = vmatpush1.bf16.msra.mxu0 %v564
      %568 = vmatprep.subr.bf16.mxu0 0
      %569 = vmatpush1.bf16.msra.mxu0 0
      %570 = vmatprep.subr.bf16.mxu0 0
      %571 = vmatpush1.bf16.msra.mxu0 0
      %572 = vmatprep.subr.bf16.mxu0 0
      %573 = vmatpush1.bf16.msra.mxu0 0
      %574 = vmatprep.subr.bf16.mxu0 0
      %575 = vmatpush1.bf16.msra.mxu0 0
      %576 = vmatprep.subr.bf16.mxu0 0
      %577 = vmatpush1.bf16.msra.mxu0 0
      %578 = vmatprep.subr.bf16.mxu0 0
      %579 = vmatpush1.bf16.msra.mxu0 0
      %580 = vmatprep.subr.bf16.mxu0 0
      %581 = vmatpush1.bf16.msra.mxu0 0
      %582 = vmatprep.subr.bf16.mxu0 0
      %583 = vmatpush1.bf16.msra.mxu0 0
      %584 = vmatprep.subr.bf16.mxu0 0
      %585 = vmatpush1.bf16.msra.mxu0 0
      %586 = vmatprep.subr.bf16.mxu0 0
      %587 = vmatpush1.bf16.msra.mxu0 0
      %588 = vmatprep.subr.bf16.mxu0 0
      %589 = vmatpush1.bf16.msra.mxu0 0
      %590 = vmatprep.subr.bf16.mxu0 0
      %591 = vmatpush1.bf16.msra.mxu0 0
      %592 = vmatprep.subr.bf16.mxu0 0
      %593 = vmatpush1.bf16.msra.mxu0 0
      %594 = vmatprep.subr.bf16.mxu0 0
      %595 = vmatpush1.bf16.msra.mxu0 0
      %596 = vmatprep.subr.bf16.mxu0 0
      %597 = vmatpush1.bf16.msra.mxu0 0
      %598 = vmatprep.mubr.bf16.mxu0 0
      %599 = vmatmul.mubr.bf16.gmra.mrb[0].mxu0 %v561
      %v600 = vpop.f32.mrb[0].mxu0
      %v601 = vadd.f32 0.0, %v600
      %v602 = vpop.f32.mrb[0].mxu0
      %v603 = vpop.f32.mrb[0].mxu0
      %v604 = vadd.f32 0.0, %v603
      %v605 = vpop.f32.mrb[0].mxu0
      %606 = vdwg.mxu0
      %v607 = vadd.f32 %v554, %v601
      %v608 = vadd.f32 %v557, %v604
      %v610 = vlaneseq
      %v611 = vshrl.u32 %v610, 7
      %v612 = vsub.s32 0, %v611
      %v613 = vrot.slane %v424, %v612
      %v615 = vadd.f32 %v607, %v613
      %v616 = vadd.f32 %v608, %v613
      %v617 = vpack.c.bf16 %v616, %v615
      %v619 = vunpack.c.l.b16 %v617
      %v620 = vunpack.c.h.b16 %v617
      %v621 = vpack.c.b16 %v619, %v619
      %v622 = vpack.c.b16 %v620, %v620
      %vm625 = vcmask 125952
      %626 = vst.msk [vmem:[%s380] sm:$0xf] %vm625, %v621
      %627 = vst.msk [vmem:[%s380 + $0x4] sm:$0xf] %vm625, %v622
      %s628 = smul.u32 2, %s21
      %p629 = scmp.lt.s32.totalorder %s20, 1
      %s630 = scalar_select %p629, %s20, 1
      %p631 = scmp.lt.s32.totalorder %s628, 1
      %s632 = scalar_select %p631, %s628, 1
      %s633 = smul.addr %s630, 2
      %s634 = sadd.s32 %s632, %s633
      %s635 = smul.addr %s634, 4
      %s636 = scalar_lea.vmem %s5, %s635
      // Predicated region
      $region41: #{rrdbnet_forward.12} parent=39 // pred_check
        %p637 = pneg %p190
      $region42: #{rrdbnet_forward.12} parent=39 // pred_check_branch
        %639 = sbr.rel (%p637) target = $region44
      $region43: #{rrdbnet_forward.12} parent=39 // pred_region
        %s640 = smul.u32 2, %s21
      $region44: #{rrdbnet_forward.12} parent=39 // pred_fallthru
        _
    $region40: #{rrdbnet_forward.12} parent=5 // pred_fallthru
      _
    %p641 = scmp.le.s32.totalorder 2, %s11
    // Predicated region
    $region45: #{rrdbnet_forward.12} parent=5 // pred_check
      %p642 = pneg %p641
    $region46: #{rrdbnet_forward.12} parent=5 // pred_check_branch
      %644 = sbr.rel (%p642) target = $region48
    $region47: #{rrdbnet_forward.12} parent=5 // pred_region
      %s645 = ssub.s32 %s11, 2
      // Predicated region
      $region49: #{rrdbnet_forward.12} parent=47 // pred_check
        %p646 = pneg %p196
      $region50: #{rrdbnet_forward.12} parent=47 // pred_check_branch
        %648 = sbr.rel (%p646) target = $region52
      $region51: #{rrdbnet_forward.12} parent=47 // pred_region
        %s649 = smul.u32 2, %s23
        %p650 = scmp.lt.s32.totalorder %s22, 1
        %s651 = scalar_select %p650, %s22, 1
        %p652 = scmp.lt.s32.totalorder %s649, 1
        %s653 = scalar_select %p652, %s649, 1
        %s654 = smul.addr %s651, 2
        %s655 = sadd.s32 %s653, %s654
        %s656 = smul.addr %s655, 4
        %s657 = scalar_lea.vmem %s5, %s656
      $region52: #{rrdbnet_forward.12} parent=47 // pred_fallthru
        _
    $region48: #{rrdbnet_forward.12} parent=5 // pred_fallthru
      _
  $region6: #{rrdbnet_forward.12} parent=0 // loop_footer
    %s15 = sadd.s32 1, %s11
  $region7: #{rrdbnet_forward.12} parent=0 // loop_footer_branch
    %10 = sbr.rel target = $region3
  $region8: #{rrdbnet_forward.12} parent=0 // loop_exit
    _

// kernel: rrdbnet_forward.16
$region0: #{rrdbnet_forward.16}
  #allocation0 [shape = 'u32[]', space=smem, size = 0x4, offset = 0x4, fixed_abs, tag = 'smem constant byte address 0x4 - core index']
  #allocation1 [shape = 'u32[144,128]{1,0:T(1,128)}', space=vmem, size = 0x12000, scoped, tag = 'internal scratch']
  %s0 = inlined_call_operand.vmem [shape: bf16[2,16,16], index: 0, kind: input, shape index: {}, may-alias: {0,1,2}]
  %s1 = inlined_call_operand.vmem [shape: bf16[2,16,16], index: 1, kind: input, shape index: {}, may-alias: {0,1,2}]
  %s2 = inlined_call_operand.vmem [shape: bf16[2,16,16], index: 2, kind: input, shape index: {}, may-alias: {0,1,2}]
  %s3 = inlined_call_operand.vmem [shape: bf16[3,16,16], index: 3, kind: input, shape index: {}]
  %s4 = inlined_call_operand.vmem [shape: f32[1,16], index: 4, kind: input, shape index: {}]
  %s5 = inlined_call_operand.vmem [shape: bf16[2,16,16], index: 5, kind: output, shape index: {}]
  %s6 = sld [smem:[#allocation0]]
  $region53: #{rrdbnet_forward.16} parent=0
    _
  %s8 = ssub.s32 1, %s6
  %s9 = scalar_select 0, %s8, %s6
  loop: start=0, step=1, limit=4
  $region2: #{rrdbnet_forward.16} parent=0 // loop_pre_header
    _
  $region3: #{rrdbnet_forward.16} parent=0 // loop_header
    %s11 = sphi 0, %s15
    %p12 = scmp.ge.s32.totalorder %s11, 4
    %s18 = sphi 0, %s30
    %s19 = sphi 0, %s26
    %s20 = sphi 0, %s18
    %s21 = sphi 0, %s19
    %s22 = sphi 0, %s20
    %s23 = sphi 0, %s21
    %s35 = sphi 0, %s37
    %s38 = sphi 0, %s35
    %s39 = sphi 0, %s38
    %s55 = sphi 0, %s39
    %s71 = sphi 0, %s73
    %s74 = sphi 0, %s71
    %s75 = sphi 0, %s74
    %s91 = sphi 0, %s75
    %s107 = sphi 0, %s109
    %s110 = sphi 0, %s107
    %s111 = sphi 0, %s110
    %s127 = sphi 0, %s111
    %s131 = sphi 0, %s131
    %s133 = sphi 0, %s131
    %s134 = sphi 0, %s133
    %s148 = sphi 0, %s134
    %s152 = sphi 0, %s152
    %s154 = sphi 0, %s152
    %s155 = sphi 0, %s154
    %s169 = sphi 0, %s155
    %s177 = sphi 0, %s179
    %s180 = sphi 0, %s177
    %s181 = sphi 0, %s180
    %s197 = sphi 0, %s181
  $region4: #{rrdbnet_forward.16} parent=0 // loop_header_branch
    %14 = sbr.rel (%p12) target = $region8
  $region5: #{rrdbnet_forward.16} parent=0 // loop_body
    %s16 = ssub.s32 %s11, 1
    %s17 = ssub.s32 %s11, 2
    %s24 = sadd.s32 1, %s19
    %p25 = scmp.ge.s32.totalorder %s24, 1
    %s26 = scalar_select %p25, 0, %s24
    %s27 = sadd.s32 1, %s18
    %s28 = scalar_select %p25, %s27, %s18
    %p29 = scmp.ge.s32.totalorder %s28, 2
    %s30 = scalar_select %p29, 0, %s28
    %s31 = ssub.s32 %s18, %s30
    %s32 = ssub.s32 %s19, %s26
    %s33 = sor.u32 %s31, %s32
    %p34 = scmp.eq.s32.totalorder %s33, 0
    %s36 = sadd.s32 %s35, 1
    %s37 = scalar_select %p34, %s35, %s36
    %p40 = pneg %p34
    %p41 = scmp.eq.s32.totalorder %s11, 1
    %p42 = por %p40, %p41
    %p43 = scmp.ne.s32.totalorder %s35, %s38
    %p44 = scmp.eq.s32.totalorder %s11, 0
    %p45 = por %p43, %p44
    %p46 = scmp.ne.s32.totalorder %s35, %s38
    %p47 = scmp.eq.s32.totalorder %s16, 1
    %p48 = por %p46, %p47
    %p49 = scmp.ne.s32.totalorder %s38, %s39
    %p50 = scmp.eq.s32.totalorder %s16, 0
    %p51 = por %p49, %p50
    %p52 = scmp.ne.s32.totalorder %s38, %s39
    %p53 = scmp.eq.s32.totalorder %s17, 1
    %p54 = por %p52, %p53
    %p56 = scmp.ne.s32.totalorder %s39, %s55
    %p57 = scmp.eq.s32.totalorder %s17, 0
    %p58 = por %p56, %p57
    %s59 = smul.u32 %s19, 2
    %s60 = ssub.s32 %s59, 1
    %p61 = scmp.gt.s32.totalorder %s60, 0
    %s62 = scalar_select %p61, %s60, 0
    %s63 = smul.u32 %s26, 2
    %s64 = ssub.s32 %s63, 1
    %p65 = scmp.gt.s32.totalorder %s64, 0
    %s66 = scalar_select %p65, %s64, 0
    %s67 = ssub.s32 %s18, %s30
    %s68 = ssub.s32 %s62, %s66
    %s69 = sor.u32 %s67, %s68
    %p70 = scmp.eq.s32.totalorder %s69, 0
    %s72 = sadd.s32 %s71, 1
    %s73 = scalar_select %p70, %s71, %s72
    %p76 = pneg %p70
    %p77 = scmp.eq.s32.totalorder %s11, 1
    %p78 = por %p76, %p77
    %p79 = scmp.ne.s32.totalorder %s71, %s74
    %p80 = scmp.eq.s32.totalorder %s11, 0
    %p81 = por %p79, %p80
    %p82 = scmp.ne.s32.totalorder %s71, %s74
    %p83 = scmp.eq.s32.totalorder %s16, 1
    %p84 = por %p82, %p83
    %p85 = scmp.ne.s32.totalorder %s74, %s75
    %p86 = scmp.eq.s32.totalorder %s16, 0
    %p87 = por %p85, %p86
    %p88 = scmp.ne.s32.totalorder %s74, %s75
    %p89 = scmp.eq.s32.totalorder %s17, 1
    %p90 = por %p88, %p89
    %p92 = scmp.ne.s32.totalorder %s75, %s91
    %p93 = scmp.eq.s32.totalorder %s17, 0
    %p94 = por %p92, %p93
    %s95 = sadd.s32 %s19, 1
    %s96 = smul.u32 %s95, 2
    %p97 = scmp.lt.s32.totalorder %s96, 1
    %s98 = scalar_select %p97, %s96, 1
    %s99 = sadd.s32 %s26, 1
    %s100 = smul.u32 %s99, 2
    %p101 = scmp.lt.s32.totalorder %s100, 1
    %s102 = scalar_select %p101, %s100, 1
    %s103 = ssub.s32 %s18, %s30
    %s104 = ssub.s32 %s98, %s102
    %s105 = sor.u32 %s103, %s104
    %p106 = scmp.eq.s32.totalorder %s105, 0
    %s108 = sadd.s32 %s107, 1
    %s109 = scalar_select %p106, %s107, %s108
    %p112 = pneg %p106
    %p113 = scmp.eq.s32.totalorder %s11, 1
    %p114 = por %p112, %p113
    %p115 = scmp.ne.s32.totalorder %s107, %s110
    %p116 = scmp.eq.s32.totalorder %s11, 0
    %p117 = por %p115, %p116
    %p118 = scmp.ne.s32.totalorder %s107, %s110
    %p119 = scmp.eq.s32.totalorder %s16, 1
    %p120 = por %p118, %p119
    %p121 = scmp.ne.s32.totalorder %s110, %s111
    %p122 = scmp.eq.s32.totalorder %s16, 0
    %p123 = por %p121, %p122
    %p124 = scmp.ne.s32.totalorder %s110, %s111
    %p125 = scmp.eq.s32.totalorder %s17, 1
    %p126 = por %p124, %p125
    %p128 = scmp.ne.s32.totalorder %s111, %s127
    %p129 = scmp.eq.s32.totalorder %s17, 0
    %p130 = por %p128, %p129
    %s132 = sadd.s32 %s131, 1
    %p135 = scmp.eq.s32.totalorder %s11, 1
    %p136 = scmp.ne.s32.totalorder %s131, %s133
    %p137 = scmp.eq.s32.totalorder %s11, 0
    %p138 = por %p136, %p137
    %p139 = scmp.ne.s32.totalorder %s131, %s133
    %p140 = scmp.eq.s32.totalorder %s16, 1
    %p141 = por %p139, %p140
    %p142 = scmp.ne.s32.totalorder %s133, %s134
    %p143 = scmp.eq.s32.totalorder %s16, 0
    %p144 = por %p142, %p143
    %p145 = scmp.ne.s32.totalorder %s133, %s134
    %p146 = scmp.eq.s32.totalorder %s17, 1
    %p147 = por %p145, %p146
    %p149 = scmp.ne.s32.totalorder %s134, %s148
    %p150 = scmp.eq.s32.totalorder %s17, 0
    %p151 = por %p149, %p150
    %s153 = sadd.s32 %s152, 1
    %p156 = scmp.eq.s32.totalorder %s11, 1
    %p157 = scmp.ne.s32.totalorder %s152, %s154
    %p158 = scmp.eq.s32.totalorder %s11, 0
    %p159 = por %p157, %p158
    %p160 = scmp.ne.s32.totalorder %s152, %s154
    %p161 = scmp.eq.s32.totalorder %s16, 1
    %p162 = por %p160, %p161
    %p163 = scmp.ne.s32.totalorder %s154, %s155
    %p164 = scmp.eq.s32.totalorder %s16, 0
    %p165 = por %p163, %p164
    %p166 = scmp.ne.s32.totalorder %s154, %s155
    %p167 = scmp.eq.s32.totalorder %s17, 1
    %p168 = por %p166, %p167
    %p170 = scmp.ne.s32.totalorder %s155, %s169
    %p171 = scmp.eq.s32.totalorder %s17, 0
    %p172 = por %p170, %p171
    %s173 = ssub.s32 %s18, %s30
    %s174 = ssub.s32 %s19, %s26
    %s175 = sor.u32 %s173, %s174
    %p176 = scmp.eq.s32.totalorder %s175, 0
    %s178 = sadd.s32 %s177, 1
    %s179 = scalar_select %p176, %s177, %s178
    %p182 = pneg %p176
    %p183 = scmp.eq.s32.totalorder %s11, 1
    %p184 = por %p182, %p183
    %p185 = scmp.ne.s32.totalorder %s177, %s180
    %p186 = scmp.eq.s32.totalorder %s11, 0
    %p187 = por %p185, %p186
    %p188 = scmp.ne.s32.totalorder %s177, %s180
    %p189 = scmp.eq.s32.totalorder %s16, 1
    %p190 = por %p188, %p189
    %p191 = scmp.ne.s32.totalorder %s180, %s181
    %p192 = scmp.eq.s32.totalorder %s16, 0
    %p193 = por %p191, %p192
    %p194 = scmp.ne.s32.totalorder %s180, %s181
    %p195 = scmp.eq.s32.totalorder %s17, 1
    %p196 = por %p194, %p195
    %p198 = scmp.ne.s32.totalorder %s181, %s197
    %p199 = scmp.eq.s32.totalorder %s17, 0
    %p200 = por %p198, %p199
    %p201 = scmp.le.s32.totalorder 1, %s11
    %p202 = scmp.lt.s32.totalorder %s11, 3
    %p203 = pnand %p201, %p202
    %p204 = pneg %p203
    // Predicated region
    $region9: #{rrdbnet_forward.16} parent=5 // pred_check
      _
    $region10: #{rrdbnet_forward.16} parent=5 // pred_check_branch
      %206 = sbr.rel (%p203) target = $region12
    $region11: #{rrdbnet_forward.16} parent=5 // pred_region
      %s207 = ssub.s32 %s11, 1
      // Predicated region
      $region13: #{rrdbnet_forward.16} parent=11 // pred_check
        %p208 = pneg %p144
      $region14: #{rrdbnet_forward.16} parent=11 // pred_check_branch
        %210 = sbr.rel (%p208) target = $region16
      $region15: #{rrdbnet_forward.16} parent=11 // pred_region
        _
      $region16: #{rrdbnet_forward.16} parent=11 // pred_fallthru
        _
      // Predicated region
      $region17: #{rrdbnet_forward.16} parent=11 // pred_check
        %p211 = pneg %p165
      $region18: #{rrdbnet_forward.16} parent=11 // pred_check_branch
        %213 = sbr.rel (%p211) target = $region20
      $region19: #{rrdbnet_forward.16} parent=11 // pred_region
        _
      $region20: #{rrdbnet_forward.16} parent=11 // pred_fallthru
        _
    $region12: #{rrdbnet_forward.16} parent=5 // pred_fallthru
      _
    %p214 = scmp.lt.s32.totalorder %s11, 2
    // Predicated region
    $region21: #{rrdbnet_forward.16} parent=5 // pred_check
      %p215 = pneg %p214
    $region22: #{rrdbnet_forward.16} parent=5 // pred_check_branch
      %217 = sbr.rel (%p215) target = $region24
    $region23: #{rrdbnet_forward.16} parent=5 // pred_region
      // Predicated region
      $region25: #{rrdbnet_forward.16} parent=23 // pred_check
        %p218 = pneg %p45
      $region26: #{rrdbnet_forward.16} parent=23 // pred_check_branch
        %220 = sbr.rel (%p218) target = $region28
      $region27: #{rrdbnet_forward.16} parent=23 // pred_region
        %s221 = smul.u32 2, %s19
        %p222 = scmp.lt.s32.totalorder %s18, 1
        %s223 = scalar_select %p222, %s18, 1
        %p224 = scmp.lt.s32.totalorder %s221, 1
        %s225 = scalar_select %p224, %s221, 1
        %s226 = smul.addr %s223, 2
        %s227 = sadd.s32 %s225, %s226
        %s228 = smul.addr %s227, 4
        %s229 = scalar_lea.vmem %s0, %s228
        %s230 = smul.u32 2, %s19
      $region28: #{rrdbnet_forward.16} parent=23 // pred_fallthru
        _
      // Predicated region
      $region29: #{rrdbnet_forward.16} parent=23 // pred_check
        %p231 = pneg %p81
      $region30: #{rrdbnet_forward.16} parent=23 // pred_check_branch
        %233 = sbr.rel (%p231) target = $region32
      $region31: #{rrdbnet_forward.16} parent=23 // pred_region
        %s234 = smul.u32 %s19, 2
        %s235 = ssub.s32 %s234, 1
        %p236 = scmp.gt.s32.totalorder %s235, 0
        %s237 = scalar_select %p236, %s235, 0
        %p238 = scmp.lt.s32.totalorder %s18, 1
        %s239 = scalar_select %p238, %s18, 1
        %p240 = scmp.lt.s32.totalorder %s237, 1
        %s241 = scalar_select %p240, %s237, 1
        %s242 = smul.addr %s239, 2
        %s243 = sadd.s32 %s241, %s242
        %s244 = smul.addr %s243, 4
        %s245 = scalar_lea.vmem %s1, %s244
        %s246 = smul.u32 %s19, 2
        %s247 = ssub.s32 %s246, 1
        %p248 = scmp.gt.s32.totalorder %s247, 0
        %s249 = scalar_select %p248, %s247, 0
      $region32: #{rrdbnet_forward.16} parent=23 // pred_fallthru
        _
      // Predicated region
      $region33: #{rrdbnet_forward.16} parent=23 // pred_check
        %p250 = pneg %p117
      $region34: #{rrdbnet_forward.16} parent=23 // pred_check_branch
        %252 = sbr.rel (%p250) target = $region36
      $region35: #{rrdbnet_forward.16} parent=23 // pred_region
        %s253 = sadd.s32 %s19, 1
        %s254 = smul.u32 %s253, 2
        %p255 = scmp.lt.s32.totalorder %s254, 1
        %s256 = scalar_select %p255, %s254, 1
        %p257 = scmp.lt.s32.totalorder %s18, 1
        %s258 = scalar_select %p257, %s18, 1
        %p259 = scmp.lt.s32.totalorder %s256, 1
        %s260 = scalar_select %p259, %s256, 1
        %s261 = smul.addr %s258, 2
        %s262 = sadd.s32 %s260, %s261
        %s263 = smul.addr %s262, 4
        %s264 = scalar_lea.vmem %s2, %s263
        %s265 = sadd.s32 %s19, 1
        %s266 = smul.u32 %s265, 2
        %p267 = scmp.lt.s32.totalorder %s266, 1
        %s268 = scalar_select %p267, %s266, 1
      $region36: #{rrdbnet_forward.16} parent=23 // pred_fallthru
        _
    $region24: #{rrdbnet_forward.16} parent=5 // pred_fallthru
      _
    %p269 = scmp.le.s32.totalorder 1, %s11
    %p270 = scmp.lt.s32.totalorder %s11, 3
    %p271 = pnand %p269, %p270
    %p272 = pneg %p271
    // Predicated region
    $region37: #{rrdbnet_forward.16} parent=5 // pred_check
      _
    $region38: #{rrdbnet_forward.16} parent=5 // pred_check_branch
      %274 = sbr.rel (%p271) target = $region40
    $region39: #{rrdbnet_forward.16} parent=5 // pred_region
      %s275 = ssub.s32 %s11, 1
      %s276 = smul.u32 2, %s21
      %p277 = scmp.lt.s32.totalorder %s20, 1
      %s278 = scalar_select %p277, %s20, 1
      %p279 = scmp.lt.s32.totalorder %s276, 1
      %s280 = scalar_select %p279, %s276, 1
      %s281 = smul.addr %s278, 2
      %s282 = sadd.s32 %s280, %s281
      %s283 = smul.addr %s282, 4
      %s284 = scalar_lea.vmem %s0, %s283
      %p285 = pneg %p51
      %p286 = pneg %p48
      %s287 = smul.u32 %s21, 2
      %s288 = ssub.s32 %s287, 1
      %p289 = scmp.gt.s32.totalorder %s288, 0
      %s290 = scalar_select %p289, %s288, 0
      %p291 = scmp.lt.s32.totalorder %s20, 1
      %s292 = scalar_select %p291, %s20, 1
      %p293 = scmp.lt.s32.totalorder %s290, 1
      %s294 = scalar_select %p293, %s290, 1
      %s295 = smul.addr %s292, 2
      %s296 = sadd.s32 %s294, %s295
      %s297 = smul.addr %s296, 4
      %s298 = scalar_lea.vmem %s1, %s297
      %p299 = pneg %p87
      %p300 = pneg %p84
      %s301 = sadd.s32 %s21, 1
      %s302 = smul.u32 %s301, 2
      %p303 = scmp.lt.s32.totalorder %s302, 1
      %s304 = scalar_select %p303, %s302, 1
      %p305 = scmp.lt.s32.totalorder %s20, 1
      %s306 = scalar_select %p305, %s20, 1
      %p307 = scmp.lt.s32.totalorder %s304, 1
      %s308 = scalar_select %p307, %s304, 1
      %s309 = smul.addr %s306, 2
      %s310 = sadd.s32 %s308, %s309
      %s311 = smul.addr %s310, 4
      %s312 = scalar_lea.vmem %s2, %s311
      %p313 = pneg %p123
      %p314 = pneg %p120
      %p315 = pneg %p144
      %p316 = pneg %p141
      %p317 = pneg %p165
      %p318 = pneg %p162
      %p319 = pneg %p193
      %p320 = pneg %p190
      %s321 = smul.u32 2, %s21
      %p322 = scmp.lt.s32.totalorder %s20, 1
      %s323 = scalar_select %p322, %s20, 1
      %p324 = scmp.lt.s32.totalorder %s321, 1
      %s325 = scalar_select %p324, %s321, 1
      %s326 = smul.addr %s323, 2
      %s327 = sadd.s32 %s325, %s326
      %s328 = smul.addr %s327, 4
      %s329 = scalar_lea.vmem %s5, %s328
      %s330 = smul.u32 2, %s21
      %p331 = scmp.lt.s32.totalorder %s20, 1
      %s332 = scalar_select %p331, %s20, 1
      %p333 = scmp.lt.s32.totalorder %s330, 1
      %s334 = scalar_select %p333, %s330, 1
      %s335 = smul.addr %s332, 2
      %s336 = sadd.s32 %s334, %s335
      %s337 = smul.addr %s336, 4
      %s338 = scalar_lea.vmem %s0, %s337
      %s339 = smul.u32 2, %s21
      %s340 = smul.u32 %s21, 2
      %s341 = ssub.s32 %s340, 1
      %p342 = scmp.gt.s32.totalorder %s341, 0
      %s343 = scalar_select %p342, %s341, 0
      %p344 = scmp.lt.s32.totalorder %s20, 1
      %s345 = scalar_select %p344, %s20, 1
      %p346 = scmp.lt.s32.totalorder %s343, 1
      %s347 = scalar_select %p346, %s343, 1
      %s348 = smul.addr %s345, 2
      %s349 = sadd.s32 %s347, %s348
      %s350 = smul.addr %s349, 4
      %s351 = scalar_lea.vmem %s1, %s350
      %s352 = smul.u32 %s21, 2
      %s353 = ssub.s32 %s352, 1
      %p354 = scmp.gt.s32.totalorder %s353, 0
      %s355 = scalar_select %p354, %s353, 0
      %s356 = sadd.s32 %s21, 1
      %s357 = smul.u32 %s356, 2
      %p358 = scmp.lt.s32.totalorder %s357, 1
      %s359 = scalar_select %p358, %s357, 1
      %p360 = scmp.lt.s32.totalorder %s20, 1
      %s361 = scalar_select %p360, %s20, 1
      %p362 = scmp.lt.s32.totalorder %s359, 1
      %s363 = scalar_select %p362, %s359, 1
      %s364 = smul.addr %s361, 2
      %s365 = sadd.s32 %s363, %s364
      %s366 = smul.addr %s365, 4
      %s367 = scalar_lea.vmem %s2, %s366
      %s368 = sadd.s32 %s21, 1
      %s369 = smul.u32 %s368, 2
      %p370 = scmp.lt.s32.totalorder %s369, 1
      %s371 = scalar_select %p370, %s369, 1
      %s372 = smul.u32 2, %s21
      %p373 = scmp.lt.s32.totalorder %s20, 1
      %s374 = scalar_select %p373, %s20, 1
      %p375 = scmp.lt.s32.totalorder %s372, 1
      %s376 = scalar_select %p375, %s372, 1
      %s377 = smul.addr %s374, 2
      %s378 = sadd.s32 %s376, %s377
      %s379 = smul.addr %s378, 4
      %s380 = scalar_lea.vmem %s5, %s379
      %s381 = smul.u32 2, %s21
      %v383 = vld [vmem:[%s338] sm:$0xf]
      %v384 = vld [vmem:[%s338 + $0x4] sm:$0xf]
      %v385 = vld [vmem:[%s351] sm:$0xf]
      %v386 = vld [vmem:[%s367] sm:$0xf]
      %p387 = scmp.gt.s32.totalorder %s21, 0
      %s388 = scalar_select %p387, 1.0, 0.0
      %p390 = scmp.ne.f32.partialorder %s388, %s388
      %s391 = sshrl.u32 %s388, 16
      %s392 = sand.u32 %s391, 1
      %s393 = sadd.s32 32767, %s392
      %s394 = sadd.s32 %s388, %s393
      %s395 = sand.u32 %s394, 4294901760
      %s396 = scalar_select %p390, 2143289344, %s395
      %s398 = sshrl.u32 %s396, 16
      %p399 = scmp.lt.s32.totalorder %s21, 0
      %s400 = scalar_select %p399, 1.0, 0.0
      %p402 = scmp.ne.f32.partialorder %s400, %s400
      %s403 = sshrl.u32 %s400, 16
      %s404 = sand.u32 %s403, 1
      %s405 = sadd.s32 32767, %s404
      %s406 = sadd.s32 %s400, %s405
      %s407 = sand.u32 %s406, 4294901760
      %s408 = scalar_select %p402, 2143289344, %s407
      %s410 = sshrl.u32 %s408, 16
      %s411 = sshll.u32 %s398, 16
      %s412 = sor.u32 %s398, %s411
      %v413 = vstv %s412
      %v415 = vmul.bf16 %v385, %v413
      %s416 = sshll.u32 %s410, 16
      %s417 = sor.u32 %s410, %s416
      %v418 = vstv %s417
      %v420 = vmul.bf16 %v386, %v418
      %v421 = vld [vmem:[%s3] sm:$0xf]
      %v422 = vld [vmem:[%s3 + $0x4] sm:$0xf]
      %v423 = vld [vmem:[%s3 + $0x8] sm:$0xf]
      %v424 = vld [vmem:[%s3 + $0xc] sm:$0xf]
      %v425 = vld [vmem:[%s3 + $0x10] sm:$0xf]
      %v426 = vld [vmem:[%s3 + $0x14] sm:$0xf]
      %v427 = vld [vmem:[%s4] sm:$0x1]
      %v429 = vunpack.c.l.b16 %v415
      %v430 = vpack.c.b16 %v429, %v429
      %v432 = vshrl.u32 %v430, 16
      %v434 = vrot.slane %v432, 3
      %v438 = vunpack.c.l.b16 %v383
      %v439 = vunpack.c.l.b16 %v384
      %v440 = vpack.c.b16 %v439, %v438
      %v442 = vshrl.u32 %v440, 16
      %v444 = vrot.slane %v442, 7
      %v445 = vshll.u32 %v440, 16
      %v447 = vor.u32 %v444, %v445
      %vm449 = vcmask 1040384
      %vm450 = vsmask.f32 256
      %vm451 = vmand %vm449, %vm450
      %v452 = vsel %vm451, %v434, %v447
      %v453 = vrot.slane %v445, 1
      %v454 = vor.u32 %v442, %v453
      %v457 = vunpack.c.l.b16 %v420
      %v458 = vpack.c.b16 %v457, %v457
      %v460 = vshll.u32 %v458, 16
      %v462 = vrot.slane %v460, 1
      %vm464 = vcmask 1047552
      %vm465 = vsmask.f32 7424
      %vm466 = vmand %vm464, %vm465
      %v467 = vsel %vm466, %v454, %v462
      %v470 = vunpack.c.l.b16 %v423
      %v471 = vunpack.c.l.b16 %v424
      %v472 = vpack.c.b16 %v471, %v470
      %vm474 = vcmask 130048
      %v475 = vsel %vm474, %v440, 0
      %477 = vmatprep.subr.bf16.mxu0 0
      %478 = vmatpush1.bf16.msra.mxu0 %v472
      %479 = vmatprep.subr.bf16.mxu0 0
      %480 = vmatpush1.bf16.msra.mxu0 0
      %481 = vmatprep.subr.bf16.mxu0 0
      %482 = vmatpush1.bf16.msra.mxu0 0
      %483 = vmatprep.subr.bf16.mxu0 0
      %484 = vmatpush1.bf16.msra.mxu0 0
      %485 = vmatprep.subr.bf16.mxu0 0
      %486 = vmatpush1.bf16.msra.mxu0 0
      %487 = vmatprep.subr.bf16.mxu0 0
      %488 = vmatpush1.bf16.msra.mxu0 0
      %489 = vmatprep.subr.bf16.mxu0 0
      %490 = vmatpush1.bf16.msra.mxu0 0
      %491 = vmatprep.subr.bf16.mxu0 0
      %492 = vmatpush1.bf16.msra.mxu0 0
      %493 = vmatprep.subr.bf16.mxu0 0
      %494 = vmatpush1.bf16.msra.mxu0 0
      %495 = vmatprep.subr.bf16.mxu0 0
      %496 = vmatpush1.bf16.msra.mxu0 0
      %497 = vmatprep.subr.bf16.mxu0 0
      %498 = vmatpush1.bf16.msra.mxu0 0
      %499 = vmatprep.subr.bf16.mxu0 0
      %500 = vmatpush1.bf16.msra.mxu0 0
      %501 = vmatprep.subr.bf16.mxu0 0
      %502 = vmatpush1.bf16.msra.mxu0 0
      %503 = vmatprep.subr.bf16.mxu0 0
      %504 = vmatpush1.bf16.msra.mxu0 0
      %505 = vmatprep.subr.bf16.mxu0 0
      %506 = vmatpush1.bf16.msra.mxu0 0
      %507 = vmatprep.subr.bf16.mxu0 0
      %508 = vmatpush1.bf16.msra.mxu0 0
      %509 = vmatprep.mubr.bf16.mxu0 0
      %510 = vmatmul.mubr.bf16.gmra.mrb[0].mxu0 %v475
      %v511 = vpop.f32.mrb[0].mxu0
      %v512 = vadd.f32 0.0, %v511
      %v513 = vpop.f32.mrb[0].mxu0
      %v514 = vpop.f32.mrb[0].mxu0
      %v515 = vadd.f32 0.0, %v514
      %v516 = vpop.f32.mrb[0].mxu0
      %517 = vdwg.mxu0
      %v520 = vunpack.c.l.b16 %v421
      %v521 = vunpack.c.l.b16 %v422
      %v522 = vpack.c.b16 %v521, %v520
      %v525 = vsel %vm474, %v452, 0
      %527 = vmatprep.subr.bf16.mxu0 0
      %528 = vmatpush1.bf16.msra.mxu0 %v522
      %529 = vmatprep.subr.bf16.mxu0 0
      %530 = vmatpush1.bf16.msra.mxu0 0
      %531 = vmatprep.subr.bf16.mxu0 0
      %532 = vmatpush1.bf16.msra.mxu0 0
      %533 = vmatprep.subr.bf16.mxu0 0
      %534 = vmatpush1.bf16.msra.mxu0 0
      %535 = vmatprep.subr.bf16.mxu0 0
      %536 = vmatpush1.bf16.msra.mxu0 0
      %537 = vmatprep.subr.bf16.mxu0 0
      %538 = vmatpush1.bf16.msra.mxu0 0
      %539 = vmatprep.subr.bf16.mxu0 0
      %540 = vmatpush1.bf16.msra.mxu0 0
      %541 = vmatprep.subr.bf16.mxu0 0
      %542 = vmatpush1.bf16.msra.mxu0 0
      %543 = vmatprep.subr.bf16.mxu0 0
      %544 = vmatpush1.bf16.msra.mxu0 0
      %545 = vmatprep.subr.bf16.mxu0 0
      %546 = vmatpush1.bf16.msra.mxu0 0
      %547 = vmatprep.subr.bf16.mxu0 0
      %548 = vmatpush1.bf16.msra.mxu0 0
      %549 = vmatprep.subr.bf16.mxu0 0
      %550 = vmatpush1.bf16.msra.mxu0 0
      %551 = vmatprep.subr.bf16.mxu0 0
      %552 = vmatpush1.bf16.msra.mxu0 0
      %553 = vmatprep.subr.bf16.mxu0 0
      %554 = vmatpush1.bf16.msra.mxu0 0
      %555 = vmatprep.subr.bf16.mxu0 0
      %556 = vmatpush1.bf16.msra.mxu0 0
      %557 = vmatprep.subr.bf16.mxu0 0
      %558 = vmatpush1.bf16.msra.mxu0 0
      %559 = vmatprep.mubr.bf16.mxu0 0
      %560 = vmatmul.mubr.bf16.gmra.mrb[0].mxu0 %v525
      %v561 = vpop.f32.mrb[0].mxu0
      %v562 = vadd.f32 %v512, %v561
      %v563 = vpop.f32.mrb[0].mxu0
      %v564 = vpop.f32.mrb[0].mxu0
      %v565 = vadd.f32 %v515, %v564
      %v566 = vpop.f32.mrb[0].mxu0
      %567 = vdwg.mxu0
      %v570 = vunpack.c.l.b16 %v425
      %v571 = vunpack.c.l.b16 %v426
      %v572 = vpack.c.b16 %v571, %v570
      %v575 = vsel %vm474, %v467, 0
      %577 = vmatprep.subr.bf16.mxu0 0
      %578 = vmatpush1.bf16.msra.mxu0 %v572
      %579 = vmatprep.subr.bf16.mxu0 0
      %580 = vmatpush1.bf16.msra.mxu0 0
      %581 = vmatprep.subr.bf16.mxu0 0
      %582 = vmatpush1.bf16.msra.mxu0 0
      %583 = vmatprep.subr.bf16.mxu0 0
      %584 = vmatpush1.bf16.msra.mxu0 0
      %585 = vmatprep.subr.bf16.mxu0 0
      %586 = vmatpush1.bf16.msra.mxu0 0
      %587 = vmatprep.subr.bf16.mxu0 0
      %588 = vmatpush1.bf16.msra.mxu0 0
      %589 = vmatprep.subr.bf16.mxu0 0
      %590 = vmatpush1.bf16.msra.mxu0 0
      %591 = vmatprep.subr.bf16.mxu0 0
      %592 = vmatpush1.bf16.msra.mxu0 0
      %593 = vmatprep.subr.bf16.mxu0 0
      %594 = vmatpush1.bf16.msra.mxu0 0
      %595 = vmatprep.subr.bf16.mxu0 0
      %596 = vmatpush1.bf16.msra.mxu0 0
      %597 = vmatprep.subr.bf16.mxu0 0
      %598 = vmatpush1.bf16.msra.mxu0 0
      %599 = vmatprep.subr.bf16.mxu0 0
      %600 = vmatpush1.bf16.msra.mxu0 0
      %601 = vmatprep.subr.bf16.mxu0 0
      %602 = vmatpush1.bf16.msra.mxu0 0
      %603 = vmatprep.subr.bf16.mxu0 0
      %604 = vmatpush1.bf16.msra.mxu0 0
      %605 = vmatprep.subr.bf16.mxu0 0
      %606 = vmatpush1.bf16.msra.mxu0 0
      %607 = vmatprep.subr.bf16.mxu0 0
      %608 = vmatpush1.bf16.msra.mxu0 0
      %609 = vmatprep.mubr.bf16.mxu0 0
      %610 = vmatmul.mubr.bf16.gmra.mrb[0].mxu0 %v575
      %v611 = vpop.f32.mrb[0].mxu0
      %v612 = vadd.f32 0.0, %v611
      %v613 = vpop.f32.mrb[0].mxu0
      %v614 = vpop.f32.mrb[0].mxu0
      %v615 = vadd.f32 0.0, %v614
      %v616 = vpop.f32.mrb[0].mxu0
      %617 = vdwg.mxu0
      %v618 = vadd.f32 %v562, %v612
      %v619 = vadd.f32 %v565, %v615
      %v621 = vlaneseq
      %v622 = vshrl.u32 %v621, 7
      %v623 = vsub.s32 0, %v622
      %v624 = vrot.slane %v427, %v623
      %v626 = vadd.f32 %v618, %v624
      %v627 = vadd.f32 %v619, %v624
      %v628 = vpack.c.bf16 %v627, %v626
      %v630 = vunpack.c.l.b16 %v628
      %v631 = vunpack.c.h.b16 %v628
      %v632 = vpack.c.b16 %v630, %v630
      %v633 = vpack.c.b16 %v631, %v631
      %vm636 = vcmask 125952
      %637 = vst.msk [vmem:[%s380] sm:$0xf] %vm636, %v632
      %638 = vst.msk [vmem:[%s380 + $0x4] sm:$0xf] %vm636, %v633
      %s639 = smul.u32 2, %s21
      %p640 = scmp.lt.s32.totalorder %s20, 1
      %s641 = scalar_select %p640, %s20, 1
      %p642 = scmp.lt.s32.totalorder %s639, 1
      %s643 = scalar_select %p642, %s639, 1
      %s644 = smul.addr %s641, 2
      %s645 = sadd.s32 %s643, %s644
      %s646 = smul.addr %s645, 4
      %s647 = scalar_lea.vmem %s5, %s646
      // Predicated region
      $region41: #{rrdbnet_forward.16} parent=39 // pred_check
        %p648 = pneg %p190
      $region42: #{rrdbnet_forward.16} parent=39 // pred_check_branch
        %650 = sbr.rel (%p648) target = $region44
      $region43: #{rrdbnet_forward.16} parent=39 // pred_region
        %s651 = smul.u32 2, %s21
      $region44: #{rrdbnet_forward.16} parent=39 // pred_fallthru
        _
    $region40: #{rrdbnet_forward.16} parent=5 // pred_fallthru
      _
    %p652 = scmp.le.s32.totalorder 2, %s11
    // Predicated region
    $region45: #{rrdbnet_forward.16} parent=5 // pred_check
      %p653 = pneg %p652
    $region46: #{rrdbnet_forward.16} parent=5 // pred_check_branch
      %655 = sbr.rel (%p653) target = $region48
    $region47: #{rrdbnet_forward.16} parent=5 // pred_region
      %s656 = ssub.s32 %s11, 2
      // Predicated region
      $region49: #{rrdbnet_forward.16} parent=47 // pred_check
        %p657 = pneg %p196
      $region50: #{rrdbnet_forward.16} parent=47 // pred_check_branch
        %659 = sbr.rel (%p657) target = $region52
      $region51: #{rrdbnet_forward.16} parent=47 // pred_region
        %s660 = smul.u32 2, %s23
        %p661 = scmp.lt.s32.totalorder %s22, 1
        %s662 = scalar_select %p661, %s22, 1
        %p663 = scmp.lt.s32.totalorder %s660, 1
        %s664 = scalar_select %p663, %s660, 1
        %s665 = smul.addr %s662, 2
        %s666 = sadd.s32 %s664, %s665
        %s667 = smul.addr %s666, 4
        %s668 = scalar_lea.vmem %s5, %s667
      $region52: #{rrdbnet_forward.16} parent=47 // pred_fallthru
        _
    $region48: #{rrdbnet_forward.16} parent=5 // pred_fallthru
      _
  $region6: #{rrdbnet_forward.16} parent=0 // loop_footer
    %s15 = sadd.s32 1, %s11
  $region7: #{rrdbnet_forward.16} parent=0 // loop_footer_branch
    %10 = sbr.rel target = $region3
  $region8: #{rrdbnet_forward.16} parent=0 // loop_exit
    _

// kernel: rrdbnet_forward.17
$region0: #{rrdbnet_forward.17}
  #allocation0 [shape = 'u32[]', space=smem, size = 0x4, offset = 0x4, fixed_abs, tag = 'smem constant byte address 0x4 - core index']
  #allocation1 [shape = 'u32[144,128]{1,0:T(1,128)}', space=vmem, size = 0x12000, scoped, tag = 'internal scratch']
  %s0 = inlined_call_operand.vmem [shape: bf16[2,32,16], index: 0, kind: input, shape index: {}, may-alias: {0,1,2}]
  %s1 = inlined_call_operand.vmem [shape: bf16[2,32,16], index: 1, kind: input, shape index: {}, may-alias: {0,1,2}]
  %s2 = inlined_call_operand.vmem [shape: bf16[2,32,16], index: 2, kind: input, shape index: {}, may-alias: {0,1,2}]
  %s3 = inlined_call_operand.vmem [shape: bf16[3,16,16], index: 3, kind: input, shape index: {}]
  %s4 = inlined_call_operand.vmem [shape: f32[1,16], index: 4, kind: input, shape index: {}]
  %s5 = inlined_call_operand.vmem [shape: bf16[2,32,16], index: 5, kind: output, shape index: {}]
  %s6 = sld [smem:[#allocation0]]
  $region53: #{rrdbnet_forward.17} parent=0
    _
  %s8 = ssub.s32 1, %s6
  %s9 = scalar_select 0, %s8, %s6
  loop: start=0, step=1, limit=4
  $region2: #{rrdbnet_forward.17} parent=0 // loop_pre_header
    _
  $region3: #{rrdbnet_forward.17} parent=0 // loop_header
    %s11 = sphi 0, %s15
    %p12 = scmp.ge.s32.totalorder %s11, 4
    %s18 = sphi 0, %s30
    %s19 = sphi 0, %s26
    %s20 = sphi 0, %s18
    %s21 = sphi 0, %s19
    %s22 = sphi 0, %s20
    %s23 = sphi 0, %s21
    %s35 = sphi 0, %s37
    %s38 = sphi 0, %s35
    %s39 = sphi 0, %s38
    %s55 = sphi 0, %s39
    %s71 = sphi 0, %s73
    %s74 = sphi 0, %s71
    %s75 = sphi 0, %s74
    %s91 = sphi 0, %s75
    %s107 = sphi 0, %s109
    %s110 = sphi 0, %s107
    %s111 = sphi 0, %s110
    %s127 = sphi 0, %s111
    %s131 = sphi 0, %s131
    %s133 = sphi 0, %s131
    %s134 = sphi 0, %s133
    %s148 = sphi 0, %s134
    %s152 = sphi 0, %s152
    %s154 = sphi 0, %s152
    %s155 = sphi 0, %s154
    %s169 = sphi 0, %s155
    %s177 = sphi 0, %s179
    %s180 = sphi 0, %s177
    %s181 = sphi 0, %s180
    %s197 = sphi 0, %s181
  $region4: #{rrdbnet_forward.17} parent=0 // loop_header_branch
    %14 = sbr.rel (%p12) target = $region8
  $region5: #{rrdbnet_forward.17} parent=0 // loop_body
    %s16 = ssub.s32 %s11, 1
    %s17 = ssub.s32 %s11, 2
    %s24 = sadd.s32 1, %s19
    %p25 = scmp.ge.s32.totalorder %s24, 1
    %s26 = scalar_select %p25, 0, %s24
    %s27 = sadd.s32 1, %s18
    %s28 = scalar_select %p25, %s27, %s18
    %p29 = scmp.ge.s32.totalorder %s28, 2
    %s30 = scalar_select %p29, 0, %s28
    %s31 = ssub.s32 %s18, %s30
    %s32 = ssub.s32 %s19, %s26
    %s33 = sor.u32 %s31, %s32
    %p34 = scmp.eq.s32.totalorder %s33, 0
    %s36 = sadd.s32 %s35, 1
    %s37 = scalar_select %p34, %s35, %s36
    %p40 = pneg %p34
    %p41 = scmp.eq.s32.totalorder %s11, 1
    %p42 = por %p40, %p41
    %p43 = scmp.ne.s32.totalorder %s35, %s38
    %p44 = scmp.eq.s32.totalorder %s11, 0
    %p45 = por %p43, %p44
    %p46 = scmp.ne.s32.totalorder %s35, %s38
    %p47 = scmp.eq.s32.totalorder %s16, 1
    %p48 = por %p46, %p47
    %p49 = scmp.ne.s32.totalorder %s38, %s39
    %p50 = scmp.eq.s32.totalorder %s16, 0
    %p51 = por %p49, %p50
    %p52 = scmp.ne.s32.totalorder %s38, %s39
    %p53 = scmp.eq.s32.totalorder %s17, 1
    %p54 = por %p52, %p53
    %p56 = scmp.ne.s32.totalorder %s39, %s55
    %p57 = scmp.eq.s32.totalorder %s17, 0
    %p58 = por %p56, %p57
    %s59 = smul.u32 %s19, 4
    %s60 = ssub.s32 %s59, 1
    %p61 = scmp.gt.s32.totalorder %s60, 0
    %s62 = scalar_select %p61, %s60, 0
    %s63 = smul.u32 %s26, 4
    %s64 = ssub.s32 %s63, 1
    %p65 = scmp.gt.s32.totalorder %s64, 0
    %s66 = scalar_select %p65, %s64, 0
    %s67 = ssub.s32 %s18, %s30
    %s68 = ssub.s32 %s62, %s66
    %s69 = sor.u32 %s67, %s68
    %p70 = scmp.eq.s32.totalorder %s69, 0
    %s72 = sadd.s32 %s71, 1
    %s73 = scalar_select %p70, %s71, %s72
    %p76 = pneg %p70
    %p77 = scmp.eq.s32.totalorder %s11, 1
    %p78 = por %p76, %p77
    %p79 = scmp.ne.s32.totalorder %s71, %s74
    %p80 = scmp.eq.s32.totalorder %s11, 0
    %p81 = por %p79, %p80
    %p82 = scmp.ne.s32.totalorder %s71, %s74
    %p83 = scmp.eq.s32.totalorder %s16, 1
    %p84 = por %p82, %p83
    %p85 = scmp.ne.s32.totalorder %s74, %s75
    %p86 = scmp.eq.s32.totalorder %s16, 0
    %p87 = por %p85, %p86
    %p88 = scmp.ne.s32.totalorder %s74, %s75
    %p89 = scmp.eq.s32.totalorder %s17, 1
    %p90 = por %p88, %p89
    %p92 = scmp.ne.s32.totalorder %s75, %s91
    %p93 = scmp.eq.s32.totalorder %s17, 0
    %p94 = por %p92, %p93
    %s95 = sadd.s32 %s19, 1
    %s96 = smul.u32 %s95, 4
    %p97 = scmp.lt.s32.totalorder %s96, 3
    %s98 = scalar_select %p97, %s96, 3
    %s99 = sadd.s32 %s26, 1
    %s100 = smul.u32 %s99, 4
    %p101 = scmp.lt.s32.totalorder %s100, 3
    %s102 = scalar_select %p101, %s100, 3
    %s103 = ssub.s32 %s18, %s30
    %s104 = ssub.s32 %s98, %s102
    %s105 = sor.u32 %s103, %s104
    %p106 = scmp.eq.s32.totalorder %s105, 0
    %s108 = sadd.s32 %s107, 1
    %s109 = scalar_select %p106, %s107, %s108
    %p112 = pneg %p106
    %p113 = scmp.eq.s32.totalorder %s11, 1
    %p114 = por %p112, %p113
    %p115 = scmp.ne.s32.totalorder %s107, %s110
    %p116 = scmp.eq.s32.totalorder %s11, 0
    %p117 = por %p115, %p116
    %p118 = scmp.ne.s32.totalorder %s107, %s110
    %p119 = scmp.eq.s32.totalorder %s16, 1
    %p120 = por %p118, %p119
    %p121 = scmp.ne.s32.totalorder %s110, %s111
    %p122 = scmp.eq.s32.totalorder %s16, 0
    %p123 = por %p121, %p122
    %p124 = scmp.ne.s32.totalorder %s110, %s111
    %p125 = scmp.eq.s32.totalorder %s17, 1
    %p126 = por %p124, %p125
    %p128 = scmp.ne.s32.totalorder %s111, %s127
    %p129 = scmp.eq.s32.totalorder %s17, 0
    %p130 = por %p128, %p129
    %s132 = sadd.s32 %s131, 1
    %p135 = scmp.eq.s32.totalorder %s11, 1
    %p136 = scmp.ne.s32.totalorder %s131, %s133
    %p137 = scmp.eq.s32.totalorder %s11, 0
    %p138 = por %p136, %p137
    %p139 = scmp.ne.s32.totalorder %s131, %s133
    %p140 = scmp.eq.s32.totalorder %s16, 1
    %p141 = por %p139, %p140
    %p142 = scmp.ne.s32.totalorder %s133, %s134
    %p143 = scmp.eq.s32.totalorder %s16, 0
    %p144 = por %p142, %p143
    %p145 = scmp.ne.s32.totalorder %s133, %s134
    %p146 = scmp.eq.s32.totalorder %s17, 1
    %p147 = por %p145, %p146
    %p149 = scmp.ne.s32.totalorder %s134, %s148
    %p150 = scmp.eq.s32.totalorder %s17, 0
    %p151 = por %p149, %p150
    %s153 = sadd.s32 %s152, 1
    %p156 = scmp.eq.s32.totalorder %s11, 1
    %p157 = scmp.ne.s32.totalorder %s152, %s154
    %p158 = scmp.eq.s32.totalorder %s11, 0
    %p159 = por %p157, %p158
    %p160 = scmp.ne.s32.totalorder %s152, %s154
    %p161 = scmp.eq.s32.totalorder %s16, 1
    %p162 = por %p160, %p161
    %p163 = scmp.ne.s32.totalorder %s154, %s155
    %p164 = scmp.eq.s32.totalorder %s16, 0
    %p165 = por %p163, %p164
    %p166 = scmp.ne.s32.totalorder %s154, %s155
    %p167 = scmp.eq.s32.totalorder %s17, 1
    %p168 = por %p166, %p167
    %p170 = scmp.ne.s32.totalorder %s155, %s169
    %p171 = scmp.eq.s32.totalorder %s17, 0
    %p172 = por %p170, %p171
    %s173 = ssub.s32 %s18, %s30
    %s174 = ssub.s32 %s19, %s26
    %s175 = sor.u32 %s173, %s174
    %p176 = scmp.eq.s32.totalorder %s175, 0
    %s178 = sadd.s32 %s177, 1
    %s179 = scalar_select %p176, %s177, %s178
    %p182 = pneg %p176
    %p183 = scmp.eq.s32.totalorder %s11, 1
    %p184 = por %p182, %p183
    %p185 = scmp.ne.s32.totalorder %s177, %s180
    %p186 = scmp.eq.s32.totalorder %s11, 0
    %p187 = por %p185, %p186
    %p188 = scmp.ne.s32.totalorder %s177, %s180
    %p189 = scmp.eq.s32.totalorder %s16, 1
    %p190 = por %p188, %p189
    %p191 = scmp.ne.s32.totalorder %s180, %s181
    %p192 = scmp.eq.s32.totalorder %s16, 0
    %p193 = por %p191, %p192
    %p194 = scmp.ne.s32.totalorder %s180, %s181
    %p195 = scmp.eq.s32.totalorder %s17, 1
    %p196 = por %p194, %p195
    %p198 = scmp.ne.s32.totalorder %s181, %s197
    %p199 = scmp.eq.s32.totalorder %s17, 0
    %p200 = por %p198, %p199
    %p201 = scmp.le.s32.totalorder 1, %s11
    %p202 = scmp.lt.s32.totalorder %s11, 3
    %p203 = pnand %p201, %p202
    %p204 = pneg %p203
    // Predicated region
    $region9: #{rrdbnet_forward.17} parent=5 // pred_check
      _
    $region10: #{rrdbnet_forward.17} parent=5 // pred_check_branch
      %206 = sbr.rel (%p203) target = $region12
    $region11: #{rrdbnet_forward.17} parent=5 // pred_region
      %s207 = ssub.s32 %s11, 1
      // Predicated region
      $region13: #{rrdbnet_forward.17} parent=11 // pred_check
        %p208 = pneg %p144
      $region14: #{rrdbnet_forward.17} parent=11 // pred_check_branch
        %210 = sbr.rel (%p208) target = $region16
      $region15: #{rrdbnet_forward.17} parent=11 // pred_region
        _
      $region16: #{rrdbnet_forward.17} parent=11 // pred_fallthru
        _
      // Predicated region
      $region17: #{rrdbnet_forward.17} parent=11 // pred_check
        %p211 = pneg %p165
      $region18: #{rrdbnet_forward.17} parent=11 // pred_check_branch
        %213 = sbr.rel (%p211) target = $region20
      $region19: #{rrdbnet_forward.17} parent=11 // pred_region
        _
      $region20: #{rrdbnet_forward.17} parent=11 // pred_fallthru
        _
    $region12: #{rrdbnet_forward.17} parent=5 // pred_fallthru
      _
    %p214 = scmp.lt.s32.totalorder %s11, 2
    // Predicated region
    $region21: #{rrdbnet_forward.17} parent=5 // pred_check
      %p215 = pneg %p214
    $region22: #{rrdbnet_forward.17} parent=5 // pred_check_branch
      %217 = sbr.rel (%p215) target = $region24
    $region23: #{rrdbnet_forward.17} parent=5 // pred_region
      // Predicated region
      $region25: #{rrdbnet_forward.17} parent=23 // pred_check
        %p218 = pneg %p45
      $region26: #{rrdbnet_forward.17} parent=23 // pred_check_branch
        %220 = sbr.rel (%p218) target = $region28
      $region27: #{rrdbnet_forward.17} parent=23 // pred_region
        %s221 = smul.u32 4, %s19
        %p222 = scmp.lt.s32.totalorder %s18, 1
        %s223 = scalar_select %p222, %s18, 1
        %p224 = scmp.lt.s32.totalorder %s221, 3
        %s225 = scalar_select %p224, %s221, 3
        %s226 = smul.addr %s223, 4
        %s227 = sadd.s32 %s225, %s226
        %s228 = smul.addr %s227, 4
        %s229 = scalar_lea.vmem %s0, %s228
        %s230 = smul.u32 4, %s19
      $region28: #{rrdbnet_forward.17} parent=23 // pred_fallthru
        _
      // Predicated region
      $region29: #{rrdbnet_forward.17} parent=23 // pred_check
        %p231 = pneg %p81
      $region30: #{rrdbnet_forward.17} parent=23 // pred_check_branch
        %233 = sbr.rel (%p231) target = $region32
      $region31: #{rrdbnet_forward.17} parent=23 // pred_region
        %s234 = smul.u32 %s19, 4
        %s235 = ssub.s32 %s234, 1
        %p236 = scmp.gt.s32.totalorder %s235, 0
        %s237 = scalar_select %p236, %s235, 0
        %p238 = scmp.lt.s32.totalorder %s18, 1
        %s239 = scalar_select %p238, %s18, 1
        %p240 = scmp.lt.s32.totalorder %s237, 3
        %s241 = scalar_select %p240, %s237, 3
        %s242 = smul.addr %s239, 4
        %s243 = sadd.s32 %s241, %s242
        %s244 = smul.addr %s243, 4
        %s245 = scalar_lea.vmem %s1, %s244
        %s246 = smul.u32 %s19, 4
        %s247 = ssub.s32 %s246, 1
        %p248 = scmp.gt.s32.totalorder %s247, 0
        %s249 = scalar_select %p248, %s247, 0
      $region32: #{rrdbnet_forward.17} parent=23 // pred_fallthru
        _
      // Predicated region
      $region33: #{rrdbnet_forward.17} parent=23 // pred_check
        %p250 = pneg %p117
      $region34: #{rrdbnet_forward.17} parent=23 // pred_check_branch
        %252 = sbr.rel (%p250) target = $region36
      $region35: #{rrdbnet_forward.17} parent=23 // pred_region
        %s253 = sadd.s32 %s19, 1
        %s254 = smul.u32 %s253, 4
        %p255 = scmp.lt.s32.totalorder %s254, 3
        %s256 = scalar_select %p255, %s254, 3
        %p257 = scmp.lt.s32.totalorder %s18, 1
        %s258 = scalar_select %p257, %s18, 1
        %p259 = scmp.lt.s32.totalorder %s256, 3
        %s260 = scalar_select %p259, %s256, 3
        %s261 = smul.addr %s258, 4
        %s262 = sadd.s32 %s260, %s261
        %s263 = smul.addr %s262, 4
        %s264 = scalar_lea.vmem %s2, %s263
        %s265 = sadd.s32 %s19, 1
        %s266 = smul.u32 %s265, 4
        %p267 = scmp.lt.s32.totalorder %s266, 3
        %s268 = scalar_select %p267, %s266, 3
      $region36: #{rrdbnet_forward.17} parent=23 // pred_fallthru
        _
    $region24: #{rrdbnet_forward.17} parent=5 // pred_fallthru
      _
    %p269 = scmp.le.s32.totalorder 1, %s11
    %p270 = scmp.lt.s32.totalorder %s11, 3
    %p271 = pnand %p269, %p270
    %p272 = pneg %p271
    // Predicated region
    $region37: #{rrdbnet_forward.17} parent=5 // pred_check
      _
    $region38: #{rrdbnet_forward.17} parent=5 // pred_check_branch
      %274 = sbr.rel (%p271) target = $region40
    $region39: #{rrdbnet_forward.17} parent=5 // pred_region
      %s275 = ssub.s32 %s11, 1
      %s276 = smul.u32 4, %s21
      %p277 = scmp.lt.s32.totalorder %s20, 1
      %s278 = scalar_select %p277, %s20, 1
      %p279 = scmp.lt.s32.totalorder %s276, 3
      %s280 = scalar_select %p279, %s276, 3
      %s281 = smul.addr %s278, 4
      %s282 = sadd.s32 %s280, %s281
      %s283 = smul.addr %s282, 4
      %s284 = scalar_lea.vmem %s0, %s283
      %p285 = pneg %p51
      %p286 = pneg %p48
      %s287 = smul.u32 %s21, 4
      %s288 = ssub.s32 %s287, 1
      %p289 = scmp.gt.s32.totalorder %s288, 0
      %s290 = scalar_select %p289, %s288, 0
      %p291 = scmp.lt.s32.totalorder %s20, 1
      %s292 = scalar_select %p291, %s20, 1
      %p293 = scmp.lt.s32.totalorder %s290, 3
      %s294 = scalar_select %p293, %s290, 3
      %s295 = smul.addr %s292, 4
      %s296 = sadd.s32 %s294, %s295
      %s297 = smul.addr %s296, 4
      %s298 = scalar_lea.vmem %s1, %s297
      %p299 = pneg %p87
      %p300 = pneg %p84
      %s301 = sadd.s32 %s21, 1
      %s302 = smul.u32 %s301, 4
      %p303 = scmp.lt.s32.totalorder %s302, 3
      %s304 = scalar_select %p303, %s302, 3
      %p305 = scmp.lt.s32.totalorder %s20, 1
      %s306 = scalar_select %p305, %s20, 1
      %p307 = scmp.lt.s32.totalorder %s304, 3
      %s308 = scalar_select %p307, %s304, 3
      %s309 = smul.addr %s306, 4
      %s310 = sadd.s32 %s308, %s309
      %s311 = smul.addr %s310, 4
      %s312 = scalar_lea.vmem %s2, %s311
      %p313 = pneg %p123
      %p314 = pneg %p120
      %p315 = pneg %p144
      %p316 = pneg %p141
      %p317 = pneg %p165
      %p318 = pneg %p162
      %p319 = pneg %p193
      %p320 = pneg %p190
      %s321 = smul.u32 4, %s21
      %p322 = scmp.lt.s32.totalorder %s20, 1
      %s323 = scalar_select %p322, %s20, 1
      %p324 = scmp.lt.s32.totalorder %s321, 3
      %s325 = scalar_select %p324, %s321, 3
      %s326 = smul.addr %s323, 4
      %s327 = sadd.s32 %s325, %s326
      %s328 = smul.addr %s327, 4
      %s329 = scalar_lea.vmem %s5, %s328
      %s330 = smul.u32 4, %s21
      %p331 = scmp.lt.s32.totalorder %s20, 1
      %s332 = scalar_select %p331, %s20, 1
      %p333 = scmp.lt.s32.totalorder %s330, 3
      %s334 = scalar_select %p333, %s330, 3
      %s335 = smul.addr %s332, 4
      %s336 = sadd.s32 %s334, %s335
      %s337 = smul.addr %s336, 4
      %s338 = scalar_lea.vmem %s0, %s337
      %s339 = smul.u32 4, %s21
      %s340 = smul.u32 %s21, 4
      %s341 = ssub.s32 %s340, 1
      %p342 = scmp.gt.s32.totalorder %s341, 0
      %s343 = scalar_select %p342, %s341, 0
      %p344 = scmp.lt.s32.totalorder %s20, 1
      %s345 = scalar_select %p344, %s20, 1
      %p346 = scmp.lt.s32.totalorder %s343, 3
      %s347 = scalar_select %p346, %s343, 3
      %s348 = smul.addr %s345, 4
      %s349 = sadd.s32 %s347, %s348
      %s350 = smul.addr %s349, 4
      %s351 = scalar_lea.vmem %s1, %s350
      %s352 = smul.u32 %s21, 4
      %s353 = ssub.s32 %s352, 1
      %p354 = scmp.gt.s32.totalorder %s353, 0
      %s355 = scalar_select %p354, %s353, 0
      %s356 = sadd.s32 %s21, 1
      %s357 = smul.u32 %s356, 4
      %p358 = scmp.lt.s32.totalorder %s357, 3
      %s359 = scalar_select %p358, %s357, 3
      %p360 = scmp.lt.s32.totalorder %s20, 1
      %s361 = scalar_select %p360, %s20, 1
      %p362 = scmp.lt.s32.totalorder %s359, 3
      %s363 = scalar_select %p362, %s359, 3
      %s364 = smul.addr %s361, 4
      %s365 = sadd.s32 %s363, %s364
      %s366 = smul.addr %s365, 4
      %s367 = scalar_lea.vmem %s2, %s366
      %s368 = sadd.s32 %s21, 1
      %s369 = smul.u32 %s368, 4
      %p370 = scmp.lt.s32.totalorder %s369, 3
      %s371 = scalar_select %p370, %s369, 3
      %s372 = smul.u32 4, %s21
      %p373 = scmp.lt.s32.totalorder %s20, 1
      %s374 = scalar_select %p373, %s20, 1
      %p375 = scmp.lt.s32.totalorder %s372, 3
      %s376 = scalar_select %p375, %s372, 3
      %s377 = smul.addr %s374, 4
      %s378 = sadd.s32 %s376, %s377
      %s379 = smul.addr %s378, 4
      %s380 = scalar_lea.vmem %s5, %s379
      %s381 = smul.u32 4, %s21
      %v383 = vld [vmem:[%s338] sm:$0xf]
      %v384 = vld [vmem:[%s338 + $0x4] sm:$0xf]
      %v385 = vld [vmem:[%s338 + $0x8] sm:$0xf]
      %v386 = vld [vmem:[%s338 + $0xc] sm:$0xf]
      %v387 = vld [vmem:[%s351] sm:$0xf]
      %v388 = vld [vmem:[%s367] sm:$0xf]
      %p389 = scmp.gt.s32.totalorder %s21, 0
      %s390 = scalar_select %p389, 1.0, 0.0
      %p392 = scmp.ne.f32.partialorder %s390, %s390
      %s393 = sshrl.u32 %s390, 16
      %s394 = sand.u32 %s393, 1
      %s395 = sadd.s32 32767, %s394
      %s396 = sadd.s32 %s390, %s395
      %s397 = sand.u32 %s396, 4294901760
      %s398 = scalar_select %p392, 2143289344, %s397
      %s400 = sshrl.u32 %s398, 16
      %p401 = scmp.lt.s32.totalorder %s21, 0
      %s402 = scalar_select %p401, 1.0, 0.0
      %p404 = scmp.ne.f32.partialorder %s402, %s402
      %s405 = sshrl.u32 %s402, 16
      %s406 = sand.u32 %s405, 1
      %s407 = sadd.s32 32767, %s406
      %s408 = sadd.s32 %s402, %s407
      %s409 = sand.u32 %s408, 4294901760
      %s410 = scalar_select %p404, 2143289344, %s409
      %s412 = sshrl.u32 %s410, 16
      %s413 = sshll.u32 %s400, 16
      %s414 = sor.u32 %s400, %s413
      %v415 = vstv %s414
      %v417 = vmul.bf16 %v387, %v415
      %s418 = sshll.u32 %s412, 16
      %s419 = sor.u32 %s412, %s418
      %v420 = vstv %s419
      %v422 = vmul.bf16 %v388, %v420
      %v423 = vld [vmem:[%s3] sm:$0xf]
      %v424 = vld [vmem:[%s3 + $0x4] sm:$0xf]
      %v425 = vld [vmem:[%s3 + $0x8] sm:$0xf]
      %v426 = vld [vmem:[%s3 + $0xc] sm:$0xf]
      %v427 = vld [vmem:[%s3 + $0x10] sm:$0xf]
      %v428 = vld [vmem:[%s3 + $0x14] sm:$0xf]
      %v429 = vld [vmem:[%s4] sm:$0x1]
      %v431 = vunpack.c.l.b16 %v417
      %v432 = vpack.c.b16 %v431, %v431
      %v434 = vshrl.u32 %v432, 16
      %v436 = vrot.slane %v434, 3
      %v442 = vunpack.c.l.b16 %v383
      %v443 = vunpack.c.l.b16 %v384
      %v444 = vunpack.c.l.b16 %v385
      %v445 = vunpack.c.l.b16 %v386
      %v446 = vpack.c.b16 %v443, %v442
      %v447 = vpack.c.b16 %v445, %v444
      %vm448 = vsmask.f32 256
      %v450 = vshrl.u32 %v446, 16
      %v452 = vrot.slane %v450, 7
      %v453 = vshll.u32 %v446, 16
      %v455 = vor.u32 %v452, %v453
      %v457 = vshrl.u32 %v447, 16
      %v459 = vrot.slane %v457, 7
      %v460 = vshll.u32 %v447, 16
      %v462 = vor.u32 %v459, %v460
      %v463 = vsel %vm448, %v452, %v462
      %vm465 = vcmask 1040384
      %vm466 = vmand %vm465, %vm448
      %v467 = vsel %vm466, %v436, %v455
      %vm468 = vsmask.f32 7424
      %v469 = vrot.slane %v453, 1
      %v470 = vor.u32 %v450, %v469
      %v471 = vrot.slane %v460, 1
      %v472 = vsel %vm468, %v470, %v471
      %v473 = vor.u32 %v457, %v471
      %v476 = vunpack.c.l.b16 %v422
      %v477 = vpack.c.b16 %v476, %v476
      %v479 = vshll.u32 %v477, 16
      %v481 = vrot.slane %v479, 1
      %vm483 = vcmask 1047552
      %vm484 = vmand %vm483, %vm468
      %v485 = vsel %vm484, %v473, %v481
      %v488 = vunpack.c.l.b16 %v425
      %v489 = vunpack.c.l.b16 %v426
      %v490 = vpack.c.b16 %v489, %v488
      %vm492 = vcmask 130048
      %v493 = vsel %vm492, %v446, 0
      %v495 = vsel %vm492, %v447, 0
      %497 = vmatprep.subr.bf16.mxu0 0
      %498 = vmatpush1.bf16.msra.mxu0 %v490
      %499 = vmatprep.subr.bf16.mxu0 0
      %500 = vmatpush1.bf16.msra.mxu0 0
      %501 = vmatprep.subr.bf16.mxu0 0
      %502 = vmatpush1.bf16.msra.mxu0 0
      %503 = vmatprep.subr.bf16.mxu0 0
      %504 = vmatpush1.bf16.msra.mxu0 0
      %505 = vmatprep.subr.bf16.mxu0 0
      %506 = vmatpush1.bf16.msra.mxu0 0
      %507 = vmatprep.subr.bf16.mxu0 0
      %508 = vmatpush1.bf16.msra.mxu0 0
      %509 = vmatprep.subr.bf16.mxu0 0
      %510 = vmatpush1.bf16.msra.mxu0 0
      %511 = vmatprep.subr.bf16.mxu0 0
      %512 = vmatpush1.bf16.msra.mxu0 0
      %513 = vmatprep.subr.bf16.mxu0 0
      %514 = vmatpush1.bf16.msra.mxu0 0
      %515 = vmatprep.subr.bf16.mxu0 0
      %516 = vmatpush1.bf16.msra.mxu0 0
      %517 = vmatprep.subr.bf16.mxu0 0
      %518 = vmatpush1.bf16.msra.mxu0 0
      %519 = vmatprep.subr.bf16.mxu0 0
      %520 = vmatpush1.bf16.msra.mxu0 0
      %521 = vmatprep.subr.bf16.mxu0 0
      %522 = vmatpush1.bf16.msra.mxu0 0
      %523 = vmatprep.subr.bf16.mxu0 0
      %524 = vmatpush1.bf16.msra.mxu0 0
      %525 = vmatprep.subr.bf16.mxu0 0
      %526 = vmatpush1.bf16.msra.mxu0 0
      %527 = vmatprep.subr.bf16.mxu0 0
      %528 = vmatpush1.bf16.msra.mxu0 0
      %529 = vmatprep.mubr.bf16.mxu0 0
      %530 = vmatmul.mubr.bf16.gmra.mrb[0].mxu0 %v493
      %v531 = vpop.f32.mrb[0].mxu0
      %v532 = vadd.f32 0.0, %v531
      %v533 = vpop.f32.mrb[0].mxu0
      %v534 = vpop.f32.mrb[0].mxu0
      %v535 = vadd.f32 0.0, %v534
      %v536 = vpop.f32.mrb[0].mxu0
      %537 = vmatprep.mubr.bf16.mxu0 0
      %538 = vmatmul.mubr.bf16.gmra.mrb[0].mxu0 %v495
      %v539 = vpop.f32.mrb[0].mxu0
      %v540 = vadd.f32 0.0, %v539
      %v541 = vpop.f32.mrb[0].mxu0
      %v542 = vpop.f32.mrb[0].mxu0
      %v543 = vadd.f32 0.0, %v542
      %v544 = vpop.f32.mrb[0].mxu0
      %545 = vdwg.mxu0
      %v548 = vunpack.c.l.b16 %v423
      %v549 = vunpack.c.l.b16 %v424
      %v550 = vpack.c.b16 %v549, %v548
      %v553 = vsel %vm492, %v467, 0
      %v556 = vsel %vm492, %v463, 0
      %558 = vmatprep.subr.bf16.mxu0 0
      %559 = vmatpush1.bf16.msra.mxu0 %v550
      %560 = vmatprep.subr.bf16.mxu0 0
      %561 = vmatpush1.bf16.msra.mxu0 0
      %562 = vmatprep.subr.bf16.mxu0 0
      %563 = vmatpush1.bf16.msra.mxu0 0
      %564 = vmatprep.subr.bf16.mxu0 0
      %565 = vmatpush1.bf16.msra.mxu0 0
      %566 = vmatprep.subr.bf16.mxu0 0
      %567 = vmatpush1.bf16.msra.mxu0 0
      %568 = vmatprep.subr.bf16.mxu0 0
      %569 = vmatpush1.bf16.msra.mxu0 0
      %570 = vmatprep.subr.bf16.mxu0 0
      %571 = vmatpush1.bf16.msra.mxu0 0
      %572 = vmatprep.subr.bf16.mxu0 0
      %573 = vmatpush1.bf16.msra.mxu0 0
      %574 = vmatprep.subr.bf16.mxu0 0
      %575 = vmatpush1.bf16.msra.mxu0 0
      %576 = vmatprep.subr.bf16.mxu0 0
      %577 = vmatpush1.bf16.msra.mxu0 0
      %578 = vmatprep.subr.bf16.mxu0 0
      %579 = vmatpush1.bf16.msra.mxu0 0
      %580 = vmatprep.subr.bf16.mxu0 0
      %581 = vmatpush1.bf16.msra.mxu0 0
      %582 = vmatprep.subr.bf16.mxu0 0
      %583 = vmatpush1.bf16.msra.mxu0 0
      %584 = vmatprep.subr.bf16.mxu0 0
      %585 = vmatpush1.bf16.msra.mxu0 0
      %586 = vmatprep.subr.bf16.mxu0 0
      %587 = vmatpush1.bf16.msra.mxu0 0
      %588 = vmatprep.subr.bf16.mxu0 0
      %589 = vmatpush1.bf16.msra.mxu0 0
      %590 = vmatprep.mubr.bf16.mxu0 0
      %591 = vmatmul.mubr.bf16.gmra.mrb[0].mxu0 %v553
      %v592 = vpop.f32.mrb[0].mxu0
      %v593 = vadd.f32 %v532, %v592
      %v594 = vpop.f32.mrb[0].mxu0
      %v595 = vpop.f32.mrb[0].mxu0
      %v596 = vadd.f32 %v535, %v595
      %v597 = vpop.f32.mrb[0].mxu0
      %598 = vmatprep.mubr.bf16.mxu0 0
      %599 = vmatmul.mubr.bf16.gmra.mrb[0].mxu0 %v556
      %v600 = vpop.f32.mrb[0].mxu0
      %v601 = vadd.f32 %v540, %v600
      %v602 = vpop.f32.mrb[0].mxu0
      %v603 = vpop.f32.mrb[0].mxu0
      %v604 = vadd.f32 %v543, %v603
      %v605 = vpop.f32.mrb[0].mxu0
      %606 = vdwg.mxu0
      %v609 = vunpack.c.l.b16 %v427
      %v610 = vunpack.c.l.b16 %v428
      %v611 = vpack.c.b16 %v610, %v609
      %v614 = vsel %vm492, %v472, 0
      %v617 = vsel %vm492, %v485, 0
      %619 = vmatprep.subr.bf16.mxu0 0
      %620 = vmatpush1.bf16.msra.mxu0 %v611
      %621 = vmatprep.subr.bf16.mxu0 0
      %622 = vmatpush1.bf16.msra.mxu0 0
      %623 = vmatprep.subr.bf16.mxu0 0
      %624 = vmatpush1.bf16.msra.mxu0 0
      %625 = vmatprep.subr.bf16.mxu0 0
      %626 = vmatpush1.bf16.msra.mxu0 0
      %627 = vmatprep.subr.bf16.mxu0 0
      %628 = vmatpush1.bf16.msra.mxu0 0
      %629 = vmatprep.subr.bf16.mxu0 0
      %630 = vmatpush1.bf16.msra.mxu0 0
      %631 = vmatprep.subr.bf16.mxu0 0
      %632 = vmatpush1.bf16.msra.mxu0 0
      %633 = vmatprep.subr.bf16.mxu0 0
      %634 = vmatpush1.bf16.msra.mxu0 0
      %635 = vmatprep.subr.bf16.mxu0 0
      %636 = vmatpush1.bf16.msra.mxu0 0
      %637 = vmatprep.subr.bf16.mxu0 0
      %638 = vmatpush1.bf16.msra.mxu0 0
      %639 = vmatprep.subr.bf16.mxu0 0
      %640 = vmatpush1.bf16.msra.mxu0 0
      %641 = vmatprep.subr.bf16.mxu0 0
      %642 = vmatpush1.bf16.msra.mxu0 0
      %643 = vmatprep.subr.bf16.mxu0 0
      %644 = vmatpush1.bf16.msra.mxu0 0
      %645 = vmatprep.subr.bf16.mxu0 0
      %646 = vmatpush1.bf16.msra.mxu0 0
      %647 = vmatprep.subr.bf16.mxu0 0
      %648 = vmatpush1.bf16.msra.mxu0 0
      %649 = vmatprep.subr.bf16.mxu0 0
      %650 = vmatpush1.bf16.msra.mxu0 0
      %651 = vmatprep.mubr.bf16.mxu0 0
      %652 = vmatmul.mubr.bf16.gmra.mrb[0].mxu0 %v614
      %v653 = vpop.f32.mrb[0].mxu0
      %v654 = vadd.f32 0.0, %v653
      %v655 = vpop.f32.mrb[0].mxu0
      %v656 = vpop.f32.mrb[0].mxu0
      %v657 = vadd.f32 0.0, %v656
      %v658 = vpop.f32.mrb[0].mxu0
      %659 = vmatprep.mubr.bf16.mxu0 0
      %660 = vmatmul.mubr.bf16.gmra.mrb[0].mxu0 %v617
      %v661 = vpop.f32.mrb[0].mxu0
      %v662 = vadd.f32 0.0, %v661
      %v663 = vpop.f32.mrb[0].mxu0
      %v664 = vpop.f32.mrb[0].mxu0
      %v665 = vadd.f32 0.0, %v664
      %v666 = vpop.f32.mrb[0].mxu0
      %667 = vdwg.mxu0
      %v668 = vadd.f32 %v593, %v654
      %v669 = vadd.f32 %v596, %v657
      %v670 = vadd.f32 %v601, %v662
      %v671 = vadd.f32 %v604, %v665
      %v673 = vlaneseq
      %v674 = vshrl.u32 %v673, 7
      %v675 = vsub.s32 0, %v674
      %v676 = vrot.slane %v429, %v675
      %v678 = vadd.f32 %v668, %v676
      %v679 = vadd.f32 %v669, %v676
      %v680 = vadd.f32 %v670, %v676
      %v681 = vadd.f32 %v671, %v676
      %vm682 = vcmp.ge.f32.partialorder %v678, 0.0
      %vm683 = vcmp.ge.f32.partialorder %v679, 0.0
      %vm684 = vcmp.ge.f32.partialorder %v680, 0.0
      %vm685 = vcmp.ge.f32.partialorder %v681, 0.0
      %v686 = vmul.f32 %v678, 0.2
      %v687 = vmul.f32 %v679, 0.2
      %v688 = vmul.f32 %v680, 0.2
      %v689 = vmul.f32 %v681, 0.2
      %v690 = vsel %vm682, %v678, %v686
      %v691 = vsel %vm683, %v679, %v687
      %v692 = vsel %vm684, %v680, %v688
      %v693 = vsel %vm685, %v681, %v689
      %v694 = vpack.c.bf16 %v691, %v690
      %v695 = vpack.c.bf16 %v693, %v692
      %v698 = vunpack.c.l.b16 %v694
      %v699 = vunpack.c.h.b16 %v694
      %v700 = vunpack.c.l.b16 %v695
      %v701 = vunpack.c.h.b16 %v695
      %v702 = vpack.c.b16 %v698, %v698
      %v703 = vpack.c.b16 %v699, %v699
      %v704 = vpack.c.b16 %v700, %v700
      %v705 = vpack.c.b16 %v701, %v701
      %vm710 = vcmask 125952
      %711 = vst.msk [vmem:[%s380] sm:$0xf] %vm710, %v702
      %712 = vst.msk [vmem:[%s380 + $0x4] sm:$0xf] %vm710, %v703
      %713 = vst.msk [vmem:[%s380 + $0x8] sm:$0xf] %vm710, %v704
      %714 = vst.msk [vmem:[%s380 + $0xc] sm:$0xf] %vm710, %v705
      %s715 = smul.u32 4, %s21
      %p716 = scmp.lt.s32.totalorder %s20, 1
      %s717 = scalar_select %p716, %s20, 1
      %p718 = scmp.lt.s32.totalorder %s715, 3
      %s719 = scalar_select %p718, %s715, 3
      %s720 = smul.addr %s717, 4
      %s721 = sadd.s32 %s719, %s720
      %s722 = smul.addr %s721, 4
      %s723 = scalar_lea.vmem %s5, %s722
      // Predicated region
      $region41: #{rrdbnet_forward.17} parent=39 // pred_check
        %p724 = pneg %p190
      $region42: #{rrdbnet_forward.17} parent=39 // pred_check_branch
        %726 = sbr.rel (%p724) target = $region44
      $region43: #{rrdbnet_forward.17} parent=39 // pred_region
        %s727 = smul.u32 4, %s21
      $region44: #{rrdbnet_forward.17} parent=39 // pred_fallthru
        _
    $region40: #{rrdbnet_forward.17} parent=5 // pred_fallthru
      _
    %p728 = scmp.le.s32.totalorder 2, %s11
    // Predicated region
    $region45: #{rrdbnet_forward.17} parent=5 // pred_check
      %p729 = pneg %p728
    $region46: #{rrdbnet_forward.17} parent=5 // pred_check_branch
      %731 = sbr.rel (%p729) target = $region48
    $region47: #{rrdbnet_forward.17} parent=5 // pred_region
      %s732 = ssub.s32 %s11, 2
      // Predicated region
      $region49: #{rrdbnet_forward.17} parent=47 // pred_check
        %p733 = pneg %p196
      $region50: #{rrdbnet_forward.17} parent=47 // pred_check_branch
        %735 = sbr.rel (%p733) target = $region52
      $region51: #{rrdbnet_forward.17} parent=47 // pred_region
        %s736 = smul.u32 4, %s23
        %p737 = scmp.lt.s32.totalorder %s22, 1
        %s738 = scalar_select %p737, %s22, 1
        %p739 = scmp.lt.s32.totalorder %s736, 3
        %s740 = scalar_select %p739, %s736, 3
        %s741 = smul.addr %s738, 4
        %s742 = sadd.s32 %s740, %s741
        %s743 = smul.addr %s742, 4
        %s744 = scalar_lea.vmem %s5, %s743
      $region52: #{rrdbnet_forward.17} parent=47 // pred_fallthru
        _
    $region48: #{rrdbnet_forward.17} parent=5 // pred_fallthru
      _
  $region6: #{rrdbnet_forward.17} parent=0 // loop_footer
    %s15 = sadd.s32 1, %s11
  $region7: #{rrdbnet_forward.17} parent=0 // loop_footer_branch
    %10 = sbr.rel target = $region3
  $region8: #{rrdbnet_forward.17} parent=0 // loop_exit
    _

// kernel: rrdbnet_forward.13
$region0: #{rrdbnet_forward.13}
  #allocation0 [shape = 'u32[]', space=smem, size = 0x4, offset = 0x4, fixed_abs, tag = 'smem constant byte address 0x4 - core index']
  #allocation1 [shape = 'u32[144,128]{1,0:T(1,128)}', space=vmem, size = 0x12000, scoped, tag = 'internal scratch']
  #allocation2 [shape = 'bf16[16,48]{1,0:T(16,128)(2,1)}', space=vmem, size = 0x1000, scoped, tag = 'scratch operand']
  %s0 = inlined_call_operand.vmem [shape: bf16[2,16,16], index: 0, kind: input, shape index: {}]
  %s1 = inlined_call_operand.vmem [shape: bf16[3,16,8], index: 1, kind: input, shape index: {}]
  %s2 = inlined_call_operand.vmem [shape: f32[1,8], index: 2, kind: input, shape index: {}]
  %s3 = inlined_call_operand.vmem [shape: bf16[3,24,8], index: 3, kind: input, shape index: {}]
  %s4 = inlined_call_operand.vmem [shape: f32[1,8], index: 4, kind: input, shape index: {}]
  %s5 = inlined_call_operand.vmem [shape: bf16[3,32,8], index: 5, kind: input, shape index: {}]
  %s6 = inlined_call_operand.vmem [shape: f32[1,8], index: 6, kind: input, shape index: {}]
  %s7 = inlined_call_operand.vmem [shape: bf16[3,40,8], index: 7, kind: input, shape index: {}]
  %s8 = inlined_call_operand.vmem [shape: f32[1,8], index: 8, kind: input, shape index: {}]
  %s9 = inlined_call_operand.vmem [shape: bf16[3,48,16], index: 9, kind: input, shape index: {}]
  %s10 = inlined_call_operand.vmem [shape: f32[1,16], index: 10, kind: input, shape index: {}]
  %s11 = inlined_call_operand.vmem [shape: bf16[2,16,16], index: 11, kind: output, shape index: {}]
  %s12 = sld [smem:[#allocation0]]
  $region77: #{rrdbnet_forward.13} parent=0
    _
  %s14 = ssub.s32 1, %s12
  %s15 = scalar_select 0, %s14, %s12
  loop: start=0, step=1, limit=4
  $region2: #{rrdbnet_forward.13} parent=0 // loop_pre_header
    _
  $region3: #{rrdbnet_forward.13} parent=0 // loop_header
    %s17 = sphi 0, %s21
    %p18 = scmp.ge.s32.totalorder %s17, 4
    %s27 = sphi 0, %s29
    %s30 = sphi 0, %s27
    %s31 = sphi 0, %s30
    %s47 = sphi 0, %s31
    %s51 = sphi 0, %s51
    %s53 = sphi 0, %s51
    %s54 = sphi 0, %s53
    %s68 = sphi 0, %s54
    %s72 = sphi 0, %s72
    %s74 = sphi 0, %s72
    %s75 = sphi 0, %s74
    %s89 = sphi 0, %s75
    %s93 = sphi 0, %s93
    %s95 = sphi 0, %s93
    %s96 = sphi 0, %s95
    %s110 = sphi 0, %s96
    %s114 = sphi 0, %s114
    %s116 = sphi 0, %s114
    %s117 = sphi 0, %s116
    %s131 = sphi 0, %s117
    %s135 = sphi 0, %s135
    %s137 = sphi 0, %s135
    %s138 = sphi 0, %s137
    %s152 = sphi 0, %s138
    %s156 = sphi 0, %s156
    %s158 = sphi 0, %s156
    %s159 = sphi 0, %s158
    %s173 = sphi 0, %s159
    %s177 = sphi 0, %s177
    %s179 = sphi 0, %s177
    %s180 = sphi 0, %s179
    %s194 = sphi 0, %s180
    %s198 = sphi 0, %s198
    %s200 = sphi 0, %s198
    %s201 = sphi 0, %s200
    %s215 = sphi 0, %s201
    %s219 = sphi 0, %s219
    %s221 = sphi 0, %s219
    %s222 = sphi 0, %s221
    %s236 = sphi 0, %s222
    %s240 = sphi 0, %s240
    %s242 = sphi 0, %s240
    %s243 = sphi 0, %s242
    %s257 = sphi 0, %s243
    %s263 = sphi 0, %s265
    %s266 = sphi 0, %s263
    %s267 = sphi 0, %s266
    %s283 = sphi 0, %s267
  $region4: #{rrdbnet_forward.13} parent=0 // loop_header_branch
    %20 = sbr.rel (%p18) target = $region8
  $region5: #{rrdbnet_forward.13} parent=0 // loop_body
    %s22 = ssub.s32 %s17, 1
    %s23 = ssub.s32 %s17, 2
    %s24 = sadd.s32 %s17, 1
    %s25 = ssub.s32 %s17, %s24
    %p26 = scmp.eq.s32.totalorder %s25, 0
    %s28 = sadd.s32 %s27, 1
    %s29 = scalar_select %p26, %s27, %s28
    %p32 = pneg %p26
    %p33 = scmp.eq.s32.totalorder %s17, 1
    %p34 = por %p32, %p33
    %p35 = scmp.ne.s32.totalorder %s27, %s30
    %p36 = scmp.eq.s32.totalorder %s17, 0
    %p37 = por %p35, %p36
    %p38 = scmp.ne.s32.totalorder %s27, %s30
    %p39 = scmp.eq.s32.totalorder %s22, 1
    %p40 = por %p38, %p39
    %p41 = scmp.ne.s32.totalorder %s30, %s31
    %p42 = scmp.eq.s32.totalorder %s22, 0
    %p43 = por %p41, %p42
    %p44 = scmp.ne.s32.totalorder %s30, %s31
    %p45 = scmp.eq.s32.totalorder %s23, 1
    %p46 = por %p44, %p45
    %p48 = scmp.ne.s32.totalorder %s31, %s47
    %p49 = scmp.eq.s32.totalorder %s23, 0
    %p50 = por %p48, %p49
    %s52 = sadd.s32 %s51, 1
    %p55 = scmp.eq.s32.totalorder %s17, 1
    %p56 = scmp.ne.s32.totalorder %s51, %s53
    %p57 = scmp.eq.s32.totalorder %s17, 0
    %p58 = por %p56, %p57
    %p59 = scmp.ne.s32.totalorder %s51, %s53
    %p60 = scmp.eq.s32.totalorder %s22, 1
    %p61 = por %p59, %p60
    %p62 = scmp.ne.s32.totalorder %s53, %s54
    %p63 = scmp.eq.s32.totalorder %s22, 0
    %p64 = por %p62, %p63
    %p65 = scmp.ne.s32.totalorder %s53, %s54
    %p66 = scmp.eq.s32.totalorder %s23, 1
    %p67 = por %p65, %p66
    %p69 = scmp.ne.s32.totalorder %s54, %s68
    %p70 = scmp.eq.s32.totalorder %s23, 0
    %p71 = por %p69, %p70
    %s73 = sadd.s32 %s72, 1
    %p76 = scmp.eq.s32.totalorder %s17, 1
    %p77 = scmp.ne.s32.totalorder %s72, %s74
    %p78 = scmp.eq.s32.totalorder %s17, 0
    %p79 = por %p77, %p78
    %p80 = scmp.ne.s32.totalorder %s72, %s74
    %p81 = scmp.eq.s32.totalorder %s22, 1
    %p82 = por %p80, %p81
    %p83 = scmp.ne.s32.totalorder %s74, %s75
    %p84 = scmp.eq.s32.totalorder %s22, 0
    %p85 = por %p83, %p84
    %p86 = scmp.ne.s32.totalorder %s74, %s75
    %p87 = scmp.eq.s32.totalorder %s23, 1
    %p88 = por %p86, %p87
    %p90 = scmp.ne.s32.totalorder %s75, %s89
    %p91 = scmp.eq.s32.totalorder %s23, 0
    %p92 = por %p90, %p91
    %s94 = sadd.s32 %s93, 1
    %p97 = scmp.eq.s32.totalorder %s17, 1
    %p98 = scmp.ne.s32.totalorder %s93, %s95
    %p99 = scmp.eq.s32.totalorder %s17, 0
    %p100 = por %p98, %p99
    %p101 = scmp.ne.s32.totalorder %s93, %s95
    %p102 = scmp.eq.s32.totalorder %s22, 1
    %p103 = por %p101, %p102
    %p104 = scmp.ne.s32.totalorder %s95, %s96
    %p105 = scmp.eq.s32.totalorder %s22, 0
    %p106 = por %p104, %p105
    %p107 = scmp.ne.s32.totalorder %s95, %s96
    %p108 = scmp.eq.s32.totalorder %s23, 1
    %p109 = por %p107, %p108
    %p111 = scmp.ne.s32.totalorder %s96, %s110
    %p112 = scmp.eq.s32.totalorder %s23, 0
    %p113 = por %p111, %p112
    %s115 = sadd.s32 %s114, 1
    %p118 = scmp.eq.s32.totalorder %s17, 1
    %p119 = scmp.ne.s32.totalorder %s114, %s116
    %p120 = scmp.eq.s32.totalorder %s17, 0
    %p121 = por %p119, %p120
    %p122 = scmp.ne.s32.totalorder %s114, %s116
    %p123 = scmp.eq.s32.totalorder %s22, 1
    %p124 = por %p122, %p123
    %p125 = scmp.ne.s32.totalorder %s116, %s117
    %p126 = scmp.eq.s32.totalorder %s22, 0
    %p127 = por %p125, %p126
    %p128 = scmp.ne.s32.totalorder %s116, %s117
    %p129 = scmp.eq.s32.totalorder %s23, 1
    %p130 = por %p128, %p129
    %p132 = scmp.ne.s32.totalorder %s117, %s131
    %p133 = scmp.eq.s32.totalorder %s23, 0
    %p134 = por %p132, %p133
    %s136 = sadd.s32 %s135, 1
    %p139 = scmp.eq.s32.totalorder %s17, 1
    %p140 = scmp.ne.s32.totalorder %s135, %s137
    %p141 = scmp.eq.s32.totalorder %s17, 0
    %p142 = por %p140, %p141
    %p143 = scmp.ne.s32.totalorder %s135, %s137
    %p144 = scmp.eq.s32.totalorder %s22, 1
    %p145 = por %p143, %p144
    %p146 = scmp.ne.s32.totalorder %s137, %s138
    %p147 = scmp.eq.s32.totalorder %s22, 0
    %p148 = por %p146, %p147
    %p149 = scmp.ne.s32.totalorder %s137, %s138
    %p150 = scmp.eq.s32.totalorder %s23, 1
    %p151 = por %p149, %p150
    %p153 = scmp.ne.s32.totalorder %s138, %s152
    %p154 = scmp.eq.s32.totalorder %s23, 0
    %p155 = por %p153, %p154
    %s157 = sadd.s32 %s156, 1
    %p160 = scmp.eq.s32.totalorder %s17, 1
    %p161 = scmp.ne.s32.totalorder %s156, %s158
    %p162 = scmp.eq.s32.totalorder %s17, 0
    %p163 = por %p161, %p162
    %p164 = scmp.ne.s32.totalorder %s156, %s158
    %p165 = scmp.eq.s32.totalorder %s22, 1
    %p166 = por %p164, %p165
    %p167 = scmp.ne.s32.totalorder %s158, %s159
    %p168 = scmp.eq.s32.totalorder %s22, 0
    %p169 = por %p167, %p168
    %p170 = scmp.ne.s32.totalorder %s158, %s159
    %p171 = scmp.eq.s32.totalorder %s23, 1
    %p172 = por %p170, %p171
    %p174 = scmp.ne.s32.totalorder %s159, %s173
    %p175 = scmp.eq.s32.totalorder %s23, 0
    %p176 = por %p174, %p175
    %s178 = sadd.s32 %s177, 1
    %p181 = scmp.eq.s32.totalorder %s17, 1
    %p182 = scmp.ne.s32.totalorder %s177, %s179
    %p183 = scmp.eq.s32.totalorder %s17, 0
    %p184 = por %p182, %p183
    %p185 = scmp.ne.s32.totalorder %s177, %s179
    %p186 = scmp.eq.s32.totalorder %s22, 1
    %p187 = por %p185, %p186
    %p188 = scmp.ne.s32.totalorder %s179, %s180
    %p189 = scmp.eq.s32.totalorder %s22, 0
    %p190 = por %p188, %p189
    %p191 = scmp.ne.s32.totalorder %s179, %s180
    %p192 = scmp.eq.s32.totalorder %s23, 1
    %p193 = por %p191, %p192
    %p195 = scmp.ne.s32.totalorder %s180, %s194
    %p196 = scmp.eq.s32.totalorder %s23, 0
    %p197 = por %p195, %p196
    %s199 = sadd.s32 %s198, 1
    %p202 = scmp.eq.s32.totalorder %s17, 1
    %p203 = scmp.ne.s32.totalorder %s198, %s200
    %p204 = scmp.eq.s32.totalorder %s17, 0
    %p205 = por %p203, %p204
    %p206 = scmp.ne.s32.totalorder %s198, %s200
    %p207 = scmp.eq.s32.totalorder %s22, 1
    %p208 = por %p206, %p207
    %p209 = scmp.ne.s32.totalorder %s200, %s201
    %p210 = scmp.eq.s32.totalorder %s22, 0
    %p211 = por %p209, %p210
    %p212 = scmp.ne.s32.totalorder %s200, %s201
    %p213 = scmp.eq.s32.totalorder %s23, 1
    %p214 = por %p212, %p213
    %p216 = scmp.ne.s32.totalorder %s201, %s215
    %p217 = scmp.eq.s32.totalorder %s23, 0
    %p218 = por %p216, %p217
    %s220 = sadd.s32 %s219, 1
    %p223 = scmp.eq.s32.totalorder %s17, 1
    %p224 = scmp.ne.s32.totalorder %s219, %s221
    %p225 = scmp.eq.s32.totalorder %s17, 0
    %p226 = por %p224, %p225
    %p227 = scmp.ne.s32.totalorder %s219, %s221
    %p228 = scmp.eq.s32.totalorder %s22, 1
    %p229 = por %p227, %p228
    %p230 = scmp.ne.s32.totalorder %s221, %s222
    %p231 = scmp.eq.s32.totalorder %s22, 0
    %p232 = por %p230, %p231
    %p233 = scmp.ne.s32.totalorder %s221, %s222
    %p234 = scmp.eq.s32.totalorder %s23, 1
    %p235 = por %p233, %p234
    %p237 = scmp.ne.s32.totalorder %s222, %s236
    %p238 = scmp.eq.s32.totalorder %s23, 0
    %p239 = por %p237, %p238
    %s241 = sadd.s32 %s240, 1
    %p244 = scmp.eq.s32.totalorder %s17, 1
    %p245 = scmp.ne.s32.totalorder %s240, %s242
    %p246 = scmp.eq.s32.totalorder %s17, 0
    %p247 = por %p245, %p246
    %p248 = scmp.ne.s32.totalorder %s240, %s242
    %p249 = scmp.eq.s32.totalorder %s22, 1
    %p250 = por %p248, %p249
    %p251 = scmp.ne.s32.totalorder %s242, %s243
    %p252 = scmp.eq.s32.totalorder %s22, 0
    %p253 = por %p251, %p252
    %p254 = scmp.ne.s32.totalorder %s242, %s243
    %p255 = scmp.eq.s32.totalorder %s23, 1
    %p256 = por %p254, %p255
    %p258 = scmp.ne.s32.totalorder %s243, %s257
    %p259 = scmp.eq.s32.totalorder %s23, 0
    %p260 = por %p258, %p259
    %s261 = ssub.s32 %s17, %s24
    %p262 = scmp.eq.s32.totalorder %s261, 0
    %s264 = sadd.s32 %s263, 1
    %s265 = scalar_select %p262, %s263, %s264
    %p268 = pneg %p262
    %p269 = scmp.eq.s32.totalorder %s17, 1
    %p270 = por %p268, %p269
    %p271 = scmp.ne.s32.totalorder %s263, %s266
    %p272 = scmp.eq.s32.totalorder %s17, 0
    %p273 = por %p271, %p272
    %p274 = scmp.ne.s32.totalorder %s263, %s266
    %p275 = scmp.eq.s32.totalorder %s22, 1
    %p276 = por %p274, %p275
    %p277 = scmp.ne.s32.totalorder %s266, %s267
    %p278 = scmp.eq.s32.totalorder %s22, 0
    %p279 = por %p277, %p278
    %p280 = scmp.ne.s32.totalorder %s266, %s267
    %p281 = scmp.eq.s32.totalorder %s23, 1
    %p282 = por %p280, %p281
    %p284 = scmp.ne.s32.totalorder %s267, %s283
    %p285 = scmp.eq.s32.totalorder %s23, 0
    %p286 = por %p284, %p285
    %p287 = scmp.le.s32.totalorder 1, %s17
    %p288 = scmp.lt.s32.totalorder %s17, 3
    %p289 = pnand %p287, %p288
    %p290 = pneg %p289
    // Predicated region
    $region9: #{rrdbnet_forward.13} parent=5 // pred_check
      _
    $region10: #{rrdbnet_forward.13} parent=5 // pred_check_branch
      %292 = sbr.rel (%p289) target = $region12
    $region11: #{rrdbnet_forward.13} parent=5 // pred_region
      %s293 = ssub.s32 %s17, 1
      // Predicated region
      $region13: #{rrdbnet_forward.13} parent=11 // pred_check
        %p294 = pneg %p64
      $region14: #{rrdbnet_forward.13} parent=11 // pred_check_branch
        %296 = sbr.rel (%p294) target = $region16
      $region15: #{rrdbnet_forward.13} parent=11 // pred_region
        _
      $region16: #{rrdbnet_forward.13} parent=11 // pred_fallthru
        _
      // Predicated region
      $region17: #{rrdbnet_forward.13} parent=11 // pred_check
        %p297 = pneg %p85
      $region18: #{rrdbnet_forward.13} parent=11 // pred_check_branch
        %299 = sbr.rel (%p297) target = $region20
      $region19: #{rrdbnet_forward.13} parent=11 // pred_region
        _
      $region20: #{rrdbnet_forward.13} parent=11 // pred_fallthru
        _
      // Predicated region
      $region21: #{rrdbnet_forward.13} parent=11 // pred_check
        %p300 = pneg %p106
      $region22: #{rrdbnet_forward.13} parent=11 // pred_check_branch
        %302 = sbr.rel (%p300) target = $region24
      $region23: #{rrdbnet_forward.13} parent=11 // pred_region
        _
      $region24: #{rrdbnet_forward.13} parent=11 // pred_fallthru
        _
      // Predicated region
      $region25: #{rrdbnet_forward.13} parent=11 // pred_check
        %p303 = pneg %p127
      $region26: #{rrdbnet_forward.13} parent=11 // pred_check_branch
        %305 = sbr.rel (%p303) target = $region28
      $region27: #{rrdbnet_forward.13} parent=11 // pred_region
        _
      $region28: #{rrdbnet_forward.13} parent=11 // pred_fallthru
        _
      // Predicated region
      $region29: #{rrdbnet_forward.13} parent=11 // pred_check
        %p306 = pneg %p148
      $region30: #{rrdbnet_forward.13} parent=11 // pred_check_branch
        %308 = sbr.rel (%p306) target = $region32
      $region31: #{rrdbnet_forward.13} parent=11 // pred_region
        _
      $region32: #{rrdbnet_forward.13} parent=11 // pred_fallthru
        _
      // Predicated region
      $region33: #{rrdbnet_forward.13} parent=11 // pred_check
        %p309 = pneg %p169
      $region34: #{rrdbnet_forward.13} parent=11 // pred_check_branch
        %311 = sbr.rel (%p309) target = $region36
      $region35: #{rrdbnet_forward.13} parent=11 // pred_region
        _
      $region36: #{rrdbnet_forward.13} parent=11 // pred_fallthru
        _
      // Predicated region
      $region37: #{rrdbnet_forward.13} parent=11 // pred_check
        %p312 = pneg %p190
      $region38: #{rrdbnet_forward.13} parent=11 // pred_check_branch
        %314 = sbr.rel (%p312) target = $region40
      $region39: #{rrdbnet_forward.13} parent=11 // pred_region
        _
      $region40: #{rrdbnet_forward.13} parent=11 // pred_fallthru
        _
      // Predicated region
      $region41: #{rrdbnet_forward.13} parent=11 // pred_check
        %p315 = pneg %p211
      $region42: #{rrdbnet_forward.13} parent=11 // pred_check_branch
        %317 = sbr.rel (%p315) target = $region44
      $region43: #{rrdbnet_forward.13} parent=11 // pred_region
        _
      $region44: #{rrdbnet_forward.13} parent=11 // pred_fallthru
        _
      // Predicated region
      $region45: #{rrdbnet_forward.13} parent=11 // pred_check
        %p318 = pneg %p232
      $region46: #{rrdbnet_forward.13} parent=11 // pred_check_branch
        %320 = sbr.rel (%p318) target = $region48
      $region47: #{rrdbnet_forward.13} parent=11 // pred_region
        _
      $region48: #{rrdbnet_forward.13} parent=11 // pred_fallthru
        _
      // Predicated region
      $region49: #{rrdbnet_forward.13} parent=11 // pred_check
        %p321 = pneg %p253
      $region50: #{rrdbnet_forward.13} parent=11 // pred_check_branch
        %323 = sbr.rel (%p321) target = $region52
      $region51: #{rrdbnet_forward.13} parent=11 // pred_region
        _
      $region52: #{rrdbnet_forward.13} parent=11 // pred_fallthru
        _
    $region12: #{rrdbnet_forward.13} parent=5 // pred_fallthru
      _
    %p324 = scmp.lt.s32.totalorder %s17, 2
    // Predicated region
    $region53: #{rrdbnet_forward.13} parent=5 // pred_check
      %p325 = pneg %p324
    $region54: #{rrdbnet_forward.13} parent=5 // pred_check_branch
      %327 = sbr.rel (%p325) target = $region56
    $region55: #{rrdbnet_forward.13} parent=5 // pred_region
      // Predicated region
      $region57: #{rrdbnet_forward.13} parent=55 // pred_check
        %p328 = pneg %p37
      $region58: #{rrdbnet_forward.13} parent=55 // pred_check_branch
        %330 = sbr.rel (%p328) target = $region60
      $region59: #{rrdbnet_forward.13} parent=55 // pred_region
        %p331 = scmp.lt.s32.totalorder %s17, 1
        %s332 = scalar_select %p331, %s17, 1
        %s333 = smul.addr %s332, 2
        %s334 = smul.addr %s333, 4
        %s335 = scalar_lea.vmem %s0, %s334
      $region60: #{rrdbnet_forward.13} parent=55 // pred_fallthru
        _
    $region56: #{rrdbnet_forward.13} parent=5 // pred_fallthru
      _
    %p336 = scmp.le.s32.totalorder 1, %s17
    %p337 = scmp.lt.s32.totalorder %s17, 3
    %p338 = pnand %p336, %p337
    %p339 = pneg %p338
    // Predicated region
    $region61: #{rrdbnet_forward.13} parent=5 // pred_check
      _
    $region62: #{rrdbnet_forward.13} parent=5 // pred_check_branch
      %341 = sbr.rel (%p338) target = $region64
    $region63: #{rrdbnet_forward.13} parent=5 // pred_region
      %s342 = ssub.s32 %s17, 1
      %p343 = scmp.lt.s32.totalorder %s22, 1
      %s344 = scalar_select %p343, %s22, 1
      %s345 = smul.addr %s344, 2
      %s346 = smul.addr %s345, 4
      %s347 = scalar_lea.vmem %s0, %s346
      %p348 = pneg %p43
      %p349 = pneg %p40
      %p350 = pneg %p64
      %p351 = pneg %p61
      %p352 = pneg %p85
      %p353 = pneg %p82
      %p354 = pneg %p106
      %p355 = pneg %p103
      %p356 = pneg %p127
      %p357 = pneg %p124
      %p358 = pneg %p148
      %p359 = pneg %p145
      %p360 = pneg %p169
      %p361 = pneg %p166
      %p362 = pneg %p190
      %p363 = pneg %p187
      %p364 = pneg %p211
      %p365 = pneg %p208
      %p366 = pneg %p232
      %p367 = pneg %p229
      %p368 = pneg %p253
      %p369 = pneg %p250
      %p370 = pneg %p279
      %p371 = pneg %p276
      %p372 = scmp.lt.s32.totalorder %s22, 1
      %s373 = scalar_select %p372, %s22, 1
      %s374 = smul.addr %s373, 2
      %s375 = smul.addr %s374, 4
      %s376 = scalar_lea.vmem %s11, %s375
      %p377 = scmp.lt.s32.totalorder %s22, 1
      %s378 = scalar_select %p377, %s22, 1
      %s379 = smul.addr %s378, 2
      %s380 = smul.addr %s379, 4
      %s381 = scalar_lea.vmem %s0, %s380
      %p382 = scmp.lt.s32.totalorder %s22, 1
      %s383 = scalar_select %p382, %s22, 1
      %s384 = smul.addr %s383, 2
      %s385 = smul.addr %s384, 4
      %s386 = scalar_lea.vmem %s11, %s385
      %v388 = vld [vmem:[%s381] sm:$0xf]
      %v389 = vld [vmem:[%s381 + $0x4] sm:$0xf]
      %v392 = vunpack.c.l.b16 %v388
      %v393 = vunpack.c.l.b16 %v389
      %v394 = vpack.c.b16 %v393, %v392
      %vm396 = vcmask 130048
      %397 = vst.msk [vmem:[#allocation2] sm:$0xff] %vm396, %v394
      %v398 = vld [vmem:[#allocation2] sm:$0xff]
      %v399 = vld [vmem:[%s1] sm:$0xf]
      %v400 = vld [vmem:[%s1 + $0x4] sm:$0xf]
      %v401 = vld [vmem:[%s1 + $0x8] sm:$0xf]
      %v402 = vld [vmem:[%s1 + $0xc] sm:$0xf]
      %v403 = vld [vmem:[%s1 + $0x10] sm:$0xf]
      %v404 = vld [vmem:[%s1 + $0x14] sm:$0xf]
      %v405 = vld [vmem:[%s2] sm:$0x1]
      %v407 = vshrl.u32 %v398, 16
      %v409 = vrot.slane %v407, 7
      %v410 = vshll.u32 %v398, 16
      %v412 = vor.u32 %v409, %v410
      %vm414 = vcmask 1040384
      %vm415 = vsmask.f32 256
      %vm416 = vmand %vm414, %vm415
      %v417 = vsel %vm416, 0, %v412
      %v418 = vrot.slane %v410, 1
      %v419 = vor.u32 %v407, %v418
      %vm421 = vcmask 1047552
      %vm422 = vsmask.f32 7424
      %vm423 = vmand %vm421, %vm422
      %v424 = vsel %vm423, %v419, 0
      %v427 = vunpack.c.l.b16 %v401
      %v428 = vunpack.c.l.b16 %v402
      %v429 = vpack.c.b16 %v428, %v427
      %v431 = vsel %vm396, %v398, 0
      %433 = vmatprep.subr.bf16.mxu0 0
      %434 = vmatpush1.bf16.msra.mxu0 %v429
      %435 = vmatprep.subr.bf16.mxu0 0
      %436 = vmatpush1.bf16.msra.mxu0 0
      %437 = vmatprep.subr.bf16.mxu0 0
      %438 = vmatpush1.bf16.msra.mxu0 0
      %439 = vmatprep.subr.bf16.mxu0 0
      %440 = vmatpush1.bf16.msra.mxu0 0
      %441 = vmatprep.subr.bf16.mxu0 0
      %442 = vmatpush1.bf16.msra.mxu0 0
      %443 = vmatprep.subr.bf16.mxu0 0
      %444 = vmatpush1.bf16.msra.mxu0 0
      %445 = vmatprep.subr.bf16.mxu0 0
      %446 = vmatpush1.bf16.msra.mxu0 0
      %447 = vmatprep.subr.bf16.mxu0 0
      %448 = vmatpush1.bf16.msra.mxu0 0
      %449 = vmatprep.subr.bf16.mxu0 0
      %450 = vmatpush1.bf16.msra.mxu0 0
      %451 = vmatprep.subr.bf16.mxu0 0
      %452 = vmatpush1.bf16.msra.mxu0 0
      %453 = vmatprep.subr.bf16.mxu0 0
      %454 = vmatpush1.bf16.msra.mxu0 0
      %455 = vmatprep.subr.bf16.mxu0 0
      %456 = vmatpush1.bf16.msra.mxu0 0
      %457 = vmatprep.subr.bf16.mxu0 0
      %458 = vmatpush1.bf16.msra.mxu0 0
      %459 = vmatprep.subr.bf16.mxu0 0
      %460 = vmatpush1.bf16.msra.mxu0 0
      %461 = vmatprep.subr.bf16.mxu0 0
      %462 = vmatpush1.bf16.msra.mxu0 0
      %463 = vmatprep.subr.bf16.mxu0 0
      %464 = vmatpush1.bf16.msra.mxu0 0
      %465 = vmatprep.mubr.bf16.mxu0 0
      %466 = vmatmul.mubr.bf16.gmra.mrb[0].mxu0 %v431
      %v467 = vpop.f32.mrb[0].mxu0
      %v468 = vadd.f32 0.0, %v467
      %v469 = vpop.f32.mrb[0].mxu0
      %v470 = vpop.f32.mrb[0].mxu0
      %v471 = vadd.f32 0.0, %v470
      %v472 = vpop.f32.mrb[0].mxu0
      %473 = vdwg.mxu0
      %v476 = vunpack.c.l.b16 %v399
      %v477 = vunpack.c.l.b16 %v400
      %v478 = vpack.c.b16 %v477, %v476
      %v481 = vsel %vm396, %v417, 0
      %483 = vmatprep.subr.bf16.mxu0 0
      %484 = vmatpush1.bf16.msra.mxu0 %v478
      %485 = vmatprep.subr.bf16.mxu0 0
      %486 = vmatpush1.bf16.msra.mxu0 0
      %487 = vmatprep.subr.bf16.mxu0 0
      %488 = vmatpush1.bf16.msra.mxu0 0
      %489 = vmatprep.subr.bf16.mxu0 0
      %490 = vmatpush1.bf16.msra.mxu0 0
      %491 = vmatprep.subr.bf16.mxu0 0
      %492 = vmatpush1.bf16.msra.mxu0 0
      %493 = vmatprep.subr.bf16.mxu0 0
      %494 = vmatpush1.bf16.msra.mxu0 0
      %495 = vmatprep.subr.bf16.mxu0 0
      %496 = vmatpush1.bf16.msra.mxu0 0
      %497 = vmatprep.subr.bf16.mxu0 0
      %498 = vmatpush1.bf16.msra.mxu0 0
      %499 = vmatprep.subr.bf16.mxu0 0
      %500 = vmatpush1.bf16.msra.mxu0 0
      %501 = vmatprep.subr.bf16.mxu0 0
      %502 = vmatpush1.bf16.msra.mxu0 0
      %503 = vmatprep.subr.bf16.mxu0 0
      %504 = vmatpush1.bf16.msra.mxu0 0
      %505 = vmatprep.subr.bf16.mxu0 0
      %506 = vmatpush1.bf16.msra.mxu0 0
      %507 = vmatprep.subr.bf16.mxu0 0
      %508 = vmatpush1.bf16.msra.mxu0 0
      %509 = vmatprep.subr.bf16.mxu0 0
      %510 = vmatpush1.bf16.msra.mxu0 0
      %511 = vmatprep.subr.bf16.mxu0 0
      %512 = vmatpush1.bf16.msra.mxu0 0
      %513 = vmatprep.subr.bf16.mxu0 0
      %514 = vmatpush1.bf16.msra.mxu0 0
      %515 = vmatprep.mubr.bf16.mxu0 0
      %516 = vmatmul.mubr.bf16.gmra.mrb[0].mxu0 %v481
      %v517 = vpop.f32.mrb[0].mxu0
      %v518 = vadd.f32 %v468, %v517
      %v519 = vpop.f32.mrb[0].mxu0
      %v520 = vpop.f32.mrb[0].mxu0
      %v521 = vadd.f32 %v471, %v520
      %v522 = vpop.f32.mrb[0].mxu0
      %523 = vdwg.mxu0
      %v526 = vunpack.c.l.b16 %v403
      %v527 = vunpack.c.l.b16 %v404
      %v528 = vpack.c.b16 %v527, %v526
      %v531 = vsel %vm396, %v424, 0
      %533 = vmatprep.subr.bf16.mxu0 0
      %534 = vmatpush1.bf16.msra.mxu0 %v528
      %535 = vmatprep.subr.bf16.mxu0 0
      %536 = vmatpush1.bf16.msra.mxu0 0
      %537 = vmatprep.subr.bf16.mxu0 0
      %538 = vmatpush1.bf16.msra.mxu0 0
      %539 = vmatprep.subr.bf16.mxu0 0
      %540 = vmatpush1.bf16.msra.mxu0 0
      %541 = vmatprep.subr.bf16.mxu0 0
      %542 = vmatpush1.bf16.msra.mxu0 0
      %543 = vmatprep.subr.bf16.mxu0 0
      %544 = vmatpush1.bf16.msra.mxu0 0
      %545 = vmatprep.subr.bf16.mxu0 0
      %546 = vmatpush1.bf16.msra.mxu0 0
      %547 = vmatprep.subr.bf16.mxu0 0
      %548 = vmatpush1.bf16.msra.mxu0 0
      %549 = vmatprep.subr.bf16.mxu0 0
      %550 = vmatpush1.bf16.msra.mxu0 0
      %551 = vmatprep.subr.bf16.mxu0 0
      %552 = vmatpush1.bf16.msra.mxu0 0
      %553 = vmatprep.subr.bf16.mxu0 0
      %554 = vmatpush1.bf16.msra.mxu0 0
      %555 = vmatprep.subr.bf16.mxu0 0
      %556 = vmatpush1.bf16.msra.mxu0 0
      %557 = vmatprep.subr.bf16.mxu0 0
      %558 = vmatpush1.bf16.msra.mxu0 0
      %559 = vmatprep.subr.bf16.mxu0 0
      %560 = vmatpush1.bf16.msra.mxu0 0
      %561 = vmatprep.subr.bf16.mxu0 0
      %562 = vmatpush1.bf16.msra.mxu0 0
      %563 = vmatprep.subr.bf16.mxu0 0
      %564 = vmatpush1.bf16.msra.mxu0 0
      %565 = vmatprep.mubr.bf16.mxu0 0
      %566 = vmatmul.mubr.bf16.gmra.mrb[0].mxu0 %v531
      %v567 = vpop.f32.mrb[0].mxu0
      %v568 = vadd.f32 0.0, %v567
      %v569 = vpop.f32.mrb[0].mxu0
      %v570 = vpop.f32.mrb[0].mxu0
      %v571 = vadd.f32 0.0, %v570
      %v572 = vpop.f32.mrb[0].mxu0
      %573 = vdwg.mxu0
      %v574 = vadd.f32 %v518, %v568
      %v575 = vadd.f32 %v521, %v571
      %v577 = vlaneseq
      %v578 = vshrl.u32 %v577, 7
      %v579 = vsub.s32 0, %v578
      %v580 = vrot.slane %v405, %v579
      %v582 = vadd.f32 %v574, %v580
      %v583 = vadd.f32 %v575, %v580
      %vm584 = vcmp.ge.f32.partialorder %v582, 0.0
      %vm585 = vcmp.ge.f32.partialorder %v583, 0.0
      %v586 = vmul.f32 %v582, 0.2
      %v587 = vmul.f32 %v583, 0.2
      %v588 = vsel %vm584, %v582, %v586
      %v589 = vsel %vm585, %v583, %v587
      %v590 = vpack.c.bf16 %v589, %v588
      %592 = vrot.lane.b32.xlu0 %v590, 16
      %v593 = vpop.permute.xlu0 %592
      %vm595 = vcmask 195712
      %596 = vst.msk [vmem:[#allocation2] sm:$0xff] %vm595, %v593
      %v597 = vld [vmem:[#allocation2] sm:$0xff]
      %v598 = vld [vmem:[%s3] sm:$0xf]
      %v599 = vld [vmem:[%s3 + $0x4] sm:$0xf]
      %v600 = vld [vmem:[%s3 + $0x8] sm:$0xf]
      %v601 = vld [vmem:[%s3 + $0xc] sm:$0xf]
      %v602 = vld [vmem:[%s3 + $0x10] sm:$0xf]
      %v603 = vld [vmem:[%s3 + $0x14] sm:$0xf]
      %v604 = vld [vmem:[%s3 + $0x18] sm:$0xf]
      %v605 = vld [vmem:[%s3 + $0x1c] sm:$0xf]
      %v606 = vld [vmem:[%s3 + $0x20] sm:$0xf]
      %v607 = vld [vmem:[%s4] sm:$0x1]
      %v609 = vshrl.u32 %v597, 16
      %v611 = vrot.slane %v609, 7
      %v612 = vshll.u32 %v597, 16
      %v614 = vor.u32 %v611, %v612
      %v616 = vsel %vm416, 0, %v614
      %v617 = vrot.slane %v612, 1
      %v618 = vor.u32 %v609, %v617
      %v620 = vsel %vm423, %v618, 0
      %v624 = vunpack.c.l.b16 %v601
      %v625 = vunpack.c.l.b16 %v602
      %v626 = vunpack.c.l.b16 %v603
      %v627 = vpack.c.b16 %v625, %v624
      %v628 = vpack.c.b16 %v626, %v626
      %vm630 = vcmask 195584
      %v631 = vsel %vm630, %v597, 0
      %vm633 = vcmask 1043456
      %v635 = vsel %vm633, %v628, 0
      %637 = vmatprep.subr.bf16.mxu0 0
      %638 = vmatpush1.bf16.msra.mxu0 %v627
      %639 = vmatprep.subr.bf16.mxu0 0
      %640 = vmatpush1.bf16.msra.mxu0 %v635
      %641 = vmatprep.subr.bf16.mxu0 0
      %642 = vmatpush1.bf16.msra.mxu0 0
      %643 = vmatprep.subr.bf16.mxu0 0
      %644 = vmatpush1.bf16.msra.mxu0 0
      %645 = vmatprep.subr.bf16.mxu0 0
      %646 = vmatpush1.bf16.msra.mxu0 0
      %647 = vmatprep.subr.bf16.mxu0 0
      %648 = vmatpush1.bf16.msra.mxu0 0
      %649 = vmatprep.subr.bf16.mxu0 0
      %650 = vmatpush1.bf16.msra.mxu0 0
      %651 = vmatprep.subr.bf16.mxu0 0
      %652 = vmatpush1.bf16.msra.mxu0 0
      %653 = vmatprep.subr.bf16.mxu0 0
      %654 = vmatpush1.bf16.msra.mxu0 0
      %655 = vmatprep.subr.bf16.mxu0 0
      %656 = vmatpush1.bf16.msra.mxu0 0
      %657 = vmatprep.subr.bf16.mxu0 0
      %658 = vmatpush1.bf16.msra.mxu0 0
      %659 = vmatprep.subr.bf16.mxu0 0
      %660 = vmatpush1.bf16.msra.mxu0 0
      %661 = vmatprep.subr.bf16.mxu0 0
      %662 = vmatpush1.bf16.msra.mxu0 0
      %663 = vmatprep.subr.bf16.mxu0 0
      %664 = vmatpush1.bf16.msra.mxu0 0
      %665 = vmatprep.subr.bf16.mxu0 0
      %666 = vmatpush1.bf16.msra.mxu0 0
      %667 = vmatprep.subr.bf16.mxu0 0
      %668 = vmatpush1.bf16.msra.mxu0 0
      %669 = vmatprep.mubr.bf16.mxu0 0
      %670 = vmatmul.mubr.bf16.gmra.mrb[0].mxu0 %v631
      %v671 = vpop.f32.mrb[0].mxu0
      %v672 = vadd.f32 0.0, %v671
      %v673 = vpop.f32.mrb[0].mxu0
      %v674 = vpop.f32.mrb[0].mxu0
      %v675 = vadd.f32 0.0, %v674
      %v676 = vpop.f32.mrb[0].mxu0
      %677 = vdwg.mxu0
      %v681 = vunpack.c.l.b16 %v598
      %v682 = vunpack.c.l.b16 %v599
      %v683 = vunpack.c.l.b16 %v600
      %v684 = vpack.c.b16 %v682, %v681
      %v685 = vpack.c.b16 %v683, %v683
      %v688 = vsel %vm630, %v616, 0
      %v691 = vsel %vm633, %v685, 0
      %693 = vmatprep.subr.bf16.mxu0 0
      %694 = vmatpush1.bf16.msra.mxu0 %v684
      %695 = vmatprep.subr.bf16.mxu0 0
      %696 = vmatpush1.bf16.msra.mxu0 %v691
      %697 = vmatprep.subr.bf16.mxu0 0
      %698 = vmatpush1.bf16.msra.mxu0 0
      %699 = vmatprep.subr.bf16.mxu0 0
      %700 = vmatpush1.bf16.msra.mxu0 0
      %701 = vmatprep.subr.bf16.mxu0 0
      %702 = vmatpush1.bf16.msra.mxu0 0
      %703 = vmatprep.subr.bf16.mxu0 0
      %704 = vmatpush1.bf16.msra.mxu0 0
      %705 = vmatprep.subr.bf16.mxu0 0
      %706 = vmatpush1.bf16.msra.mxu0 0
      %707 = vmatprep.subr.bf16.mxu0 0
      %708 = vmatpush1.bf16.msra.mxu0 0
      %709 = vmatprep.subr.bf16.mxu0 0
      %710 = vmatpush1.bf16.msra.mxu0 0
      %711 = vmatprep.subr.bf16.mxu0 0
      %712 = vmatpush1.bf16.msra.mxu0 0
      %713 = vmatprep.subr.bf16.mxu0 0
      %714 = vmatpush1.bf16.msra.mxu0 0
      %715 = vmatprep.subr.bf16.mxu0 0
      %716 = vmatpush1.bf16.msra.mxu0 0
      %717 = vmatprep.subr.bf16.mxu0 0
      %718 = vmatpush1.bf16.msra.mxu0 0
      %719 = vmatprep.subr.bf16.mxu0 0
      %720 = vmatpush1.bf16.msra.mxu0 0
      %721 = vmatprep.subr.bf16.mxu0 0
      %722 = vmatpush1.bf16.msra.mxu0 0
      %723 = vmatprep.subr.bf16.mxu0 0
      %724 = vmatpush1.bf16.msra.mxu0 0
      %725 = vmatprep.mubr.bf16.mxu0 0
      %726 = vmatmul.mubr.bf16.gmra.mrb[0].mxu0 %v688
      %v727 = vpop.f32.mrb[0].mxu0
      %v728 = vadd.f32 %v672, %v727
      %v729 = vpop.f32.mrb[0].mxu0
      %v730 = vpop.f32.mrb[0].mxu0
      %v731 = vadd.f32 %v675, %v730
      %v732 = vpop.f32.mrb[0].mxu0
      %733 = vdwg.mxu0
      %v737 = vunpack.c.l.b16 %v604
      %v738 = vunpack.c.l.b16 %v605
      %v739 = vunpack.c.l.b16 %v606
      %v740 = vpack.c.b16 %v738, %v737
      %v741 = vpack.c.b16 %v739, %v739
      %v744 = vsel %vm630, %v620, 0
      %v747 = vsel %vm633, %v741, 0
      %749 = vmatprep.subr.bf16.mxu0 0
      %750 = vmatpush1.bf16.msra.mxu0 %v740
      %751 = vmatprep.subr.bf16.mxu0 0
      %752 = vmatpush1.bf16.msra.mxu0 %v747
      %753 = vmatprep.subr.bf16.mxu0 0
      %754 = vmatpush1.bf16.msra.mxu0 0
      %755 = vmatprep.subr.bf16.mxu0 0
      %756 = vmatpush1.bf16.msra.mxu0 0
      %757 = vmatprep.subr.bf16.mxu0 0
      %758 = vmatpush1.bf16.msra.mxu0 0
      %759 = vmatprep.subr.bf16.mxu0 0
      %760 = vmatpush1.bf16.msra.mxu0 0
      %761 = vmatprep.subr.bf16.mxu0 0
      %762 = vmatpush1.bf16.msra.mxu0 0
      %763 = vmatprep.subr.bf16.mxu0 0
      %764 = vmatpush1.bf16.msra.mxu0 0
      %765 = vmatprep.subr.bf16.mxu0 0
      %766 = vmatpush1.bf16.msra.mxu0 0
      %767 = vmatprep.subr.bf16.mxu0 0
      %768 = vmatpush1.bf16.msra.mxu0 0
      %769 = vmatprep.subr.bf16.mxu0 0
      %770 = vmatpush1.bf16.msra.mxu0 0
      %771 = vmatprep.subr.bf16.mxu0 0
      %772 = vmatpush1.bf16.msra.mxu0 0
      %773 = vmatprep.subr.bf16.mxu0 0
      %774 = vmatpush1.bf16.msra.mxu0 0
      %775 = vmatprep.subr.bf16.mxu0 0
      %776 = vmatpush1.bf16.msra.mxu0 0
      %777 = vmatprep.subr.bf16.mxu0 0
      %778 = vmatpush1.bf16.msra.mxu0 0
      %779 = vmatprep.subr.bf16.mxu0 0
      %780 = vmatpush1.bf16.msra.mxu0 0
      %781 = vmatprep.mubr.bf16.mxu0 0
      %782 = vmatmul.mubr.bf16.gmra.mrb[0].mxu0 %v744
      %v783 = vpop.f32.mrb[0].mxu0
      %v784 = vadd.f32 0.0, %v783
      %v785 = vpop.f32.mrb[0].mxu0
      %v786 = vpop.f32.mrb[0].mxu0
      %v787 = vadd.f32 0.0, %v786
      %v788 = vpop.f32.mrb[0].mxu0
      %789 = vdwg.mxu0
      %v790 = vadd.f32 %v728, %v784
      %v791 = vadd.f32 %v731, %v787
      %v793 = vlaneseq
      %v794 = vshrl.u32 %v793, 7
      %v795 = vsub.s32 0, %v794
      %v796 = vrot.slane %v607, %v795
      %v798 = vadd.f32 %v790, %v796
      %v799 = vadd.f32 %v791, %v796
      %vm800 = vcmp.ge.f32.partialorder %v798, 0.0
      %vm801 = vcmp.ge.f32.partialorder %v799, 0.0
      %v802 = vmul.f32 %v798, 0.2
      %v803 = vmul.f32 %v799, 0.2
      %v804 = vsel %vm800, %v798, %v802
      %v805 = vsel %vm801, %v799, %v803
      %v806 = vpack.c.bf16 %v805, %v804
      %808 = vrot.lane.b32.xlu0 %v806, 24
      %v809 = vpop.permute.xlu0 %808
      %vm811 = vcmask 261312
      %812 = vst.msk [vmem:[#allocation2] sm:$0xff] %vm811, %v809
      %v813 = vld [vmem:[#allocation2] sm:$0xff]
      %v814 = vld [vmem:[%s5] sm:$0xf]
      %v815 = vld [vmem:[%s5 + $0x4] sm:$0xf]
      %v816 = vld [vmem:[%s5 + $0x8] sm:$0xf]
      %v817 = vld [vmem:[%s5 + $0xc] sm:$0xf]
      %v818 = vld [vmem:[%s5 + $0x10] sm:$0xf]
      %v819 = vld [vmem:[%s5 + $0x14] sm:$0xf]
      %v820 = vld [vmem:[%s5 + $0x18] sm:$0xf]
      %v821 = vld [vmem:[%s5 + $0x1c] sm:$0xf]
      %v822 = vld [vmem:[%s5 + $0x20] sm:$0xf]
      %v823 = vld [vmem:[%s5 + $0x24] sm:$0xf]
      %v824 = vld [vmem:[%s5 + $0x28] sm:$0xf]
      %v825 = vld [vmem:[%s5 + $0x2c] sm:$0xf]
      %v826 = vld [vmem:[%s6] sm:$0x1]
      %v828 = vshrl.u32 %v813, 16
      %v830 = vrot.slane %v828, 7
      %v831 = vshll.u32 %v813, 16
      %v833 = vor.u32 %v830, %v831
      %v835 = vsel %vm416, 0, %v833
      %v836 = vrot.slane %v831, 1
      %v837 = vor.u32 %v828, %v836
      %v839 = vsel %vm423, %v837, 0
      %v844 = vunpack.c.l.b16 %v818
      %v845 = vunpack.c.l.b16 %v819
      %v846 = vunpack.c.l.b16 %v820
      %v847 = vunpack.c.l.b16 %v821
      %v848 = vpack.c.b16 %v845, %v844
      %v849 = vpack.c.b16 %v847, %v846
      %vm852 = vcmask 261120
      %v853 = vsel %vm852, %v813, 0
      %855 = vmatprep.subr.bf16.mxu0 0
      %856 = vmatpush1.bf16.msra.mxu0 %v848
      %857 = vmatprep.subr.bf16.mxu0 0
      %858 = vmatpush1.bf16.msra.mxu0 %v849
      %859 = vmatprep.subr.bf16.mxu0 0
      %860 = vmatpush1.bf16.msra.mxu0 0
      %861 = vmatprep.subr.bf16.mxu0 0
      %862 = vmatpush1.bf16.msra.mxu0 0
      %863 = vmatprep.subr.bf16.mxu0 0
      %864 = vmatpush1.bf16.msra.mxu0 0
      %865 = vmatprep.subr.bf16.mxu0 0
      %866 = vmatpush1.bf16.msra.mxu0 0
      %867 = vmatprep.subr.bf16.mxu0 0
      %868 = vmatpush1.bf16.msra.mxu0 0
      %869 = vmatprep.subr.bf16.mxu0 0
      %870 = vmatpush1.bf16.msra.mxu0 0
      %871 = vmatprep.subr.bf16.mxu0 0
      %872 = vmatpush1.bf16.msra.mxu0 0
      %873 = vmatprep.subr.bf16.mxu0 0
      %874 = vmatpush1.bf16.msra.mxu0 0
      %875 = vmatprep.subr.bf16.mxu0 0
      %876 = vmatpush1.bf16.msra.mxu0 0
      %877 = vmatprep.subr.bf16.mxu0 0
      %878 = vmatpush1.bf16.msra.mxu0 0
      %879 = vmatprep.subr.bf16.mxu0 0
      %880 = vmatpush1.bf16.msra.mxu0 0
      %881 = vmatprep.subr.bf16.mxu0 0
      %882 = vmatpush1.bf16.msra.mxu0 0
      %883 = vmatprep.subr.bf16.mxu0 0
      %884 = vmatpush1.bf16.msra.mxu0 0
      %885 = vmatprep.subr.bf16.mxu0 0
      %886 = vmatpush1.bf16.msra.mxu0 0
      %887 = vmatprep.mubr.bf16.mxu0 0
      %888 = vmatmul.mubr.bf16.gmra.mrb[0].mxu0 %v853
      %v889 = vpop.f32.mrb[0].mxu0
      %v890 = vadd.f32 0.0, %v889
      %v891 = vpop.f32.mrb[0].mxu0
      %v892 = vpop.f32.mrb[0].mxu0
      %v893 = vadd.f32 0.0, %v892
      %v894 = vpop.f32.mrb[0].mxu0
      %895 = vdwg.mxu0
      %v900 = vunpack.c.l.b16 %v814
      %v901 = vunpack.c.l.b16 %v815
      %v902 = vunpack.c.l.b16 %v816
      %v903 = vunpack.c.l.b16 %v817
      %v904 = vpack.c.b16 %v901, %v900
      %v905 = vpack.c.b16 %v903, %v902
      %v909 = vsel %vm852, %v835, 0
      %911 = vmatprep.subr.bf16.mxu0 0
      %912 = vmatpush1.bf16.msra.mxu0 %v904
      %913 = vmatprep.subr.bf16.mxu0 0
      %914 = vmatpush1.bf16.msra.mxu0 %v905
      %915 = vmatprep.subr.bf16.mxu0 0
      %916 = vmatpush1.bf16.msra.mxu0 0
      %917 = vmatprep.subr.bf16.mxu0 0
      %918 = vmatpush1.bf16.msra.mxu0 0
      %919 = vmatprep.subr.bf16.mxu0 0
      %920 = vmatpush1.bf16.msra.mxu0 0
      %921 = vmatprep.subr.bf16.mxu0 0
      %922 = vmatpush1.bf16.msra.mxu0 0
      %923 = vmatprep.subr.bf16.mxu0 0
      %924 = vmatpush1.bf16.msra.mxu0 0
      %925 = vmatprep.subr.bf16.mxu0 0
      %926 = vmatpush1.bf16.msra.mxu0 0
      %927 = vmatprep.subr.bf16.mxu0 0
      %928 = vmatpush1.bf16.msra.mxu0 0
      %929 = vmatprep.subr.bf16.mxu0 0
      %930 = vmatpush1.bf16.msra.mxu0 0
      %931 = vmatprep.subr.bf16.mxu0 0
      %932 = vmatpush1.bf16.msra.mxu0 0
      %933 = vmatprep.subr.bf16.mxu0 0
      %934 = vmatpush1.bf16.msra.mxu0 0
      %935 = vmatprep.subr.bf16.mxu0 0
      %936 = vmatpush1.bf16.msra.mxu0 0
      %937 = vmatprep.subr.bf16.mxu0 0
      %938 = vmatpush1.bf16.msra.mxu0 0
      %939 = vmatprep.subr.bf16.mxu0 0
      %940 = vmatpush1.bf16.msra.mxu0 0
      %941 = vmatprep.subr.bf16.mxu0 0
      %942 = vmatpush1.bf16.msra.mxu0 0
      %943 = vmatprep.mubr.bf16.mxu0 0
      %944 = vmatmul.mubr.bf16.gmra.mrb[0].mxu0 %v909
      %v945 = vpop.f32.mrb[0].mxu0
      %v946 = vadd.f32 %v890, %v945
      %v947 = vpop.f32.mrb[0].mxu0
      %v948 = vpop.f32.mrb[0].mxu0
      %v949 = vadd.f32 %v893, %v948
      %v950 = vpop.f32.mrb[0].mxu0
      %951 = vdwg.mxu0
      %v956 = vunpack.c.l.b16 %v822
      %v957 = vunpack.c.l.b16 %v823
      %v958 = vunpack.c.l.b16 %v824
      %v959 = vunpack.c.l.b16 %v825
      %v960 = vpack.c.b16 %v957, %v956
      %v961 = vpack.c.b16 %v959, %v958
      %v965 = vsel %vm852, %v839, 0
      %967 = vmatprep.subr.bf16.mxu0 0
      %968 = vmatpush1.bf16.msra.mxu0 %v960
      %969 = vmatprep.subr.bf16.mxu0 0
      %970 = vmatpush1.bf16.msra.mxu0 %v961
      %971 = vmatprep.subr.bf16.mxu0 0
      %972 = vmatpush1.bf16.msra.mxu0 0
      %973 = vmatprep.subr.bf16.mxu0 0
      %974 = vmatpush1.bf16.msra.mxu0 0
      %975 = vmatprep.subr.bf16.mxu0 0
      %976 = vmatpush1.bf16.msra.mxu0 0
      %977 = vmatprep.subr.bf16.mxu0 0
      %978 = vmatpush1.bf16.msra.mxu0 0
      %979 = vmatprep.subr.bf16.mxu0 0
      %980 = vmatpush1.bf16.msra.mxu0 0
      %981 = vmatprep.subr.bf16.mxu0 0
      %982 = vmatpush1.bf16.msra.mxu0 0
      %983 = vmatprep.subr.bf16.mxu0 0
      %984 = vmatpush1.bf16.msra.mxu0 0
      %985 = vmatprep.subr.bf16.mxu0 0
      %986 = vmatpush1.bf16.msra.mxu0 0
      %987 = vmatprep.subr.bf16.mxu0 0
      %988 = vmatpush1.bf16.msra.mxu0 0
      %989 = vmatprep.subr.bf16.mxu0 0
      %990 = vmatpush1.bf16.msra.mxu0 0
      %991 = vmatprep.subr.bf16.mxu0 0
      %992 = vmatpush1.bf16.msra.mxu0 0
      %993 = vmatprep.subr.bf16.mxu0 0
      %994 = vmatpush1.bf16.msra.mxu0 0
      %995 = vmatprep.subr.bf16.mxu0 0
      %996 = vmatpush1.bf16.msra.mxu0 0
      %997 = vmatprep.subr.bf16.mxu0 0
      %998 = vmatpush1.bf16.msra.mxu0 0
      %999 = vmatprep.mubr.bf16.mxu0 0
      %1000 = vmatmul.mubr.bf16.gmra.mrb[0].mxu0 %v965
      %v1001 = vpop.f32.mrb[0].mxu0
      %v1002 = vadd.f32 0.0, %v1001
      %v1003 = vpop.f32.mrb[0].mxu0
      %v1004 = vpop.f32.mrb[0].mxu0
      %v1005 = vadd.f32 0.0, %v1004
      %v1006 = vpop.f32.mrb[0].mxu0
      %1007 = vdwg.mxu0
      %v1008 = vadd.f32 %v946, %v1002
      %v1009 = vadd.f32 %v949, %v1005
      %v1011 = vlaneseq
      %v1012 = vshrl.u32 %v1011, 7
      %v1013 = vsub.s32 0, %v1012
      %v1014 = vrot.slane %v826, %v1013
      %v1016 = vadd.f32 %v1008, %v1014
      %v1017 = vadd.f32 %v1009, %v1014
      %vm1018 = vcmp.ge.f32.partialorder %v1016, 0.0
      %vm1019 = vcmp.ge.f32.partialorder %v1017, 0.0
      %v1020 = vmul.f32 %v1016, 0.2
      %v1021 = vmul.f32 %v1017, 0.2
      %v1022 = vsel %vm1018, %v1016, %v1020
      %v1023 = vsel %vm1019, %v1017, %v1021
      %v1024 = vpack.c.bf16 %v1023, %v1022
      %1026 = vrot.lane.b32.xlu0 %v1024, 32
      %v1027 = vpop.permute.xlu0 %1026
      %vm1029 = vcmask 326912
      %1030 = vst.msk [vmem:[#allocation2] sm:$0xff] %vm1029, %v1027
      %v1031 = vld [vmem:[#allocation2] sm:$0xff]
      %v1032 = vld [vmem:[%s7] sm:$0xf]
      %v1033 = vld [vmem:[%s7 + $0x4] sm:$0xf]
      %v1034 = vld [vmem:[%s7 + $0x8] sm:$0xf]
      %v1035 = vld [vmem:[%s7 + $0xc] sm:$0xf]
      %v1036 = vld [vmem:[%s7 + $0x10] sm:$0xf]
      %v1037 = vld [vmem:[%s7 + $0x14] sm:$0xf]
      %v1038 = vld [vmem:[%s7 + $0x18] sm:$0xf]
      %v1039 = vld [vmem:[%s7 + $0x1c] sm:$0xf]
      %v1040 = vld [vmem:[%s7 + $0x20] sm:$0xf]
      %v1041 = vld [vmem:[%s7 + $0x24] sm:$0xf]
      %v1042 = vld [vmem:[%s7 + $0x28] sm:$0xf]
      %v1043 = vld [vmem:[%s7 + $0x2c] sm:$0xf]
      %v1044 = vld [vmem:[%s7 + $0x30] sm:$0xf]
      %v1045 = vld [vmem:[%s7 + $0x34] sm:$0xf]
      %v1046 = vld [vmem:[%s7 + $0x38] sm:$0xf]
      %v1047 = vld [vmem:[%s8] sm:$0x1]
      %v1049 = vshrl.u32 %v1031, 16
      %v1051 = vrot.slane %v1049, 7
      %v1052 = vshll.u32 %v1031, 16
      %v1054 = vor.u32 %v1051, %v1052
      %v1056 = vsel %vm416, 0, %v1054
      %v1057 = vrot.slane %v1052, 1
      %v1058 = vor.u32 %v1049, %v1057
      %v1060 = vsel %vm423, %v1058, 0
      %v1066 = vunpack.c.l.b16 %v1037
      %v1067 = vunpack.c.l.b16 %v1038
      %v1068 = vunpack.c.l.b16 %v1039
      %v1069 = vunpack.c.l.b16 %v1040
      %v1070 = vunpack.c.l.b16 %v1041
      %v1071 = vpack.c.b16 %v1067, %v1066
      %v1072 = vpack.c.b16 %v1069, %v1068
      %v1073 = vpack.c.b16 %v1070, %v1070
      %vm1076 = vcmask 326656
      %v1077 = vsel %vm1076, %v1031, 0
      %v1080 = vsel %vm633, %v1073, 0
      %1082 = vmatprep.subr.bf16.mxu0 0
      %1083 = vmatpush1.bf16.msra.mxu0 %v1071
      %1084 = vmatprep.subr.bf16.mxu0 0
      %1085 = vmatpush1.bf16.msra.mxu0 %v1072
      %1086 = vmatprep.subr.bf16.mxu0 0
      %1087 = vmatpush1.bf16.msra.mxu0 %v1080
      %1088 = vmatprep.subr.bf16.mxu0 0
      %1089 = vmatpush1.bf16.msra.mxu0 0
      %1090 = vmatprep.subr.bf16.mxu0 0
      %1091 = vmatpush1.bf16.msra.mxu0 0
      %1092 = vmatprep.subr.bf16.mxu0 0
      %1093 = vmatpush1.bf16.msra.mxu0 0
      %1094 = vmatprep.subr.bf16.mxu0 0
      %1095 = vmatpush1.bf16.msra.mxu0 0
      %1096 = vmatprep.subr.bf16.mxu0 0
      %1097 = vmatpush1.bf16.msra.mxu0 0
      %1098 = vmatprep.subr.bf16.mxu0 0
      %1099 = vmatpush1.bf16.msra.mxu0 0
      %1100 = vmatprep.subr.bf16.mxu0 0
      %1101 = vmatpush1.bf16.msra.mxu0 0
      %1102 = vmatprep.subr.bf16.mxu0 0
      %1103 = vmatpush1.bf16.msra.mxu0 0
      %1104 = vmatprep.subr.bf16.mxu0 0
      %1105 = vmatpush1.bf16.msra.mxu0 0
      %1106 = vmatprep.subr.bf16.mxu0 0
      %1107 = vmatpush1.bf16.msra.mxu0 0
      %1108 = vmatprep.subr.bf16.mxu0 0
      %1109 = vmatpush1.bf16.msra.mxu0 0
      %1110 = vmatprep.subr.bf16.mxu0 0
      %1111 = vmatpush1.bf16.msra.mxu0 0
      %1112 = vmatprep.subr.bf16.mxu0 0
      %1113 = vmatpush1.bf16.msra.mxu0 0
      %1114 = vmatprep.mubr.bf16.mxu0 0
      %1115 = vmatmul.mubr.bf16.gmra.mrb[0].mxu0 %v1077
      %v1116 = vpop.f32.mrb[0].mxu0
      %v1117 = vadd.f32 0.0, %v1116
      %v1118 = vpop.f32.mrb[0].mxu0
      %v1119 = vpop.f32.mrb[0].mxu0
      %v1120 = vadd.f32 0.0, %v1119
      %v1121 = vpop.f32.mrb[0].mxu0
      %1122 = vdwg.mxu0
      %v1128 = vunpack.c.l.b16 %v1032
      %v1129 = vunpack.c.l.b16 %v1033
      %v1130 = vunpack.c.l.b16 %v1034
      %v1131 = vunpack.c.l.b16 %v1035
      %v1132 = vunpack.c.l.b16 %v1036
      %v1133 = vpack.c.b16 %v1129, %v1128
      %v1134 = vpack.c.b16 %v1131, %v1130
      %v1135 = vpack.c.b16 %v1132, %v1132
      %v1139 = vsel %vm1076, %v1056, 0
      %v1142 = vsel %vm633, %v1135, 0
      %1144 = vmatprep.subr.bf16.mxu0 0
      %1145 = vmatpush1.bf16.msra.mxu0 %v1133
      %1146 = vmatprep.subr.bf16.mxu0 0
      %1147 = vmatpush1.bf16.msra.mxu0 %v1134
      %1148 = vmatprep.subr.bf16.mxu0 0
      %1149 = vmatpush1.bf16.msra.mxu0 %v1142
      %1150 = vmatprep.subr.bf16.mxu0 0
      %1151 = vmatpush1.bf16.msra.mxu0 0
      %1152 = vmatprep.subr.bf16.mxu0 0
      %1153 = vmatpush1.bf16.msra.mxu0 0
      %1154 = vmatprep.subr.bf16.mxu0 0
      %1155 = vmatpush1.bf16.msra.mxu0 0
      %1156 = vmatprep.subr.bf16.mxu0 0
      %1157 = vmatpush1.bf16.msra.mxu0 0
      %1158 = vmatprep.subr.bf16.mxu0 0
      %1159 = vmatpush1.bf16.msra.mxu0 0
      %1160 = vmatprep.subr.bf16.mxu0 0
      %1161 = vmatpush1.bf16.msra.mxu0 0
      %1162 = vmatprep.subr.bf16.mxu0 0
      %1163 = vmatpush1.bf16.msra.mxu0 0
      %1164 = vmatprep.subr.bf16.mxu0 0
      %1165 = vmatpush1.bf16.msra.mxu0 0
      %1166 = vmatprep.subr.bf16.mxu0 0
      %1167 = vmatpush1.bf16.msra.mxu0 0
      %1168 = vmatprep.subr.bf16.mxu0 0
      %1169 = vmatpush1.bf16.msra.mxu0 0
      %1170 = vmatprep.subr.bf16.mxu0 0
      %1171 = vmatpush1.bf16.msra.mxu0 0
      %1172 = vmatprep.subr.bf16.mxu0 0
      %1173 = vmatpush1.bf16.msra.mxu0 0
      %1174 = vmatprep.subr.bf16.mxu0 0
      %1175 = vmatpush1.bf16.msra.mxu0 0
      %1176 = vmatprep.mubr.bf16.mxu0 0
      %1177 = vmatmul.mubr.bf16.gmra.mrb[0].mxu0 %v1139
      %v1178 = vpop.f32.mrb[0].mxu0
      %v1179 = vadd.f32 %v1117, %v1178
      %v1180 = vpop.f32.mrb[0].mxu0
      %v1181 = vpop.f32.mrb[0].mxu0
      %v1182 = vadd.f32 %v1120, %v1181
      %v1183 = vpop.f32.mrb[0].mxu0
      %1184 = vdwg.mxu0
      %v1190 = vunpack.c.l.b16 %v1042
      %v1191 = vunpack.c.l.b16 %v1043
      %v1192 = vunpack.c.l.b16 %v1044
      %v1193 = vunpack.c.l.b16 %v1045
      %v1194 = vunpack.c.l.b16 %v1046
      %v1195 = vpack.c.b16 %v1191, %v1190
      %v1196 = vpack.c.b16 %v1193, %v1192
      %v1197 = vpack.c.b16 %v1194, %v1194
      %v1201 = vsel %vm1076, %v1060, 0
      %v1204 = vsel %vm633, %v1197, 0
      %1206 = vmatprep.subr.bf16.mxu0 0
      %1207 = vmatpush1.bf16.msra.mxu0 %v1195
      %1208 = vmatprep.subr.bf16.mxu0 0
      %1209 = vmatpush1.bf16.msra.mxu0 %v1196
      %1210 = vmatprep.subr.bf16.mxu0 0
      %1211 = vmatpush1.bf16.msra.mxu0 %v1204
      %1212 = vmatprep.subr.bf16.mxu0 0
      %1213 = vmatpush1.bf16.msra.mxu0 0
      %1214 = vmatprep.subr.bf16.mxu0 0
      %1215 = vmatpush1.bf16.msra.mxu0 0
      %1216 = vmatprep.subr.bf16.mxu0 0
      %1217 = vmatpush1.bf16.msra.mxu0 0
      %1218 = vmatprep.subr.bf16.mxu0 0
      %1219 = vmatpush1.bf16.msra.mxu0 0
      %1220 = vmatprep.subr.bf16.mxu0 0
      %1221 = vmatpush1.bf16.msra.mxu0 0
      %1222 = vmatprep.subr.bf16.mxu0 0
      %1223 = vmatpush1.bf16.msra.mxu0 0
      %1224 = vmatprep.subr.bf16.mxu0 0
      %1225 = vmatpush1.bf16.msra.mxu0 0
      %1226 = vmatprep.subr.bf16.mxu0 0
      %1227 = vmatpush1.bf16.msra.mxu0 0
      %1228 = vmatprep.subr.bf16.mxu0 0
      %1229 = vmatpush1.bf16.msra.mxu0 0
      %1230 = vmatprep.subr.bf16.mxu0 0
      %1231 = vmatpush1.bf16.msra.mxu0 0
      %1232 = vmatprep.subr.bf16.mxu0 0
      %1233 = vmatpush1.bf16.msra.mxu0 0
      %1234 = vmatprep.subr.bf16.mxu0 0
      %1235 = vmatpush1.bf16.msra.mxu0 0
      %1236 = vmatprep.subr.bf16.mxu0 0
      %1237 = vmatpush1.bf16.msra.mxu0 0
      %1238 = vmatprep.mubr.bf16.mxu0 0
      %1239 = vmatmul.mubr.bf16.gmra.mrb[0].mxu0 %v1201
      %v1240 = vpop.f32.mrb[0].mxu0
      %v1241 = vadd.f32 0.0, %v1240
      %v1242 = vpop.f32.mrb[0].mxu0
      %v1243 = vpop.f32.mrb[0].mxu0
      %v1244 = vadd.f32 0.0, %v1243
      %v1245 = vpop.f32.mrb[0].mxu0
      %1246 = vdwg.mxu0
      %v1247 = vadd.f32 %v1179, %v1241
      %v1248 = vadd.f32 %v1182, %v1244
      %v1250 = vlaneseq
      %v1251 = vshrl.u32 %v1250, 7
      %v1252 = vsub.s32 0, %v1251
      %v1253 = vrot.slane %v1047, %v1252
      %v1255 = vadd.f32 %v1247, %v1253
      %v1256 = vadd.f32 %v1248, %v1253
      %vm1257 = vcmp.ge.f32.partialorder %v1255, 0.0
      %vm1258 = vcmp.ge.f32.partialorder %v1256, 0.0
      %v1259 = vmul.f32 %v1255, 0.2
      %v1260 = vmul.f32 %v1256, 0.2
      %v1261 = vsel %vm1257, %v1255, %v1259
      %v1262 = vsel %vm1258, %v1256, %v1260
      %v1263 = vpack.c.bf16 %v1262, %v1261
      %1265 = vrot.lane.b32.xlu0 %v1263, 40
      %v1266 = vpop.permute.xlu0 %1265
      %vm1268 = vcmask 392512
      %1269 = vst.msk [vmem:[#allocation2] sm:$0xff] %vm1268, %v1266
      %v1270 = vld [vmem:[#allocation2] sm:$0xff]
      %v1271 = vld [vmem:[%s9] sm:$0xf]
      %v1272 = vld [vmem:[%s9 + $0x4] sm:$0xf]
      %v1273 = vld [vmem:[%s9 + $0x8] sm:$0xf]
      %v1274 = vld [vmem:[%s9 + $0xc] sm:$0xf]
      %v1275 = vld [vmem:[%s9 + $0x10] sm:$0xf]
      %v1276 = vld [vmem:[%s9 + $0x14] sm:$0xf]
      %v1277 = vld [vmem:[%s9 + $0x18] sm:$0xf]
      %v1278 = vld [vmem:[%s9 + $0x1c] sm:$0xf]
      %v1279 = vld [vmem:[%s9 + $0x20] sm:$0xf]
      %v1280 = vld [vmem:[%s9 + $0x24] sm:$0xf]
      %v1281 = vld [vmem:[%s9 + $0x28] sm:$0xf]
      %v1282 = vld [vmem:[%s9 + $0x2c] sm:$0xf]
      %v1283 = vld [vmem:[%s9 + $0x30] sm:$0xf]
      %v1284 = vld [vmem:[%s9 + $0x34] sm:$0xf]
      %v1285 = vld [vmem:[%s9 + $0x38] sm:$0xf]
      %v1286 = vld [vmem:[%s9 + $0x3c] sm:$0xf]
      %v1287 = vld [vmem:[%s9 + $0x40] sm:$0xf]
      %v1288 = vld [vmem:[%s9 + $0x44] sm:$0xf]
      %v1289 = vld [vmem:[%s10] sm:$0x1]
      %v1291 = vshrl.u32 %v1270, 16
      %v1293 = vrot.slane %v1291, 7
      %v1294 = vshll.u32 %v1270, 16
      %v1296 = vor.u32 %v1293, %v1294
      %v1298 = vsel %vm416, 0, %v1296
      %v1299 = vrot.slane %v1294, 1
      %v1300 = vor.u32 %v1291, %v1299
      %v1302 = vsel %vm423, %v1300, 0
      %v1309 = vunpack.c.l.b16 %v1277
      %v1310 = vunpack.c.l.b16 %v1278
      %v1311 = vunpack.c.l.b16 %v1279
      %v1312 = vunpack.c.l.b16 %v1280
      %v1313 = vunpack.c.l.b16 %v1281
      %v1314 = vunpack.c.l.b16 %v1282
      %v1315 = vpack.c.b16 %v1310, %v1309
      %v1316 = vpack.c.b16 %v1312, %v1311
      %v1317 = vpack.c.b16 %v1314, %v1313
      %vm1321 = vcmask 392192
      %v1322 = vsel %vm1321, %v1270, 0
      %1324 = vmatprep.subr.bf16.mxu0 0
      %1325 = vmatpush1.bf16.msra.mxu0 %v1315
      %1326 = vmatprep.subr.bf16.mxu0 0
      %1327 = vmatpush1.bf16.msra.mxu0 %v1316
      %1328 = vmatprep.subr.bf16.mxu0 0
      %1329 = vmatpush1.bf16.msra.mxu0 %v1317
      %1330 = vmatprep.subr.bf16.mxu0 0
      %1331 = vmatpush1.bf16.msra.mxu0 0
      %1332 = vmatprep.subr.bf16.mxu0 0
      %1333 = vmatpush1.bf16.msra.mxu0 0
      %1334 = vmatprep.subr.bf16.mxu0 0
      %1335 = vmatpush1.bf16.msra.mxu0 0
      %1336 = vmatprep.subr.bf16.mxu0 0
      %1337 = vmatpush1.bf16.msra.mxu0 0
      %1338 = vmatprep.subr.bf16.mxu0 0
      %1339 = vmatpush1.bf16.msra.mxu0 0
      %1340 = vmatprep.subr.bf16.mxu0 0
      %1341 = vmatpush1.bf16.msra.mxu0 0
      %1342 = vmatprep.subr.bf16.mxu0 0
      %1343 = vmatpush1.bf16.msra.mxu0 0
      %1344 = vmatprep.subr.bf16.mxu0 0
      %1345 = vmatpush1.bf16.msra.mxu0 0
      %1346 = vmatprep.subr.bf16.mxu0 0
      %1347 = vmatpush1.bf16.msra.mxu0 0
      %1348 = vmatprep.subr.bf16.mxu0 0
      %1349 = vmatpush1.bf16.msra.mxu0 0
      %1350 = vmatprep.subr.bf16.mxu0 0
      %1351 = vmatpush1.bf16.msra.mxu0 0
      %1352 = vmatprep.subr.bf16.mxu0 0
      %1353 = vmatpush1.bf16.msra.mxu0 0
      %1354 = vmatprep.subr.bf16.mxu0 0
      %1355 = vmatpush1.bf16.msra.mxu0 0
      %1356 = vmatprep.mubr.bf16.mxu0 0
      %1357 = vmatmul.mubr.bf16.gmra.mrb[0].mxu0 %v1322
      %v1358 = vpop.f32.mrb[0].mxu0
      %v1359 = vadd.f32 0.0, %v1358
      %v1360 = vpop.f32.mrb[0].mxu0
      %v1361 = vpop.f32.mrb[0].mxu0
      %v1362 = vadd.f32 0.0, %v1361
      %v1363 = vpop.f32.mrb[0].mxu0
      %1364 = vdwg.mxu0
      %v1371 = vunpack.c.l.b16 %v1271
      %v1372 = vunpack.c.l.b16 %v1272
      %v1373 = vunpack.c.l.b16 %v1273
      %v1374 = vunpack.c.l.b16 %v1274
      %v1375 = vunpack.c.l.b16 %v1275
      %v1376 = vunpack.c.l.b16 %v1276
      %v1377 = vpack.c.b16 %v1372, %v1371
      %v1378 = vpack.c.b16 %v1374, %v1373
      %v1379 = vpack.c.b16 %v1376, %v1375
      %v1384 = vsel %vm1321, %v1298, 0
      %1386 = vmatprep.subr.bf16.mxu0 0
      %1387 = vmatpush1.bf16.msra.mxu0 %v1377
      %1388 = vmatprep.subr.bf16.mxu0 0
      %1389 = vmatpush1.bf16.msra.mxu0 %v1378
      %1390 = vmatprep.subr.bf16.mxu0 0
      %1391 = vmatpush1.bf16.msra.mxu0 %v1379
      %1392 = vmatprep.subr.bf16.mxu0 0
      %1393 = vmatpush1.bf16.msra.mxu0 0
      %1394 = vmatprep.subr.bf16.mxu0 0
      %1395 = vmatpush1.bf16.msra.mxu0 0
      %1396 = vmatprep.subr.bf16.mxu0 0
      %1397 = vmatpush1.bf16.msra.mxu0 0
      %1398 = vmatprep.subr.bf16.mxu0 0
      %1399 = vmatpush1.bf16.msra.mxu0 0
      %1400 = vmatprep.subr.bf16.mxu0 0
      %1401 = vmatpush1.bf16.msra.mxu0 0
      %1402 = vmatprep.subr.bf16.mxu0 0
      %1403 = vmatpush1.bf16.msra.mxu0 0
      %1404 = vmatprep.subr.bf16.mxu0 0
      %1405 = vmatpush1.bf16.msra.mxu0 0
      %1406 = vmatprep.subr.bf16.mxu0 0
      %1407 = vmatpush1.bf16.msra.mxu0 0
      %1408 = vmatprep.subr.bf16.mxu0 0
      %1409 = vmatpush1.bf16.msra.mxu0 0
      %1410 = vmatprep.subr.bf16.mxu0 0
      %1411 = vmatpush1.bf16.msra.mxu0 0
      %1412 = vmatprep.subr.bf16.mxu0 0
      %1413 = vmatpush1.bf16.msra.mxu0 0
      %1414 = vmatprep.subr.bf16.mxu0 0
      %1415 = vmatpush1.bf16.msra.mxu0 0
      %1416 = vmatprep.subr.bf16.mxu0 0
      %1417 = vmatpush1.bf16.msra.mxu0 0
      %1418 = vmatprep.mubr.bf16.mxu0 0
      %1419 = vmatmul.mubr.bf16.gmra.mrb[0].mxu0 %v1384
      %v1420 = vpop.f32.mrb[0].mxu0
      %v1421 = vadd.f32 %v1359, %v1420
      %v1422 = vpop.f32.mrb[0].mxu0
      %v1423 = vpop.f32.mrb[0].mxu0
      %v1424 = vadd.f32 %v1362, %v1423
      %v1425 = vpop.f32.mrb[0].mxu0
      %1426 = vdwg.mxu0
      %v1433 = vunpack.c.l.b16 %v1283
      %v1434 = vunpack.c.l.b16 %v1284
      %v1435 = vunpack.c.l.b16 %v1285
      %v1436 = vunpack.c.l.b16 %v1286
      %v1437 = vunpack.c.l.b16 %v1287
      %v1438 = vunpack.c.l.b16 %v1288
      %v1439 = vpack.c.b16 %v1434, %v1433
      %v1440 = vpack.c.b16 %v1436, %v1435
      %v1441 = vpack.c.b16 %v1438, %v1437
      %v1446 = vsel %vm1321, %v1302, 0
      %1448 = vmatprep.subr.bf16.mxu0 0
      %1449 = vmatpush1.bf16.msra.mxu0 %v1439
      %1450 = vmatprep.subr.bf16.mxu0 0
      %1451 = vmatpush1.bf16.msra.mxu0 %v1440
      %1452 = vmatprep.subr.bf16.mxu0 0
      %1453 = vmatpush1.bf16.msra.mxu0 %v1441
      %1454 = vmatprep.subr.bf16.mxu0 0
      %1455 = vmatpush1.bf16.msra.mxu0 0
      %1456 = vmatprep.subr.bf16.mxu0 0
      %1457 = vmatpush1.bf16.msra.mxu0 0
      %1458 = vmatprep.subr.bf16.mxu0 0
      %1459 = vmatpush1.bf16.msra.mxu0 0
      %1460 = vmatprep.subr.bf16.mxu0 0
      %1461 = vmatpush1.bf16.msra.mxu0 0
      %1462 = vmatprep.subr.bf16.mxu0 0
      %1463 = vmatpush1.bf16.msra.mxu0 0
      %1464 = vmatprep.subr.bf16.mxu0 0
      %1465 = vmatpush1.bf16.msra.mxu0 0
      %1466 = vmatprep.subr.bf16.mxu0 0
      %1467 = vmatpush1.bf16.msra.mxu0 0
      %1468 = vmatprep.subr.bf16.mxu0 0
      %1469 = vmatpush1.bf16.msra.mxu0 0
      %1470 = vmatprep.subr.bf16.mxu0 0
      %1471 = vmatpush1.bf16.msra.mxu0 0
      %1472 = vmatprep.subr.bf16.mxu0 0
      %1473 = vmatpush1.bf16.msra.mxu0 0
      %1474 = vmatprep.subr.bf16.mxu0 0
      %1475 = vmatpush1.bf16.msra.mxu0 0
      %1476 = vmatprep.subr.bf16.mxu0 0
      %1477 = vmatpush1.bf16.msra.mxu0 0
      %1478 = vmatprep.subr.bf16.mxu0 0
      %1479 = vmatpush1.bf16.msra.mxu0 0
      %1480 = vmatprep.mubr.bf16.mxu0 0
      %1481 = vmatmul.mubr.bf16.gmra.mrb[0].mxu0 %v1446
      %v1482 = vpop.f32.mrb[0].mxu0
      %v1483 = vadd.f32 0.0, %v1482
      %v1484 = vpop.f32.mrb[0].mxu0
      %v1485 = vpop.f32.mrb[0].mxu0
      %v1486 = vadd.f32 0.0, %v1485
      %v1487 = vpop.f32.mrb[0].mxu0
      %1488 = vdwg.mxu0
      %v1489 = vadd.f32 %v1421, %v1483
      %v1490 = vadd.f32 %v1424, %v1486
      %v1492 = vlaneseq
      %v1493 = vshrl.u32 %v1492, 7
      %v1494 = vsub.s32 0, %v1493
      %v1495 = vrot.slane %v1289, %v1494
      %v1497 = vadd.f32 %v1489, %v1495
      %v1498 = vadd.f32 %v1490, %v1495
      %v1499 = vmul.f32 %v1497, 0.2
      %v1500 = vmul.f32 %v1498, 0.2
      %v1501 = vunpack.c.l.bf16 %v1270
      %v1502 = vunpack.c.h.bf16 %v1270
      %v1503 = vadd.f32 %v1499, %v1501
      %v1504 = vadd.f32 %v1500, %v1502
      %v1505 = vpack.c.bf16 %v1504, %v1503
      %v1507 = vunpack.c.l.b16 %v1505
      %v1508 = vunpack.c.h.b16 %v1505
      %v1509 = vpack.c.b16 %v1507, %v1507
      %v1510 = vpack.c.b16 %v1508, %v1508
      %vm1513 = vcmask 125952
      %1514 = vst.msk [vmem:[%s386] sm:$0xf] %vm1513, %v1509
      %1515 = vst.msk [vmem:[%s386 + $0x4] sm:$0xf] %vm1513, %v1510
      %p1516 = scmp.lt.s32.totalorder %s22, 1
      %s1517 = scalar_select %p1516, %s22, 1
      %s1518 = smul.addr %s1517, 2
      %s1519 = smul.addr %s1518, 4
      %s1520 = scalar_lea.vmem %s11, %s1519
      // Predicated region
      $region65: #{rrdbnet_forward.13} parent=63 // pred_check
        %p1521 = pneg %p276
      $region66: #{rrdbnet_forward.13} parent=63 // pred_check_branch
        %1523 = sbr.rel (%p1521) target = $region68
      $region67: #{rrdbnet_forward.13} parent=63 // pred_region
        _
      $region68: #{rrdbnet_forward.13} parent=63 // pred_fallthru
        _
    $region64: #{rrdbnet_forward.13} parent=5 // pred_fallthru
      _
    %p1524 = scmp.le.s32.totalorder 2, %s17
    // Predicated region
    $region69: #{rrdbnet_forward.13} parent=5 // pred_check
      %p1525 = pneg %p1524
    $region70: #{rrdbnet_forward.13} parent=5 // pred_check_branch
      %1527 = sbr.rel (%p1525) target = $region72
    $region71: #{rrdbnet_forward.13} parent=5 // pred_region
      %s1528 = ssub.s32 %s17, 2
      // Predicated region
      $region73: #{rrdbnet_forward.13} parent=71 // pred_check
        %p1529 = pneg %p282
      $region74: #{rrdbnet_forward.13} parent=71 // pred_check_branch
        %1531 = sbr.rel (%p1529) target = $region76
      $region75: #{rrdbnet_forward.13} parent=71 // pred_region
        %p1532 = scmp.lt.s32.totalorder %s23, 1
        %s1533 = scalar_select %p1532, %s23, 1
        %s1534 = smul.addr %s1533, 2
        %s1535 = smul.addr %s1534, 4
        %s1536 = scalar_lea.vmem %s11, %s1535
      $region76: #{rrdbnet_forward.13} parent=71 // pred_fallthru
        _
    $region72: #{rrdbnet_forward.13} parent=5 // pred_fallthru
      _
  $region6: #{rrdbnet_forward.13} parent=0 // loop_footer
    %s21 = sadd.s32 1, %s17
  $region7: #{rrdbnet_forward.13} parent=0 // loop_footer_branch
    %16 = sbr.rel target = $region3
  $region8: #{rrdbnet_forward.13} parent=0 // loop_exit
    _

// kernel: rrdbnet_forward.18
$region0: #{rrdbnet_forward.18}
  #allocation0 [shape = 'u32[]', space=smem, size = 0x4, offset = 0x4, fixed_abs, tag = 'smem constant byte address 0x4 - core index']
  #allocation1 [shape = 'u32[144,128]{1,0:T(1,128)}', space=vmem, size = 0x12000, scoped, tag = 'internal scratch']
  %s0 = inlined_call_operand.vmem [shape: bf16[2,64,16], index: 0, kind: input, shape index: {}, may-alias: {0,1,2}]
  %s1 = inlined_call_operand.vmem [shape: bf16[2,64,16], index: 1, kind: input, shape index: {}, may-alias: {0,1,2}]
  %s2 = inlined_call_operand.vmem [shape: bf16[2,64,16], index: 2, kind: input, shape index: {}, may-alias: {0,1,2}]
  %s3 = inlined_call_operand.vmem [shape: bf16[3,16,16], index: 3, kind: input, shape index: {}]
  %s4 = inlined_call_operand.vmem [shape: f32[1,16], index: 4, kind: input, shape index: {}]
  %s5 = inlined_call_operand.vmem [shape: bf16[2,64,16], index: 5, kind: output, shape index: {}]
  %s6 = sld [smem:[#allocation0]]
  $region53: #{rrdbnet_forward.18} parent=0
    _
  %s8 = ssub.s32 1, %s6
  %s9 = scalar_select 0, %s8, %s6
  loop: start=0, step=1, limit=4
  $region2: #{rrdbnet_forward.18} parent=0 // loop_pre_header
    _
  $region3: #{rrdbnet_forward.18} parent=0 // loop_header
    %s11 = sphi 0, %s15
    %p12 = scmp.ge.s32.totalorder %s11, 4
    %s18 = sphi 0, %s30
    %s19 = sphi 0, %s26
    %s20 = sphi 0, %s18
    %s21 = sphi 0, %s19
    %s22 = sphi 0, %s20
    %s23 = sphi 0, %s21
    %s35 = sphi 0, %s37
    %s38 = sphi 0, %s35
    %s39 = sphi 0, %s38
    %s55 = sphi 0, %s39
    %s71 = sphi 0, %s73
    %s74 = sphi 0, %s71
    %s75 = sphi 0, %s74
    %s91 = sphi 0, %s75
    %s107 = sphi 0, %s109
    %s110 = sphi 0, %s107
    %s111 = sphi 0, %s110
    %s127 = sphi 0, %s111
    %s131 = sphi 0, %s131
    %s133 = sphi 0, %s131
    %s134 = sphi 0, %s133
    %s148 = sphi 0, %s134
    %s152 = sphi 0, %s152
    %s154 = sphi 0, %s152
    %s155 = sphi 0, %s154
    %s169 = sphi 0, %s155
    %s177 = sphi 0, %s179
    %s180 = sphi 0, %s177
    %s181 = sphi 0, %s180
    %s197 = sphi 0, %s181
  $region4: #{rrdbnet_forward.18} parent=0 // loop_header_branch
    %14 = sbr.rel (%p12) target = $region8
  $region5: #{rrdbnet_forward.18} parent=0 // loop_body
    %s16 = ssub.s32 %s11, 1
    %s17 = ssub.s32 %s11, 2
    %s24 = sadd.s32 1, %s19
    %p25 = scmp.ge.s32.totalorder %s24, 1
    %s26 = scalar_select %p25, 0, %s24
    %s27 = sadd.s32 1, %s18
    %s28 = scalar_select %p25, %s27, %s18
    %p29 = scmp.ge.s32.totalorder %s28, 2
    %s30 = scalar_select %p29, 0, %s28
    %s31 = ssub.s32 %s18, %s30
    %s32 = ssub.s32 %s19, %s26
    %s33 = sor.u32 %s31, %s32
    %p34 = scmp.eq.s32.totalorder %s33, 0
    %s36 = sadd.s32 %s35, 1
    %s37 = scalar_select %p34, %s35, %s36
    %p40 = pneg %p34
    %p41 = scmp.eq.s32.totalorder %s11, 1
    %p42 = por %p40, %p41
    %p43 = scmp.ne.s32.totalorder %s35, %s38
    %p44 = scmp.eq.s32.totalorder %s11, 0
    %p45 = por %p43, %p44
    %p46 = scmp.ne.s32.totalorder %s35, %s38
    %p47 = scmp.eq.s32.totalorder %s16, 1
    %p48 = por %p46, %p47
    %p49 = scmp.ne.s32.totalorder %s38, %s39
    %p50 = scmp.eq.s32.totalorder %s16, 0
    %p51 = por %p49, %p50
    %p52 = scmp.ne.s32.totalorder %s38, %s39
    %p53 = scmp.eq.s32.totalorder %s17, 1
    %p54 = por %p52, %p53
    %p56 = scmp.ne.s32.totalorder %s39, %s55
    %p57 = scmp.eq.s32.totalorder %s17, 0
    %p58 = por %p56, %p57
    %s59 = smul.u32 %s19, 8
    %s60 = ssub.s32 %s59, 1
    %p61 = scmp.gt.s32.totalorder %s60, 0
    %s62 = scalar_select %p61, %s60, 0
    %s63 = smul.u32 %s26, 8
    %s64 = ssub.s32 %s63, 1
    %p65 = scmp.gt.s32.totalorder %s64, 0
    %s66 = scalar_select %p65, %s64, 0
    %s67 = ssub.s32 %s18, %s30
    %s68 = ssub.s32 %s62, %s66
    %s69 = sor.u32 %s67, %s68
    %p70 = scmp.eq.s32.totalorder %s69, 0
    %s72 = sadd.s32 %s71, 1
    %s73 = scalar_select %p70, %s71, %s72
    %p76 = pneg %p70
    %p77 = scmp.eq.s32.totalorder %s11, 1
    %p78 = por %p76, %p77
    %p79 = scmp.ne.s32.totalorder %s71, %s74
    %p80 = scmp.eq.s32.totalorder %s11, 0
    %p81 = por %p79, %p80
    %p82 = scmp.ne.s32.totalorder %s71, %s74
    %p83 = scmp.eq.s32.totalorder %s16, 1
    %p84 = por %p82, %p83
    %p85 = scmp.ne.s32.totalorder %s74, %s75
    %p86 = scmp.eq.s32.totalorder %s16, 0
    %p87 = por %p85, %p86
    %p88 = scmp.ne.s32.totalorder %s74, %s75
    %p89 = scmp.eq.s32.totalorder %s17, 1
    %p90 = por %p88, %p89
    %p92 = scmp.ne.s32.totalorder %s75, %s91
    %p93 = scmp.eq.s32.totalorder %s17, 0
    %p94 = por %p92, %p93
    %s95 = sadd.s32 %s19, 1
    %s96 = smul.u32 %s95, 8
    %p97 = scmp.lt.s32.totalorder %s96, 7
    %s98 = scalar_select %p97, %s96, 7
    %s99 = sadd.s32 %s26, 1
    %s100 = smul.u32 %s99, 8
    %p101 = scmp.lt.s32.totalorder %s100, 7
    %s102 = scalar_select %p101, %s100, 7
    %s103 = ssub.s32 %s18, %s30
    %s104 = ssub.s32 %s98, %s102
    %s105 = sor.u32 %s103, %s104
    %p106 = scmp.eq.s32.totalorder %s105, 0
    %s108 = sadd.s32 %s107, 1
    %s109 = scalar_select %p106, %s107, %s108
    %p112 = pneg %p106
    %p113 = scmp.eq.s32.totalorder %s11, 1
    %p114 = por %p112, %p113
    %p115 = scmp.ne.s32.totalorder %s107, %s110
    %p116 = scmp.eq.s32.totalorder %s11, 0
    %p117 = por %p115, %p116
    %p118 = scmp.ne.s32.totalorder %s107, %s110
    %p119 = scmp.eq.s32.totalorder %s16, 1
    %p120 = por %p118, %p119
    %p121 = scmp.ne.s32.totalorder %s110, %s111
    %p122 = scmp.eq.s32.totalorder %s16, 0
    %p123 = por %p121, %p122
    %p124 = scmp.ne.s32.totalorder %s110, %s111
    %p125 = scmp.eq.s32.totalorder %s17, 1
    %p126 = por %p124, %p125
    %p128 = scmp.ne.s32.totalorder %s111, %s127
    %p129 = scmp.eq.s32.totalorder %s17, 0
    %p130 = por %p128, %p129
    %s132 = sadd.s32 %s131, 1
    %p135 = scmp.eq.s32.totalorder %s11, 1
    %p136 = scmp.ne.s32.totalorder %s131, %s133
    %p137 = scmp.eq.s32.totalorder %s11, 0
    %p138 = por %p136, %p137
    %p139 = scmp.ne.s32.totalorder %s131, %s133
    %p140 = scmp.eq.s32.totalorder %s16, 1
    %p141 = por %p139, %p140
    %p142 = scmp.ne.s32.totalorder %s133, %s134
    %p143 = scmp.eq.s32.totalorder %s16, 0
    %p144 = por %p142, %p143
    %p145 = scmp.ne.s32.totalorder %s133, %s134
    %p146 = scmp.eq.s32.totalorder %s17, 1
    %p147 = por %p145, %p146
    %p149 = scmp.ne.s32.totalorder %s134, %s148
    %p150 = scmp.eq.s32.totalorder %s17, 0
    %p151 = por %p149, %p150
    %s153 = sadd.s32 %s152, 1
    %p156 = scmp.eq.s32.totalorder %s11, 1
    %p157 = scmp.ne.s32.totalorder %s152, %s154
    %p158 = scmp.eq.s32.totalorder %s11, 0
    %p159 = por %p157, %p158
    %p160 = scmp.ne.s32.totalorder %s152, %s154
    %p161 = scmp.eq.s32.totalorder %s16, 1
    %p162 = por %p160, %p161
    %p163 = scmp.ne.s32.totalorder %s154, %s155
    %p164 = scmp.eq.s32.totalorder %s16, 0
    %p165 = por %p163, %p164
    %p166 = scmp.ne.s32.totalorder %s154, %s155
    %p167 = scmp.eq.s32.totalorder %s17, 1
    %p168 = por %p166, %p167
    %p170 = scmp.ne.s32.totalorder %s155, %s169
    %p171 = scmp.eq.s32.totalorder %s17, 0
    %p172 = por %p170, %p171
    %s173 = ssub.s32 %s18, %s30
    %s174 = ssub.s32 %s19, %s26
    %s175 = sor.u32 %s173, %s174
    %p176 = scmp.eq.s32.totalorder %s175, 0
    %s178 = sadd.s32 %s177, 1
    %s179 = scalar_select %p176, %s177, %s178
    %p182 = pneg %p176
    %p183 = scmp.eq.s32.totalorder %s11, 1
    %p184 = por %p182, %p183
    %p185 = scmp.ne.s32.totalorder %s177, %s180
    %p186 = scmp.eq.s32.totalorder %s11, 0
    %p187 = por %p185, %p186
    %p188 = scmp.ne.s32.totalorder %s177, %s180
    %p189 = scmp.eq.s32.totalorder %s16, 1
    %p190 = por %p188, %p189
    %p191 = scmp.ne.s32.totalorder %s180, %s181
    %p192 = scmp.eq.s32.totalorder %s16, 0
    %p193 = por %p191, %p192
    %p194 = scmp.ne.s32.totalorder %s180, %s181
    %p195 = scmp.eq.s32.totalorder %s17, 1
    %p196 = por %p194, %p195
    %p198 = scmp.ne.s32.totalorder %s181, %s197
    %p199 = scmp.eq.s32.totalorder %s17, 0
    %p200 = por %p198, %p199
    %p201 = scmp.le.s32.totalorder 1, %s11
    %p202 = scmp.lt.s32.totalorder %s11, 3
    %p203 = pnand %p201, %p202
    %p204 = pneg %p203
    // Predicated region
    $region9: #{rrdbnet_forward.18} parent=5 // pred_check
      _
    $region10: #{rrdbnet_forward.18} parent=5 // pred_check_branch
      %206 = sbr.rel (%p203) target = $region12
    $region11: #{rrdbnet_forward.18} parent=5 // pred_region
      %s207 = ssub.s32 %s11, 1
      // Predicated region
      $region13: #{rrdbnet_forward.18} parent=11 // pred_check
        %p208 = pneg %p144
      $region14: #{rrdbnet_forward.18} parent=11 // pred_check_branch
        %210 = sbr.rel (%p208) target = $region16
      $region15: #{rrdbnet_forward.18} parent=11 // pred_region
        _
      $region16: #{rrdbnet_forward.18} parent=11 // pred_fallthru
        _
      // Predicated region
      $region17: #{rrdbnet_forward.18} parent=11 // pred_check
        %p211 = pneg %p165
      $region18: #{rrdbnet_forward.18} parent=11 // pred_check_branch
        %213 = sbr.rel (%p211) target = $region20
      $region19: #{rrdbnet_forward.18} parent=11 // pred_region
        _
      $region20: #{rrdbnet_forward.18} parent=11 // pred_fallthru
        _
    $region12: #{rrdbnet_forward.18} parent=5 // pred_fallthru
      _
    %p214 = scmp.lt.s32.totalorder %s11, 2
    // Predicated region
    $region21: #{rrdbnet_forward.18} parent=5 // pred_check
      %p215 = pneg %p214
    $region22: #{rrdbnet_forward.18} parent=5 // pred_check_branch
      %217 = sbr.rel (%p215) target = $region24
    $region23: #{rrdbnet_forward.18} parent=5 // pred_region
      // Predicated region
      $region25: #{rrdbnet_forward.18} parent=23 // pred_check
        %p218 = pneg %p45
      $region26: #{rrdbnet_forward.18} parent=23 // pred_check_branch
        %220 = sbr.rel (%p218) target = $region28
      $region27: #{rrdbnet_forward.18} parent=23 // pred_region
        %s221 = smul.u32 8, %s19
        %p222 = scmp.lt.s32.totalorder %s18, 1
        %s223 = scalar_select %p222, %s18, 1
        %p224 = scmp.lt.s32.totalorder %s221, 7
        %s225 = scalar_select %p224, %s221, 7
        %s226 = smul.addr %s223, 8
        %s227 = sadd.s32 %s225, %s226
        %s228 = smul.addr %s227, 4
        %s229 = scalar_lea.vmem %s0, %s228
        %s230 = smul.u32 8, %s19
      $region28: #{rrdbnet_forward.18} parent=23 // pred_fallthru
        _
      // Predicated region
      $region29: #{rrdbnet_forward.18} parent=23 // pred_check
        %p231 = pneg %p81
      $region30: #{rrdbnet_forward.18} parent=23 // pred_check_branch
        %233 = sbr.rel (%p231) target = $region32
      $region31: #{rrdbnet_forward.18} parent=23 // pred_region
        %s234 = smul.u32 %s19, 8
        %s235 = ssub.s32 %s234, 1
        %p236 = scmp.gt.s32.totalorder %s235, 0
        %s237 = scalar_select %p236, %s235, 0
        %p238 = scmp.lt.s32.totalorder %s18, 1
        %s239 = scalar_select %p238, %s18, 1
        %p240 = scmp.lt.s32.totalorder %s237, 7
        %s241 = scalar_select %p240, %s237, 7
        %s242 = smul.addr %s239, 8
        %s243 = sadd.s32 %s241, %s242
        %s244 = smul.addr %s243, 4
        %s245 = scalar_lea.vmem %s1, %s244
        %s246 = smul.u32 %s19, 8
        %s247 = ssub.s32 %s246, 1
        %p248 = scmp.gt.s32.totalorder %s247, 0
        %s249 = scalar_select %p248, %s247, 0
      $region32: #{rrdbnet_forward.18} parent=23 // pred_fallthru
        _
      // Predicated region
      $region33: #{rrdbnet_forward.18} parent=23 // pred_check
        %p250 = pneg %p117
      $region34: #{rrdbnet_forward.18} parent=23 // pred_check_branch
        %252 = sbr.rel (%p250) target = $region36
      $region35: #{rrdbnet_forward.18} parent=23 // pred_region
        %s253 = sadd.s32 %s19, 1
        %s254 = smul.u32 %s253, 8
        %p255 = scmp.lt.s32.totalorder %s254, 7
        %s256 = scalar_select %p255, %s254, 7
        %p257 = scmp.lt.s32.totalorder %s18, 1
        %s258 = scalar_select %p257, %s18, 1
        %p259 = scmp.lt.s32.totalorder %s256, 7
        %s260 = scalar_select %p259, %s256, 7
        %s261 = smul.addr %s258, 8
        %s262 = sadd.s32 %s260, %s261
        %s263 = smul.addr %s262, 4
        %s264 = scalar_lea.vmem %s2, %s263
        %s265 = sadd.s32 %s19, 1
        %s266 = smul.u32 %s265, 8
        %p267 = scmp.lt.s32.totalorder %s266, 7
        %s268 = scalar_select %p267, %s266, 7
      $region36: #{rrdbnet_forward.18} parent=23 // pred_fallthru
        _
    $region24: #{rrdbnet_forward.18} parent=5 // pred_fallthru
      _
    %p269 = scmp.le.s32.totalorder 1, %s11
    %p270 = scmp.lt.s32.totalorder %s11, 3
    %p271 = pnand %p269, %p270
    %p272 = pneg %p271
    // Predicated region
    $region37: #{rrdbnet_forward.18} parent=5 // pred_check
      _
    $region38: #{rrdbnet_forward.18} parent=5 // pred_check_branch
      %274 = sbr.rel (%p271) target = $region40
    $region39: #{rrdbnet_forward.18} parent=5 // pred_region
      %s275 = ssub.s32 %s11, 1
      %s276 = smul.u32 8, %s21
      %p277 = scmp.lt.s32.totalorder %s20, 1
      %s278 = scalar_select %p277, %s20, 1
      %p279 = scmp.lt.s32.totalorder %s276, 7
      %s280 = scalar_select %p279, %s276, 7
      %s281 = smul.addr %s278, 8
      %s282 = sadd.s32 %s280, %s281
      %s283 = smul.addr %s282, 4
      %s284 = scalar_lea.vmem %s0, %s283
      %p285 = pneg %p51
      %p286 = pneg %p48
      %s287 = smul.u32 %s21, 8
      %s288 = ssub.s32 %s287, 1
      %p289 = scmp.gt.s32.totalorder %s288, 0
      %s290 = scalar_select %p289, %s288, 0
      %p291 = scmp.lt.s32.totalorder %s20, 1
      %s292 = scalar_select %p291, %s20, 1
      %p293 = scmp.lt.s32.totalorder %s290, 7
      %s294 = scalar_select %p293, %s290, 7
      %s295 = smul.addr %s292, 8
      %s296 = sadd.s32 %s294, %s295
      %s297 = smul.addr %s296, 4
      %s298 = scalar_lea.vmem %s1, %s297
      %p299 = pneg %p87
      %p300 = pneg %p84
      %s301 = sadd.s32 %s21, 1
      %s302 = smul.u32 %s301, 8
      %p303 = scmp.lt.s32.totalorder %s302, 7
      %s304 = scalar_select %p303, %s302, 7
      %p305 = scmp.lt.s32.totalorder %s20, 1
      %s306 = scalar_select %p305, %s20, 1
      %p307 = scmp.lt.s32.totalorder %s304, 7
      %s308 = scalar_select %p307, %s304, 7
      %s309 = smul.addr %s306, 8
      %s310 = sadd.s32 %s308, %s309
      %s311 = smul.addr %s310, 4
      %s312 = scalar_lea.vmem %s2, %s311
      %p313 = pneg %p123
      %p314 = pneg %p120
      %p315 = pneg %p144
      %p316 = pneg %p141
      %p317 = pneg %p165
      %p318 = pneg %p162
      %p319 = pneg %p193
      %p320 = pneg %p190
      %s321 = smul.u32 8, %s21
      %p322 = scmp.lt.s32.totalorder %s20, 1
      %s323 = scalar_select %p322, %s20, 1
      %p324 = scmp.lt.s32.totalorder %s321, 7
      %s325 = scalar_select %p324, %s321, 7
      %s326 = smul.addr %s323, 8
      %s327 = sadd.s32 %s325, %s326
      %s328 = smul.addr %s327, 4
      %s329 = scalar_lea.vmem %s5, %s328
      %s330 = smul.u32 8, %s21
      %p331 = scmp.lt.s32.totalorder %s20, 1
      %s332 = scalar_select %p331, %s20, 1
      %p333 = scmp.lt.s32.totalorder %s330, 7
      %s334 = scalar_select %p333, %s330, 7
      %s335 = smul.addr %s332, 8
      %s336 = sadd.s32 %s334, %s335
      %s337 = smul.addr %s336, 4
      %s338 = scalar_lea.vmem %s0, %s337
      %s339 = smul.u32 8, %s21
      %s340 = smul.u32 %s21, 8
      %s341 = ssub.s32 %s340, 1
      %p342 = scmp.gt.s32.totalorder %s341, 0
      %s343 = scalar_select %p342, %s341, 0
      %p344 = scmp.lt.s32.totalorder %s20, 1
      %s345 = scalar_select %p344, %s20, 1
      %p346 = scmp.lt.s32.totalorder %s343, 7
      %s347 = scalar_select %p346, %s343, 7
      %s348 = smul.addr %s345, 8
      %s349 = sadd.s32 %s347, %s348
      %s350 = smul.addr %s349, 4
      %s351 = scalar_lea.vmem %s1, %s350
      %s352 = smul.u32 %s21, 8
      %s353 = ssub.s32 %s352, 1
      %p354 = scmp.gt.s32.totalorder %s353, 0
      %s355 = scalar_select %p354, %s353, 0
      %s356 = sadd.s32 %s21, 1
      %s357 = smul.u32 %s356, 8
      %p358 = scmp.lt.s32.totalorder %s357, 7
      %s359 = scalar_select %p358, %s357, 7
      %p360 = scmp.lt.s32.totalorder %s20, 1
      %s361 = scalar_select %p360, %s20, 1
      %p362 = scmp.lt.s32.totalorder %s359, 7
      %s363 = scalar_select %p362, %s359, 7
      %s364 = smul.addr %s361, 8
      %s365 = sadd.s32 %s363, %s364
      %s366 = smul.addr %s365, 4
      %s367 = scalar_lea.vmem %s2, %s366
      %s368 = sadd.s32 %s21, 1
      %s369 = smul.u32 %s368, 8
      %p370 = scmp.lt.s32.totalorder %s369, 7
      %s371 = scalar_select %p370, %s369, 7
      %s372 = smul.u32 8, %s21
      %p373 = scmp.lt.s32.totalorder %s20, 1
      %s374 = scalar_select %p373, %s20, 1
      %p375 = scmp.lt.s32.totalorder %s372, 7
      %s376 = scalar_select %p375, %s372, 7
      %s377 = smul.addr %s374, 8
      %s378 = sadd.s32 %s376, %s377
      %s379 = smul.addr %s378, 4
      %s380 = scalar_lea.vmem %s5, %s379
      %s381 = smul.u32 8, %s21
      %v383 = vld [vmem:[%s338] sm:$0xf]
      %v384 = vld [vmem:[%s338 + $0x4] sm:$0xf]
      %v385 = vld [vmem:[%s338 + $0x8] sm:$0xf]
      %v386 = vld [vmem:[%s338 + $0xc] sm:$0xf]
      %v387 = vld [vmem:[%s338 + $0x10] sm:$0xf]
      %v388 = vld [vmem:[%s338 + $0x14] sm:$0xf]
      %v389 = vld [vmem:[%s338 + $0x18] sm:$0xf]
      %v390 = vld [vmem:[%s338 + $0x1c] sm:$0xf]
      %v391 = vld [vmem:[%s351] sm:$0xf]
      %v392 = vld [vmem:[%s367] sm:$0xf]
      %p393 = scmp.gt.s32.totalorder %s21, 0
      %s394 = scalar_select %p393, 1.0, 0.0
      %p396 = scmp.ne.f32.partialorder %s394, %s394
      %s397 = sshrl.u32 %s394, 16
      %s398 = sand.u32 %s397, 1
      %s399 = sadd.s32 32767, %s398
      %s400 = sadd.s32 %s394, %s399
      %s401 = sand.u32 %s400, 4294901760
      %s402 = scalar_select %p396, 2143289344, %s401
      %s404 = sshrl.u32 %s402, 16
      %p405 = scmp.lt.s32.totalorder %s21, 0
      %s406 = scalar_select %p405, 1.0, 0.0
      %p408 = scmp.ne.f32.partialorder %s406, %s406
      %s409 = sshrl.u32 %s406, 16
      %s410 = sand.u32 %s409, 1
      %s411 = sadd.s32 32767, %s410
      %s412 = sadd.s32 %s406, %s411
      %s413 = sand.u32 %s412, 4294901760
      %s414 = scalar_select %p408, 2143289344, %s413
      %s416 = sshrl.u32 %s414, 16
      %s417 = sshll.u32 %s404, 16
      %s418 = sor.u32 %s404, %s417
      %v419 = vstv %s418
      %v421 = vmul.bf16 %v391, %v419
      %s422 = sshll.u32 %s416, 16
      %s423 = sor.u32 %s416, %s422
      %v424 = vstv %s423
      %v426 = vmul.bf16 %v392, %v424
      %v427 = vld [vmem:[%s3] sm:$0xf]
      %v428 = vld [vmem:[%s3 + $0x4] sm:$0xf]
      %v429 = vld [vmem:[%s3 + $0x8] sm:$0xf]
      %v430 = vld [vmem:[%s3 + $0xc] sm:$0xf]
      %v431 = vld [vmem:[%s3 + $0x10] sm:$0xf]
      %v432 = vld [vmem:[%s3 + $0x14] sm:$0xf]
      %v433 = vld [vmem:[%s4] sm:$0x1]
      %v435 = vunpack.c.l.b16 %v421
      %v436 = vpack.c.b16 %v435, %v435
      %v438 = vshrl.u32 %v436, 16
      %v440 = vrot.slane %v438, 3
      %v450 = vunpack.c.l.b16 %v383
      %v451 = vunpack.c.l.b16 %v384
      %v452 = vunpack.c.l.b16 %v385
      %v453 = vunpack.c.l.b16 %v386
      %v454 = vunpack.c.l.b16 %v387
      %v455 = vunpack.c.l.b16 %v388
      %v456 = vunpack.c.l.b16 %v389
      %v457 = vunpack.c.l.b16 %v390
      %v458 = vpack.c.b16 %v451, %v450
      %v459 = vpack.c.b16 %v453, %v452
      %v460 = vpack.c.b16 %v455, %v454
      %v461 = vpack.c.b16 %v457, %v456
      %vm462 = vsmask.f32 256
      %v464 = vshrl.u32 %v458, 16
      %v466 = vrot.slane %v464, 7
      %v467 = vshll.u32 %v458, 16
      %v469 = vor.u32 %v466, %v467
      %v471 = vshrl.u32 %v459, 16
      %v473 = vrot.slane %v471, 7
      %v474 = vshll.u32 %v459, 16
      %v476 = vor.u32 %v473, %v474
      %v477 = vsel %vm462, %v466, %v476
      %v479 = vshrl.u32 %v460, 16
      %v481 = vrot.slane %v479, 7
      %v482 = vshll.u32 %v460, 16
      %v484 = vor.u32 %v481, %v482
      %v485 = vsel %vm462, %v473, %v484
      %v487 = vshrl.u32 %v461, 16
      %v489 = vrot.slane %v487, 7
      %v490 = vshll.u32 %v461, 16
      %v492 = vor.u32 %v489, %v490
      %v493 = vsel %vm462, %v481, %v492
      %vm495 = vcmask 1040384
      %vm496 = vmand %vm495, %vm462
      %v497 = vsel %vm496, %v440, %v469
      %vm498 = vsmask.f32 7424
      %v499 = vrot.slane %v467, 1
      %v500 = vor.u32 %v464, %v499
      %v501 = vrot.slane %v474, 1
      %v502 = vsel %vm498, %v500, %v501
      %v503 = vor.u32 %v471, %v501
      %v504 = vrot.slane %v482, 1
      %v505 = vsel %vm498, %v503, %v504
      %v506 = vor.u32 %v479, %v504
      %v507 = vrot.slane %v490, 1
      %v508 = vsel %vm498, %v506, %v507
      %v509 = vor.u32 %v487, %v507
      %v512 = vunpack.c.l.b16 %v426
      %v513 = vpack.c.b16 %v512, %v512
      %v515 = vshll.u32 %v513, 16
      %v517 = vrot.slane %v515, 1
      %vm519 = vcmask 1047552
      %vm520 = vmand %vm519, %vm498
      %v521 = vsel %vm520, %v509, %v517
      %v524 = vunpack.c.l.b16 %v429
      %v525 = vunpack.c.l.b16 %v430
      %v526 = vpack.c.b16 %v525, %v524
      %vm528 = vcmask 130048
      %v529 = vsel %vm528, %v458, 0
      %v531 = vsel %vm528, %v459, 0
      %v533 = vsel %vm528, %v460, 0
      %v535 = vsel %vm528, %v461, 0
      %537 = vmatprep.subr.bf16.mxu0 0
      %538 = vmatpush1.bf16.msra.mxu0 %v526
      %539 = vmatprep.subr.bf16.mxu0 0
      %540 = vmatpush1.bf16.msra.mxu0 0
      %541 = vmatprep.subr.bf16.mxu0 0
      %542 = vmatpush1.bf16.msra.mxu0 0
      %543 = vmatprep.subr.bf16.mxu0 0
      %544 = vmatpush1.bf16.msra.mxu0 0
      %545 = vmatprep.subr.bf16.mxu0 0
      %546 = vmatpush1.bf16.msra.mxu0 0
      %547 = vmatprep.subr.bf16.mxu0 0
      %548 = vmatpush1.bf16.msra.mxu0 0
      %549 = vmatprep.subr.bf16.mxu0 0
      %550 = vmatpush1.bf16.msra.mxu0 0
      %551 = vmatprep.subr.bf16.mxu0 0
      %552 = vmatpush1.bf16.msra.mxu0 0
      %553 = vmatprep.subr.bf16.mxu0 0
      %554 = vmatpush1.bf16.msra.mxu0 0
      %555 = vmatprep.subr.bf16.mxu0 0
      %556 = vmatpush1.bf16.msra.mxu0 0
      %557 = vmatprep.subr.bf16.mxu0 0
      %558 = vmatpush1.bf16.msra.mxu0 0
      %559 = vmatprep.subr.bf16.mxu0 0
      %560 = vmatpush1.bf16.msra.mxu0 0
      %561 = vmatprep.subr.bf16.mxu0 0
      %562 = vmatpush1.bf16.msra.mxu0 0
      %563 = vmatprep.subr.bf16.mxu0 0
      %564 = vmatpush1.bf16.msra.mxu0 0
      %565 = vmatprep.subr.bf16.mxu0 0
      %566 = vmatpush1.bf16.msra.mxu0 0
      %567 = vmatprep.subr.bf16.mxu0 0
      %568 = vmatpush1.bf16.msra.mxu0 0
      %569 = vmatprep.mubr.bf16.mxu0 0
      %570 = vmatmul.mubr.bf16.gmra.mrb[0].mxu0 %v529
      %v571 = vpop.f32.mrb[0].mxu0
      %v572 = vadd.f32 0.0, %v571
      %v573 = vpop.f32.mrb[0].mxu0
      %v574 = vpop.f32.mrb[0].mxu0
      %v575 = vadd.f32 0.0, %v574
      %v576 = vpop.f32.mrb[0].mxu0
      %577 = vmatprep.mubr.bf16.mxu0 0
      %578 = vmatmul.mubr.bf16.gmra.mrb[0].mxu0 %v531
      %v579 = vpop.f32.mrb[0].mxu0
      %v580 = vadd.f32 0.0, %v579
      %v581 = vpop.f32.mrb[0].mxu0
      %v582 = vpop.f32.mrb[0].mxu0
      %v583 = vadd.f32 0.0, %v582
      %v584 = vpop.f32.mrb[0].mxu0
      %585 = vmatprep.mubr.bf16.mxu0 0
      %586 = vmatmul.mubr.bf16.gmra.mrb[0].mxu0 %v533
      %v587 = vpop.f32.mrb[0].mxu0
      %v588 = vadd.f32 0.0, %v587
      %v589 = vpop.f32.mrb[0].mxu0
      %v590 = vpop.f32.mrb[0].mxu0
      %v591 = vadd.f32 0.0, %v590
      %v592 = vpop.f32.mrb[0].mxu0
      %593 = vmatprep.mubr.bf16.mxu0 0
      %594 = vmatmul.mubr.bf16.gmra.mrb[0].mxu0 %v535
      %v595 = vpop.f32.mrb[0].mxu0
      %v596 = vadd.f32 0.0, %v595
      %v597 = vpop.f32.mrb[0].mxu0
      %v598 = vpop.f32.mrb[0].mxu0
      %v599 = vadd.f32 0.0, %v598
      %v600 = vpop.f32.mrb[0].mxu0
      %601 = vdwg.mxu0
      %v604 = vunpack.c.l.b16 %v427
      %v605 = vunpack.c.l.b16 %v428
      %v606 = vpack.c.b16 %v605, %v604
      %v609 = vsel %vm528, %v497, 0
      %v612 = vsel %vm528, %v477, 0
      %v615 = vsel %vm528, %v485, 0
      %v618 = vsel %vm528, %v493, 0
      %620 = vmatprep.subr.bf16.mxu0 0
      %621 = vmatpush1.bf16.msra.mxu0 %v606
      %622 = vmatprep.subr.bf16.mxu0 0
      %623 = vmatpush1.bf16.msra.mxu0 0
      %624 = vmatprep.subr.bf16.mxu0 0
      %625 = vmatpush1.bf16.msra.mxu0 0
      %626 = vmatprep.subr.bf16.mxu0 0
      %627 = vmatpush1.bf16.msra.mxu0 0
      %628 = vmatprep.subr.bf16.mxu0 0
      %629 = vmatpush1.bf16.msra.mxu0 0
      %630 = vmatprep.subr.bf16.mxu0 0
      %631 = vmatpush1.bf16.msra.mxu0 0
      %632 = vmatprep.subr.bf16.mxu0 0
      %633 = vmatpush1.bf16.msra.mxu0 0
      %634 = vmatprep.subr.bf16.mxu0 0
      %635 = vmatpush1.bf16.msra.mxu0 0
      %636 = vmatprep.subr.bf16.mxu0 0
      %637 = vmatpush1.bf16.msra.mxu0 0
      %638 = vmatprep.subr.bf16.mxu0 0
      %639 = vmatpush1.bf16.msra.mxu0 0
      %640 = vmatprep.subr.bf16.mxu0 0
      %641 = vmatpush1.bf16.msra.mxu0 0
      %642 = vmatprep.subr.bf16.mxu0 0
      %643 = vmatpush1.bf16.msra.mxu0 0
      %644 = vmatprep.subr.bf16.mxu0 0
      %645 = vmatpush1.bf16.msra.mxu0 0
      %646 = vmatprep.subr.bf16.mxu0 0
      %647 = vmatpush1.bf16.msra.mxu0 0
      %648 = vmatprep.subr.bf16.mxu0 0
      %649 = vmatpush1.bf16.msra.mxu0 0
      %650 = vmatprep.subr.bf16.mxu0 0
      %651 = vmatpush1.bf16.msra.mxu0 0
      %652 = vmatprep.mubr.bf16.mxu0 0
      %653 = vmatmul.mubr.bf16.gmra.mrb[0].mxu0 %v609
      %v654 = vpop.f32.mrb[0].mxu0
      %v655 = vadd.f32 %v572, %v654
      %v656 = vpop.f32.mrb[0].mxu0
      %v657 = vpop.f32.mrb[0].mxu0
      %v658 = vadd.f32 %v575, %v657
      %v659 = vpop.f32.mrb[0].mxu0
      %660 = vmatprep.mubr.bf16.mxu0 0
      %661 = vmatmul.mubr.bf16.gmra.mrb[0].mxu0 %v612
      %v662 = vpop.f32.mrb[0].mxu0
      %v663 = vadd.f32 %v580, %v662
      %v664 = vpop.f32.mrb[0].mxu0
      %v665 = vpop.f32.mrb[0].mxu0
      %v666 = vadd.f32 %v583, %v665
      %v667 = vpop.f32.mrb[0].mxu0
      %668 = vmatprep.mubr.bf16.mxu0 0
      %669 = vmatmul.mubr.bf16.gmra.mrb[0].mxu0 %v615
      %v670 = vpop.f32.mrb[0].mxu0
      %v671 = vadd.f32 %v588, %v670
      %v672 = vpop.f32.mrb[0].mxu0
      %v673 = vpop.f32.mrb[0].mxu0
      %v674 = vadd.f32 %v591, %v673
      %v675 = vpop.f32.mrb[0].mxu0
      %676 = vmatprep.mubr.bf16.mxu0 0
      %677 = vmatmul.mubr.bf16.gmra.mrb[0].mxu0 %v618
      %v678 = vpop.f32.mrb[0].mxu0
      %v679 = vadd.f32 %v596, %v678
      %v680 = vpop.f32.mrb[0].mxu0
      %v681 = vpop.f32.mrb[0].mxu0
      %v682 = vadd.f32 %v599, %v681
      %v683 = vpop.f32.mrb[0].mxu0
      %684 = vdwg.mxu0
      %v687 = vunpack.c.l.b16 %v431
      %v688 = vunpack.c.l.b16 %v432
      %v689 = vpack.c.b16 %v688, %v687
      %v692 = vsel %vm528, %v502, 0
      %v695 = vsel %vm528, %v505, 0
      %v698 = vsel %vm528, %v508, 0
      %v701 = vsel %vm528, %v521, 0
      %703 = vmatprep.subr.bf16.mxu0 0
      %704 = vmatpush1.bf16.msra.mxu0 %v689
      %705 = vmatprep.subr.bf16.mxu0 0
      %706 = vmatpush1.bf16.msra.mxu0 0
      %707 = vmatprep.subr.bf16.mxu0 0
      %708 = vmatpush1.bf16.msra.mxu0 0
      %709 = vmatprep.subr.bf16.mxu0 0
      %710 = vmatpush1.bf16.msra.mxu0 0
      %711 = vmatprep.subr.bf16.mxu0 0
      %712 = vmatpush1.bf16.msra.mxu0 0
      %713 = vmatprep.subr.bf16.mxu0 0
      %714 = vmatpush1.bf16.msra.mxu0 0
      %715 = vmatprep.subr.bf16.mxu0 0
      %716 = vmatpush1.bf16.msra.mxu0 0
      %717 = vmatprep.subr.bf16.mxu0 0
      %718 = vmatpush1.bf16.msra.mxu0 0
      %719 = vmatprep.subr.bf16.mxu0 0
      %720 = vmatpush1.bf16.msra.mxu0 0
      %721 = vmatprep.subr.bf16.mxu0 0
      %722 = vmatpush1.bf16.msra.mxu0 0
      %723 = vmatprep.subr.bf16.mxu0 0
      %724 = vmatpush1.bf16.msra.mxu0 0
      %725 = vmatprep.subr.bf16.mxu0 0
      %726 = vmatpush1.bf16.msra.mxu0 0
      %727 = vmatprep.subr.bf16.mxu0 0
      %728 = vmatpush1.bf16.msra.mxu0 0
      %729 = vmatprep.subr.bf16.mxu0 0
      %730 = vmatpush1.bf16.msra.mxu0 0
      %731 = vmatprep.subr.bf16.mxu0 0
      %732 = vmatpush1.bf16.msra.mxu0 0
      %733 = vmatprep.subr.bf16.mxu0 0
      %734 = vmatpush1.bf16.msra.mxu0 0
      %735 = vmatprep.mubr.bf16.mxu0 0
      %736 = vmatmul.mubr.bf16.gmra.mrb[0].mxu0 %v692
      %v737 = vpop.f32.mrb[0].mxu0
      %v738 = vadd.f32 0.0, %v737
      %v739 = vpop.f32.mrb[0].mxu0
      %v740 = vpop.f32.mrb[0].mxu0
      %v741 = vadd.f32 0.0, %v740
      %v742 = vpop.f32.mrb[0].mxu0
      %743 = vmatprep.mubr.bf16.mxu0 0
      %744 = vmatmul.mubr.bf16.gmra.mrb[0].mxu0 %v695
      %v745 = vpop.f32.mrb[0].mxu0
      %v746 = vadd.f32 0.0, %v745
      %v747 = vpop.f32.mrb[0].mxu0
      %v748 = vpop.f32.mrb[0].mxu0
      %v749 = vadd.f32 0.0, %v748
      %v750 = vpop.f32.mrb[0].mxu0
      %751 = vmatprep.mubr.bf16.mxu0 0
      %752 = vmatmul.mubr.bf16.gmra.mrb[0].mxu0 %v698
      %v753 = vpop.f32.mrb[0].mxu0
      %v754 = vadd.f32 0.0, %v753
      %v755 = vpop.f32.mrb[0].mxu0
      %v756 = vpop.f32.mrb[0].mxu0
      %v757 = vadd.f32 0.0, %v756
      %v758 = vpop.f32.mrb[0].mxu0
      %759 = vmatprep.mubr.bf16.mxu0 0
      %760 = vmatmul.mubr.bf16.gmra.mrb[0].mxu0 %v701
      %v761 = vpop.f32.mrb[0].mxu0
      %v762 = vadd.f32 0.0, %v761
      %v763 = vpop.f32.mrb[0].mxu0
      %v764 = vpop.f32.mrb[0].mxu0
      %v765 = vadd.f32 0.0, %v764
      %v766 = vpop.f32.mrb[0].mxu0
      %767 = vdwg.mxu0
      %v768 = vadd.f32 %v655, %v738
      %v769 = vadd.f32 %v658, %v741
      %v770 = vadd.f32 %v663, %v746
      %v771 = vadd.f32 %v666, %v749
      %v772 = vadd.f32 %v671, %v754
      %v773 = vadd.f32 %v674, %v757
      %v774 = vadd.f32 %v679, %v762
      %v775 = vadd.f32 %v682, %v765
      %v777 = vlaneseq
      %v778 = vshrl.u32 %v777, 7
      %v779 = vsub.s32 0, %v778
      %v780 = vrot.slane %v433, %v779
      %v782 = vadd.f32 %v768, %v780
      %v783 = vadd.f32 %v769, %v780
      %v784 = vadd.f32 %v770, %v780
      %v785 = vadd.f32 %v771, %v780
      %v786 = vadd.f32 %v772, %v780
      %v787 = vadd.f32 %v773, %v780
      %v788 = vadd.f32 %v774, %v780
      %v789 = vadd.f32 %v775, %v780
      %vm790 = vcmp.ge.f32.partialorder %v782, 0.0
      %vm791 = vcmp.ge.f32.partialorder %v783, 0.0
      %vm792 = vcmp.ge.f32.partialorder %v784, 0.0
      %vm793 = vcmp.ge.f32.partialorder %v785, 0.0
      %vm794 = vcmp.ge.f32.partialorder %v786, 0.0
      %vm795 = vcmp.ge.f32.partialorder %v787, 0.0
      %vm796 = vcmp.ge.f32.partialorder %v788, 0.0
      %vm797 = vcmp.ge.f32.partialorder %v789, 0.0
      %v798 = vmul.f32 %v782, 0.2
      %v799 = vmul.f32 %v783, 0.2
      %v800 = vmul.f32 %v784, 0.2
      %v801 = vmul.f32 %v785, 0.2
      %v802 = vmul.f32 %v786, 0.2
      %v803 = vmul.f32 %v787, 0.2
      %v804 = vmul.f32 %v788, 0.2
      %v805 = vmul.f32 %v789, 0.2
      %v806 = vsel %vm790, %v782, %v798
      %v807 = vsel %vm791, %v783, %v799
      %v808 = vsel %vm792, %v784, %v800
      %v809 = vsel %vm793, %v785, %v801
      %v810 = vsel %vm794, %v786, %v802
      %v811 = vsel %vm795, %v787, %v803
      %v812 = vsel %vm796, %v788, %v804
      %v813 = vsel %vm797, %v789, %v805
      %v814 = vpack.c.bf16 %v807, %v806
      %v815 = vpack.c.bf16 %v809, %v808
      %v816 = vpack.c.bf16 %v811, %v810
      %v817 = vpack.c.bf16 %v813, %v812
      %v822 = vunpack.c.l.b16 %v814
      %v823 = vunpack.c.h.b16 %v814
      %v824 = vunpack.c.l.b16 %v815
      %v825 = vunpack.c.h.b16 %v815
      %v826 = vunpack.c.l.b16 %v816
      %v827 = vunpack.c.h.b16 %v816
      %v828 = vunpack.c.l.b16 %v817
      %v829 = vunpack.c.h.b16 %v817
      %v830 = vpack.c.b16 %v822, %v822
      %v831 = vpack.c.b16 %v823, %v823
      %v832 = vpack.c.b16 %v824, %v824
      %v833 = vpack.c.b16 %v825, %v825
      %v834 = vpack.c.b16 %v826, %v826
      %v835 = vpack.c.b16 %v827, %v827
      %v836 = vpack.c.b16 %v828, %v828
      %v837 = vpack.c.b16 %v829, %v829
      %vm846 = vcmask 125952
      %847 = vst.msk [vmem:[%s380] sm:$0xf] %vm846, %v830
      %848 = vst.msk [vmem:[%s380 + $0x4] sm:$0xf] %vm846, %v831
      %849 = vst.msk [vmem:[%s380 + $0x8] sm:$0xf] %vm846, %v832
      %850 = vst.msk [vmem:[%s380 + $0xc] sm:$0xf] %vm846, %v833
      %851 = vst.msk [vmem:[%s380 + $0x10] sm:$0xf] %vm846, %v834
      %852 = vst.msk [vmem:[%s380 + $0x14] sm:$0xf] %vm846, %v835
      %853 = vst.msk [vmem:[%s380 + $0x18] sm:$0xf] %vm846, %v836
      %854 = vst.msk [vmem:[%s380 + $0x1c] sm:$0xf] %vm846, %v837
      %s855 = smul.u32 8, %s21
      %p856 = scmp.lt.s32.totalorder %s20, 1
      %s857 = scalar_select %p856, %s20, 1
      %p858 = scmp.lt.s32.totalorder %s855, 7
      %s859 = scalar_select %p858, %s855, 7
      %s860 = smul.addr %s857, 8
      %s861 = sadd.s32 %s859, %s860
      %s862 = smul.addr %s861, 4
      %s863 = scalar_lea.vmem %s5, %s862
      // Predicated region
      $region41: #{rrdbnet_forward.18} parent=39 // pred_check
        %p864 = pneg %p190
      $region42: #{rrdbnet_forward.18} parent=39 // pred_check_branch
        %866 = sbr.rel (%p864) target = $region44
      $region43: #{rrdbnet_forward.18} parent=39 // pred_region
        %s867 = smul.u32 8, %s21
      $region44: #{rrdbnet_forward.18} parent=39 // pred_fallthru
        _
    $region40: #{rrdbnet_forward.18} parent=5 // pred_fallthru
      _
    %p868 = scmp.le.s32.totalorder 2, %s11
    // Predicated region
    $region45: #{rrdbnet_forward.18} parent=5 // pred_check
      %p869 = pneg %p868
    $region46: #{rrdbnet_forward.18} parent=5 // pred_check_branch
      %871 = sbr.rel (%p869) target = $region48
    $region47: #{rrdbnet_forward.18} parent=5 // pred_region
      %s872 = ssub.s32 %s11, 2
      // Predicated region
      $region49: #{rrdbnet_forward.18} parent=47 // pred_check
        %p873 = pneg %p196
      $region50: #{rrdbnet_forward.18} parent=47 // pred_check_branch
        %875 = sbr.rel (%p873) target = $region52
      $region51: #{rrdbnet_forward.18} parent=47 // pred_region
        %s876 = smul.u32 8, %s23
        %p877 = scmp.lt.s32.totalorder %s22, 1
        %s878 = scalar_select %p877, %s22, 1
        %p879 = scmp.lt.s32.totalorder %s876, 7
        %s880 = scalar_select %p879, %s876, 7
        %s881 = smul.addr %s878, 8
        %s882 = sadd.s32 %s880, %s881
        %s883 = smul.addr %s882, 4
        %s884 = scalar_lea.vmem %s5, %s883
      $region52: #{rrdbnet_forward.18} parent=47 // pred_fallthru
        _
    $region48: #{rrdbnet_forward.18} parent=5 // pred_fallthru
      _
  $region6: #{rrdbnet_forward.18} parent=0 // loop_footer
    %s15 = sadd.s32 1, %s11
  $region7: #{rrdbnet_forward.18} parent=0 // loop_footer_branch
    %10 = sbr.rel target = $region3
  $region8: #{rrdbnet_forward.18} parent=0 // loop_exit
    _

// kernel: rrdbnet_forward.19
$region0: #{rrdbnet_forward.19}
  #allocation0 [shape = 'u32[]', space=smem, size = 0x4, offset = 0x4, fixed_abs, tag = 'smem constant byte address 0x4 - core index']
  #allocation1 [shape = 'u32[144,128]{1,0:T(1,128)}', space=vmem, size = 0x12000, scoped, tag = 'internal scratch']
  %s0 = inlined_call_operand.vmem [shape: bf16[2,128,16], index: 0, kind: input, shape index: {}, may-alias: {0,1,2}]
  %s1 = inlined_call_operand.vmem [shape: bf16[2,128,16], index: 1, kind: input, shape index: {}, may-alias: {0,1,2}]
  %s2 = inlined_call_operand.vmem [shape: bf16[2,128,16], index: 2, kind: input, shape index: {}, may-alias: {0,1,2}]
  %s3 = inlined_call_operand.vmem [shape: bf16[3,16,16], index: 3, kind: input, shape index: {}]
  %s4 = inlined_call_operand.vmem [shape: f32[1,16], index: 4, kind: input, shape index: {}]
  %s5 = inlined_call_operand.vmem [shape: bf16[2,128,16], index: 5, kind: output, shape index: {}]
  %s6 = sld [smem:[#allocation0]]
  $region53: #{rrdbnet_forward.19} parent=0
    _
  %s8 = ssub.s32 1, %s6
  %s9 = scalar_select 0, %s8, %s6
  loop: start=0, step=1, limit=4
  $region2: #{rrdbnet_forward.19} parent=0 // loop_pre_header
    _
  $region3: #{rrdbnet_forward.19} parent=0 // loop_header
    %s11 = sphi 0, %s15
    %p12 = scmp.ge.s32.totalorder %s11, 4
    %s18 = sphi 0, %s30
    %s19 = sphi 0, %s26
    %s20 = sphi 0, %s18
    %s21 = sphi 0, %s19
    %s22 = sphi 0, %s20
    %s23 = sphi 0, %s21
    %s35 = sphi 0, %s37
    %s38 = sphi 0, %s35
    %s39 = sphi 0, %s38
    %s55 = sphi 0, %s39
    %s71 = sphi 0, %s73
    %s74 = sphi 0, %s71
    %s75 = sphi 0, %s74
    %s91 = sphi 0, %s75
    %s107 = sphi 0, %s109
    %s110 = sphi 0, %s107
    %s111 = sphi 0, %s110
    %s127 = sphi 0, %s111
    %s131 = sphi 0, %s131
    %s133 = sphi 0, %s131
    %s134 = sphi 0, %s133
    %s148 = sphi 0, %s134
    %s152 = sphi 0, %s152
    %s154 = sphi 0, %s152
    %s155 = sphi 0, %s154
    %s169 = sphi 0, %s155
    %s177 = sphi 0, %s179
    %s180 = sphi 0, %s177
    %s181 = sphi 0, %s180
    %s197 = sphi 0, %s181
  $region4: #{rrdbnet_forward.19} parent=0 // loop_header_branch
    %14 = sbr.rel (%p12) target = $region8
  $region5: #{rrdbnet_forward.19} parent=0 // loop_body
    %s16 = ssub.s32 %s11, 1
    %s17 = ssub.s32 %s11, 2
    %s24 = sadd.s32 1, %s19
    %p25 = scmp.ge.s32.totalorder %s24, 1
    %s26 = scalar_select %p25, 0, %s24
    %s27 = sadd.s32 1, %s18
    %s28 = scalar_select %p25, %s27, %s18
    %p29 = scmp.ge.s32.totalorder %s28, 2
    %s30 = scalar_select %p29, 0, %s28
    %s31 = ssub.s32 %s18, %s30
    %s32 = ssub.s32 %s19, %s26
    %s33 = sor.u32 %s31, %s32
    %p34 = scmp.eq.s32.totalorder %s33, 0
    %s36 = sadd.s32 %s35, 1
    %s37 = scalar_select %p34, %s35, %s36
    %p40 = pneg %p34
    %p41 = scmp.eq.s32.totalorder %s11, 1
    %p42 = por %p40, %p41
    %p43 = scmp.ne.s32.totalorder %s35, %s38
    %p44 = scmp.eq.s32.totalorder %s11, 0
    %p45 = por %p43, %p44
    %p46 = scmp.ne.s32.totalorder %s35, %s38
    %p47 = scmp.eq.s32.totalorder %s16, 1
    %p48 = por %p46, %p47
    %p49 = scmp.ne.s32.totalorder %s38, %s39
    %p50 = scmp.eq.s32.totalorder %s16, 0
    %p51 = por %p49, %p50
    %p52 = scmp.ne.s32.totalorder %s38, %s39
    %p53 = scmp.eq.s32.totalorder %s17, 1
    %p54 = por %p52, %p53
    %p56 = scmp.ne.s32.totalorder %s39, %s55
    %p57 = scmp.eq.s32.totalorder %s17, 0
    %p58 = por %p56, %p57
    %s59 = smul.u32 %s19, 16
    %s60 = ssub.s32 %s59, 1
    %p61 = scmp.gt.s32.totalorder %s60, 0
    %s62 = scalar_select %p61, %s60, 0
    %s63 = smul.u32 %s26, 16
    %s64 = ssub.s32 %s63, 1
    %p65 = scmp.gt.s32.totalorder %s64, 0
    %s66 = scalar_select %p65, %s64, 0
    %s67 = ssub.s32 %s18, %s30
    %s68 = ssub.s32 %s62, %s66
    %s69 = sor.u32 %s67, %s68
    %p70 = scmp.eq.s32.totalorder %s69, 0
    %s72 = sadd.s32 %s71, 1
    %s73 = scalar_select %p70, %s71, %s72
    %p76 = pneg %p70
    %p77 = scmp.eq.s32.totalorder %s11, 1
    %p78 = por %p76, %p77
    %p79 = scmp.ne.s32.totalorder %s71, %s74
    %p80 = scmp.eq.s32.totalorder %s11, 0
    %p81 = por %p79, %p80
    %p82 = scmp.ne.s32.totalorder %s71, %s74
    %p83 = scmp.eq.s32.totalorder %s16, 1
    %p84 = por %p82, %p83
    %p85 = scmp.ne.s32.totalorder %s74, %s75
    %p86 = scmp.eq.s32.totalorder %s16, 0
    %p87 = por %p85, %p86
    %p88 = scmp.ne.s32.totalorder %s74, %s75
    %p89 = scmp.eq.s32.totalorder %s17, 1
    %p90 = por %p88, %p89
    %p92 = scmp.ne.s32.totalorder %s75, %s91
    %p93 = scmp.eq.s32.totalorder %s17, 0
    %p94 = por %p92, %p93
    %s95 = sadd.s32 %s19, 1
    %s96 = smul.u32 %s95, 16
    %p97 = scmp.lt.s32.totalorder %s96, 15
    %s98 = scalar_select %p97, %s96, 15
    %s99 = sadd.s32 %s26, 1
    %s100 = smul.u32 %s99, 16
    %p101 = scmp.lt.s32.totalorder %s100, 15
    %s102 = scalar_select %p101, %s100, 15
    %s103 = ssub.s32 %s18, %s30
    %s104 = ssub.s32 %s98, %s102
    %s105 = sor.u32 %s103, %s104
    %p106 = scmp.eq.s32.totalorder %s105, 0
    %s108 = sadd.s32 %s107, 1
    %s109 = scalar_select %p106, %s107, %s108
    %p112 = pneg %p106
    %p113 = scmp.eq.s32.totalorder %s11, 1
    %p114 = por %p112, %p113
    %p115 = scmp.ne.s32.totalorder %s107, %s110
    %p116 = scmp.eq.s32.totalorder %s11, 0
    %p117 = por %p115, %p116
    %p118 = scmp.ne.s32.totalorder %s107, %s110
    %p119 = scmp.eq.s32.totalorder %s16, 1
    %p120 = por %p118, %p119
    %p121 = scmp.ne.s32.totalorder %s110, %s111
    %p122 = scmp.eq.s32.totalorder %s16, 0
    %p123 = por %p121, %p122
    %p124 = scmp.ne.s32.totalorder %s110, %s111
    %p125 = scmp.eq.s32.totalorder %s17, 1
    %p126 = por %p124, %p125
    %p128 = scmp.ne.s32.totalorder %s111, %s127
    %p129 = scmp.eq.s32.totalorder %s17, 0
    %p130 = por %p128, %p129
    %s132 = sadd.s32 %s131, 1
    %p135 = scmp.eq.s32.totalorder %s11, 1
    %p136 = scmp.ne.s32.totalorder %s131, %s133
    %p137 = scmp.eq.s32.totalorder %s11, 0
    %p138 = por %p136, %p137
    %p139 = scmp.ne.s32.totalorder %s131, %s133
    %p140 = scmp.eq.s32.totalorder %s16, 1
    %p141 = por %p139, %p140
    %p142 = scmp.ne.s32.totalorder %s133, %s134
    %p143 = scmp.eq.s32.totalorder %s16, 0
    %p144 = por %p142, %p143
    %p145 = scmp.ne.s32.totalorder %s133, %s134
    %p146 = scmp.eq.s32.totalorder %s17, 1
    %p147 = por %p145, %p146
    %p149 = scmp.ne.s32.totalorder %s134, %s148
    %p150 = scmp.eq.s32.totalorder %s17, 0
    %p151 = por %p149, %p150
    %s153 = sadd.s32 %s152, 1
    %p156 = scmp.eq.s32.totalorder %s11, 1
    %p157 = scmp.ne.s32.totalorder %s152, %s154
    %p158 = scmp.eq.s32.totalorder %s11, 0
    %p159 = por %p157, %p158
    %p160 = scmp.ne.s32.totalorder %s152, %s154
    %p161 = scmp.eq.s32.totalorder %s16, 1
    %p162 = por %p160, %p161
    %p163 = scmp.ne.s32.totalorder %s154, %s155
    %p164 = scmp.eq.s32.totalorder %s16, 0
    %p165 = por %p163, %p164
    %p166 = scmp.ne.s32.totalorder %s154, %s155
    %p167 = scmp.eq.s32.totalorder %s17, 1
    %p168 = por %p166, %p167
    %p170 = scmp.ne.s32.totalorder %s155, %s169
    %p171 = scmp.eq.s32.totalorder %s17, 0
    %p172 = por %p170, %p171
    %s173 = ssub.s32 %s18, %s30
    %s174 = ssub.s32 %s19, %s26
    %s175 = sor.u32 %s173, %s174
    %p176 = scmp.eq.s32.totalorder %s175, 0
    %s178 = sadd.s32 %s177, 1
    %s179 = scalar_select %p176, %s177, %s178
    %p182 = pneg %p176
    %p183 = scmp.eq.s32.totalorder %s11, 1
    %p184 = por %p182, %p183
    %p185 = scmp.ne.s32.totalorder %s177, %s180
    %p186 = scmp.eq.s32.totalorder %s11, 0
    %p187 = por %p185, %p186
    %p188 = scmp.ne.s32.totalorder %s177, %s180
    %p189 = scmp.eq.s32.totalorder %s16, 1
    %p190 = por %p188, %p189
    %p191 = scmp.ne.s32.totalorder %s180, %s181
    %p192 = scmp.eq.s32.totalorder %s16, 0
    %p193 = por %p191, %p192
    %p194 = scmp.ne.s32.totalorder %s180, %s181
    %p195 = scmp.eq.s32.totalorder %s17, 1
    %p196 = por %p194, %p195
    %p198 = scmp.ne.s32.totalorder %s181, %s197
    %p199 = scmp.eq.s32.totalorder %s17, 0
    %p200 = por %p198, %p199
    %p201 = scmp.le.s32.totalorder 1, %s11
    %p202 = scmp.lt.s32.totalorder %s11, 3
    %p203 = pnand %p201, %p202
    %p204 = pneg %p203
    // Predicated region
    $region9: #{rrdbnet_forward.19} parent=5 // pred_check
      _
    $region10: #{rrdbnet_forward.19} parent=5 // pred_check_branch
      %206 = sbr.rel (%p203) target = $region12
    $region11: #{rrdbnet_forward.19} parent=5 // pred_region
      %s207 = ssub.s32 %s11, 1
      // Predicated region
      $region13: #{rrdbnet_forward.19} parent=11 // pred_check
        %p208 = pneg %p144
      $region14: #{rrdbnet_forward.19} parent=11 // pred_check_branch
        %210 = sbr.rel (%p208) target = $region16
      $region15: #{rrdbnet_forward.19} parent=11 // pred_region
        _
      $region16: #{rrdbnet_forward.19} parent=11 // pred_fallthru
        _
      // Predicated region
      $region17: #{rrdbnet_forward.19} parent=11 // pred_check
        %p211 = pneg %p165
      $region18: #{rrdbnet_forward.19} parent=11 // pred_check_branch
        %213 = sbr.rel (%p211) target = $region20
      $region19: #{rrdbnet_forward.19} parent=11 // pred_region
        _
      $region20: #{rrdbnet_forward.19} parent=11 // pred_fallthru
        _
    $region12: #{rrdbnet_forward.19} parent=5 // pred_fallthru
      _
    %p214 = scmp.lt.s32.totalorder %s11, 2
    // Predicated region
    $region21: #{rrdbnet_forward.19} parent=5 // pred_check
      %p215 = pneg %p214
    $region22: #{rrdbnet_forward.19} parent=5 // pred_check_branch
      %217 = sbr.rel (%p215) target = $region24
    $region23: #{rrdbnet_forward.19} parent=5 // pred_region
      // Predicated region
      $region25: #{rrdbnet_forward.19} parent=23 // pred_check
        %p218 = pneg %p45
      $region26: #{rrdbnet_forward.19} parent=23 // pred_check_branch
        %220 = sbr.rel (%p218) target = $region28
      $region27: #{rrdbnet_forward.19} parent=23 // pred_region
        %s221 = smul.u32 16, %s19
        %p222 = scmp.lt.s32.totalorder %s18, 1
        %s223 = scalar_select %p222, %s18, 1
        %p224 = scmp.lt.s32.totalorder %s221, 15
        %s225 = scalar_select %p224, %s221, 15
        %s226 = smul.addr %s223, 16
        %s227 = sadd.s32 %s225, %s226
        %s228 = smul.addr %s227, 4
        %s229 = scalar_lea.vmem %s0, %s228
        %s230 = smul.u32 16, %s19
      $region28: #{rrdbnet_forward.19} parent=23 // pred_fallthru
        _
      // Predicated region
      $region29: #{rrdbnet_forward.19} parent=23 // pred_check
        %p231 = pneg %p81
      $region30: #{rrdbnet_forward.19} parent=23 // pred_check_branch
        %233 = sbr.rel (%p231) target = $region32
      $region31: #{rrdbnet_forward.19} parent=23 // pred_region
        %s234 = smul.u32 %s19, 16
        %s235 = ssub.s32 %s234, 1
        %p236 = scmp.gt.s32.totalorder %s235, 0
        %s237 = scalar_select %p236, %s235, 0
        %p238 = scmp.lt.s32.totalorder %s18, 1
        %s239 = scalar_select %p238, %s18, 1
        %p240 = scmp.lt.s32.totalorder %s237, 15
        %s241 = scalar_select %p240, %s237, 15
        %s242 = smul.addr %s239, 16
        %s243 = sadd.s32 %s241, %s242
        %s244 = smul.addr %s243, 4
        %s245 = scalar_lea.vmem %s1, %s244
        %s246 = smul.u32 %s19, 16
        %s247 = ssub.s32 %s246, 1
        %p248 = scmp.gt.s32.totalorder %s247, 0
        %s249 = scalar_select %p248, %s247, 0
      $region32: #{rrdbnet_forward.19} parent=23 // pred_fallthru
        _
      // Predicated region
      $region33: #{rrdbnet_forward.19} parent=23 // pred_check
        %p250 = pneg %p117
      $region34: #{rrdbnet_forward.19} parent=23 // pred_check_branch
        %252 = sbr.rel (%p250) target = $region36
      $region35: #{rrdbnet_forward.19} parent=23 // pred_region
        %s253 = sadd.s32 %s19, 1
        %s254 = smul.u32 %s253, 16
        %p255 = scmp.lt.s32.totalorder %s254, 15
        %s256 = scalar_select %p255, %s254, 15
        %p257 = scmp.lt.s32.totalorder %s18, 1
        %s258 = scalar_select %p257, %s18, 1
        %p259 = scmp.lt.s32.totalorder %s256, 15
        %s260 = scalar_select %p259, %s256, 15
        %s261 = smul.addr %s258, 16
        %s262 = sadd.s32 %s260, %s261
        %s263 = smul.addr %s262, 4
        %s264 = scalar_lea.vmem %s2, %s263
        %s265 = sadd.s32 %s19, 1
        %s266 = smul.u32 %s265, 16
        %p267 = scmp.lt.s32.totalorder %s266, 15
        %s268 = scalar_select %p267, %s266, 15
      $region36: #{rrdbnet_forward.19} parent=23 // pred_fallthru
        _
    $region24: #{rrdbnet_forward.19} parent=5 // pred_fallthru
      _
    %p269 = scmp.le.s32.totalorder 1, %s11
    %p270 = scmp.lt.s32.totalorder %s11, 3
    %p271 = pnand %p269, %p270
    %p272 = pneg %p271
    // Predicated region
    $region37: #{rrdbnet_forward.19} parent=5 // pred_check
      _
    $region38: #{rrdbnet_forward.19} parent=5 // pred_check_branch
      %274 = sbr.rel (%p271) target = $region40
    $region39: #{rrdbnet_forward.19} parent=5 // pred_region
      %s275 = ssub.s32 %s11, 1
      %s276 = smul.u32 16, %s21
      %p277 = scmp.lt.s32.totalorder %s20, 1
      %s278 = scalar_select %p277, %s20, 1
      %p279 = scmp.lt.s32.totalorder %s276, 15
      %s280 = scalar_select %p279, %s276, 15
      %s281 = smul.addr %s278, 16
      %s282 = sadd.s32 %s280, %s281
      %s283 = smul.addr %s282, 4
      %s284 = scalar_lea.vmem %s0, %s283
      %p285 = pneg %p51
      %p286 = pneg %p48
      %s287 = smul.u32 %s21, 16
      %s288 = ssub.s32 %s287, 1
      %p289 = scmp.gt.s32.totalorder %s288, 0
      %s290 = scalar_select %p289, %s288, 0
      %p291 = scmp.lt.s32.totalorder %s20, 1
      %s292 = scalar_select %p291, %s20, 1
      %p293 = scmp.lt.s32.totalorder %s290, 15
      %s294 = scalar_select %p293, %s290, 15
      %s295 = smul.addr %s292, 16
      %s296 = sadd.s32 %s294, %s295
      %s297 = smul.addr %s296, 4
      %s298 = scalar_lea.vmem %s1, %s297
      %p299 = pneg %p87
      %p300 = pneg %p84
      %s301 = sadd.s32 %s21, 1
      %s302 = smul.u32 %s301, 16
      %p303 = scmp.lt.s32.totalorder %s302, 15
      %s304 = scalar_select %p303, %s302, 15
      %p305 = scmp.lt.s32.totalorder %s20, 1
      %s306 = scalar_select %p305, %s20, 1
      %p307 = scmp.lt.s32.totalorder %s304, 15
      %s308 = scalar_select %p307, %s304, 15
      %s309 = smul.addr %s306, 16
      %s310 = sadd.s32 %s308, %s309
      %s311 = smul.addr %s310, 4
      %s312 = scalar_lea.vmem %s2, %s311
      %p313 = pneg %p123
      %p314 = pneg %p120
      %p315 = pneg %p144
      %p316 = pneg %p141
      %p317 = pneg %p165
      %p318 = pneg %p162
      %p319 = pneg %p193
      %p320 = pneg %p190
      %s321 = smul.u32 16, %s21
      %p322 = scmp.lt.s32.totalorder %s20, 1
      %s323 = scalar_select %p322, %s20, 1
      %p324 = scmp.lt.s32.totalorder %s321, 15
      %s325 = scalar_select %p324, %s321, 15
      %s326 = smul.addr %s323, 16
      %s327 = sadd.s32 %s325, %s326
      %s328 = smul.addr %s327, 4
      %s329 = scalar_lea.vmem %s5, %s328
      %s330 = smul.u32 16, %s21
      %p331 = scmp.lt.s32.totalorder %s20, 1
      %s332 = scalar_select %p331, %s20, 1
      %p333 = scmp.lt.s32.totalorder %s330, 15
      %s334 = scalar_select %p333, %s330, 15
      %s335 = smul.addr %s332, 16
      %s336 = sadd.s32 %s334, %s335
      %s337 = smul.addr %s336, 4
      %s338 = scalar_lea.vmem %s0, %s337
      %s339 = smul.u32 16, %s21
      %s340 = smul.u32 %s21, 16
      %s341 = ssub.s32 %s340, 1
      %p342 = scmp.gt.s32.totalorder %s341, 0
      %s343 = scalar_select %p342, %s341, 0
      %p344 = scmp.lt.s32.totalorder %s20, 1
      %s345 = scalar_select %p344, %s20, 1
      %p346 = scmp.lt.s32.totalorder %s343, 15
      %s347 = scalar_select %p346, %s343, 15
      %s348 = smul.addr %s345, 16
      %s349 = sadd.s32 %s347, %s348
      %s350 = smul.addr %s349, 4
      %s351 = scalar_lea.vmem %s1, %s350
      %s352 = smul.u32 %s21, 16
      %s353 = ssub.s32 %s352, 1
      %p354 = scmp.gt.s32.totalorder %s353, 0
      %s355 = scalar_select %p354, %s353, 0
      %s356 = sadd.s32 %s21, 1
      %s357 = smul.u32 %s356, 16
      %p358 = scmp.lt.s32.totalorder %s357, 15
      %s359 = scalar_select %p358, %s357, 15
      %p360 = scmp.lt.s32.totalorder %s20, 1
      %s361 = scalar_select %p360, %s20, 1
      %p362 = scmp.lt.s32.totalorder %s359, 15
      %s363 = scalar_select %p362, %s359, 15
      %s364 = smul.addr %s361, 16
      %s365 = sadd.s32 %s363, %s364
      %s366 = smul.addr %s365, 4
      %s367 = scalar_lea.vmem %s2, %s366
      %s368 = sadd.s32 %s21, 1
      %s369 = smul.u32 %s368, 16
      %p370 = scmp.lt.s32.totalorder %s369, 15
      %s371 = scalar_select %p370, %s369, 15
      %s372 = smul.u32 16, %s21
      %p373 = scmp.lt.s32.totalorder %s20, 1
      %s374 = scalar_select %p373, %s20, 1
      %p375 = scmp.lt.s32.totalorder %s372, 15
      %s376 = scalar_select %p375, %s372, 15
      %s377 = smul.addr %s374, 16
      %s378 = sadd.s32 %s376, %s377
      %s379 = smul.addr %s378, 4
      %s380 = scalar_lea.vmem %s5, %s379
      %s381 = smul.u32 16, %s21
      %v383 = vld [vmem:[%s338] sm:$0xf]
      %v384 = vld [vmem:[%s338 + $0x4] sm:$0xf]
      %v385 = vld [vmem:[%s338 + $0x8] sm:$0xf]
      %v386 = vld [vmem:[%s338 + $0xc] sm:$0xf]
      %v387 = vld [vmem:[%s338 + $0x10] sm:$0xf]
      %v388 = vld [vmem:[%s338 + $0x14] sm:$0xf]
      %v389 = vld [vmem:[%s338 + $0x18] sm:$0xf]
      %v390 = vld [vmem:[%s338 + $0x1c] sm:$0xf]
      %v391 = vld [vmem:[%s338 + $0x20] sm:$0xf]
      %v392 = vld [vmem:[%s338 + $0x24] sm:$0xf]
      %v393 = vld [vmem:[%s338 + $0x28] sm:$0xf]
      %v394 = vld [vmem:[%s338 + $0x2c] sm:$0xf]
      %v395 = vld [vmem:[%s338 + $0x30] sm:$0xf]
      %v396 = vld [vmem:[%s338 + $0x34] sm:$0xf]
      %v397 = vld [vmem:[%s338 + $0x38] sm:$0xf]
      %v398 = vld [vmem:[%s338 + $0x3c] sm:$0xf]
      %v399 = vld [vmem:[%s351] sm:$0xf]
      %v400 = vld [vmem:[%s367] sm:$0xf]
      %p401 = scmp.gt.s32.totalorder %s21, 0
      %s402 = scalar_select %p401, 1.0, 0.0
      %p404 = scmp.ne.f32.partialorder %s402, %s402
      %s405 = sshrl.u32 %s402, 16
      %s406 = sand.u32 %s405, 1
      %s407 = sadd.s32 32767, %s406
      %s408 = sadd.s32 %s402, %s407
      %s409 = sand.u32 %s408, 4294901760
      %s410 = scalar_select %p404, 2143289344, %s409
      %s412 = sshrl.u32 %s410, 16
      %p413 = scmp.lt.s32.totalorder %s21, 0
      %s414 = scalar_select %p413, 1.0, 0.0
      %p416 = scmp.ne.f32.partialorder %s414, %s414
      %s417 = sshrl.u32 %s414, 16
      %s418 = sand.u32 %s417, 1
      %s419 = sadd.s32 32767, %s418
      %s420 = sadd.s32 %s414, %s419
      %s421 = sand.u32 %s420, 4294901760
      %s422 = scalar_select %p416, 2143289344, %s421
      %s424 = sshrl.u32 %s422, 16
      %s425 = sshll.u32 %s412, 16
      %s426 = sor.u32 %s412, %s425
      %v427 = vstv %s426
      %v429 = vmul.bf16 %v399, %v427
      %s430 = sshll.u32 %s424, 16
      %s431 = sor.u32 %s424, %s430
      %v432 = vstv %s431
      %v434 = vmul.bf16 %v400, %v432
      %v435 = vld [vmem:[%s3] sm:$0xf]
      %v436 = vld [vmem:[%s3 + $0x4] sm:$0xf]
      %v437 = vld [vmem:[%s3 + $0x8] sm:$0xf]
      %v438 = vld [vmem:[%s3 + $0xc] sm:$0xf]
      %v439 = vld [vmem:[%s3 + $0x10] sm:$0xf]
      %v440 = vld [vmem:[%s3 + $0x14] sm:$0xf]
      %v441 = vld [vmem:[%s4] sm:$0x1]
      %v443 = vunpack.c.l.b16 %v429
      %v444 = vpack.c.b16 %v443, %v443
      %v446 = vshrl.u32 %v444, 16
      %v448 = vrot.slane %v446, 3
      %v466 = vunpack.c.l.b16 %v383
      %v467 = vunpack.c.l.b16 %v384
      %v468 = vunpack.c.l.b16 %v385
      %v469 = vunpack.c.l.b16 %v386
      %v470 = vunpack.c.l.b16 %v387
      %v471 = vunpack.c.l.b16 %v388
      %v472 = vunpack.c.l.b16 %v389
      %v473 = vunpack.c.l.b16 %v390
      %v474 = vunpack.c.l.b16 %v391
      %v475 = vunpack.c.l.b16 %v392
      %v476 = vunpack.c.l.b16 %v393
      %v477 = vunpack.c.l.b16 %v394
      %v478 = vunpack.c.l.b16 %v395
      %v479 = vunpack.c.l.b16 %v396
      %v480 = vunpack.c.l.b16 %v397
      %v481 = vunpack.c.l.b16 %v398
      %v482 = vpack.c.b16 %v467, %v466
      %v483 = vpack.c.b16 %v469, %v468
      %v484 = vpack.c.b16 %v471, %v470
      %v485 = vpack.c.b16 %v473, %v472
      %v486 = vpack.c.b16 %v475, %v474
      %v487 = vpack.c.b16 %v477, %v476
      %v488 = vpack.c.b16 %v479, %v478
      %v489 = vpack.c.b16 %v481, %v480
      %vm490 = vsmask.f32 256
      %v492 = vshrl.u32 %v482, 16
      %v494 = vrot.slane %v492, 7
      %v495 = vshll.u32 %v482, 16
      %v497 = vor.u32 %v494, %v495
      %v499 = vshrl.u32 %v483, 16
      %v501 = vrot.slane %v499, 7
      %v502 = vshll.u32 %v483, 16
      %v504 = vor.u32 %v501, %v502
      %v505 = vsel %vm490, %v494, %v504
      %v507 = vshrl.u32 %v484, 16
      %v509 = vrot.slane %v507, 7
      %v510 = vshll.u32 %v484, 16
      %v512 = vor.u32 %v509, %v510
      %v513 = vsel %vm490, %v501, %v512
      %v515 = vshrl.u32 %v485, 16
      %v517 = vrot.slane %v515, 7
      %v518 = vshll.u32 %v485, 16
      %v520 = vor.u32 %v517, %v518
      %v521 = vsel %vm490, %v509, %v520
      %v523 = vshrl.u32 %v486, 16
      %v525 = vrot.slane %v523, 7
      %v526 = vshll.u32 %v486, 16
      %v528 = vor.u32 %v525, %v526
      %v529 = vsel %vm490, %v517, %v528
      %v531 = vshrl.u32 %v487, 16
      %v533 = vrot.slane %v531, 7
      %v534 = vshll.u32 %v487, 16
      %v536 = vor.u32 %v533, %v534
      %v537 = vsel %vm490, %v525, %v536
      %v539 = vshrl.u32 %v488, 16
      %v541 = vrot.slane %v539, 7
      %v542 = vshll.u32 %v488, 16
      %v544 = vor.u32 %v541, %v542
      %v545 = vsel %vm490, %v533, %v544
      %v547 = vshrl.u32 %v489, 16
      %v549 = vrot.slane %v547, 7
      %v550 = vshll.u32 %v489, 16
      %v552 = vor.u32 %v549, %v550
      %v553 = vsel %vm490, %v541, %v552
      %vm555 = vcmask 1040384
      %vm556 = vmand %vm555, %vm490
      %v557 = vsel %vm556, %v448, %v497
      %vm558 = vsmask.f32 7424
      %v559 = vrot.slane %v495, 1
      %v560 = vor.u32 %v492, %v559
      %v561 = vrot.slane %v502, 1
      %v562 = vsel %vm558, %v560, %v561
      %v563 = vor.u32 %v499, %v561
      %v564 = vrot.slane %v510, 1
      %v565 = vsel %vm558, %v563, %v564
      %v566 = vor.u32 %v507, %v564
      %v567 = vrot.slane %v518, 1
      %v568 = vsel %vm558, %v566, %v567
      %v569 = vor.u32 %v515, %v567
      %v570 = vrot.slane %v526, 1
      %v571 = vsel %vm558, %v569, %v570
      %v572 = vor.u32 %v523, %v570
      %v573 = vrot.slane %v534, 1
      %v574 = vsel %vm558, %v572, %v573
      %v575 = vor.u32 %v531, %v573
      %v576 = vrot.slane %v542, 1
      %v577 = vsel %vm558, %v575, %v576
      %v578 = vor.u32 %v539, %v576
      %v579 = vrot.slane %v550, 1
      %v580 = vsel %vm558, %v578, %v579
      %v581 = vor.u32 %v547, %v579
      %v584 = vunpack.c.l.b16 %v434
      %v585 = vpack.c.b16 %v584, %v584
      %v587 = vshll.u32 %v585, 16
      %v589 = vrot.slane %v587, 1
      %vm591 = vcmask 1047552
      %vm592 = vmand %vm591, %vm558
      %v593 = vsel %vm592, %v581, %v589
      %v596 = vunpack.c.l.b16 %v437
      %v597 = vunpack.c.l.b16 %v438
      %v598 = vpack.c.b16 %v597, %v596
      %vm600 = vcmask 130048
      %v601 = vsel %vm600, %v482, 0
      %v603 = vsel %vm600, %v483, 0
      %v605 = vsel %vm600, %v484, 0
      %v607 = vsel %vm600, %v485, 0
      %v609 = vsel %vm600, %v486, 0
      %v611 = vsel %vm600, %v487, 0
      %v613 = vsel %vm600, %v488, 0
      %v615 = vsel %vm600, %v489, 0
      %617 = vmatprep.subr.bf16.mxu0 0
      %618 = vmatpush1.bf16.msra.mxu0 %v598
      %619 = vmatprep.subr.bf16.mxu0 0
      %620 = vmatpush1.bf16.msra.mxu0 0
      %621 = vmatprep.subr.bf16.mxu0 0
      %622 = vmatpush1.bf16.msra.mxu0 0
      %623 = vmatprep.subr.bf16.mxu0 0
      %624 = vmatpush1.bf16.msra.mxu0 0
      %625 = vmatprep.subr.bf16.mxu0 0
      %626 = vmatpush1.bf16.msra.mxu0 0
      %627 = vmatprep.subr.bf16.mxu0 0
      %628 = vmatpush1.bf16.msra.mxu0 0
      %629 = vmatprep.subr.bf16.mxu0 0
      %630 = vmatpush1.bf16.msra.mxu0 0
      %631 = vmatprep.subr.bf16.mxu0 0
      %632 = vmatpush1.bf16.msra.mxu0 0
      %633 = vmatprep.subr.bf16.mxu0 0
      %634 = vmatpush1.bf16.msra.mxu0 0
      %635 = vmatprep.subr.bf16.mxu0 0
      %636 = vmatpush1.bf16.msra.mxu0 0
      %637 = vmatprep.subr.bf16.mxu0 0
      %638 = vmatpush1.bf16.msra.mxu0 0
      %639 = vmatprep.subr.bf16.mxu0 0
      %640 = vmatpush1.bf16.msra.mxu0 0
      %641 = vmatprep.subr.bf16.mxu0 0
      %642 = vmatpush1.bf16.msra.mxu0 0
      %643 = vmatprep.subr.bf16.mxu0 0
      %644 = vmatpush1.bf16.msra.mxu0 0
      %645 = vmatprep.subr.bf16.mxu0 0
      %646 = vmatpush1.bf16.msra.mxu0 0
      %647 = vmatprep.subr.bf16.mxu0 0
      %648 = vmatpush1.bf16.msra.mxu0 0
      %649 = vmatprep.mubr.bf16.mxu0 0
      %650 = vmatmul.mubr.bf16.gmra.mrb[0].mxu0 %v601
      %v651 = vpop.f32.mrb[0].mxu0
      %v652 = vadd.f32 0.0, %v651
      %v653 = vpop.f32.mrb[0].mxu0
      %v654 = vpop.f32.mrb[0].mxu0
      %v655 = vadd.f32 0.0, %v654
      %v656 = vpop.f32.mrb[0].mxu0
      %657 = vmatprep.mubr.bf16.mxu0 0
      %658 = vmatmul.mubr.bf16.gmra.mrb[0].mxu0 %v603
      %v659 = vpop.f32.mrb[0].mxu0
      %v660 = vadd.f32 0.0, %v659
      %v661 = vpop.f32.mrb[0].mxu0
      %v662 = vpop.f32.mrb[0].mxu0
      %v663 = vadd.f32 0.0, %v662
      %v664 = vpop.f32.mrb[0].mxu0
      %665 = vmatprep.mubr.bf16.mxu0 0
      %666 = vmatmul.mubr.bf16.gmra.mrb[0].mxu0 %v605
      %v667 = vpop.f32.mrb[0].mxu0
      %v668 = vadd.f32 0.0, %v667
      %v669 = vpop.f32.mrb[0].mxu0
      %v670 = vpop.f32.mrb[0].mxu0
      %v671 = vadd.f32 0.0, %v670
      %v672 = vpop.f32.mrb[0].mxu0
      %673 = vmatprep.mubr.bf16.mxu0 0
      %674 = vmatmul.mubr.bf16.gmra.mrb[0].mxu0 %v607
      %v675 = vpop.f32.mrb[0].mxu0
      %v676 = vadd.f32 0.0, %v675
      %v677 = vpop.f32.mrb[0].mxu0
      %v678 = vpop.f32.mrb[0].mxu0
      %v679 = vadd.f32 0.0, %v678
      %v680 = vpop.f32.mrb[0].mxu0
      %681 = vmatprep.mubr.bf16.mxu0 0
      %682 = vmatmul.mubr.bf16.gmra.mrb[0].mxu0 %v609
      %v683 = vpop.f32.mrb[0].mxu0
      %v684 = vadd.f32 0.0, %v683
      %v685 = vpop.f32.mrb[0].mxu0
      %v686 = vpop.f32.mrb[0].mxu0
      %v687 = vadd.f32 0.0, %v686
      %v688 = vpop.f32.mrb[0].mxu0
      %689 = vmatprep.mubr.bf16.mxu0 0
      %690 = vmatmul.mubr.bf16.gmra.mrb[0].mxu0 %v611
      %v691 = vpop.f32.mrb[0].mxu0
      %v692 = vadd.f32 0.0, %v691
      %v693 = vpop.f32.mrb[0].mxu0
      %v694 = vpop.f32.mrb[0].mxu0
      %v695 = vadd.f32 0.0, %v694
      %v696 = vpop.f32.mrb[0].mxu0
      %697 = vmatprep.mubr.bf16.mxu0 0
      %698 = vmatmul.mubr.bf16.gmra.mrb[0].mxu0 %v613
      %v699 = vpop.f32.mrb[0].mxu0
      %v700 = vadd.f32 0.0, %v699
      %v701 = vpop.f32.mrb[0].mxu0
      %v702 = vpop.f32.mrb[0].mxu0
      %v703 = vadd.f32 0.0, %v702
      %v704 = vpop.f32.mrb[0].mxu0
      %705 = vmatprep.mubr.bf16.mxu0 0
      %706 = vmatmul.mubr.bf16.gmra.mrb[0].mxu0 %v615
      %v707 = vpop.f32.mrb[0].mxu0
      %v708 = vadd.f32 0.0, %v707
      %v709 = vpop.f32.mrb[0].mxu0
      %v710 = vpop.f32.mrb[0].mxu0
      %v711 = vadd.f32 0.0, %v710
      %v712 = vpop.f32.mrb[0].mxu0
      %713 = vdwg.mxu0
      %v716 = vunpack.c.l.b16 %v435
      %v717 = vunpack.c.l.b16 %v436
      %v718 = vpack.c.b16 %v717, %v716
      %v721 = vsel %vm600, %v557, 0
      %v724 = vsel %vm600, %v505, 0
      %v727 = vsel %vm600, %v513, 0
      %v730 = vsel %vm600, %v521, 0
      %v733 = vsel %vm600, %v529, 0
      %v736 = vsel %vm600, %v537, 0
      %v739 = vsel %vm600, %v545, 0
      %v742 = vsel %vm600, %v553, 0
      %744 = vmatprep.subr.bf16.mxu0 0
      %745 = vmatpush1.bf16.msra.mxu0 %v718
      %746 = vmatprep.subr.bf16.mxu0 0
      %747 = vmatpush1.bf16.msra.mxu0 0
      %748 = vmatprep.subr.bf16.mxu0 0
      %749 = vmatpush1.bf16.msra.mxu0 0
      %750 = vmatprep.subr.bf16.mxu0 0
      %751 = vmatpush1.bf16.msra.mxu0 0
      %752 = vmatprep.subr.bf16.mxu0 0
      %753 = vmatpush1.bf16.msra.mxu0 0
      %754 = vmatprep.subr.bf16.mxu0 0
      %755 = vmatpush1.bf16.msra.mxu0 0
      %756 = vmatprep.subr.bf16.mxu0 0
      %757 = vmatpush1.bf16.msra.mxu0 0
      %758 = vmatprep.subr.bf16.mxu0 0
      %759 = vmatpush1.bf16.msra.mxu0 0
      %760 = vmatprep.subr.bf16.mxu0 0
      %761 = vmatpush1.bf16.msra.mxu0 0
      %762 = vmatprep.subr.bf16.mxu0 0
      %763 = vmatpush1.bf16.msra.mxu0 0
      %764 = vmatprep.subr.bf16.mxu0 0
      %765 = vmatpush1.bf16.msra.mxu0 0
      %766 = vmatprep.subr.bf16.mxu0 0
      %767 = vmatpush1.bf16.msra.mxu0 0
      %768 = vmatprep.subr.bf16.mxu0 0
      %769 = vmatpush1.bf16.msra.mxu0 0
      %770 = vmatprep.subr.bf16.mxu0 0
      %771 = vmatpush1.bf16.msra.mxu0 0
      %772 = vmatprep.subr.bf16.mxu0 0
      %773 = vmatpush1.bf16.msra.mxu0 0
      %774 = vmatprep.subr.bf16.mxu0 0
      %775 = vmatpush1.bf16.msra.mxu0 0
      %776 = vmatprep.mubr.bf16.mxu0 0
      %777 = vmatmul.mubr.bf16.gmra.mrb[0].mxu0 %v721
      %v778 = vpop.f32.mrb[0].mxu0
      %v779 = vadd.f32 %v652, %v778
      %v780 = vpop.f32.mrb[0].mxu0
      %v781 = vpop.f32.mrb[0].mxu0
      %v782 = vadd.f32 %v655, %v781
      %v783 = vpop.f32.mrb[0].mxu0
      %784 = vmatprep.mubr.bf16.mxu0 0
      %785 = vmatmul.mubr.bf16.gmra.mrb[0].mxu0 %v724
      %v786 = vpop.f32.mrb[0].mxu0
      %v787 = vadd.f32 %v660, %v786
      %v788 = vpop.f32.mrb[0].mxu0
      %v789 = vpop.f32.mrb[0].mxu0
      %v790 = vadd.f32 %v663, %v789
      %v791 = vpop.f32.mrb[0].mxu0
      %792 = vmatprep.mubr.bf16.mxu0 0
      %793 = vmatmul.mubr.bf16.gmra.mrb[0].mxu0 %v727
      %v794 = vpop.f32.mrb[0].mxu0
      %v795 = vadd.f32 %v668, %v794
      %v796 = vpop.f32.mrb[0].mxu0
      %v797 = vpop.f32.mrb[0].mxu0
      %v798 = vadd.f32 %v671, %v797
      %v799 = vpop.f32.mrb[0].mxu0
      %800 = vmatprep.mubr.bf16.mxu0 0
      %801 = vmatmul.mubr.bf16.gmra.mrb[0].mxu0 %v730
      %v802 = vpop.f32.mrb[0].mxu0
      %v803 = vadd.f32 %v676, %v802
      %v804 = vpop.f32.mrb[0].mxu0
      %v805 = vpop.f32.mrb[0].mxu0
      %v806 = vadd.f32 %v679, %v805
      %v807 = vpop.f32.mrb[0].mxu0
      %808 = vmatprep.mubr.bf16.mxu0 0
      %809 = vmatmul.mubr.bf16.gmra.mrb[0].mxu0 %v733
      %v810 = vpop.f32.mrb[0].mxu0
      %v811 = vadd.f32 %v684, %v810
      %v812 = vpop.f32.mrb[0].mxu0
      %v813 = vpop.f32.mrb[0].mxu0
      %v814 = vadd.f32 %v687, %v813
      %v815 = vpop.f32.mrb[0].mxu0
      %816 = vmatprep.mubr.bf16.mxu0 0
      %817 = vmatmul.mubr.bf16.gmra.mrb[0].mxu0 %v736
      %v818 = vpop.f32.mrb[0].mxu0
      %v819 = vadd.f32 %v692, %v818
      %v820 = vpop.f32.mrb[0].mxu0
      %v821 = vpop.f32.mrb[0].mxu0
      %v822 = vadd.f32 %v695, %v821
      %v823 = vpop.f32.mrb[0].mxu0
      %824 = vmatprep.mubr.bf16.mxu0 0
      %825 = vmatmul.mubr.bf16.gmra.mrb[0].mxu0 %v739
      %v826 = vpop.f32.mrb[0].mxu0
      %v827 = vadd.f32 %v700, %v826
      %v828 = vpop.f32.mrb[0].mxu0
      %v829 = vpop.f32.mrb[0].mxu0
      %v830 = vadd.f32 %v703, %v829
      %v831 = vpop.f32.mrb[0].mxu0
      %832 = vmatprep.mubr.bf16.mxu0 0
      %833 = vmatmul.mubr.bf16.gmra.mrb[0].mxu0 %v742
      %v834 = vpop.f32.mrb[0].mxu0
      %v835 = vadd.f32 %v708, %v834
      %v836 = vpop.f32.mrb[0].mxu0
      %v837 = vpop.f32.mrb[0].mxu0
      %v838 = vadd.f32 %v711, %v837
      %v839 = vpop.f32.mrb[0].mxu0
      %840 = vdwg.mxu0
      %v843 = vunpack.c.l.b16 %v439
      %v844 = vunpack.c.l.b16 %v440
      %v845 = vpack.c.b16 %v844, %v843
      %v848 = vsel %vm600, %v562, 0
      %v851 = vsel %vm600, %v565, 0
      %v854 = vsel %vm600, %v568, 0
      %v857 = vsel %vm600, %v571, 0
      %v860 = vsel %vm600, %v574, 0
      %v863 = vsel %vm600, %v577, 0
      %v866 = vsel %vm600, %v580, 0
      %v869 = vsel %vm600, %v593, 0
      %871 = vmatprep.subr.bf16.mxu0 0
      %872 = vmatpush1.bf16.msra.mxu0 %v845
      %873 = vmatprep.subr.bf16.mxu0 0
      %874 = vmatpush1.bf16.msra.mxu0 0
      %875 = vmatprep.subr.bf16.mxu0 0
      %876 = vmatpush1.bf16.msra.mxu0 0
      %877 = vmatprep.subr.bf16.mxu0 0
      %878 = vmatpush1.bf16.msra.mxu0 0
      %879 = vmatprep.subr.bf16.mxu0 0
      %880 = vmatpush1.bf16.msra.mxu0 0
      %881 = vmatprep.subr.bf16.mxu0 0
      %882 = vmatpush1.bf16.msra.mxu0 0
      %883 = vmatprep.subr.bf16.mxu0 0
      %884 = vmatpush1.bf16.msra.mxu0 0
      %885 = vmatprep.subr.bf16.mxu0 0
      %886 = vmatpush1.bf16.msra.mxu0 0
      %887 = vmatprep.subr.bf16.mxu0 0
      %888 = vmatpush1.bf16.msra.mxu0 0
      %889 = vmatprep.subr.bf16.mxu0 0
      %890 = vmatpush1.bf16.msra.mxu0 0
      %891 = vmatprep.subr.bf16.mxu0 0
      %892 = vmatpush1.bf16.msra.mxu0 0
      %893 = vmatprep.subr.bf16.mxu0 0
      %894 = vmatpush1.bf16.msra.mxu0 0
      %895 = vmatprep.subr.bf16.mxu0 0
      %896 = vmatpush1.bf16.msra.mxu0 0
      %897 = vmatprep.subr.bf16.mxu0 0
      %898 = vmatpush1.bf16.msra.mxu0 0
      %899 = vmatprep.subr.bf16.mxu0 0
      %900 = vmatpush1.bf16.msra.mxu0 0
      %901 = vmatprep.subr.bf16.mxu0 0
      %902 = vmatpush1.bf16.msra.mxu0 0
      %903 = vmatprep.mubr.bf16.mxu0 0
      %904 = vmatmul.mubr.bf16.gmra.mrb[0].mxu0 %v848
      %v905 = vpop.f32.mrb[0].mxu0
      %v906 = vadd.f32 0.0, %v905
      %v907 = vpop.f32.mrb[0].mxu0
      %v908 = vpop.f32.mrb[0].mxu0
      %v909 = vadd.f32 0.0, %v908
      %v910 = vpop.f32.mrb[0].mxu0
      %911 = vmatprep.mubr.bf16.mxu0 0
      %912 = vmatmul.mubr.bf16.gmra.mrb[0].mxu0 %v851
      %v913 = vpop.f32.mrb[0].mxu0
      %v914 = vadd.f32 0.0, %v913
      %v915 = vpop.f32.mrb[0].mxu0
      %v916 = vpop.f32.mrb[0].mxu0
      %v917 = vadd.f32 0.0, %v916
      %v918 = vpop.f32.mrb[0].mxu0
      %919 = vmatprep.mubr.bf16.mxu0 0
      %920 = vmatmul.mubr.bf16.gmra.mrb[0].mxu0 %v854
      %v921 = vpop.f32.mrb[0].mxu0
      %v922 = vadd.f32 0.0, %v921
      %v923 = vpop.f32.mrb[0].mxu0
      %v924 = vpop.f32.mrb[0].mxu0
      %v925 = vadd.f32 0.0, %v924
      %v926 = vpop.f32.mrb[0].mxu0
      %927 = vmatprep.mubr.bf16.mxu0 0
      %928 = vmatmul.mubr.bf16.gmra.mrb[0].mxu0 %v857
      %v929 = vpop.f32.mrb[0].mxu0
      %v930 = vadd.f32 0.0, %v929
      %v931 = vpop.f32.mrb[0].mxu0
      %v932 = vpop.f32.mrb[0].mxu0
      %v933 = vadd.f32 0.0, %v932
      %v934 = vpop.f32.mrb[0].mxu0
      %935 = vmatprep.mubr.bf16.mxu0 0
      %936 = vmatmul.mubr.bf16.gmra.mrb[0].mxu0 %v860
      %v937 = vpop.f32.mrb[0].mxu0
      %v938 = vadd.f32 0.0, %v937
      %v939 = vpop.f32.mrb[0].mxu0
      %v940 = vpop.f32.mrb[0].mxu0
      %v941 = vadd.f32 0.0, %v940
      %v942 = vpop.f32.mrb[0].mxu0
      %943 = vmatprep.mubr.bf16.mxu0 0
      %944 = vmatmul.mubr.bf16.gmra.mrb[0].mxu0 %v863
      %v945 = vpop.f32.mrb[0].mxu0
      %v946 = vadd.f32 0.0, %v945
      %v947 = vpop.f32.mrb[0].mxu0
      %v948 = vpop.f32.mrb[0].mxu0
      %v949 = vadd.f32 0.0, %v948
      %v950 = vpop.f32.mrb[0].mxu0
      %951 = vmatprep.mubr.bf16.mxu0 0
      %952 = vmatmul.mubr.bf16.gmra.mrb[0].mxu0 %v866
      %v953 = vpop.f32.mrb[0].mxu0
      %v954 = vadd.f32 0.0, %v953
      %v955 = vpop.f32.mrb[0].mxu0
      %v956 = vpop.f32.mrb[0].mxu0
      %v957 = vadd.f32 0.0, %v956
      %v958 = vpop.f32.mrb[0].mxu0
      %959 = vmatprep.mubr.bf16.mxu0 0
      %960 = vmatmul.mubr.bf16.gmra.mrb[0].mxu0 %v869
      %v961 = vpop.f32.mrb[0].mxu0
      %v962 = vadd.f32 0.0, %v961
      %v963 = vpop.f32.mrb[0].mxu0
      %v964 = vpop.f32.mrb[0].mxu0
      %v965 = vadd.f32 0.0, %v964
      %v966 = vpop.f32.mrb[0].mxu0
      %967 = vdwg.mxu0
      %v968 = vadd.f32 %v779, %v906
      %v969 = vadd.f32 %v782, %v909
      %v970 = vadd.f32 %v787, %v914
      %v971 = vadd.f32 %v790, %v917
      %v972 = vadd.f32 %v795, %v922
      %v973 = vadd.f32 %v798, %v925
      %v974 = vadd.f32 %v803, %v930
      %v975 = vadd.f32 %v806, %v933
      %v976 = vadd.f32 %v811, %v938
      %v977 = vadd.f32 %v814, %v941
      %v978 = vadd.f32 %v819, %v946
      %v979 = vadd.f32 %v822, %v949
      %v980 = vadd.f32 %v827, %v954
      %v981 = vadd.f32 %v830, %v957
      %v982 = vadd.f32 %v835, %v962
      %v983 = vadd.f32 %v838, %v965
      %v985 = vlaneseq
      %v986 = vshrl.u32 %v985, 7
      %v987 = vsub.s32 0, %v986
      %v988 = vrot.slane %v441, %v987
      %v990 = vadd.f32 %v968, %v988
      %v991 = vadd.f32 %v969, %v988
      %v992 = vadd.f32 %v970, %v988
      %v993 = vadd.f32 %v971, %v988
      %v994 = vadd.f32 %v972, %v988
      %v995 = vadd.f32 %v973, %v988
      %v996 = vadd.f32 %v974, %v988
      %v997 = vadd.f32 %v975, %v988
      %v998 = vadd.f32 %v976, %v988
      %v999 = vadd.f32 %v977, %v988
      %v1000 = vadd.f32 %v978, %v988
      %v1001 = vadd.f32 %v979, %v988
      %v1002 = vadd.f32 %v980, %v988
      %v1003 = vadd.f32 %v981, %v988
      %v1004 = vadd.f32 %v982, %v988
      %v1005 = vadd.f32 %v983, %v988
      %vm1006 = vcmp.ge.f32.partialorder %v990, 0.0
      %vm1007 = vcmp.ge.f32.partialorder %v991, 0.0
      %vm1008 = vcmp.ge.f32.partialorder %v992, 0.0
      %vm1009 = vcmp.ge.f32.partialorder %v993, 0.0
      %vm1010 = vcmp.ge.f32.partialorder %v994, 0.0
      %vm1011 = vcmp.ge.f32.partialorder %v995, 0.0
      %vm1012 = vcmp.ge.f32.partialorder %v996, 0.0
      %vm1013 = vcmp.ge.f32.partialorder %v997, 0.0
      %vm1014 = vcmp.ge.f32.partialorder %v998, 0.0
      %vm1015 = vcmp.ge.f32.partialorder %v999, 0.0
      %vm1016 = vcmp.ge.f32.partialorder %v1000, 0.0
      %vm1017 = vcmp.ge.f32.partialorder %v1001, 0.0
      %vm1018 = vcmp.ge.f32.partialorder %v1002, 0.0
      %vm1019 = vcmp.ge.f32.partialorder %v1003, 0.0
      %vm1020 = vcmp.ge.f32.partialorder %v1004, 0.0
      %vm1021 = vcmp.ge.f32.partialorder %v1005, 0.0
      %v1022 = vmul.f32 %v990, 0.2
      %v1023 = vmul.f32 %v991, 0.2
      %v1024 = vmul.f32 %v992, 0.2
      %v1025 = vmul.f32 %v993, 0.2
      %v1026 = vmul.f32 %v994, 0.2
      %v1027 = vmul.f32 %v995, 0.2
      %v1028 = vmul.f32 %v996, 0.2
      %v1029 = vmul.f32 %v997, 0.2
      %v1030 = vmul.f32 %v998, 0.2
      %v1031 = vmul.f32 %v999, 0.2
      %v1032 = vmul.f32 %v1000, 0.2
      %v1033 = vmul.f32 %v1001, 0.2
      %v1034 = vmul.f32 %v1002, 0.2
      %v1035 = vmul.f32 %v1003, 0.2
      %v1036 = vmul.f32 %v1004, 0.2
      %v1037 = vmul.f32 %v1005, 0.2
      %v1038 = vsel %vm1006, %v990, %v1022
      %v1039 = vsel %vm1007, %v991, %v1023
      %v1040 = vsel %vm1008, %v992, %v1024
      %v1041 = vsel %vm1009, %v993, %v1025
      %v1042 = vsel %vm1010, %v994, %v1026
      %v1043 = vsel %vm1011, %v995, %v1027
      %v1044 = vsel %vm1012, %v996, %v1028
      %v1045 = vsel %vm1013, %v997, %v1029
      %v1046 = vsel %vm1014, %v998, %v1030
      %v1047 = vsel %vm1015, %v999, %v1031
      %v1048 = vsel %vm1016, %v1000, %v1032
      %v1049 = vsel %vm1017, %v1001, %v1033
      %v1050 = vsel %vm1018, %v1002, %v1034
      %v1051 = vsel %vm1019, %v1003, %v1035
      %v1052 = vsel %vm1020, %v1004, %v1036
      %v1053 = vsel %vm1021, %v1005, %v1037
      %v1054 = vpack.c.bf16 %v1039, %v1038
      %v1055 = vpack.c.bf16 %v1041, %v1040
      %v1056 = vpack.c.bf16 %v1043, %v1042
      %v1057 = vpack.c.bf16 %v1045, %v1044
      %v1058 = vpack.c.bf16 %v1047, %v1046
      %v1059 = vpack.c.bf16 %v1049, %v1048
      %v1060 = vpack.c.bf16 %v1051, %v1050
      %v1061 = vpack.c.bf16 %v1053, %v1052
      %v1070 = vunpack.c.l.b16 %v1054
      %v1071 = vunpack.c.h.b16 %v1054
      %v1072 = vunpack.c.l.b16 %v1055
      %v1073 = vunpack.c.h.b16 %v1055
      %v1074 = vunpack.c.l.b16 %v1056
      %v1075 = vunpack.c.h.b16 %v1056
      %v1076 = vunpack.c.l.b16 %v1057
      %v1077 = vunpack.c.h.b16 %v1057
      %v1078 = vunpack.c.l.b16 %v1058
      %v1079 = vunpack.c.h.b16 %v1058
      %v1080 = vunpack.c.l.b16 %v1059
      %v1081 = vunpack.c.h.b16 %v1059
      %v1082 = vunpack.c.l.b16 %v1060
      %v1083 = vunpack.c.h.b16 %v1060
      %v1084 = vunpack.c.l.b16 %v1061
      %v1085 = vunpack.c.h.b16 %v1061
      %v1086 = vpack.c.b16 %v1070, %v1070
      %v1087 = vpack.c.b16 %v1071, %v1071
      %v1088 = vpack.c.b16 %v1072, %v1072
      %v1089 = vpack.c.b16 %v1073, %v1073
      %v1090 = vpack.c.b16 %v1074, %v1074
      %v1091 = vpack.c.b16 %v1075, %v1075
      %v1092 = vpack.c.b16 %v1076, %v1076
      %v1093 = vpack.c.b16 %v1077, %v1077
      %v1094 = vpack.c.b16 %v1078, %v1078
      %v1095 = vpack.c.b16 %v1079, %v1079
      %v1096 = vpack.c.b16 %v1080, %v1080
      %v1097 = vpack.c.b16 %v1081, %v1081
      %v1098 = vpack.c.b16 %v1082, %v1082
      %v1099 = vpack.c.b16 %v1083, %v1083
      %v1100 = vpack.c.b16 %v1084, %v1084
      %v1101 = vpack.c.b16 %v1085, %v1085
      %vm1118 = vcmask 125952
      %1119 = vst.msk [vmem:[%s380] sm:$0xf] %vm1118, %v1086
      %1120 = vst.msk [vmem:[%s380 + $0x4] sm:$0xf] %vm1118, %v1087
      %1121 = vst.msk [vmem:[%s380 + $0x8] sm:$0xf] %vm1118, %v1088
      %1122 = vst.msk [vmem:[%s380 + $0xc] sm:$0xf] %vm1118, %v1089
      %1123 = vst.msk [vmem:[%s380 + $0x10] sm:$0xf] %vm1118, %v1090
      %1124 = vst.msk [vmem:[%s380 + $0x14] sm:$0xf] %vm1118, %v1091
      %1125 = vst.msk [vmem:[%s380 + $0x18] sm:$0xf] %vm1118, %v1092
      %1126 = vst.msk [vmem:[%s380 + $0x1c] sm:$0xf] %vm1118, %v1093
      %1127 = vst.msk [vmem:[%s380 + $0x20] sm:$0xf] %vm1118, %v1094
      %1128 = vst.msk [vmem:[%s380 + $0x24] sm:$0xf] %vm1118, %v1095
      %1129 = vst.msk [vmem:[%s380 + $0x28] sm:$0xf] %vm1118, %v1096
      %1130 = vst.msk [vmem:[%s380 + $0x2c] sm:$0xf] %vm1118, %v1097
      %1131 = vst.msk [vmem:[%s380 + $0x30] sm:$0xf] %vm1118, %v1098
      %1132 = vst.msk [vmem:[%s380 + $0x34] sm:$0xf] %vm1118, %v1099
      %1133 = vst.msk [vmem:[%s380 + $0x38] sm:$0xf] %vm1118, %v1100
      %1134 = vst.msk [vmem:[%s380 + $0x3c] sm:$0xf] %vm1118, %v1101
      %s1135 = smul.u32 16, %s21
      %p1136 = scmp.lt.s32.totalorder %s20, 1
      %s1137 = scalar_select %p1136, %s20, 1
      %p1138 = scmp.lt.s32.totalorder %s1135, 15
      %s1139 = scalar_select %p1138, %s1135, 15
      %s1140 = smul.addr %s1137, 16
      %s1141 = sadd.s32 %s1139, %s1140
      %s1142 = smul.addr %s1141, 4
      %s1143 = scalar_lea.vmem %s5, %s1142
      // Predicated region
      $region41: #{rrdbnet_forward.19} parent=39 // pred_check
        %p1144 = pneg %p190
      $region42: #{rrdbnet_forward.19} parent=39 // pred_check_branch
        %1146 = sbr.rel (%p1144) target = $region44
      $region43: #{rrdbnet_forward.19} parent=39 // pred_region
        %s1147 = smul.u32 16, %s21
      $region44: #{rrdbnet_forward.19} parent=39 // pred_fallthru
        _
    $region40: #{rrdbnet_forward.19} parent=5 // pred_fallthru
      _
    %p1148 = scmp.le.s32.totalorder 2, %s11
    // Predicated region
    $region45: #{rrdbnet_forward.19} parent=5 // pred_check
      %p1149 = pneg %p1148
    $region46: #{rrdbnet_forward.19} parent=5 // pred_check_branch
      %1151 = sbr.rel (%p1149) target = $region48
    $region47: #{rrdbnet_forward.19} parent=5 // pred_region
      %s1152 = ssub.s32 %s11, 2
      // Predicated region
      $region49: #{rrdbnet_forward.19} parent=47 // pred_check
        %p1153 = pneg %p196
      $region50: #{rrdbnet_forward.19} parent=47 // pred_check_branch
        %1155 = sbr.rel (%p1153) target = $region52
      $region51: #{rrdbnet_forward.19} parent=47 // pred_region
        %s1156 = smul.u32 16, %s23
        %p1157 = scmp.lt.s32.totalorder %s22, 1
        %s1158 = scalar_select %p1157, %s22, 1
        %p1159 = scmp.lt.s32.totalorder %s1156, 15
        %s1160 = scalar_select %p1159, %s1156, 15
        %s1161 = smul.addr %s1158, 16
        %s1162 = sadd.s32 %s1160, %s1161
        %s1163 = smul.addr %s1162, 4
        %s1164 = scalar_lea.vmem %s5, %s1163
      $region52: #{rrdbnet_forward.19} parent=47 // pred_fallthru
        _
    $region48: #{rrdbnet_forward.19} parent=5 // pred_fallthru
      _
  $region6: #{rrdbnet_forward.19} parent=0 // loop_footer
    %s15 = sadd.s32 1, %s11
  $region7: #{rrdbnet_forward.19} parent=0 // loop_footer_branch
    %10 = sbr.rel target = $region3
  $region8: #{rrdbnet_forward.19} parent=0 // loop_exit
    _

// kernel: rrdbnet_forward.20
$region0: #{rrdbnet_forward.20}
  #allocation0 [shape = 'u32[]', space=smem, size = 0x4, offset = 0x4, fixed_abs, tag = 'smem constant byte address 0x4 - core index']
  #allocation1 [shape = 'u32[144,128]{1,0:T(1,128)}', space=vmem, size = 0x12000, scoped, tag = 'internal scratch']
  %s0 = inlined_call_operand.vmem [shape: bf16[2,256,16], index: 0, kind: input, shape index: {}, may-alias: {0,1,2}]
  %s1 = inlined_call_operand.vmem [shape: bf16[2,256,16], index: 1, kind: input, shape index: {}, may-alias: {0,1,2}]
  %s2 = inlined_call_operand.vmem [shape: bf16[2,256,16], index: 2, kind: input, shape index: {}, may-alias: {0,1,2}]
  %s3 = inlined_call_operand.vmem [shape: bf16[3,16,16], index: 3, kind: input, shape index: {}]
  %s4 = inlined_call_operand.vmem [shape: f32[1,16], index: 4, kind: input, shape index: {}]
  %s5 = inlined_call_operand.vmem [shape: bf16[2,256,16], index: 5, kind: output, shape index: {}]
  %s6 = sld [smem:[#allocation0]]
  $region53: #{rrdbnet_forward.20} parent=0
    _
  %s8 = ssub.s32 1, %s6
  %s9 = scalar_select 0, %s8, %s6
  loop: start=0, step=1, limit=4
  $region2: #{rrdbnet_forward.20} parent=0 // loop_pre_header
    _
  $region3: #{rrdbnet_forward.20} parent=0 // loop_header
    %s11 = sphi 0, %s15
    %p12 = scmp.ge.s32.totalorder %s11, 4
    %s18 = sphi 0, %s30
    %s19 = sphi 0, %s26
    %s20 = sphi 0, %s18
    %s21 = sphi 0, %s19
    %s22 = sphi 0, %s20
    %s23 = sphi 0, %s21
    %s35 = sphi 0, %s37
    %s38 = sphi 0, %s35
    %s39 = sphi 0, %s38
    %s55 = sphi 0, %s39
    %s71 = sphi 0, %s73
    %s74 = sphi 0, %s71
    %s75 = sphi 0, %s74
    %s91 = sphi 0, %s75
    %s107 = sphi 0, %s109
    %s110 = sphi 0, %s107
    %s111 = sphi 0, %s110
    %s127 = sphi 0, %s111
    %s131 = sphi 0, %s131
    %s133 = sphi 0, %s131
    %s134 = sphi 0, %s133
    %s148 = sphi 0, %s134
    %s152 = sphi 0, %s152
    %s154 = sphi 0, %s152
    %s155 = sphi 0, %s154
    %s169 = sphi 0, %s155
    %s177 = sphi 0, %s179
    %s180 = sphi 0, %s177
    %s181 = sphi 0, %s180
    %s197 = sphi 0, %s181
  $region4: #{rrdbnet_forward.20} parent=0 // loop_header_branch
    %14 = sbr.rel (%p12) target = $region8
  $region5: #{rrdbnet_forward.20} parent=0 // loop_body
    %s16 = ssub.s32 %s11, 1
    %s17 = ssub.s32 %s11, 2
    %s24 = sadd.s32 1, %s19
    %p25 = scmp.ge.s32.totalorder %s24, 1
    %s26 = scalar_select %p25, 0, %s24
    %s27 = sadd.s32 1, %s18
    %s28 = scalar_select %p25, %s27, %s18
    %p29 = scmp.ge.s32.totalorder %s28, 2
    %s30 = scalar_select %p29, 0, %s28
    %s31 = ssub.s32 %s18, %s30
    %s32 = ssub.s32 %s19, %s26
    %s33 = sor.u32 %s31, %s32
    %p34 = scmp.eq.s32.totalorder %s33, 0
    %s36 = sadd.s32 %s35, 1
    %s37 = scalar_select %p34, %s35, %s36
    %p40 = pneg %p34
    %p41 = scmp.eq.s32.totalorder %s11, 1
    %p42 = por %p40, %p41
    %p43 = scmp.ne.s32.totalorder %s35, %s38
    %p44 = scmp.eq.s32.totalorder %s11, 0
    %p45 = por %p43, %p44
    %p46 = scmp.ne.s32.totalorder %s35, %s38
    %p47 = scmp.eq.s32.totalorder %s16, 1
    %p48 = por %p46, %p47
    %p49 = scmp.ne.s32.totalorder %s38, %s39
    %p50 = scmp.eq.s32.totalorder %s16, 0
    %p51 = por %p49, %p50
    %p52 = scmp.ne.s32.totalorder %s38, %s39
    %p53 = scmp.eq.s32.totalorder %s17, 1
    %p54 = por %p52, %p53
    %p56 = scmp.ne.s32.totalorder %s39, %s55
    %p57 = scmp.eq.s32.totalorder %s17, 0
    %p58 = por %p56, %p57
    %s59 = smul.u32 %s19, 32
    %s60 = ssub.s32 %s59, 1
    %p61 = scmp.gt.s32.totalorder %s60, 0
    %s62 = scalar_select %p61, %s60, 0
    %s63 = smul.u32 %s26, 32
    %s64 = ssub.s32 %s63, 1
    %p65 = scmp.gt.s32.totalorder %s64, 0
    %s66 = scalar_select %p65, %s64, 0
    %s67 = ssub.s32 %s18, %s30
    %s68 = ssub.s32 %s62, %s66
    %s69 = sor.u32 %s67, %s68
    %p70 = scmp.eq.s32.totalorder %s69, 0
    %s72 = sadd.s32 %s71, 1
    %s73 = scalar_select %p70, %s71, %s72
    %p76 = pneg %p70
    %p77 = scmp.eq.s32.totalorder %s11, 1
    %p78 = por %p76, %p77
    %p79 = scmp.ne.s32.totalorder %s71, %s74
    %p80 = scmp.eq.s32.totalorder %s11, 0
    %p81 = por %p79, %p80
    %p82 = scmp.ne.s32.totalorder %s71, %s74
    %p83 = scmp.eq.s32.totalorder %s16, 1
    %p84 = por %p82, %p83
    %p85 = scmp.ne.s32.totalorder %s74, %s75
    %p86 = scmp.eq.s32.totalorder %s16, 0
    %p87 = por %p85, %p86
    %p88 = scmp.ne.s32.totalorder %s74, %s75
    %p89 = scmp.eq.s32.totalorder %s17, 1
    %p90 = por %p88, %p89
    %p92 = scmp.ne.s32.totalorder %s75, %s91
    %p93 = scmp.eq.s32.totalorder %s17, 0
    %p94 = por %p92, %p93
    %s95 = sadd.s32 %s19, 1
    %s96 = smul.u32 %s95, 32
    %p97 = scmp.lt.s32.totalorder %s96, 31
    %s98 = scalar_select %p97, %s96, 31
    %s99 = sadd.s32 %s26, 1
    %s100 = smul.u32 %s99, 32
    %p101 = scmp.lt.s32.totalorder %s100, 31
    %s102 = scalar_select %p101, %s100, 31
    %s103 = ssub.s32 %s18, %s30
    %s104 = ssub.s32 %s98, %s102
    %s105 = sor.u32 %s103, %s104
    %p106 = scmp.eq.s32.totalorder %s105, 0
    %s108 = sadd.s32 %s107, 1
    %s109 = scalar_select %p106, %s107, %s108
    %p112 = pneg %p106
    %p113 = scmp.eq.s32.totalorder %s11, 1
    %p114 = por %p112, %p113
    %p115 = scmp.ne.s32.totalorder %s107, %s110
    %p116 = scmp.eq.s32.totalorder %s11, 0
    %p117 = por %p115, %p116
    %p118 = scmp.ne.s32.totalorder %s107, %s110
    %p119 = scmp.eq.s32.totalorder %s16, 1
    %p120 = por %p118, %p119
    %p121 = scmp.ne.s32.totalorder %s110, %s111
    %p122 = scmp.eq.s32.totalorder %s16, 0
    %p123 = por %p121, %p122
    %p124 = scmp.ne.s32.totalorder %s110, %s111
    %p125 = scmp.eq.s32.totalorder %s17, 1
    %p126 = por %p124, %p125
    %p128 = scmp.ne.s32.totalorder %s111, %s127
    %p129 = scmp.eq.s32.totalorder %s17, 0
    %p130 = por %p128, %p129
    %s132 = sadd.s32 %s131, 1
    %p135 = scmp.eq.s32.totalorder %s11, 1
    %p136 = scmp.ne.s32.totalorder %s131, %s133
    %p137 = scmp.eq.s32.totalorder %s11, 0
    %p138 = por %p136, %p137
    %p139 = scmp.ne.s32.totalorder %s131, %s133
    %p140 = scmp.eq.s32.totalorder %s16, 1
    %p141 = por %p139, %p140
    %p142 = scmp.ne.s32.totalorder %s133, %s134
    %p143 = scmp.eq.s32.totalorder %s16, 0
    %p144 = por %p142, %p143
    %p145 = scmp.ne.s32.totalorder %s133, %s134
    %p146 = scmp.eq.s32.totalorder %s17, 1
    %p147 = por %p145, %p146
    %p149 = scmp.ne.s32.totalorder %s134, %s148
    %p150 = scmp.eq.s32.totalorder %s17, 0
    %p151 = por %p149, %p150
    %s153 = sadd.s32 %s152, 1
    %p156 = scmp.eq.s32.totalorder %s11, 1
    %p157 = scmp.ne.s32.totalorder %s152, %s154
    %p158 = scmp.eq.s32.totalorder %s11, 0
    %p159 = por %p157, %p158
    %p160 = scmp.ne.s32.totalorder %s152, %s154
    %p161 = scmp.eq.s32.totalorder %s16, 1
    %p162 = por %p160, %p161
    %p163 = scmp.ne.s32.totalorder %s154, %s155
    %p164 = scmp.eq.s32.totalorder %s16, 0
    %p165 = por %p163, %p164
    %p166 = scmp.ne.s32.totalorder %s154, %s155
    %p167 = scmp.eq.s32.totalorder %s17, 1
    %p168 = por %p166, %p167
    %p170 = scmp.ne.s32.totalorder %s155, %s169
    %p171 = scmp.eq.s32.totalorder %s17, 0
    %p172 = por %p170, %p171
    %s173 = ssub.s32 %s18, %s30
    %s174 = ssub.s32 %s19, %s26
    %s175 = sor.u32 %s173, %s174
    %p176 = scmp.eq.s32.totalorder %s175, 0
    %s178 = sadd.s32 %s177, 1
    %s179 = scalar_select %p176, %s177, %s178
    %p182 = pneg %p176
    %p183 = scmp.eq.s32.totalorder %s11, 1
    %p184 = por %p182, %p183
    %p185 = scmp.ne.s32.totalorder %s177, %s180
    %p186 = scmp.eq.s32.totalorder %s11, 0
    %p187 = por %p185, %p186
    %p188 = scmp.ne.s32.totalorder %s177, %s180
    %p189 = scmp.eq.s32.totalorder %s16, 1
    %p190 = por %p188, %p189
    %p191 = scmp.ne.s32.totalorder %s180, %s181
    %p192 = scmp.eq.s32.totalorder %s16, 0
    %p193 = por %p191, %p192
    %p194 = scmp.ne.s32.totalorder %s180, %s181
    %p195 = scmp.eq.s32.totalorder %s17, 1
    %p196 = por %p194, %p195
    %p198 = scmp.ne.s32.totalorder %s181, %s197
    %p199 = scmp.eq.s32.totalorder %s17, 0
    %p200 = por %p198, %p199
    %p201 = scmp.le.s32.totalorder 1, %s11
    %p202 = scmp.lt.s32.totalorder %s11, 3
    %p203 = pnand %p201, %p202
    %p204 = pneg %p203
    // Predicated region
    $region9: #{rrdbnet_forward.20} parent=5 // pred_check
      _
    $region10: #{rrdbnet_forward.20} parent=5 // pred_check_branch
      %206 = sbr.rel (%p203) target = $region12
    $region11: #{rrdbnet_forward.20} parent=5 // pred_region
      %s207 = ssub.s32 %s11, 1
      // Predicated region
      $region13: #{rrdbnet_forward.20} parent=11 // pred_check
        %p208 = pneg %p144
      $region14: #{rrdbnet_forward.20} parent=11 // pred_check_branch
        %210 = sbr.rel (%p208) target = $region16
      $region15: #{rrdbnet_forward.20} parent=11 // pred_region
        _
      $region16: #{rrdbnet_forward.20} parent=11 // pred_fallthru
        _
      // Predicated region
      $region17: #{rrdbnet_forward.20} parent=11 // pred_check
        %p211 = pneg %p165
      $region18: #{rrdbnet_forward.20} parent=11 // pred_check_branch
        %213 = sbr.rel (%p211) target = $region20
      $region19: #{rrdbnet_forward.20} parent=11 // pred_region
        _
      $region20: #{rrdbnet_forward.20} parent=11 // pred_fallthru
        _
    $region12: #{rrdbnet_forward.20} parent=5 // pred_fallthru
      _
    %p214 = scmp.lt.s32.totalorder %s11, 2
    // Predicated region
    $region21: #{rrdbnet_forward.20} parent=5 // pred_check
      %p215 = pneg %p214
    $region22: #{rrdbnet_forward.20} parent=5 // pred_check_branch
      %217 = sbr.rel (%p215) target = $region24
    $region23: #{rrdbnet_forward.20} parent=5 // pred_region
      // Predicated region
      $region25: #{rrdbnet_forward.20} parent=23 // pred_check
        %p218 = pneg %p45
      $region26: #{rrdbnet_forward.20} parent=23 // pred_check_branch
        %220 = sbr.rel (%p218) target = $region28
      $region27: #{rrdbnet_forward.20} parent=23 // pred_region
        %s221 = smul.u32 32, %s19
        %p222 = scmp.lt.s32.totalorder %s18, 1
        %s223 = scalar_select %p222, %s18, 1
        %p224 = scmp.lt.s32.totalorder %s221, 31
        %s225 = scalar_select %p224, %s221, 31
        %s226 = smul.addr %s223, 32
        %s227 = sadd.s32 %s225, %s226
        %s228 = smul.addr %s227, 4
        %s229 = scalar_lea.vmem %s0, %s228
        %s230 = smul.u32 32, %s19
      $region28: #{rrdbnet_forward.20} parent=23 // pred_fallthru
        _
      // Predicated region
      $region29: #{rrdbnet_forward.20} parent=23 // pred_check
        %p231 = pneg %p81
      $region30: #{rrdbnet_forward.20} parent=23 // pred_check_branch
        %233 = sbr.rel (%p231) target = $region32
      $region31: #{rrdbnet_forward.20} parent=23 // pred_region
        %s234 = smul.u32 %s19, 32
        %s235 = ssub.s32 %s234, 1
        %p236 = scmp.gt.s32.totalorder %s235, 0
        %s237 = scalar_select %p236, %s235, 0
        %p238 = scmp.lt.s32.totalorder %s18, 1
        %s239 = scalar_select %p238, %s18, 1
        %p240 = scmp.lt.s32.totalorder %s237, 31
        %s241 = scalar_select %p240, %s237, 31
        %s242 = smul.addr %s239, 32
        %s243 = sadd.s32 %s241, %s242
        %s244 = smul.addr %s243, 4
        %s245 = scalar_lea.vmem %s1, %s244
        %s246 = smul.u32 %s19, 32
        %s247 = ssub.s32 %s246, 1
        %p248 = scmp.gt.s32.totalorder %s247, 0
        %s249 = scalar_select %p248, %s247, 0
      $region32: #{rrdbnet_forward.20} parent=23 // pred_fallthru
        _
      // Predicated region
      $region33: #{rrdbnet_forward.20} parent=23 // pred_check
        %p250 = pneg %p117
      $region34: #{rrdbnet_forward.20} parent=23 // pred_check_branch
        %252 = sbr.rel (%p250) target = $region36
      $region35: #{rrdbnet_forward.20} parent=23 // pred_region
        %s253 = sadd.s32 %s19, 1
        %s254 = smul.u32 %s253, 32
        %p255 = scmp.lt.s32.totalorder %s254, 31
        %s256 = scalar_select %p255, %s254, 31
        %p257 = scmp.lt.s32.totalorder %s18, 1
        %s258 = scalar_select %p257, %s18, 1
        %p259 = scmp.lt.s32.totalorder %s256, 31
        %s260 = scalar_select %p259, %s256, 31
        %s261 = smul.addr %s258, 32
        %s262 = sadd.s32 %s260, %s261
        %s263 = smul.addr %s262, 4
        %s264 = scalar_lea.vmem %s2, %s263
        %s265 = sadd.s32 %s19, 1
        %s266 = smul.u32 %s265, 32
        %p267 = scmp.lt.s32.totalorder %s266, 31
        %s268 = scalar_select %p267, %s266, 31
      $region36: #{rrdbnet_forward.20} parent=23 // pred_fallthru
        _
    $region24: #{rrdbnet_forward.20} parent=5 // pred_fallthru
      _
    %p269 = scmp.le.s32.totalorder 1, %s11
    %p270 = scmp.lt.s32.totalorder %s11, 3
    %p271 = pnand %p269, %p270
    %p272 = pneg %p271
    // Predicated region
    $region37: #{rrdbnet_forward.20} parent=5 // pred_check
      _
    $region38: #{rrdbnet_forward.20} parent=5 // pred_check_branch
      %274 = sbr.rel (%p271) target = $region40
    $region39: #{rrdbnet_forward.20} parent=5 // pred_region
      %s275 = ssub.s32 %s11, 1
      %s276 = smul.u32 32, %s21
      %p277 = scmp.lt.s32.totalorder %s20, 1
      %s278 = scalar_select %p277, %s20, 1
      %p279 = scmp.lt.s32.totalorder %s276, 31
      %s280 = scalar_select %p279, %s276, 31
      %s281 = smul.addr %s278, 32
      %s282 = sadd.s32 %s280, %s281
      %s283 = smul.addr %s282, 4
      %s284 = scalar_lea.vmem %s0, %s283
      %p285 = pneg %p51
      %p286 = pneg %p48
      %s287 = smul.u32 %s21, 32
      %s288 = ssub.s32 %s287, 1
      %p289 = scmp.gt.s32.totalorder %s288, 0
      %s290 = scalar_select %p289, %s288, 0
      %p291 = scmp.lt.s32.totalorder %s20, 1
      %s292 = scalar_select %p291, %s20, 1
      %p293 = scmp.lt.s32.totalorder %s290, 31
      %s294 = scalar_select %p293, %s290, 31
      %s295 = smul.addr %s292, 32
      %s296 = sadd.s32 %s294, %s295
      %s297 = smul.addr %s296, 4
      %s298 = scalar_lea.vmem %s1, %s297
      %p299 = pneg %p87
      %p300 = pneg %p84
      %s301 = sadd.s32 %s21, 1
      %s302 = smul.u32 %s301, 32
      %p303 = scmp.lt.s32.totalorder %s302, 31
      %s304 = scalar_select %p303, %s302, 31
      %p305 = scmp.lt.s32.totalorder %s20, 1
      %s306 = scalar_select %p305, %s20, 1
      %p307 = scmp.lt.s32.totalorder %s304, 31
      %s308 = scalar_select %p307, %s304, 31
      %s309 = smul.addr %s306, 32
      %s310 = sadd.s32 %s308, %s309
      %s311 = smul.addr %s310, 4
      %s312 = scalar_lea.vmem %s2, %s311
      %p313 = pneg %p123
      %p314 = pneg %p120
      %p315 = pneg %p144
      %p316 = pneg %p141
      %p317 = pneg %p165
      %p318 = pneg %p162
      %p319 = pneg %p193
      %p320 = pneg %p190
      %s321 = smul.u32 32, %s21
      %p322 = scmp.lt.s32.totalorder %s20, 1
      %s323 = scalar_select %p322, %s20, 1
      %p324 = scmp.lt.s32.totalorder %s321, 31
      %s325 = scalar_select %p324, %s321, 31
      %s326 = smul.addr %s323, 32
      %s327 = sadd.s32 %s325, %s326
      %s328 = smul.addr %s327, 4
      %s329 = scalar_lea.vmem %s5, %s328
      %s330 = smul.u32 32, %s21
      %p331 = scmp.lt.s32.totalorder %s20, 1
      %s332 = scalar_select %p331, %s20, 1
      %p333 = scmp.lt.s32.totalorder %s330, 31
      %s334 = scalar_select %p333, %s330, 31
      %s335 = smul.addr %s332, 32
      %s336 = sadd.s32 %s334, %s335
      %s337 = smul.addr %s336, 4
      %s338 = scalar_lea.vmem %s0, %s337
      %s339 = smul.u32 32, %s21
      %s340 = smul.u32 %s21, 32
      %s341 = ssub.s32 %s340, 1
      %p342 = scmp.gt.s32.totalorder %s341, 0
      %s343 = scalar_select %p342, %s341, 0
      %p344 = scmp.lt.s32.totalorder %s20, 1
      %s345 = scalar_select %p344, %s20, 1
      %p346 = scmp.lt.s32.totalorder %s343, 31
      %s347 = scalar_select %p346, %s343, 31
      %s348 = smul.addr %s345, 32
      %s349 = sadd.s32 %s347, %s348
      %s350 = smul.addr %s349, 4
      %s351 = scalar_lea.vmem %s1, %s350
      %s352 = smul.u32 %s21, 32
      %s353 = ssub.s32 %s352, 1
      %p354 = scmp.gt.s32.totalorder %s353, 0
      %s355 = scalar_select %p354, %s353, 0
      %s356 = sadd.s32 %s21, 1
      %s357 = smul.u32 %s356, 32
      %p358 = scmp.lt.s32.totalorder %s357, 31
      %s359 = scalar_select %p358, %s357, 31
      %p360 = scmp.lt.s32.totalorder %s20, 1
      %s361 = scalar_select %p360, %s20, 1
      %p362 = scmp.lt.s32.totalorder %s359, 31
      %s363 = scalar_select %p362, %s359, 31
      %s364 = smul.addr %s361, 32
      %s365 = sadd.s32 %s363, %s364
      %s366 = smul.addr %s365, 4
      %s367 = scalar_lea.vmem %s2, %s366
      %s368 = sadd.s32 %s21, 1
      %s369 = smul.u32 %s368, 32
      %p370 = scmp.lt.s32.totalorder %s369, 31
      %s371 = scalar_select %p370, %s369, 31
      %s372 = smul.u32 32, %s21
      %p373 = scmp.lt.s32.totalorder %s20, 1
      %s374 = scalar_select %p373, %s20, 1
      %p375 = scmp.lt.s32.totalorder %s372, 31
      %s376 = scalar_select %p375, %s372, 31
      %s377 = smul.addr %s374, 32
      %s378 = sadd.s32 %s376, %s377
      %s379 = smul.addr %s378, 4
      %s380 = scalar_lea.vmem %s5, %s379
      %s381 = smul.u32 32, %s21
      %v383 = vld [vmem:[%s338] sm:$0xf]
      %v384 = vld [vmem:[%s338 + $0x4] sm:$0xf]
      %v385 = vld [vmem:[%s338 + $0x8] sm:$0xf]
      %v386 = vld [vmem:[%s338 + $0xc] sm:$0xf]
      %v387 = vld [vmem:[%s338 + $0x10] sm:$0xf]
      %v388 = vld [vmem:[%s338 + $0x14] sm:$0xf]
      %v389 = vld [vmem:[%s338 + $0x18] sm:$0xf]
      %v390 = vld [vmem:[%s338 + $0x1c] sm:$0xf]
      %v391 = vld [vmem:[%s338 + $0x20] sm:$0xf]
      %v392 = vld [vmem:[%s338 + $0x24] sm:$0xf]
      %v393 = vld [vmem:[%s338 + $0x28] sm:$0xf]
      %v394 = vld [vmem:[%s338 + $0x2c] sm:$0xf]
      %v395 = vld [vmem:[%s338 + $0x30] sm:$0xf]
      %v396 = vld [vmem:[%s338 + $0x34] sm:$0xf]
      %v397 = vld [vmem:[%s338 + $0x38] sm:$0xf]
      %v398 = vld [vmem:[%s338 + $0x3c] sm:$0xf]
      %v399 = vld [vmem:[%s338 + $0x40] sm:$0xf]
      %v400 = vld [vmem:[%s338 + $0x44] sm:$0xf]
      %v401 = vld [vmem:[%s338 + $0x48] sm:$0xf]
      %v402 = vld [vmem:[%s338 + $0x4c] sm:$0xf]
      %v403 = vld [vmem:[%s338 + $0x50] sm:$0xf]
      %v404 = vld [vmem:[%s338 + $0x54] sm:$0xf]
      %v405 = vld [vmem:[%s338 + $0x58] sm:$0xf]
      %v406 = vld [vmem:[%s338 + $0x5c] sm:$0xf]
      %v407 = vld [vmem:[%s338 + $0x60] sm:$0xf]
      %v408 = vld [vmem:[%s338 + $0x64] sm:$0xf]
      %v409 = vld [vmem:[%s338 + $0x68] sm:$0xf]
      %v410 = vld [vmem:[%s338 + $0x6c] sm:$0xf]
      %v411 = vld [vmem:[%s338 + $0x70] sm:$0xf]
      %v412 = vld [vmem:[%s338 + $0x74] sm:$0xf]
      %v413 = vld [vmem:[%s338 + $0x78] sm:$0xf]
      %v414 = vld [vmem:[%s338 + $0x7c] sm:$0xf]
      %v415 = vld [vmem:[%s351] sm:$0xf]
      %v416 = vld [vmem:[%s367] sm:$0xf]
      %p417 = scmp.gt.s32.totalorder %s21, 0
      %s418 = scalar_select %p417, 1.0, 0.0
      %p420 = scmp.ne.f32.partialorder %s418, %s418
      %s421 = sshrl.u32 %s418, 16
      %s422 = sand.u32 %s421, 1
      %s423 = sadd.s32 32767, %s422
      %s424 = sadd.s32 %s418, %s423
      %s425 = sand.u32 %s424, 4294901760
      %s426 = scalar_select %p420, 2143289344, %s425
      %s428 = sshrl.u32 %s426, 16
      %p429 = scmp.lt.s32.totalorder %s21, 0
      %s430 = scalar_select %p429, 1.0, 0.0
      %p432 = scmp.ne.f32.partialorder %s430, %s430
      %s433 = sshrl.u32 %s430, 16
      %s434 = sand.u32 %s433, 1
      %s435 = sadd.s32 32767, %s434
      %s436 = sadd.s32 %s430, %s435
      %s437 = sand.u32 %s436, 4294901760
      %s438 = scalar_select %p432, 2143289344, %s437
      %s440 = sshrl.u32 %s438, 16
      %s441 = sshll.u32 %s428, 16
      %s442 = sor.u32 %s428, %s441
      %v443 = vstv %s442
      %v445 = vmul.bf16 %v415, %v443
      %s446 = sshll.u32 %s440, 16
      %s447 = sor.u32 %s440, %s446
      %v448 = vstv %s447
      %v450 = vmul.bf16 %v416, %v448
      %v451 = vld [vmem:[%s3] sm:$0xf]
      %v452 = vld [vmem:[%s3 + $0x4] sm:$0xf]
      %v453 = vld [vmem:[%s3 + $0x8] sm:$0xf]
      %v454 = vld [vmem:[%s3 + $0xc] sm:$0xf]
      %v455 = vld [vmem:[%s3 + $0x10] sm:$0xf]
      %v456 = vld [vmem:[%s3 + $0x14] sm:$0xf]
      %v457 = vld [vmem:[%s4] sm:$0x1]
      %v459 = vunpack.c.l.b16 %v445
      %v460 = vpack.c.b16 %v459, %v459
      %v462 = vshrl.u32 %v460, 16
      %v464 = vrot.slane %v462, 3
      %v498 = vunpack.c.l.b16 %v383
      %v499 = vunpack.c.l.b16 %v384
      %v500 = vunpack.c.l.b16 %v385
      %v501 = vunpack.c.l.b16 %v386
      %v502 = vunpack.c.l.b16 %v387
      %v503 = vunpack.c.l.b16 %v388
      %v504 = vunpack.c.l.b16 %v389
      %v505 = vunpack.c.l.b16 %v390
      %v506 = vunpack.c.l.b16 %v391
      %v507 = vunpack.c.l.b16 %v392
      %v508 = vunpack.c.l.b16 %v393
      %v509 = vunpack.c.l.b16 %v394
      %v510 = vunpack.c.l.b16 %v395
      %v511 = vunpack.c.l.b16 %v396
      %v512 = vunpack.c.l.b16 %v397
      %v513 = vunpack.c.l.b16 %v398
      %v514 = vunpack.c.l.b16 %v399
      %v515 = vunpack.c.l.b16 %v400
      %v516 = vunpack.c.l.b16 %v401
      %v517 = vunpack.c.l.b16 %v402
      %v518 = vunpack.c.l.b16 %v403
      %v519 = vunpack.c.l.b16 %v404
      %v520 = vunpack.c.l.b16 %v405
      %v521 = vunpack.c.l.b16 %v406
      %v522 = vunpack.c.l.b16 %v407
      %v523 = vunpack.c.l.b16 %v408
      %v524 = vunpack.c.l.b16 %v409
      %v525 = vunpack.c.l.b16 %v410
      %v526 = vunpack.c.l.b16 %v411
      %v527 = vunpack.c.l.b16 %v412
      %v528 = vunpack.c.l.b16 %v413
      %v529 = vunpack.c.l.b16 %v414
      %v530 = vpack.c.b16 %v499, %v498
      %v531 = vpack.c.b16 %v501, %v500
      %v532 = vpack.c.b16 %v503, %v502
      %v533 = vpack.c.b16 %v505, %v504
      %v534 = vpack.c.b16 %v507, %v506
      %v535 = vpack.c.b16 %v509, %v508
      %v536 = vpack.c.b16 %v511, %v510
      %v537 = vpack.c.b16 %v513, %v512
      %v538 = vpack.c.b16 %v515, %v514
      %v539 = vpack.c.b16 %v517, %v516
      %v540 = vpack.c.b16 %v519, %v518
      %v541 = vpack.c.b16 %v521, %v520
      %v542 = vpack.c.b16 %v523, %v522
      %v543 = vpack.c.b16 %v525, %v524
      %v544 = vpack.c.b16 %v527, %v526
      %v545 = vpack.c.b16 %v529, %v528
      %vm546 = vsmask.f32 256
      %v548 = vshrl.u32 %v530, 16
      %v550 = vrot.slane %v548, 7
      %v551 = vshll.u32 %v530, 16
      %v553 = vor.u32 %v550, %v551
      %v555 = vshrl.u32 %v531, 16
      %v557 = vrot.slane %v555, 7
      %v558 = vshll.u32 %v531, 16
      %v560 = vor.u32 %v557, %v558
      %v561 = vsel %vm546, %v550, %v560
      %v563 = vshrl.u32 %v532, 16
      %v565 = vrot.slane %v563, 7
      %v566 = vshll.u32 %v532, 16
      %v568 = vor.u32 %v565, %v566
      %v569 = vsel %vm546, %v557, %v568
      %v571 = vshrl.u32 %v533, 16
      %v573 = vrot.slane %v571, 7
      %v574 = vshll.u32 %v533, 16
      %v576 = vor.u32 %v573, %v574
      %v577 = vsel %vm546, %v565, %v576
      %v579 = vshrl.u32 %v534, 16
      %v581 = vrot.slane %v579, 7
      %v582 = vshll.u32 %v534, 16
      %v584 = vor.u32 %v581, %v582
      %v585 = vsel %vm546, %v573, %v584
      %v587 = vshrl.u32 %v535, 16
      %v589 = vrot.slane %v587, 7
      %v590 = vshll.u32 %v535, 16
      %v592 = vor.u32 %v589, %v590
      %v593 = vsel %vm546, %v581, %v592
      %v595 = vshrl.u32 %v536, 16
      %v597 = vrot.slane %v595, 7
      %v598 = vshll.u32 %v536, 16
      %v600 = vor.u32 %v597, %v598
      %v601 = vsel %vm546, %v589, %v600
      %v603 = vshrl.u32 %v537, 16
      %v605 = vrot.slane %v603, 7
      %v606 = vshll.u32 %v537, 16
      %v608 = vor.u32 %v605, %v606
      %v609 = vsel %vm546, %v597, %v608
      %v611 = vshrl.u32 %v538, 16
      %v613 = vrot.slane %v611, 7
      %v614 = vshll.u32 %v538, 16
      %v616 = vor.u32 %v613, %v614
      %v617 = vsel %vm546, %v605, %v616
      %v619 = vshrl.u32 %v539, 16
      %v621 = vrot.slane %v619, 7
      %v622 = vshll.u32 %v539, 16
      %v624 = vor.u32 %v621, %v622
      %v625 = vsel %vm546, %v613, %v624
      %v627 = vshrl.u32 %v540, 16
      %v629 = vrot.slane %v627, 7
      %v630 = vshll.u32 %v540, 16
      %v632 = vor.u32 %v629, %v630
      %v633 = vsel %vm546, %v621, %v632
      %v635 = vshrl.u32 %v541, 16
      %v637 = vrot.slane %v635, 7
      %v638 = vshll.u32 %v541, 16
      %v640 = vor.u32 %v637, %v638
      %v641 = vsel %vm546, %v629, %v640
      %v643 = vshrl.u32 %v542, 16
      %v645 = vrot.slane %v643, 7
      %v646 = vshll.u32 %v542, 16
      %v648 = vor.u32 %v645, %v646
      %v649 = vsel %vm546, %v637, %v648
      %v651 = vshrl.u32 %v543, 16
      %v653 = vrot.slane %v651, 7
      %v654 = vshll.u32 %v543, 16
      %v656 = vor.u32 %v653, %v654
      %v657 = vsel %vm546, %v645, %v656
      %v659 = vshrl.u32 %v544, 16
      %v661 = vrot.slane %v659, 7
      %v662 = vshll.u32 %v544, 16
      %v664 = vor.u32 %v661, %v662
      %v665 = vsel %vm546, %v653, %v664
      %v667 = vshrl.u32 %v545, 16
      %v669 = vrot.slane %v667, 7
      %v670 = vshll.u32 %v545, 16
      %v672 = vor.u32 %v669, %v670
      %v673 = vsel %vm546, %v661, %v672
      %vm675 = vcmask 1040384
      %vm676 = vmand %vm675, %vm546
      %v677 = vsel %vm676, %v464, %v553
      %vm678 = vsmask.f32 7424
      %v679 = vrot.slane %v551, 1
      %v680 = vor.u32 %v548, %v679
      %v681 = vrot.slane %v558, 1
      %v682 = vsel %vm678, %v680, %v681
      %v683 = vor.u32 %v555, %v681
      %v684 = vrot.slane %v566, 1
      %v685 = vsel %vm678, %v683, %v684
      %v686 = vor.u32 %v563, %v684
      %v687 = vrot.slane %v574, 1
      %v688 = vsel %vm678, %v686, %v687
      %v689 = vor.u32 %v571, %v687
      %v690 = vrot.slane %v582, 1
      %v691 = vsel %vm678, %v689, %v690
      %v692 = vor.u32 %v579, %v690
      %v693 = vrot.slane %v590, 1
      %v694 = vsel %vm678, %v692, %v693
      %v695 = vor.u32 %v587, %v693
      %v696 = vrot.slane %v598, 1
      %v697 = vsel %vm678, %v695, %v696
      %v698 = vor.u32 %v595, %v696
      %v699 = vrot.slane %v606, 1
      %v700 = vsel %vm678, %v698, %v699
      %v701 = vor.u32 %v603, %v699
      %v702 = vrot.slane %v614, 1
      %v703 = vsel %vm678, %v701, %v702
      %v704 = vor.u32 %v611, %v702
      %v705 = vrot.slane %v622, 1
      %v706 = vsel %vm678, %v704, %v705
      %v707 = vor.u32 %v619, %v705
      %v708 = vrot.slane %v630, 1
      %v709 = vsel %vm678, %v707, %v708
      %v710 = vor.u32 %v627, %v708
      %v711 = vrot.slane %v638, 1
      %v712 = vsel %vm678, %v710, %v711
      %v713 = vor.u32 %v635, %v711
      %v714 = vrot.slane %v646, 1
      %v715 = vsel %vm678, %v713, %v714
      %v716 = vor.u32 %v643, %v714
      %v717 = vrot.slane %v654, 1
      %v718 = vsel %vm678, %v716, %v717
      %v719 = vor.u32 %v651, %v717
      %v720 = vrot.slane %v662, 1
      %v721 = vsel %vm678, %v719, %v720
      %v722 = vor.u32 %v659, %v720
      %v723 = vrot.slane %v670, 1
      %v724 = vsel %vm678, %v722, %v723
      %v725 = vor.u32 %v667, %v723
      %v728 = vunpack.c.l.b16 %v450
      %v729 = vpack.c.b16 %v728, %v728
      %v731 = vshll.u32 %v729, 16
      %v733 = vrot.slane %v731, 1
      %vm735 = vcmask 1047552
      %vm736 = vmand %vm735, %vm678
      %v737 = vsel %vm736, %v725, %v733
      %v740 = vunpack.c.l.b16 %v453
      %v741 = vunpack.c.l.b16 %v454
      %v742 = vpack.c.b16 %v741, %v740
      %vm744 = vcmask 130048
      %v745 = vsel %vm744, %v530, 0
      %v747 = vsel %vm744, %v531, 0
      %v749 = vsel %vm744, %v532, 0
      %v751 = vsel %vm744, %v533, 0
      %v753 = vsel %vm744, %v534, 0
      %v755 = vsel %vm744, %v535, 0
      %v757 = vsel %vm744, %v536, 0
      %v759 = vsel %vm744, %v537, 0
      %v761 = vsel %vm744, %v538, 0
      %v763 = vsel %vm744, %v539, 0
      %v765 = vsel %vm744, %v540, 0
      %v767 = vsel %vm744, %v541, 0
      %v769 = vsel %vm744, %v542, 0
      %v771 = vsel %vm744, %v543, 0
      %v773 = vsel %vm744, %v544, 0
      %v775 = vsel %vm744, %v545, 0
      %777 = vmatprep.subr.bf16.mxu0 0
      %778 = vmatpush1.bf16.msra.mxu0 %v742
      %779 = vmatprep.subr.bf16.mxu0 0
      %780 = vmatpush1.bf16.msra.mxu0 0
      %781 = vmatprep.subr.bf16.mxu0 0
      %782 = vmatpush1.bf16.msra.mxu0 0
      %783 = vmatprep.subr.bf16.mxu0 0
      %784 = vmatpush1.bf16.msra.mxu0 0
      %785 = vmatprep.subr.bf16.mxu0 0
      %786 = vmatpush1.bf16.msra.mxu0 0
      %787 = vmatprep.subr.bf16.mxu0 0
      %788 = vmatpush1.bf16.msra.mxu0 0
      %789 = vmatprep.subr.bf16.mxu0 0
      %790 = vmatpush1.bf16.msra.mxu0 0
      %791 = vmatprep.subr.bf16.mxu0 0
      %792 = vmatpush1.bf16.msra.mxu0 0
      %793 = vmatprep.subr.bf16.mxu0 0
      %794 = vmatpush1.bf16.msra.mxu0 0
      %795 = vmatprep.subr.bf16.mxu0 0
      %796 = vmatpush1.bf16.msra.mxu0 0
      %797 = vmatprep.subr.bf16.mxu0 0
      %798 = vmatpush1.bf16.msra.mxu0 0
      %799 = vmatprep.subr.bf16.mxu0 0
      %800 = vmatpush1.bf16.msra.mxu0 0
      %801 = vmatprep.subr.bf16.mxu0 0
      %802 = vmatpush1.bf16.msra.mxu0 0
      %803 = vmatprep.subr.bf16.mxu0 0
      %804 = vmatpush1.bf16.msra.mxu0 0
      %805 = vmatprep.subr.bf16.mxu0 0
      %806 = vmatpush1.bf16.msra.mxu0 0
      %807 = vmatprep.subr.bf16.mxu0 0
      %808 = vmatpush1.bf16.msra.mxu0 0
      %809 = vmatprep.mubr.bf16.mxu0 0
      %810 = vmatmul.mubr.bf16.gmra.mrb[0].mxu0 %v745
      %v811 = vpop.f32.mrb[0].mxu0
      %v812 = vadd.f32 0.0, %v811
      %v813 = vpop.f32.mrb[0].mxu0
      %v814 = vpop.f32.mrb[0].mxu0
      %v815 = vadd.f32 0.0, %v814
      %v816 = vpop.f32.mrb[0].mxu0
      %817 = vmatprep.mubr.bf16.mxu0 0
      %818 = vmatmul.mubr.bf16.gmra.mrb[0].mxu0 %v747
      %v819 = vpop.f32.mrb[0].mxu0
      %v820 = vadd.f32 0.0, %v819
      %v821 = vpop.f32.mrb[0].mxu0
      %v822 = vpop.f32.mrb[0].mxu0
      %v823 = vadd.f32 0.0, %v822
      %v824 = vpop.f32.mrb[0].mxu0
      %825 = vmatprep.mubr.bf16.mxu0 0
      %826 = vmatmul.mubr.bf16.gmra.mrb[0].mxu0 %v749
      %v827 = vpop.f32.mrb[0].mxu0
      %v828 = vadd.f32 0.0, %v827
      %v829 = vpop.f32.mrb[0].mxu0
      %v830 = vpop.f32.mrb[0].mxu0
      %v831 = vadd.f32 0.0, %v830
      %v832 = vpop.f32.mrb[0].mxu0
      %833 = vmatprep.mubr.bf16.mxu0 0
      %834 = vmatmul.mubr.bf16.gmra.mrb[0].mxu0 %v751
      %v835 = vpop.f32.mrb[0].mxu0
      %v836 = vadd.f32 0.0, %v835
      %v837 = vpop.f32.mrb[0].mxu0
      %v838 = vpop.f32.mrb[0].mxu0
      %v839 = vadd.f32 0.0, %v838
      %v840 = vpop.f32.mrb[0].mxu0
      %841 = vmatprep.mubr.bf16.mxu0 0
      %842 = vmatmul.mubr.bf16.gmra.mrb[0].mxu0 %v753
      %v843 = vpop.f32.mrb[0].mxu0
      %v844 = vadd.f32 0.0, %v843
      %v845 = vpop.f32.mrb[0].mxu0
      %v846 = vpop.f32.mrb[0].mxu0
      %v847 = vadd.f32 0.0, %v846
      %v848 = vpop.f32.mrb[0].mxu0
      %849 = vmatprep.mubr.bf16.mxu0 0
      %850 = vmatmul.mubr.bf16.gmra.mrb[0].mxu0 %v755
      %v851 = vpop.f32.mrb[0].mxu0
      %v852 = vadd.f32 0.0, %v851
      %v853 = vpop.f32.mrb[0].mxu0
      %v854 = vpop.f32.mrb[0].mxu0
      %v855 = vadd.f32 0.0, %v854
      %v856 = vpop.f32.mrb[0].mxu0
      %857 = vmatprep.mubr.bf16.mxu0 0
      %858 = vmatmul.mubr.bf16.gmra.mrb[0].mxu0 %v757
      %v859 = vpop.f32.mrb[0].mxu0
      %v860 = vadd.f32 0.0, %v859
      %v861 = vpop.f32.mrb[0].mxu0
      %v862 = vpop.f32.mrb[0].mxu0
      %v863 = vadd.f32 0.0, %v862
      %v864 = vpop.f32.mrb[0].mxu0
      %865 = vmatprep.mubr.bf16.mxu0 0
      %866 = vmatmul.mubr.bf16.gmra.mrb[0].mxu0 %v759
      %v867 = vpop.f32.mrb[0].mxu0
      %v868 = vadd.f32 0.0, %v867
      %v869 = vpop.f32.mrb[0].mxu0
      %v870 = vpop.f32.mrb[0].mxu0
      %v871 = vadd.f32 0.0, %v870
      %v872 = vpop.f32.mrb[0].mxu0
      %873 = vmatprep.mubr.bf16.mxu0 0
      %874 = vmatmul.mubr.bf16.gmra.mrb[0].mxu0 %v761
      %v875 = vpop.f32.mrb[0].mxu0
      %v876 = vadd.f32 0.0, %v875
      %v877 = vpop.f32.mrb[0].mxu0
      %v878 = vpop.f32.mrb[0].mxu0
      %v879 = vadd.f32 0.0, %v878
      %v880 = vpop.f32.mrb[0].mxu0
      %881 = vmatprep.mubr.bf16.mxu0 0
      %882 = vmatmul.mubr.bf16.gmra.mrb[0].mxu0 %v763
      %v883 = vpop.f32.mrb[0].mxu0
      %v884 = vadd.f32 0.0, %v883
      %v885 = vpop.f32.mrb[0].mxu0
      %v886 = vpop.f32.mrb[0].mxu0
      %v887 = vadd.f32 0.0, %v886
      %v888 = vpop.f32.mrb[0].mxu0
      %889 = vmatprep.mubr.bf16.mxu0 0
      %890 = vmatmul.mubr.bf16.gmra.mrb[0].mxu0 %v765
      %v891 = vpop.f32.mrb[0].mxu0
      %v892 = vadd.f32 0.0, %v891
      %v893 = vpop.f32.mrb[0].mxu0
      %v894 = vpop.f32.mrb[0].mxu0
      %v895 = vadd.f32 0.0, %v894
      %v896 = vpop.f32.mrb[0].mxu0
      %897 = vmatprep.mubr.bf16.mxu0 0
      %898 = vmatmul.mubr.bf16.gmra.mrb[0].mxu0 %v767
      %v899 = vpop.f32.mrb[0].mxu0
      %v900 = vadd.f32 0.0, %v899
      %v901 = vpop.f32.mrb[0].mxu0
      %v902 = vpop.f32.mrb[0].mxu0
      %v903 = vadd.f32 0.0, %v902
      %v904 = vpop.f32.mrb[0].mxu0
      %905 = vmatprep.mubr.bf16.mxu0 0
      %906 = vmatmul.mubr.bf16.gmra.mrb[0].mxu0 %v769
      %v907 = vpop.f32.mrb[0].mxu0
      %v908 = vadd.f32 0.0, %v907
      %v909 = vpop.f32.mrb[0].mxu0
      %v910 = vpop.f32.mrb[0].mxu0
      %v911 = vadd.f32 0.0, %v910
      %v912 = vpop.f32.mrb[0].mxu0
      %913 = vmatprep.mubr.bf16.mxu0 0
      %914 = vmatmul.mubr.bf16.gmra.mrb[0].mxu0 %v771
      %v915 = vpop.f32.mrb[0].mxu0
      %v916 = vadd.f32 0.0, %v915
      %v917 = vpop.f32.mrb[0].mxu0
      %v918 = vpop.f32.mrb[0].mxu0
      %v919 = vadd.f32 0.0, %v918
      %v920 = vpop.f32.mrb[0].mxu0
      %921 = vmatprep.mubr.bf16.mxu0 0
      %922 = vmatmul.mubr.bf16.gmra.mrb[0].mxu0 %v773
      %v923 = vpop.f32.mrb[0].mxu0
      %v924 = vadd.f32 0.0, %v923
      %v925 = vpop.f32.mrb[0].mxu0
      %v926 = vpop.f32.mrb[0].mxu0
      %v927 = vadd.f32 0.0, %v926
      %v928 = vpop.f32.mrb[0].mxu0
      %929 = vmatprep.mubr.bf16.mxu0 0
      %930 = vmatmul.mubr.bf16.gmra.mrb[0].mxu0 %v775
      %v931 = vpop.f32.mrb[0].mxu0
      %v932 = vadd.f32 0.0, %v931
      %v933 = vpop.f32.mrb[0].mxu0
      %v934 = vpop.f32.mrb[0].mxu0
      %v935 = vadd.f32 0.0, %v934
      %v936 = vpop.f32.mrb[0].mxu0
      %937 = vdwg.mxu0
      %v940 = vunpack.c.l.b16 %v451
      %v941 = vunpack.c.l.b16 %v452
      %v942 = vpack.c.b16 %v941, %v940
      %v945 = vsel %vm744, %v677, 0
      %v948 = vsel %vm744, %v561, 0
      %v951 = vsel %vm744, %v569, 0
      %v954 = vsel %vm744, %v577, 0
      %v957 = vsel %vm744, %v585, 0
      %v960 = vsel %vm744, %v593, 0
      %v963 = vsel %vm744, %v601, 0
      %v966 = vsel %vm744, %v609, 0
      %v969 = vsel %vm744, %v617, 0
      %v972 = vsel %vm744, %v625, 0
      %v975 = vsel %vm744, %v633, 0
      %v978 = vsel %vm744, %v641, 0
      %v981 = vsel %vm744, %v649, 0
      %v984 = vsel %vm744, %v657, 0
      %v987 = vsel %vm744, %v665, 0
      %v990 = vsel %vm744, %v673, 0
      %992 = vmatprep.subr.bf16.mxu0 0
      %993 = vmatpush1.bf16.msra.mxu0 %v942
      %994 = vmatprep.subr.bf16.mxu0 0
      %995 = vmatpush1.bf16.msra.mxu0 0
      %996 = vmatprep.subr.bf16.mxu0 0
      %997 = vmatpush1.bf16.msra.mxu0 0
      %998 = vmatprep.subr.bf16.mxu0 0
      %999 = vmatpush1.bf16.msra.mxu0 0
      %1000 = vmatprep.subr.bf16.mxu0 0
      %1001 = vmatpush1.bf16.msra.mxu0 0
      %1002 = vmatprep.subr.bf16.mxu0 0
      %1003 = vmatpush1.bf16.msra.mxu0 0
      %1004 = vmatprep.subr.bf16.mxu0 0
      %1005 = vmatpush1.bf16.msra.mxu0 0
      %1006 = vmatprep.subr.bf16.mxu0 0
      %1007 = vmatpush1.bf16.msra.mxu0 0
      %1008 = vmatprep.subr.bf16.mxu0 0
      %1009 = vmatpush1.bf16.msra.mxu0 0
      %1010 = vmatprep.subr.bf16.mxu0 0
      %1011 = vmatpush1.bf16.msra.mxu0 0
      %1012 = vmatprep.subr.bf16.mxu0 0
      %1013 = vmatpush1.bf16.msra.mxu0 0
      %1014 = vmatprep.subr.bf16.mxu0 0
      %1015 = vmatpush1.bf16.msra.mxu0 0
      %1016 = vmatprep.subr.bf16.mxu0 0
      %1017 = vmatpush1.bf16.msra.mxu0 0
      %1018 = vmatprep.subr.bf16.mxu0 0
      %1019 = vmatpush1.bf16.msra.mxu0 0
      %1020 = vmatprep.subr.bf16.mxu0 0
      %1021 = vmatpush1.bf16.msra.mxu0 0
      %1022 = vmatprep.subr.bf16.mxu0 0
      %1023 = vmatpush1.bf16.msra.mxu0 0
      %1024 = vmatprep.mubr.bf16.mxu0 0
      %1025 = vmatmul.mubr.bf16.gmra.mrb[0].mxu0 %v945
      %v1026 = vpop.f32.mrb[0].mxu0
      %v1027 = vadd.f32 %v812, %v1026
      %v1028 = vpop.f32.mrb[0].mxu0
      %v1029 = vpop.f32.mrb[0].mxu0
      %v1030 = vadd.f32 %v815, %v1029
      %v1031 = vpop.f32.mrb[0].mxu0
      %1032 = vmatprep.mubr.bf16.mxu0 0
      %1033 = vmatmul.mubr.bf16.gmra.mrb[0].mxu0 %v948
      %v1034 = vpop.f32.mrb[0].mxu0
      %v1035 = vadd.f32 %v820, %v1034
      %v1036 = vpop.f32.mrb[0].mxu0
      %v1037 = vpop.f32.mrb[0].mxu0
      %v1038 = vadd.f32 %v823, %v1037
      %v1039 = vpop.f32.mrb[0].mxu0
      %1040 = vmatprep.mubr.bf16.mxu0 0
      %1041 = vmatmul.mubr.bf16.gmra.mrb[0].mxu0 %v951
      %v1042 = vpop.f32.mrb[0].mxu0
      %v1043 = vadd.f32 %v828, %v1042
      %v1044 = vpop.f32.mrb[0].mxu0
      %v1045 = vpop.f32.mrb[0].mxu0
      %v1046 = vadd.f32 %v831, %v1045
      %v1047 = vpop.f32.mrb[0].mxu0
      %1048 = vmatprep.mubr.bf16.mxu0 0
      %1049 = vmatmul.mubr.bf16.gmra.mrb[0].mxu0 %v954
      %v1050 = vpop.f32.mrb[0].mxu0
      %v1051 = vadd.f32 %v836, %v1050
      %v1052 = vpop.f32.mrb[0].mxu0
      %v1053 = vpop.f32.mrb[0].mxu0
      %v1054 = vadd.f32 %v839, %v1053
      %v1055 = vpop.f32.mrb[0].mxu0
      %1056 = vmatprep.mubr.bf16.mxu0 0
      %1057 = vmatmul.mubr.bf16.gmra.mrb[0].mxu0 %v957
      %v1058 = vpop.f32.mrb[0].mxu0
      %v1059 = vadd.f32 %v844, %v1058
      %v1060 = vpop.f32.mrb[0].mxu0
      %v1061 = vpop.f32.mrb[0].mxu0
      %v1062 = vadd.f32 %v847, %v1061
      %v1063 = vpop.f32.mrb[0].mxu0
      %1064 = vmatprep.mubr.bf16.mxu0 0
      %1065 = vmatmul.mubr.bf16.gmra.mrb[0].mxu0 %v960
      %v1066 = vpop.f32.mrb[0].mxu0
      %v1067 = vadd.f32 %v852, %v1066
      %v1068 = vpop.f32.mrb[0].mxu0
      %v1069 = vpop.f32.mrb[0].mxu0
      %v1070 = vadd.f32 %v855, %v1069
      %v1071 = vpop.f32.mrb[0].mxu0
      %1072 = vmatprep.mubr.bf16.mxu0 0
      %1073 = vmatmul.mubr.bf16.gmra.mrb[0].mxu0 %v963
      %v1074 = vpop.f32.mrb[0].mxu0
      %v1075 = vadd.f32 %v860, %v1074
      %v1076 = vpop.f32.mrb[0].mxu0
      %v1077 = vpop.f32.mrb[0].mxu0
      %v1078 = vadd.f32 %v863, %v1077
      %v1079 = vpop.f32.mrb[0].mxu0
      %1080 = vmatprep.mubr.bf16.mxu0 0
      %1081 = vmatmul.mubr.bf16.gmra.mrb[0].mxu0 %v966
      %v1082 = vpop.f32.mrb[0].mxu0
      %v1083 = vadd.f32 %v868, %v1082
      %v1084 = vpop.f32.mrb[0].mxu0
      %v1085 = vpop.f32.mrb[0].mxu0
      %v1086 = vadd.f32 %v871, %v1085
      %v1087 = vpop.f32.mrb[0].mxu0
      %1088 = vmatprep.mubr.bf16.mxu0 0
      %1089 = vmatmul.mubr.bf16.gmra.mrb[0].mxu0 %v969
      %v1090 = vpop.f32.mrb[0].mxu0
      %v1091 = vadd.f32 %v876, %v1090
      %v1092 = vpop.f32.mrb[0].mxu0
      %v1093 = vpop.f32.mrb[0].mxu0
      %v1094 = vadd.f32 %v879, %v1093
      %v1095 = vpop.f32.mrb[0].mxu0
      %1096 = vmatprep.mubr.bf16.mxu0 0
      %1097 = vmatmul.mubr.bf16.gmra.mrb[0].mxu0 %v972
      %v1098 = vpop.f32.mrb[0].mxu0
      %v1099 = vadd.f32 %v884, %v1098
      %v1100 = vpop.f32.mrb[0].mxu0
      %v1101 = vpop.f32.mrb[0].mxu0
      %v1102 = vadd.f32 %v887, %v1101
      %v1103 = vpop.f32.mrb[0].mxu0
      %1104 = vmatprep.mubr.bf16.mxu0 0
      %1105 = vmatmul.mubr.bf16.gmra.mrb[0].mxu0 %v975
      %v1106 = vpop.f32.mrb[0].mxu0
      %v1107 = vadd.f32 %v892, %v1106
      %v1108 = vpop.f32.mrb[0].mxu0
      %v1109 = vpop.f32.mrb[0].mxu0
      %v1110 = vadd.f32 %v895, %v1109
      %v1111 = vpop.f32.mrb[0].mxu0
      %1112 = vmatprep.mubr.bf16.mxu0 0
      %1113 = vmatmul.mubr.bf16.gmra.mrb[0].mxu0 %v978
      %v1114 = vpop.f32.mrb[0].mxu0
      %v1115 = vadd.f32 %v900, %v1114
      %v1116 = vpop.f32.mrb[0].mxu0
      %v1117 = vpop.f32.mrb[0].mxu0
      %v1118 = vadd.f32 %v903, %v1117
      %v1119 = vpop.f32.mrb[0].mxu0
      %1120 = vmatprep.mubr.bf16.mxu0 0
      %1121 = vmatmul.mubr.bf16.gmra.mrb[0].mxu0 %v981
      %v1122 = vpop.f32.mrb[0].mxu0
      %v1123 = vadd.f32 %v908, %v1122
      %v1124 = vpop.f32.mrb[0].mxu0
      %v1125 = vpop.f32.mrb[0].mxu0
      %v1126 = vadd.f32 %v911, %v1125
      %v1127 = vpop.f32.mrb[0].mxu0
      %1128 = vmatprep.mubr.bf16.mxu0 0
      %1129 = vmatmul.mubr.bf16.gmra.mrb[0].mxu0 %v984
      %v1130 = vpop.f32.mrb[0].mxu0
      %v1131 = vadd.f32 %v916, %v1130
      %v1132 = vpop.f32.mrb[0].mxu0
      %v1133 = vpop.f32.mrb[0].mxu0
      %v1134 = vadd.f32 %v919, %v1133
      %v1135 = vpop.f32.mrb[0].mxu0
      %1136 = vmatprep.mubr.bf16.mxu0 0
      %1137 = vmatmul.mubr.bf16.gmra.mrb[0].mxu0 %v987
      %v1138 = vpop.f32.mrb[0].mxu0
      %v1139 = vadd.f32 %v924, %v1138
      %v1140 = vpop.f32.mrb[0].mxu0
      %v1141 = vpop.f32.mrb[0].mxu0
      %v1142 = vadd.f32 %v927, %v1141
      %v1143 = vpop.f32.mrb[0].mxu0
      %1144 = vmatprep.mubr.bf16.mxu0 0
      %1145 = vmatmul.mubr.bf16.gmra.mrb[0].mxu0 %v990
      %v1146 = vpop.f32.mrb[0].mxu0
      %v1147 = vadd.f32 %v932, %v1146
      %v1148 = vpop.f32.mrb[0].mxu0
      %v1149 = vpop.f32.mrb[0].mxu0
      %v1150 = vadd.f32 %v935, %v1149
      %v1151 = vpop.f32.mrb[0].mxu0
      %1152 = vdwg.mxu0
      %v1155 = vunpack.c.l.b16 %v455
      %v1156 = vunpack.c.l.b16 %v456
      %v1157 = vpack.c.b16 %v1156, %v1155
      %v1160 = vsel %vm744, %v682, 0
      %v1163 = vsel %vm744, %v685, 0
      %v1166 = vsel %vm744, %v688, 0
      %v1169 = vsel %vm744, %v691, 0
      %v1172 = vsel %vm744, %v694, 0
      %v1175 = vsel %vm744, %v697, 0
      %v1178 = vsel %vm744, %v700, 0
      %v1181 = vsel %vm744, %v703, 0
      %v1184 = vsel %vm744, %v706, 0
      %v1187 = vsel %vm744, %v709, 0
      %v1190 = vsel %vm744, %v712, 0
      %v1193 = vsel %vm744, %v715, 0
      %v1196 = vsel %vm744, %v718, 0
      %v1199 = vsel %vm744, %v721, 0
      %v1202 = vsel %vm744, %v724, 0
      %v1205 = vsel %vm744, %v737, 0
      %1207 = vmatprep.subr.bf16.mxu0 0
      %1208 = vmatpush1.bf16.msra.mxu0 %v1157
      %1209 = vmatprep.subr.bf16.mxu0 0
      %1210 = vmatpush1.bf16.msra.mxu0 0
      %1211 = vmatprep.subr.bf16.mxu0 0
      %1212 = vmatpush1.bf16.msra.mxu0 0
      %1213 = vmatprep.subr.bf16.mxu0 0
      %1214 = vmatpush1.bf16.msra.mxu0 0
      %1215 = vmatprep.subr.bf16.mxu0 0
      %1216 = vmatpush1.bf16.msra.mxu0 0
      %1217 = vmatprep.subr.bf16.mxu0 0
      %1218 = vmatpush1.bf16.msra.mxu0 0
      %1219 = vmatprep.subr.bf16.mxu0 0
      %1220 = vmatpush1.bf16.msra.mxu0 0
      %1221 = vmatprep.subr.bf16.mxu0 0
      %1222 = vmatpush1.bf16.msra.mxu0 0
      %1223 = vmatprep.subr.bf16.mxu0 0
      %1224 = vmatpush1.bf16.msra.mxu0 0
      %1225 = vmatprep.subr.bf16.mxu0 0
      %1226 = vmatpush1.bf16.msra.mxu0 0
      %1227 = vmatprep.subr.bf16.mxu0 0
      %1228 = vmatpush1.bf16.msra.mxu0 0
      %1229 = vmatprep.subr.bf16.mxu0 0
      %1230 = vmatpush1.bf16.msra.mxu0 0
      %1231 = vmatprep.subr.bf16.mxu0 0
      %1232 = vmatpush1.bf16.msra.mxu0 0
      %1233 = vmatprep.subr.bf16.mxu0 0
      %1234 = vmatpush1.bf16.msra.mxu0 0
      %1235 = vmatprep.subr.bf16.mxu0 0
      %1236 = vmatpush1.bf16.msra.mxu0 0
      %1237 = vmatprep.subr.bf16.mxu0 0
      %1238 = vmatpush1.bf16.msra.mxu0 0
      %1239 = vmatprep.mubr.bf16.mxu0 0
      %1240 = vmatmul.mubr.bf16.gmra.mrb[0].mxu0 %v1160
      %v1241 = vpop.f32.mrb[0].mxu0
      %v1242 = vadd.f32 0.0, %v1241
      %v1243 = vpop.f32.mrb[0].mxu0
      %v1244 = vpop.f32.mrb[0].mxu0
      %v1245 = vadd.f32 0.0, %v1244
      %v1246 = vpop.f32.mrb[0].mxu0
      %1247 = vmatprep.mubr.bf16.mxu0 0
      %1248 = vmatmul.mubr.bf16.gmra.mrb[0].mxu0 %v1163
      %v1249 = vpop.f32.mrb[0].mxu0
      %v1250 = vadd.f32 0.0, %v1249
      %v1251 = vpop.f32.mrb[0].mxu0
      %v1252 = vpop.f32.mrb[0].mxu0
      %v1253 = vadd.f32 0.0, %v1252
      %v1254 = vpop.f32.mrb[0].mxu0
      %1255 = vmatprep.mubr.bf16.mxu0 0
      %1256 = vmatmul.mubr.bf16.gmra.mrb[0].mxu0 %v1166
      %v1257 = vpop.f32.mrb[0].mxu0
      %v1258 = vadd.f32 0.0, %v1257
      %v1259 = vpop.f32.mrb[0].mxu0
      %v1260 = vpop.f32.mrb[0].mxu0
      %v1261 = vadd.f32 0.0, %v1260
      %v1262 = vpop.f32.mrb[0].mxu0
      %1263 = vmatprep.mubr.bf16.mxu0 0
      %1264 = vmatmul.mubr.bf16.gmra.mrb[0].mxu0 %v1169
      %v1265 = vpop.f32.mrb[0].mxu0
      %v1266 = vadd.f32 0.0, %v1265
      %v1267 = vpop.f32.mrb[0].mxu0
      %v1268 = vpop.f32.mrb[0].mxu0
      %v1269 = vadd.f32 0.0, %v1268
      %v1270 = vpop.f32.mrb[0].mxu0
      %1271 = vmatprep.mubr.bf16.mxu0 0
      %1272 = vmatmul.mubr.bf16.gmra.mrb[0].mxu0 %v1172
      %v1273 = vpop.f32.mrb[0].mxu0
      %v1274 = vadd.f32 0.0, %v1273
      %v1275 = vpop.f32.mrb[0].mxu0
      %v1276 = vpop.f32.mrb[0].mxu0
      %v1277 = vadd.f32 0.0, %v1276
      %v1278 = vpop.f32.mrb[0].mxu0
      %1279 = vmatprep.mubr.bf16.mxu0 0
      %1280 = vmatmul.mubr.bf16.gmra.mrb[0].mxu0 %v1175
      %v1281 = vpop.f32.mrb[0].mxu0
      %v1282 = vadd.f32 0.0, %v1281
      %v1283 = vpop.f32.mrb[0].mxu0
      %v1284 = vpop.f32.mrb[0].mxu0
      %v1285 = vadd.f32 0.0, %v1284
      %v1286 = vpop.f32.mrb[0].mxu0
      %1287 = vmatprep.mubr.bf16.mxu0 0
      %1288 = vmatmul.mubr.bf16.gmra.mrb[0].mxu0 %v1178
      %v1289 = vpop.f32.mrb[0].mxu0
      %v1290 = vadd.f32 0.0, %v1289
      %v1291 = vpop.f32.mrb[0].mxu0
      %v1292 = vpop.f32.mrb[0].mxu0
      %v1293 = vadd.f32 0.0, %v1292
      %v1294 = vpop.f32.mrb[0].mxu0
      %1295 = vmatprep.mubr.bf16.mxu0 0
      %1296 = vmatmul.mubr.bf16.gmra.mrb[0].mxu0 %v1181
      %v1297 = vpop.f32.mrb[0].mxu0
      %v1298 = vadd.f32 0.0, %v1297
      %v1299 = vpop.f32.mrb[0].mxu0
      %v1300 = vpop.f32.mrb[0].mxu0
      %v1301 = vadd.f32 0.0, %v1300
      %v1302 = vpop.f32.mrb[0].mxu0
      %1303 = vmatprep.mubr.bf16.mxu0 0
      %1304 = vmatmul.mubr.bf16.gmra.mrb[0].mxu0 %v1184
      %v1305 = vpop.f32.mrb[0].mxu0
      %v1306 = vadd.f32 0.0, %v1305
      %v1307 = vpop.f32.mrb[0].mxu0
      %v1308 = vpop.f32.mrb[0].mxu0
      %v1309 = vadd.f32 0.0, %v1308
      %v1310 = vpop.f32.mrb[0].mxu0
      %1311 = vmatprep.mubr.bf16.mxu0 0
      %1312 = vmatmul.mubr.bf16.gmra.mrb[0].mxu0 %v1187
      %v1313 = vpop.f32.mrb[0].mxu0
      %v1314 = vadd.f32 0.0, %v1313
      %v1315 = vpop.f32.mrb[0].mxu0
      %v1316 = vpop.f32.mrb[0].mxu0
      %v1317 = vadd.f32 0.0, %v1316
      %v1318 = vpop.f32.mrb[0].mxu0
      %1319 = vmatprep.mubr.bf16.mxu0 0
      %1320 = vmatmul.mubr.bf16.gmra.mrb[0].mxu0 %v1190
      %v1321 = vpop.f32.mrb[0].mxu0
      %v1322 = vadd.f32 0.0, %v1321
      %v1323 = vpop.f32.mrb[0].mxu0
      %v1324 = vpop.f32.mrb[0].mxu0
      %v1325 = vadd.f32 0.0, %v1324
      %v1326 = vpop.f32.mrb[0].mxu0
      %1327 = vmatprep.mubr.bf16.mxu0 0
      %1328 = vmatmul.mubr.bf16.gmra.mrb[0].mxu0 %v1193
      %v1329 = vpop.f32.mrb[0].mxu0
      %v1330 = vadd.f32 0.0, %v1329
      %v1331 = vpop.f32.mrb[0].mxu0
      %v1332 = vpop.f32.mrb[0].mxu0
      %v1333 = vadd.f32 0.0, %v1332
      %v1334 = vpop.f32.mrb[0].mxu0
      %1335 = vmatprep.mubr.bf16.mxu0 0
      %1336 = vmatmul.mubr.bf16.gmra.mrb[0].mxu0 %v1196
      %v1337 = vpop.f32.mrb[0].mxu0
      %v1338 = vadd.f32 0.0, %v1337
      %v1339 = vpop.f32.mrb[0].mxu0
      %v1340 = vpop.f32.mrb[0].mxu0
      %v1341 = vadd.f32 0.0, %v1340
      %v1342 = vpop.f32.mrb[0].mxu0
      %1343 = vmatprep.mubr.bf16.mxu0 0
      %1344 = vmatmul.mubr.bf16.gmra.mrb[0].mxu0 %v1199
      %v1345 = vpop.f32.mrb[0].mxu0
      %v1346 = vadd.f32 0.0, %v1345
      %v1347 = vpop.f32.mrb[0].mxu0
      %v1348 = vpop.f32.mrb[0].mxu0
      %v1349 = vadd.f32 0.0, %v1348
      %v1350 = vpop.f32.mrb[0].mxu0
      %1351 = vmatprep.mubr.bf16.mxu0 0
      %1352 = vmatmul.mubr.bf16.gmra.mrb[0].mxu0 %v1202
      %v1353 = vpop.f32.mrb[0].mxu0
      %v1354 = vadd.f32 0.0, %v1353
      %v1355 = vpop.f32.mrb[0].mxu0
      %v1356 = vpop.f32.mrb[0].mxu0
      %v1357 = vadd.f32 0.0, %v1356
      %v1358 = vpop.f32.mrb[0].mxu0
      %1359 = vmatprep.mubr.bf16.mxu0 0
      %1360 = vmatmul.mubr.bf16.gmra.mrb[0].mxu0 %v1205
      %v1361 = vpop.f32.mrb[0].mxu0
      %v1362 = vadd.f32 0.0, %v1361
      %v1363 = vpop.f32.mrb[0].mxu0
      %v1364 = vpop.f32.mrb[0].mxu0
      %v1365 = vadd.f32 0.0, %v1364
      %v1366 = vpop.f32.mrb[0].mxu0
      %1367 = vdwg.mxu0
      %v1368 = vadd.f32 %v1027, %v1242
      %v1369 = vadd.f32 %v1030, %v1245
      %v1370 = vadd.f32 %v1035, %v1250
      %v1371 = vadd.f32 %v1038, %v1253
      %v1372 = vadd.f32 %v1043, %v1258
      %v1373 = vadd.f32 %v1046, %v1261
      %v1374 = vadd.f32 %v1051, %v1266
      %v1375 = vadd.f32 %v1054, %v1269
      %v1376 = vadd.f32 %v1059, %v1274
      %v1377 = vadd.f32 %v1062, %v1277
      %v1378 = vadd.f32 %v1067, %v1282
      %v1379 = vadd.f32 %v1070, %v1285
      %v1380 = vadd.f32 %v1075, %v1290
      %v1381 = vadd.f32 %v1078, %v1293
      %v1382 = vadd.f32 %v1083, %v1298
      %v1383 = vadd.f32 %v1086, %v1301
      %v1384 = vadd.f32 %v1091, %v1306
      %v1385 = vadd.f32 %v1094, %v1309
      %v1386 = vadd.f32 %v1099, %v1314
      %v1387 = vadd.f32 %v1102, %v1317
      %v1388 = vadd.f32 %v1107, %v1322
      %v1389 = vadd.f32 %v1110, %v1325
      %v1390 = vadd.f32 %v1115, %v1330
      %v1391 = vadd.f32 %v1118, %v1333
      %v1392 = vadd.f32 %v1123, %v1338
      %v1393 = vadd.f32 %v1126, %v1341
      %v1394 = vadd.f32 %v1131, %v1346
      %v1395 = vadd.f32 %v1134, %v1349
      %v1396 = vadd.f32 %v1139, %v1354
      %v1397 = vadd.f32 %v1142, %v1357
      %v1398 = vadd.f32 %v1147, %v1362
      %v1399 = vadd.f32 %v1150, %v1365
      %v1401 = vlaneseq
      %v1402 = vshrl.u32 %v1401, 7
      %v1403 = vsub.s32 0, %v1402
      %v1404 = vrot.slane %v457, %v1403
      %v1406 = vadd.f32 %v1368, %v1404
      %v1407 = vadd.f32 %v1369, %v1404
      %v1408 = vadd.f32 %v1370, %v1404
      %v1409 = vadd.f32 %v1371, %v1404
      %v1410 = vadd.f32 %v1372, %v1404
      %v1411 = vadd.f32 %v1373, %v1404
      %v1412 = vadd.f32 %v1374, %v1404
      %v1413 = vadd.f32 %v1375, %v1404
      %v1414 = vadd.f32 %v1376, %v1404
      %v1415 = vadd.f32 %v1377, %v1404
      %v1416 = vadd.f32 %v1378, %v1404
      %v1417 = vadd.f32 %v1379, %v1404
      %v1418 = vadd.f32 %v1380, %v1404
      %v1419 = vadd.f32 %v1381, %v1404
      %v1420 = vadd.f32 %v1382, %v1404
      %v1421 = vadd.f32 %v1383, %v1404
      %v1422 = vadd.f32 %v1384, %v1404
      %v1423 = vadd.f32 %v1385, %v1404
      %v1424 = vadd.f32 %v1386, %v1404
      %v1425 = vadd.f32 %v1387, %v1404
      %v1426 = vadd.f32 %v1388, %v1404
      %v1427 = vadd.f32 %v1389, %v1404
      %v1428 = vadd.f32 %v1390, %v1404
      %v1429 = vadd.f32 %v1391, %v1404
      %v1430 = vadd.f32 %v1392, %v1404
      %v1431 = vadd.f32 %v1393, %v1404
      %v1432 = vadd.f32 %v1394, %v1404
      %v1433 = vadd.f32 %v1395, %v1404
      %v1434 = vadd.f32 %v1396, %v1404
      %v1435 = vadd.f32 %v1397, %v1404
      %v1436 = vadd.f32 %v1398, %v1404
      %v1437 = vadd.f32 %v1399, %v1404
      %vm1438 = vcmp.ge.f32.partialorder %v1406, 0.0
      %vm1439 = vcmp.ge.f32.partialorder %v1407, 0.0
      %vm1440 = vcmp.ge.f32.partialorder %v1408, 0.0
      %vm1441 = vcmp.ge.f32.partialorder %v1409, 0.0
      %vm1442 = vcmp.ge.f32.partialorder %v1410, 0.0
      %vm1443 = vcmp.ge.f32.partialorder %v1411, 0.0
      %vm1444 = vcmp.ge.f32.partialorder %v1412, 0.0
      %vm1445 = vcmp.ge.f32.partialorder %v1413, 0.0
      %vm1446 = vcmp.ge.f32.partialorder %v1414, 0.0
      %vm1447 = vcmp.ge.f32.partialorder %v1415, 0.0
      %vm1448 = vcmp.ge.f32.partialorder %v1416, 0.0
      %vm1449 = vcmp.ge.f32.partialorder %v1417, 0.0
      %vm1450 = vcmp.ge.f32.partialorder %v1418, 0.0
      %vm1451 = vcmp.ge.f32.partialorder %v1419, 0.0
      %vm1452 = vcmp.ge.f32.partialorder %v1420, 0.0
      %vm1453 = vcmp.ge.f32.partialorder %v1421, 0.0
      %vm1454 = vcmp.ge.f32.partialorder %v1422, 0.0
      %vm1455 = vcmp.ge.f32.partialorder %v1423, 0.0
      %vm1456 = vcmp.ge.f32.partialorder %v1424, 0.0
      %vm1457 = vcmp.ge.f32.partialorder %v1425, 0.0
      %vm1458 = vcmp.ge.f32.partialorder %v1426, 0.0
      %vm1459 = vcmp.ge.f32.partialorder %v1427, 0.0
      %vm1460 = vcmp.ge.f32.partialorder %v1428, 0.0
      %vm1461 = vcmp.ge.f32.partialorder %v1429, 0.0
      %vm1462 = vcmp.ge.f32.partialorder %v1430, 0.0
      %vm1463 = vcmp.ge.f32.partialorder %v1431, 0.0
      %vm1464 = vcmp.ge.f32.partialorder %v1432, 0.0
      %vm1465 = vcmp.ge.f32.partialorder %v1433, 0.0
      %vm1466 = vcmp.ge.f32.partialorder %v1434, 0.0
      %vm1467 = vcmp.ge.f32.partialorder %v1435, 0.0
      %vm1468 = vcmp.ge.f32.partialorder %v1436, 0.0
      %vm1469 = vcmp.ge.f32.partialorder %v1437, 0.0
      %v1470 = vmul.f32 %v1406, 0.2
      %v1471 = vmul.f32 %v1407, 0.2
      %v1472 = vmul.f32 %v1408, 0.2
      %v1473 = vmul.f32 %v1409, 0.2
      %v1474 = vmul.f32 %v1410, 0.2
      %v1475 = vmul.f32 %v1411, 0.2
      %v1476 = vmul.f32 %v1412, 0.2
      %v1477 = vmul.f32 %v1413, 0.2
      %v1478 = vmul.f32 %v1414, 0.2
      %v1479 = vmul.f32 %v1415, 0.2
      %v1480 = vmul.f32 %v1416, 0.2
      %v1481 = vmul.f32 %v1417, 0.2
      %v1482 = vmul.f32 %v1418, 0.2
      %v1483 = vmul.f32 %v1419, 0.2
      %v1484 = vmul.f32 %v1420, 0.2
      %v1485 = vmul.f32 %v1421, 0.2
      %v1486 = vmul.f32 %v1422, 0.2
      %v1487 = vmul.f32 %v1423, 0.2
      %v1488 = vmul.f32 %v1424, 0.2
      %v1489 = vmul.f32 %v1425, 0.2
      %v1490 = vmul.f32 %v1426, 0.2
      %v1491 = vmul.f32 %v1427, 0.2
      %v1492 = vmul.f32 %v1428, 0.2
      %v1493 = vmul.f32 %v1429, 0.2
      %v1494 = vmul.f32 %v1430, 0.2
      %v1495 = vmul.f32 %v1431, 0.2
      %v1496 = vmul.f32 %v1432, 0.2
      %v1497 = vmul.f32 %v1433, 0.2
      %v1498 = vmul.f32 %v1434, 0.2
      %v1499 = vmul.f32 %v1435, 0.2
      %v1500 = vmul.f32 %v1436, 0.2
      %v1501 = vmul.f32 %v1437, 0.2
      %v1502 = vsel %vm1438, %v1406, %v1470
      %v1503 = vsel %vm1439, %v1407, %v1471
      %v1504 = vsel %vm1440, %v1408, %v1472
      %v1505 = vsel %vm1441, %v1409, %v1473
      %v1506 = vsel %vm1442, %v1410, %v1474
      %v1507 = vsel %vm1443, %v1411, %v1475
      %v1508 = vsel %vm1444, %v1412, %v1476
      %v1509 = vsel %vm1445, %v1413, %v1477
      %v1510 = vsel %vm1446, %v1414, %v1478
      %v1511 = vsel %vm1447, %v1415, %v1479
      %v1512 = vsel %vm1448, %v1416, %v1480
      %v1513 = vsel %vm1449, %v1417, %v1481
      %v1514 = vsel %vm1450, %v1418, %v1482
      %v1515 = vsel %vm1451, %v1419, %v1483
      %v1516 = vsel %vm1452, %v1420, %v1484
      %v1517 = vsel %vm1453, %v1421, %v1485
      %v1518 = vsel %vm1454, %v1422, %v1486
      %v1519 = vsel %vm1455, %v1423, %v1487
      %v1520 = vsel %vm1456, %v1424, %v1488
      %v1521 = vsel %vm1457, %v1425, %v1489
      %v1522 = vsel %vm1458, %v1426, %v1490
      %v1523 = vsel %vm1459, %v1427, %v1491
      %v1524 = vsel %vm1460, %v1428, %v1492
      %v1525 = vsel %vm1461, %v1429, %v1493
      %v1526 = vsel %vm1462, %v1430, %v1494
      %v1527 = vsel %vm1463, %v1431, %v1495
      %v1528 = vsel %vm1464, %v1432, %v1496
      %v1529 = vsel %vm1465, %v1433, %v1497
      %v1530 = vsel %vm1466, %v1434, %v1498
      %v1531 = vsel %vm1467, %v1435, %v1499
      %v1532 = vsel %vm1468, %v1436, %v1500
      %v1533 = vsel %vm1469, %v1437, %v1501
      %v1534 = vpack.c.bf16 %v1503, %v1502
      %v1535 = vpack.c.bf16 %v1505, %v1504
      %v1536 = vpack.c.bf16 %v1507, %v1506
      %v1537 = vpack.c.bf16 %v1509, %v1508
      %v1538 = vpack.c.bf16 %v1511, %v1510
      %v1539 = vpack.c.bf16 %v1513, %v1512
      %v1540 = vpack.c.bf16 %v1515, %v1514
      %v1541 = vpack.c.bf16 %v1517, %v1516
      %v1542 = vpack.c.bf16 %v1519, %v1518
      %v1543 = vpack.c.bf16 %v1521, %v1520
      %v1544 = vpack.c.bf16 %v1523, %v1522
      %v1545 = vpack.c.bf16 %v1525, %v1524
      %v1546 = vpack.c.bf16 %v1527, %v1526
      %v1547 = vpack.c.bf16 %v1529, %v1528
      %v1548 = vpack.c.bf16 %v1531, %v1530
      %v1549 = vpack.c.bf16 %v1533, %v1532
      %v1566 = vunpack.c.l.b16 %v1534
      %v1567 = vunpack.c.h.b16 %v1534
      %v1568 = vunpack.c.l.b16 %v1535
      %v1569 = vunpack.c.h.b16 %v1535
      %v1570 = vunpack.c.l.b16 %v1536
      %v1571 = vunpack.c.h.b16 %v1536
      %v1572 = vunpack.c.l.b16 %v1537
      %v1573 = vunpack.c.h.b16 %v1537
      %v1574 = vunpack.c.l.b16 %v1538
      %v1575 = vunpack.c.h.b16 %v1538
      %v1576 = vunpack.c.l.b16 %v1539
      %v1577 = vunpack.c.h.b16 %v1539
      %v1578 = vunpack.c.l.b16 %v1540
      %v1579 = vunpack.c.h.b16 %v1540
      %v1580 = vunpack.c.l.b16 %v1541
      %v1581 = vunpack.c.h.b16 %v1541
      %v1582 = vunpack.c.l.b16 %v1542
      %v1583 = vunpack.c.h.b16 %v1542
      %v1584 = vunpack.c.l.b16 %v1543
      %v1585 = vunpack.c.h.b16 %v1543
      %v1586 = vunpack.c.l.b16 %v1544
      %v1587 = vunpack.c.h.b16 %v1544
      %v1588 = vunpack.c.l.b16 %v1545
      %v1589 = vunpack.c.h.b16 %v1545
      %v1590 = vunpack.c.l.b16 %v1546
      %v1591 = vunpack.c.h.b16 %v1546
      %v1592 = vunpack.c.l.b16 %v1547
      %v1593 = vunpack.c.h.b16 %v1547
      %v1594 = vunpack.c.l.b16 %v1548
      %v1595 = vunpack.c.h.b16 %v1548
      %v1596 = vunpack.c.l.b16 %v1549
      %v1597 = vunpack.c.h.b16 %v1549
      %v1598 = vpack.c.b16 %v1566, %v1566
      %v1599 = vpack.c.b16 %v1567, %v1567
      %v1600 = vpack.c.b16 %v1568, %v1568
      %v1601 = vpack.c.b16 %v1569, %v1569
      %v1602 = vpack.c.b16 %v1570, %v1570
      %v1603 = vpack.c.b16 %v1571, %v1571
      %v1604 = vpack.c.b16 %v1572, %v1572
      %v1605 = vpack.c.b16 %v1573, %v1573
      %v1606 = vpack.c.b16 %v1574, %v1574
      %v1607 = vpack.c.b16 %v1575, %v1575
      %v1608 = vpack.c.b16 %v1576, %v1576
      %v1609 = vpack.c.b16 %v1577, %v1577
      %v1610 = vpack.c.b16 %v1578, %v1578
      %v1611 = vpack.c.b16 %v1579, %v1579
      %v1612 = vpack.c.b16 %v1580, %v1580
      %v1613 = vpack.c.b16 %v1581, %v1581
      %v1614 = vpack.c.b16 %v1582, %v1582
      %v1615 = vpack.c.b16 %v1583, %v1583
      %v1616 = vpack.c.b16 %v1584, %v1584
      %v1617 = vpack.c.b16 %v1585, %v1585
      %v1618 = vpack.c.b16 %v1586, %v1586
      %v1619 = vpack.c.b16 %v1587, %v1587
      %v1620 = vpack.c.b16 %v1588, %v1588
      %v1621 = vpack.c.b16 %v1589, %v1589
      %v1622 = vpack.c.b16 %v1590, %v1590
      %v1623 = vpack.c.b16 %v1591, %v1591
      %v1624 = vpack.c.b16 %v1592, %v1592
      %v1625 = vpack.c.b16 %v1593, %v1593
      %v1626 = vpack.c.b16 %v1594, %v1594
      %v1627 = vpack.c.b16 %v1595, %v1595
      %v1628 = vpack.c.b16 %v1596, %v1596
      %v1629 = vpack.c.b16 %v1597, %v1597
      %vm1662 = vcmask 125952
      %1663 = vst.msk [vmem:[%s380] sm:$0xf] %vm1662, %v1598
      %1664 = vst.msk [vmem:[%s380 + $0x4] sm:$0xf] %vm1662, %v1599
      %1665 = vst.msk [vmem:[%s380 + $0x8] sm:$0xf] %vm1662, %v1600
      %1666 = vst.msk [vmem:[%s380 + $0xc] sm:$0xf] %vm1662, %v1601
      %1667 = vst.msk [vmem:[%s380 + $0x10] sm:$0xf] %vm1662, %v1602
      %1668 = vst.msk [vmem:[%s380 + $0x14] sm:$0xf] %vm1662, %v1603
      %1669 = vst.msk [vmem:[%s380 + $0x18] sm:$0xf] %vm1662, %v1604
      %1670 = vst.msk [vmem:[%s380 + $0x1c] sm:$0xf] %vm1662, %v1605
      %1671 = vst.msk [vmem:[%s380 + $0x20] sm:$0xf] %vm1662, %v1606
      %1672 = vst.msk [vmem:[%s380 + $0x24] sm:$0xf] %vm1662, %v1607
      %1673 = vst.msk [vmem:[%s380 + $0x28] sm:$0xf] %vm1662, %v1608
      %1674 = vst.msk [vmem:[%s380 + $0x2c] sm:$0xf] %vm1662, %v1609
      %1675 = vst.msk [vmem:[%s380 + $0x30] sm:$0xf] %vm1662, %v1610
      %1676 = vst.msk [vmem:[%s380 + $0x34] sm:$0xf] %vm1662, %v1611
      %1677 = vst.msk [vmem:[%s380 + $0x38] sm:$0xf] %vm1662, %v1612
      %1678 = vst.msk [vmem:[%s380 + $0x3c] sm:$0xf] %vm1662, %v1613
      %1679 = vst.msk [vmem:[%s380 + $0x40] sm:$0xf] %vm1662, %v1614
      %1680 = vst.msk [vmem:[%s380 + $0x44] sm:$0xf] %vm1662, %v1615
      %1681 = vst.msk [vmem:[%s380 + $0x48] sm:$0xf] %vm1662, %v1616
      %1682 = vst.msk [vmem:[%s380 + $0x4c] sm:$0xf] %vm1662, %v1617
      %1683 = vst.msk [vmem:[%s380 + $0x50] sm:$0xf] %vm1662, %v1618
      %1684 = vst.msk [vmem:[%s380 + $0x54] sm:$0xf] %vm1662, %v1619
      %1685 = vst.msk [vmem:[%s380 + $0x58] sm:$0xf] %vm1662, %v1620
      %1686 = vst.msk [vmem:[%s380 + $0x5c] sm:$0xf] %vm1662, %v1621
      %1687 = vst.msk [vmem:[%s380 + $0x60] sm:$0xf] %vm1662, %v1622
      %1688 = vst.msk [vmem:[%s380 + $0x64] sm:$0xf] %vm1662, %v1623
      %1689 = vst.msk [vmem:[%s380 + $0x68] sm:$0xf] %vm1662, %v1624
      %1690 = vst.msk [vmem:[%s380 + $0x6c] sm:$0xf] %vm1662, %v1625
      %1691 = vst.msk [vmem:[%s380 + $0x70] sm:$0xf] %vm1662, %v1626
      %1692 = vst.msk [vmem:[%s380 + $0x74] sm:$0xf] %vm1662, %v1627
      %1693 = vst.msk [vmem:[%s380 + $0x78] sm:$0xf] %vm1662, %v1628
      %1694 = vst.msk [vmem:[%s380 + $0x7c] sm:$0xf] %vm1662, %v1629
      %s1695 = smul.u32 32, %s21
      %p1696 = scmp.lt.s32.totalorder %s20, 1
      %s1697 = scalar_select %p1696, %s20, 1
      %p1698 = scmp.lt.s32.totalorder %s1695, 31
      %s1699 = scalar_select %p1698, %s1695, 31
      %s1700 = smul.addr %s1697, 32
      %s1701 = sadd.s32 %s1699, %s1700
      %s1702 = smul.addr %s1701, 4
      %s1703 = scalar_lea.vmem %s5, %s1702
      // Predicated region
      $region41: #{rrdbnet_forward.20} parent=39 // pred_check
        %p1704 = pneg %p190
      $region42: #{rrdbnet_forward.20} parent=39 // pred_check_branch
        %1706 = sbr.rel (%p1704) target = $region44
      $region43: #{rrdbnet_forward.20} parent=39 // pred_region
        %s1707 = smul.u32 32, %s21
      $region44: #{rrdbnet_forward.20} parent=39 // pred_fallthru
        _
    $region40: #{rrdbnet_forward.20} parent=5 // pred_fallthru
      _
    %p1708 = scmp.le.s32.totalorder 2, %s11
    // Predicated region
    $region45: #{rrdbnet_forward.20} parent=5 // pred_check
      %p1709 = pneg %p1708
    $region46: #{rrdbnet_forward.20} parent=5 // pred_check_branch
      %1711 = sbr.rel (%p1709) target = $region48
    $region47: #{rrdbnet_forward.20} parent=5 // pred_region
      %s1712 = ssub.s32 %s11, 2
      // Predicated region
      $region49: #{rrdbnet_forward.20} parent=47 // pred_check
        %p1713 = pneg %p196
      $region50: #{rrdbnet_forward.20} parent=47 // pred_check_branch
        %1715 = sbr.rel (%p1713) target = $region52
      $region51: #{rrdbnet_forward.20} parent=47 // pred_region
        %s1716 = smul.u32 32, %s23
        %p1717 = scmp.lt.s32.totalorder %s22, 1
        %s1718 = scalar_select %p1717, %s22, 1
        %p1719 = scmp.lt.s32.totalorder %s1716, 31
        %s1720 = scalar_select %p1719, %s1716, 31
        %s1721 = smul.addr %s1718, 32
        %s1722 = sadd.s32 %s1720, %s1721
        %s1723 = smul.addr %s1722, 4
        %s1724 = scalar_lea.vmem %s5, %s1723
      $region52: #{rrdbnet_forward.20} parent=47 // pred_fallthru
        _
    $region48: #{rrdbnet_forward.20} parent=5 // pred_fallthru
      _
  $region6: #{rrdbnet_forward.20} parent=0 // loop_footer
    %s15 = sadd.s32 1, %s11
  $region7: #{rrdbnet_forward.20} parent=0 // loop_footer_branch
    %10 = sbr.rel target = $region3
  $region8: #{rrdbnet_forward.20} parent=0 // loop_exit
    _

// kernel: rrdbnet_forward.22
$region0: #{rrdbnet_forward.22}
  #allocation0 [shape = 'u32[]', space=smem, size = 0x4, offset = 0x4, fixed_abs, tag = 'smem constant byte address 0x4 - core index']
  #allocation1 [shape = 'u32[144,128]{1,0:T(1,128)}', space=vmem, size = 0x12000, scoped, tag = 'internal scratch']
  %s0 = inlined_call_operand.vmem [shape: bf16[2,256,16], index: 0, kind: input, shape index: {}, may-alias: {0,1,2}]
  %s1 = inlined_call_operand.vmem [shape: bf16[2,256,16], index: 1, kind: input, shape index: {}, may-alias: {0,1,2}]
  %s2 = inlined_call_operand.vmem [shape: bf16[2,256,16], index: 2, kind: input, shape index: {}, may-alias: {0,1,2}]
  %s3 = inlined_call_operand.vmem [shape: bf16[3,16,16], index: 3, kind: input, shape index: {}]
  %s4 = inlined_call_operand.vmem [shape: f32[1,16], index: 4, kind: input, shape index: {}]
  %s5 = inlined_call_operand.vmem [shape: bf16[2,256,16], index: 5, kind: output, shape index: {}]
  %s6 = sld [smem:[#allocation0]]
  $region53: #{rrdbnet_forward.22} parent=0
    _
  %s8 = ssub.s32 1, %s6
  %s9 = scalar_select 0, %s8, %s6
  loop: start=0, step=1, limit=4
  $region2: #{rrdbnet_forward.22} parent=0 // loop_pre_header
    _
  $region3: #{rrdbnet_forward.22} parent=0 // loop_header
    %s11 = sphi 0, %s15
    %p12 = scmp.ge.s32.totalorder %s11, 4
    %s18 = sphi 0, %s30
    %s19 = sphi 0, %s26
    %s20 = sphi 0, %s18
    %s21 = sphi 0, %s19
    %s22 = sphi 0, %s20
    %s23 = sphi 0, %s21
    %s35 = sphi 0, %s37
    %s38 = sphi 0, %s35
    %s39 = sphi 0, %s38
    %s55 = sphi 0, %s39
    %s71 = sphi 0, %s73
    %s74 = sphi 0, %s71
    %s75 = sphi 0, %s74
    %s91 = sphi 0, %s75
    %s107 = sphi 0, %s109
    %s110 = sphi 0, %s107
    %s111 = sphi 0, %s110
    %s127 = sphi 0, %s111
    %s131 = sphi 0, %s131
    %s133 = sphi 0, %s131
    %s134 = sphi 0, %s133
    %s148 = sphi 0, %s134
    %s152 = sphi 0, %s152
    %s154 = sphi 0, %s152
    %s155 = sphi 0, %s154
    %s169 = sphi 0, %s155
    %s177 = sphi 0, %s179
    %s180 = sphi 0, %s177
    %s181 = sphi 0, %s180
    %s197 = sphi 0, %s181
  $region4: #{rrdbnet_forward.22} parent=0 // loop_header_branch
    %14 = sbr.rel (%p12) target = $region8
  $region5: #{rrdbnet_forward.22} parent=0 // loop_body
    %s16 = ssub.s32 %s11, 1
    %s17 = ssub.s32 %s11, 2
    %s24 = sadd.s32 1, %s19
    %p25 = scmp.ge.s32.totalorder %s24, 1
    %s26 = scalar_select %p25, 0, %s24
    %s27 = sadd.s32 1, %s18
    %s28 = scalar_select %p25, %s27, %s18
    %p29 = scmp.ge.s32.totalorder %s28, 2
    %s30 = scalar_select %p29, 0, %s28
    %s31 = ssub.s32 %s18, %s30
    %s32 = ssub.s32 %s19, %s26
    %s33 = sor.u32 %s31, %s32
    %p34 = scmp.eq.s32.totalorder %s33, 0
    %s36 = sadd.s32 %s35, 1
    %s37 = scalar_select %p34, %s35, %s36
    %p40 = pneg %p34
    %p41 = scmp.eq.s32.totalorder %s11, 1
    %p42 = por %p40, %p41
    %p43 = scmp.ne.s32.totalorder %s35, %s38
    %p44 = scmp.eq.s32.totalorder %s11, 0
    %p45 = por %p43, %p44
    %p46 = scmp.ne.s32.totalorder %s35, %s38
    %p47 = scmp.eq.s32.totalorder %s16, 1
    %p48 = por %p46, %p47
    %p49 = scmp.ne.s32.totalorder %s38, %s39
    %p50 = scmp.eq.s32.totalorder %s16, 0
    %p51 = por %p49, %p50
    %p52 = scmp.ne.s32.totalorder %s38, %s39
    %p53 = scmp.eq.s32.totalorder %s17, 1
    %p54 = por %p52, %p53
    %p56 = scmp.ne.s32.totalorder %s39, %s55
    %p57 = scmp.eq.s32.totalorder %s17, 0
    %p58 = por %p56, %p57
    %s59 = smul.u32 %s19, 32
    %s60 = ssub.s32 %s59, 1
    %p61 = scmp.gt.s32.totalorder %s60, 0
    %s62 = scalar_select %p61, %s60, 0
    %s63 = smul.u32 %s26, 32
    %s64 = ssub.s32 %s63, 1
    %p65 = scmp.gt.s32.totalorder %s64, 0
    %s66 = scalar_select %p65, %s64, 0
    %s67 = ssub.s32 %s18, %s30
    %s68 = ssub.s32 %s62, %s66
    %s69 = sor.u32 %s67, %s68
    %p70 = scmp.eq.s32.totalorder %s69, 0
    %s72 = sadd.s32 %s71, 1
    %s73 = scalar_select %p70, %s71, %s72
    %p76 = pneg %p70
    %p77 = scmp.eq.s32.totalorder %s11, 1
    %p78 = por %p76, %p77
    %p79 = scmp.ne.s32.totalorder %s71, %s74
    %p80 = scmp.eq.s32.totalorder %s11, 0
    %p81 = por %p79, %p80
    %p82 = scmp.ne.s32.totalorder %s71, %s74
    %p83 = scmp.eq.s32.totalorder %s16, 1
    %p84 = por %p82, %p83
    %p85 = scmp.ne.s32.totalorder %s74, %s75
    %p86 = scmp.eq.s32.totalorder %s16, 0
    %p87 = por %p85, %p86
    %p88 = scmp.ne.s32.totalorder %s74, %s75
    %p89 = scmp.eq.s32.totalorder %s17, 1
    %p90 = por %p88, %p89
    %p92 = scmp.ne.s32.totalorder %s75, %s91
    %p93 = scmp.eq.s32.totalorder %s17, 0
    %p94 = por %p92, %p93
    %s95 = sadd.s32 %s19, 1
    %s96 = smul.u32 %s95, 32
    %p97 = scmp.lt.s32.totalorder %s96, 31
    %s98 = scalar_select %p97, %s96, 31
    %s99 = sadd.s32 %s26, 1
    %s100 = smul.u32 %s99, 32
    %p101 = scmp.lt.s32.totalorder %s100, 31
    %s102 = scalar_select %p101, %s100, 31
    %s103 = ssub.s32 %s18, %s30
    %s104 = ssub.s32 %s98, %s102
    %s105 = sor.u32 %s103, %s104
    %p106 = scmp.eq.s32.totalorder %s105, 0
    %s108 = sadd.s32 %s107, 1
    %s109 = scalar_select %p106, %s107, %s108
    %p112 = pneg %p106
    %p113 = scmp.eq.s32.totalorder %s11, 1
    %p114 = por %p112, %p113
    %p115 = scmp.ne.s32.totalorder %s107, %s110
    %p116 = scmp.eq.s32.totalorder %s11, 0
    %p117 = por %p115, %p116
    %p118 = scmp.ne.s32.totalorder %s107, %s110
    %p119 = scmp.eq.s32.totalorder %s16, 1
    %p120 = por %p118, %p119
    %p121 = scmp.ne.s32.totalorder %s110, %s111
    %p122 = scmp.eq.s32.totalorder %s16, 0
    %p123 = por %p121, %p122
    %p124 = scmp.ne.s32.totalorder %s110, %s111
    %p125 = scmp.eq.s32.totalorder %s17, 1
    %p126 = por %p124, %p125
    %p128 = scmp.ne.s32.totalorder %s111, %s127
    %p129 = scmp.eq.s32.totalorder %s17, 0
    %p130 = por %p128, %p129
    %s132 = sadd.s32 %s131, 1
    %p135 = scmp.eq.s32.totalorder %s11, 1
    %p136 = scmp.ne.s32.totalorder %s131, %s133
    %p137 = scmp.eq.s32.totalorder %s11, 0
    %p138 = por %p136, %p137
    %p139 = scmp.ne.s32.totalorder %s131, %s133
    %p140 = scmp.eq.s32.totalorder %s16, 1
    %p141 = por %p139, %p140
    %p142 = scmp.ne.s32.totalorder %s133, %s134
    %p143 = scmp.eq.s32.totalorder %s16, 0
    %p144 = por %p142, %p143
    %p145 = scmp.ne.s32.totalorder %s133, %s134
    %p146 = scmp.eq.s32.totalorder %s17, 1
    %p147 = por %p145, %p146
    %p149 = scmp.ne.s32.totalorder %s134, %s148
    %p150 = scmp.eq.s32.totalorder %s17, 0
    %p151 = por %p149, %p150
    %s153 = sadd.s32 %s152, 1
    %p156 = scmp.eq.s32.totalorder %s11, 1
    %p157 = scmp.ne.s32.totalorder %s152, %s154
    %p158 = scmp.eq.s32.totalorder %s11, 0
    %p159 = por %p157, %p158
    %p160 = scmp.ne.s32.totalorder %s152, %s154
    %p161 = scmp.eq.s32.totalorder %s16, 1
    %p162 = por %p160, %p161
    %p163 = scmp.ne.s32.totalorder %s154, %s155
    %p164 = scmp.eq.s32.totalorder %s16, 0
    %p165 = por %p163, %p164
    %p166 = scmp.ne.s32.totalorder %s154, %s155
    %p167 = scmp.eq.s32.totalorder %s17, 1
    %p168 = por %p166, %p167
    %p170 = scmp.ne.s32.totalorder %s155, %s169
    %p171 = scmp.eq.s32.totalorder %s17, 0
    %p172 = por %p170, %p171
    %s173 = ssub.s32 %s18, %s30
    %s174 = ssub.s32 %s19, %s26
    %s175 = sor.u32 %s173, %s174
    %p176 = scmp.eq.s32.totalorder %s175, 0
    %s178 = sadd.s32 %s177, 1
    %s179 = scalar_select %p176, %s177, %s178
    %p182 = pneg %p176
    %p183 = scmp.eq.s32.totalorder %s11, 1
    %p184 = por %p182, %p183
    %p185 = scmp.ne.s32.totalorder %s177, %s180
    %p186 = scmp.eq.s32.totalorder %s11, 0
    %p187 = por %p185, %p186
    %p188 = scmp.ne.s32.totalorder %s177, %s180
    %p189 = scmp.eq.s32.totalorder %s16, 1
    %p190 = por %p188, %p189
    %p191 = scmp.ne.s32.totalorder %s180, %s181
    %p192 = scmp.eq.s32.totalorder %s16, 0
    %p193 = por %p191, %p192
    %p194 = scmp.ne.s32.totalorder %s180, %s181
    %p195 = scmp.eq.s32.totalorder %s17, 1
    %p196 = por %p194, %p195
    %p198 = scmp.ne.s32.totalorder %s181, %s197
    %p199 = scmp.eq.s32.totalorder %s17, 0
    %p200 = por %p198, %p199
    %p201 = scmp.le.s32.totalorder 1, %s11
    %p202 = scmp.lt.s32.totalorder %s11, 3
    %p203 = pnand %p201, %p202
    %p204 = pneg %p203
    // Predicated region
    $region9: #{rrdbnet_forward.22} parent=5 // pred_check
      _
    $region10: #{rrdbnet_forward.22} parent=5 // pred_check_branch
      %206 = sbr.rel (%p203) target = $region12
    $region11: #{rrdbnet_forward.22} parent=5 // pred_region
      %s207 = ssub.s32 %s11, 1
      // Predicated region
      $region13: #{rrdbnet_forward.22} parent=11 // pred_check
        %p208 = pneg %p144
      $region14: #{rrdbnet_forward.22} parent=11 // pred_check_branch
        %210 = sbr.rel (%p208) target = $region16
      $region15: #{rrdbnet_forward.22} parent=11 // pred_region
        _
      $region16: #{rrdbnet_forward.22} parent=11 // pred_fallthru
        _
      // Predicated region
      $region17: #{rrdbnet_forward.22} parent=11 // pred_check
        %p211 = pneg %p165
      $region18: #{rrdbnet_forward.22} parent=11 // pred_check_branch
        %213 = sbr.rel (%p211) target = $region20
      $region19: #{rrdbnet_forward.22} parent=11 // pred_region
        _
      $region20: #{rrdbnet_forward.22} parent=11 // pred_fallthru
        _
    $region12: #{rrdbnet_forward.22} parent=5 // pred_fallthru
      _
    %p214 = scmp.lt.s32.totalorder %s11, 2
    // Predicated region
    $region21: #{rrdbnet_forward.22} parent=5 // pred_check
      %p215 = pneg %p214
    $region22: #{rrdbnet_forward.22} parent=5 // pred_check_branch
      %217 = sbr.rel (%p215) target = $region24
    $region23: #{rrdbnet_forward.22} parent=5 // pred_region
      // Predicated region
      $region25: #{rrdbnet_forward.22} parent=23 // pred_check
        %p218 = pneg %p45
      $region26: #{rrdbnet_forward.22} parent=23 // pred_check_branch
        %220 = sbr.rel (%p218) target = $region28
      $region27: #{rrdbnet_forward.22} parent=23 // pred_region
        %s221 = smul.u32 32, %s19
        %p222 = scmp.lt.s32.totalorder %s18, 1
        %s223 = scalar_select %p222, %s18, 1
        %p224 = scmp.lt.s32.totalorder %s221, 31
        %s225 = scalar_select %p224, %s221, 31
        %s226 = smul.addr %s223, 32
        %s227 = sadd.s32 %s225, %s226
        %s228 = smul.addr %s227, 4
        %s229 = scalar_lea.vmem %s0, %s228
        %s230 = smul.u32 32, %s19
      $region28: #{rrdbnet_forward.22} parent=23 // pred_fallthru
        _
      // Predicated region
      $region29: #{rrdbnet_forward.22} parent=23 // pred_check
        %p231 = pneg %p81
      $region30: #{rrdbnet_forward.22} parent=23 // pred_check_branch
        %233 = sbr.rel (%p231) target = $region32
      $region31: #{rrdbnet_forward.22} parent=23 // pred_region
        %s234 = smul.u32 %s19, 32
        %s235 = ssub.s32 %s234, 1
        %p236 = scmp.gt.s32.totalorder %s235, 0
        %s237 = scalar_select %p236, %s235, 0
        %p238 = scmp.lt.s32.totalorder %s18, 1
        %s239 = scalar_select %p238, %s18, 1
        %p240 = scmp.lt.s32.totalorder %s237, 31
        %s241 = scalar_select %p240, %s237, 31
        %s242 = smul.addr %s239, 32
        %s243 = sadd.s32 %s241, %s242
        %s244 = smul.addr %s243, 4
        %s245 = scalar_lea.vmem %s1, %s244
        %s246 = smul.u32 %s19, 32
        %s247 = ssub.s32 %s246, 1
        %p248 = scmp.gt.s32.totalorder %s247, 0
        %s249 = scalar_select %p248, %s247, 0
      $region32: #{rrdbnet_forward.22} parent=23 // pred_fallthru
        _
      // Predicated region
      $region33: #{rrdbnet_forward.22} parent=23 // pred_check
        %p250 = pneg %p117
      $region34: #{rrdbnet_forward.22} parent=23 // pred_check_branch
        %252 = sbr.rel (%p250) target = $region36
      $region35: #{rrdbnet_forward.22} parent=23 // pred_region
        %s253 = sadd.s32 %s19, 1
        %s254 = smul.u32 %s253, 32
        %p255 = scmp.lt.s32.totalorder %s254, 31
        %s256 = scalar_select %p255, %s254, 31
        %p257 = scmp.lt.s32.totalorder %s18, 1
        %s258 = scalar_select %p257, %s18, 1
        %p259 = scmp.lt.s32.totalorder %s256, 31
        %s260 = scalar_select %p259, %s256, 31
        %s261 = smul.addr %s258, 32
        %s262 = sadd.s32 %s260, %s261
        %s263 = smul.addr %s262, 4
        %s264 = scalar_lea.vmem %s2, %s263
        %s265 = sadd.s32 %s19, 1
        %s266 = smul.u32 %s265, 32
        %p267 = scmp.lt.s32.totalorder %s266, 31
        %s268 = scalar_select %p267, %s266, 31
      $region36: #{rrdbnet_forward.22} parent=23 // pred_fallthru
        _
    $region24: #{rrdbnet_forward.22} parent=5 // pred_fallthru
      _
    %p269 = scmp.le.s32.totalorder 1, %s11
    %p270 = scmp.lt.s32.totalorder %s11, 3
    %p271 = pnand %p269, %p270
    %p272 = pneg %p271
    // Predicated region
    $region37: #{rrdbnet_forward.22} parent=5 // pred_check
      _
    $region38: #{rrdbnet_forward.22} parent=5 // pred_check_branch
      %274 = sbr.rel (%p271) target = $region40
    $region39: #{rrdbnet_forward.22} parent=5 // pred_region
      %s275 = ssub.s32 %s11, 1
      %s276 = smul.u32 32, %s21
      %p277 = scmp.lt.s32.totalorder %s20, 1
      %s278 = scalar_select %p277, %s20, 1
      %p279 = scmp.lt.s32.totalorder %s276, 31
      %s280 = scalar_select %p279, %s276, 31
      %s281 = smul.addr %s278, 32
      %s282 = sadd.s32 %s280, %s281
      %s283 = smul.addr %s282, 4
      %s284 = scalar_lea.vmem %s0, %s283
      %p285 = pneg %p51
      %p286 = pneg %p48
      %s287 = smul.u32 %s21, 32
      %s288 = ssub.s32 %s287, 1
      %p289 = scmp.gt.s32.totalorder %s288, 0
      %s290 = scalar_select %p289, %s288, 0
      %p291 = scmp.lt.s32.totalorder %s20, 1
      %s292 = scalar_select %p291, %s20, 1
      %p293 = scmp.lt.s32.totalorder %s290, 31
      %s294 = scalar_select %p293, %s290, 31
      %s295 = smul.addr %s292, 32
      %s296 = sadd.s32 %s294, %s295
      %s297 = smul.addr %s296, 4
      %s298 = scalar_lea.vmem %s1, %s297
      %p299 = pneg %p87
      %p300 = pneg %p84
      %s301 = sadd.s32 %s21, 1
      %s302 = smul.u32 %s301, 32
      %p303 = scmp.lt.s32.totalorder %s302, 31
      %s304 = scalar_select %p303, %s302, 31
      %p305 = scmp.lt.s32.totalorder %s20, 1
      %s306 = scalar_select %p305, %s20, 1
      %p307 = scmp.lt.s32.totalorder %s304, 31
      %s308 = scalar_select %p307, %s304, 31
      %s309 = smul.addr %s306, 32
      %s310 = sadd.s32 %s308, %s309
      %s311 = smul.addr %s310, 4
      %s312 = scalar_lea.vmem %s2, %s311
      %p313 = pneg %p123
      %p314 = pneg %p120
      %p315 = pneg %p144
      %p316 = pneg %p141
      %p317 = pneg %p165
      %p318 = pneg %p162
      %p319 = pneg %p193
      %p320 = pneg %p190
      %s321 = smul.u32 32, %s21
      %p322 = scmp.lt.s32.totalorder %s20, 1
      %s323 = scalar_select %p322, %s20, 1
      %p324 = scmp.lt.s32.totalorder %s321, 31
      %s325 = scalar_select %p324, %s321, 31
      %s326 = smul.addr %s323, 32
      %s327 = sadd.s32 %s325, %s326
      %s328 = smul.addr %s327, 4
      %s329 = scalar_lea.vmem %s5, %s328
      %s330 = smul.u32 32, %s21
      %p331 = scmp.lt.s32.totalorder %s20, 1
      %s332 = scalar_select %p331, %s20, 1
      %p333 = scmp.lt.s32.totalorder %s330, 31
      %s334 = scalar_select %p333, %s330, 31
      %s335 = smul.addr %s332, 32
      %s336 = sadd.s32 %s334, %s335
      %s337 = smul.addr %s336, 4
      %s338 = scalar_lea.vmem %s0, %s337
      %s339 = smul.u32 32, %s21
      %s340 = smul.u32 %s21, 32
      %s341 = ssub.s32 %s340, 1
      %p342 = scmp.gt.s32.totalorder %s341, 0
      %s343 = scalar_select %p342, %s341, 0
      %p344 = scmp.lt.s32.totalorder %s20, 1
      %s345 = scalar_select %p344, %s20, 1
      %p346 = scmp.lt.s32.totalorder %s343, 31
      %s347 = scalar_select %p346, %s343, 31
      %s348 = smul.addr %s345, 32
      %s349 = sadd.s32 %s347, %s348
      %s350 = smul.addr %s349, 4
      %s351 = scalar_lea.vmem %s1, %s350
      %s352 = smul.u32 %s21, 32
      %s353 = ssub.s32 %s352, 1
      %p354 = scmp.gt.s32.totalorder %s353, 0
      %s355 = scalar_select %p354, %s353, 0
      %s356 = sadd.s32 %s21, 1
      %s357 = smul.u32 %s356, 32
      %p358 = scmp.lt.s32.totalorder %s357, 31
      %s359 = scalar_select %p358, %s357, 31
      %p360 = scmp.lt.s32.totalorder %s20, 1
      %s361 = scalar_select %p360, %s20, 1
      %p362 = scmp.lt.s32.totalorder %s359, 31
      %s363 = scalar_select %p362, %s359, 31
      %s364 = smul.addr %s361, 32
      %s365 = sadd.s32 %s363, %s364
      %s366 = smul.addr %s365, 4
      %s367 = scalar_lea.vmem %s2, %s366
      %s368 = sadd.s32 %s21, 1
      %s369 = smul.u32 %s368, 32
      %p370 = scmp.lt.s32.totalorder %s369, 31
      %s371 = scalar_select %p370, %s369, 31
      %s372 = smul.u32 32, %s21
      %p373 = scmp.lt.s32.totalorder %s20, 1
      %s374 = scalar_select %p373, %s20, 1
      %p375 = scmp.lt.s32.totalorder %s372, 31
      %s376 = scalar_select %p375, %s372, 31
      %s377 = smul.addr %s374, 32
      %s378 = sadd.s32 %s376, %s377
      %s379 = smul.addr %s378, 4
      %s380 = scalar_lea.vmem %s5, %s379
      %s381 = smul.u32 32, %s21
      %v383 = vld [vmem:[%s338] sm:$0xf]
      %v384 = vld [vmem:[%s338 + $0x4] sm:$0xf]
      %v385 = vld [vmem:[%s338 + $0x8] sm:$0xf]
      %v386 = vld [vmem:[%s338 + $0xc] sm:$0xf]
      %v387 = vld [vmem:[%s338 + $0x10] sm:$0xf]
      %v388 = vld [vmem:[%s338 + $0x14] sm:$0xf]
      %v389 = vld [vmem:[%s338 + $0x18] sm:$0xf]
      %v390 = vld [vmem:[%s338 + $0x1c] sm:$0xf]
      %v391 = vld [vmem:[%s338 + $0x20] sm:$0xf]
      %v392 = vld [vmem:[%s338 + $0x24] sm:$0xf]
      %v393 = vld [vmem:[%s338 + $0x28] sm:$0xf]
      %v394 = vld [vmem:[%s338 + $0x2c] sm:$0xf]
      %v395 = vld [vmem:[%s338 + $0x30] sm:$0xf]
      %v396 = vld [vmem:[%s338 + $0x34] sm:$0xf]
      %v397 = vld [vmem:[%s338 + $0x38] sm:$0xf]
      %v398 = vld [vmem:[%s338 + $0x3c] sm:$0xf]
      %v399 = vld [vmem:[%s338 + $0x40] sm:$0xf]
      %v400 = vld [vmem:[%s338 + $0x44] sm:$0xf]
      %v401 = vld [vmem:[%s338 + $0x48] sm:$0xf]
      %v402 = vld [vmem:[%s338 + $0x4c] sm:$0xf]
      %v403 = vld [vmem:[%s338 + $0x50] sm:$0xf]
      %v404 = vld [vmem:[%s338 + $0x54] sm:$0xf]
      %v405 = vld [vmem:[%s338 + $0x58] sm:$0xf]
      %v406 = vld [vmem:[%s338 + $0x5c] sm:$0xf]
      %v407 = vld [vmem:[%s338 + $0x60] sm:$0xf]
      %v408 = vld [vmem:[%s338 + $0x64] sm:$0xf]
      %v409 = vld [vmem:[%s338 + $0x68] sm:$0xf]
      %v410 = vld [vmem:[%s338 + $0x6c] sm:$0xf]
      %v411 = vld [vmem:[%s338 + $0x70] sm:$0xf]
      %v412 = vld [vmem:[%s338 + $0x74] sm:$0xf]
      %v413 = vld [vmem:[%s338 + $0x78] sm:$0xf]
      %v414 = vld [vmem:[%s338 + $0x7c] sm:$0xf]
      %v415 = vld [vmem:[%s351] sm:$0xf]
      %v416 = vld [vmem:[%s367] sm:$0xf]
      %p417 = scmp.gt.s32.totalorder %s21, 0
      %s418 = scalar_select %p417, 1.0, 0.0
      %p420 = scmp.ne.f32.partialorder %s418, %s418
      %s421 = sshrl.u32 %s418, 16
      %s422 = sand.u32 %s421, 1
      %s423 = sadd.s32 32767, %s422
      %s424 = sadd.s32 %s418, %s423
      %s425 = sand.u32 %s424, 4294901760
      %s426 = scalar_select %p420, 2143289344, %s425
      %s428 = sshrl.u32 %s426, 16
      %p429 = scmp.lt.s32.totalorder %s21, 0
      %s430 = scalar_select %p429, 1.0, 0.0
      %p432 = scmp.ne.f32.partialorder %s430, %s430
      %s433 = sshrl.u32 %s430, 16
      %s434 = sand.u32 %s433, 1
      %s435 = sadd.s32 32767, %s434
      %s436 = sadd.s32 %s430, %s435
      %s437 = sand.u32 %s436, 4294901760
      %s438 = scalar_select %p432, 2143289344, %s437
      %s440 = sshrl.u32 %s438, 16
      %s441 = sshll.u32 %s428, 16
      %s442 = sor.u32 %s428, %s441
      %v443 = vstv %s442
      %v445 = vmul.bf16 %v415, %v443
      %s446 = sshll.u32 %s440, 16
      %s447 = sor.u32 %s440, %s446
      %v448 = vstv %s447
      %v450 = vmul.bf16 %v416, %v448
      %v451 = vld [vmem:[%s3] sm:$0xf]
      %v452 = vld [vmem:[%s3 + $0x4] sm:$0xf]
      %v453 = vld [vmem:[%s3 + $0x8] sm:$0xf]
      %v454 = vld [vmem:[%s3 + $0xc] sm:$0xf]
      %v455 = vld [vmem:[%s3 + $0x10] sm:$0xf]
      %v456 = vld [vmem:[%s3 + $0x14] sm:$0xf]
      %v457 = vld [vmem:[%s4] sm:$0x1]
      %v459 = vunpack.c.l.b16 %v445
      %v460 = vpack.c.b16 %v459, %v459
      %v462 = vshrl.u32 %v460, 16
      %v464 = vrot.slane %v462, 3
      %v498 = vunpack.c.l.b16 %v383
      %v499 = vunpack.c.l.b16 %v384
      %v500 = vunpack.c.l.b16 %v385
      %v501 = vunpack.c.l.b16 %v386
      %v502 = vunpack.c.l.b16 %v387
      %v503 = vunpack.c.l.b16 %v388
      %v504 = vunpack.c.l.b16 %v389
      %v505 = vunpack.c.l.b16 %v390
      %v506 = vunpack.c.l.b16 %v391
      %v507 = vunpack.c.l.b16 %v392
      %v508 = vunpack.c.l.b16 %v393
      %v509 = vunpack.c.l.b16 %v394
      %v510 = vunpack.c.l.b16 %v395
      %v511 = vunpack.c.l.b16 %v396
      %v512 = vunpack.c.l.b16 %v397
      %v513 = vunpack.c.l.b16 %v398
      %v514 = vunpack.c.l.b16 %v399
      %v515 = vunpack.c.l.b16 %v400
      %v516 = vunpack.c.l.b16 %v401
      %v517 = vunpack.c.l.b16 %v402
      %v518 = vunpack.c.l.b16 %v403
      %v519 = vunpack.c.l.b16 %v404
      %v520 = vunpack.c.l.b16 %v405
      %v521 = vunpack.c.l.b16 %v406
      %v522 = vunpack.c.l.b16 %v407
      %v523 = vunpack.c.l.b16 %v408
      %v524 = vunpack.c.l.b16 %v409
      %v525 = vunpack.c.l.b16 %v410
      %v526 = vunpack.c.l.b16 %v411
      %v527 = vunpack.c.l.b16 %v412
      %v528 = vunpack.c.l.b16 %v413
      %v529 = vunpack.c.l.b16 %v414
      %v530 = vpack.c.b16 %v499, %v498
      %v531 = vpack.c.b16 %v501, %v500
      %v532 = vpack.c.b16 %v503, %v502
      %v533 = vpack.c.b16 %v505, %v504
      %v534 = vpack.c.b16 %v507, %v506
      %v535 = vpack.c.b16 %v509, %v508
      %v536 = vpack.c.b16 %v511, %v510
      %v537 = vpack.c.b16 %v513, %v512
      %v538 = vpack.c.b16 %v515, %v514
      %v539 = vpack.c.b16 %v517, %v516
      %v540 = vpack.c.b16 %v519, %v518
      %v541 = vpack.c.b16 %v521, %v520
      %v542 = vpack.c.b16 %v523, %v522
      %v543 = vpack.c.b16 %v525, %v524
      %v544 = vpack.c.b16 %v527, %v526
      %v545 = vpack.c.b16 %v529, %v528
      %vm546 = vsmask.f32 256
      %v548 = vshrl.u32 %v530, 16
      %v550 = vrot.slane %v548, 7
      %v551 = vshll.u32 %v530, 16
      %v553 = vor.u32 %v550, %v551
      %v555 = vshrl.u32 %v531, 16
      %v557 = vrot.slane %v555, 7
      %v558 = vshll.u32 %v531, 16
      %v560 = vor.u32 %v557, %v558
      %v561 = vsel %vm546, %v550, %v560
      %v563 = vshrl.u32 %v532, 16
      %v565 = vrot.slane %v563, 7
      %v566 = vshll.u32 %v532, 16
      %v568 = vor.u32 %v565, %v566
      %v569 = vsel %vm546, %v557, %v568
      %v571 = vshrl.u32 %v533, 16
      %v573 = vrot.slane %v571, 7
      %v574 = vshll.u32 %v533, 16
      %v576 = vor.u32 %v573, %v574
      %v577 = vsel %vm546, %v565, %v576
      %v579 = vshrl.u32 %v534, 16
      %v581 = vrot.slane %v579, 7
      %v582 = vshll.u32 %v534, 16
      %v584 = vor.u32 %v581, %v582
      %v585 = vsel %vm546, %v573, %v584
      %v587 = vshrl.u32 %v535, 16
      %v589 = vrot.slane %v587, 7
      %v590 = vshll.u32 %v535, 16
      %v592 = vor.u32 %v589, %v590
      %v593 = vsel %vm546, %v581, %v592
      %v595 = vshrl.u32 %v536, 16
      %v597 = vrot.slane %v595, 7
      %v598 = vshll.u32 %v536, 16
      %v600 = vor.u32 %v597, %v598
      %v601 = vsel %vm546, %v589, %v600
      %v603 = vshrl.u32 %v537, 16
      %v605 = vrot.slane %v603, 7
      %v606 = vshll.u32 %v537, 16
      %v608 = vor.u32 %v605, %v606
      %v609 = vsel %vm546, %v597, %v608
      %v611 = vshrl.u32 %v538, 16
      %v613 = vrot.slane %v611, 7
      %v614 = vshll.u32 %v538, 16
      %v616 = vor.u32 %v613, %v614
      %v617 = vsel %vm546, %v605, %v616
      %v619 = vshrl.u32 %v539, 16
      %v621 = vrot.slane %v619, 7
      %v622 = vshll.u32 %v539, 16
      %v624 = vor.u32 %v621, %v622
      %v625 = vsel %vm546, %v613, %v624
      %v627 = vshrl.u32 %v540, 16
      %v629 = vrot.slane %v627, 7
      %v630 = vshll.u32 %v540, 16
      %v632 = vor.u32 %v629, %v630
      %v633 = vsel %vm546, %v621, %v632
      %v635 = vshrl.u32 %v541, 16
      %v637 = vrot.slane %v635, 7
      %v638 = vshll.u32 %v541, 16
      %v640 = vor.u32 %v637, %v638
      %v641 = vsel %vm546, %v629, %v640
      %v643 = vshrl.u32 %v542, 16
      %v645 = vrot.slane %v643, 7
      %v646 = vshll.u32 %v542, 16
      %v648 = vor.u32 %v645, %v646
      %v649 = vsel %vm546, %v637, %v648
      %v651 = vshrl.u32 %v543, 16
      %v653 = vrot.slane %v651, 7
      %v654 = vshll.u32 %v543, 16
      %v656 = vor.u32 %v653, %v654
      %v657 = vsel %vm546, %v645, %v656
      %v659 = vshrl.u32 %v544, 16
      %v661 = vrot.slane %v659, 7
      %v662 = vshll.u32 %v544, 16
      %v664 = vor.u32 %v661, %v662
      %v665 = vsel %vm546, %v653, %v664
      %v667 = vshrl.u32 %v545, 16
      %v669 = vrot.slane %v667, 7
      %v670 = vshll.u32 %v545, 16
      %v672 = vor.u32 %v669, %v670
      %v673 = vsel %vm546, %v661, %v672
      %vm675 = vcmask 1040384
      %vm676 = vmand %vm675, %vm546
      %v677 = vsel %vm676, %v464, %v553
      %vm678 = vsmask.f32 7424
      %v679 = vrot.slane %v551, 1
      %v680 = vor.u32 %v548, %v679
      %v681 = vrot.slane %v558, 1
      %v682 = vsel %vm678, %v680, %v681
      %v683 = vor.u32 %v555, %v681
      %v684 = vrot.slane %v566, 1
      %v685 = vsel %vm678, %v683, %v684
      %v686 = vor.u32 %v563, %v684
      %v687 = vrot.slane %v574, 1
      %v688 = vsel %vm678, %v686, %v687
      %v689 = vor.u32 %v571, %v687
      %v690 = vrot.slane %v582, 1
      %v691 = vsel %vm678, %v689, %v690
      %v692 = vor.u32 %v579, %v690
      %v693 = vrot.slane %v590, 1
      %v694 = vsel %vm678, %v692, %v693
      %v695 = vor.u32 %v587, %v693
      %v696 = vrot.slane %v598, 1
      %v697 = vsel %vm678, %v695, %v696
      %v698 = vor.u32 %v595, %v696
      %v699 = vrot.slane %v606, 1
      %v700 = vsel %vm678, %v698, %v699
      %v701 = vor.u32 %v603, %v699
      %v702 = vrot.slane %v614, 1
      %v703 = vsel %vm678, %v701, %v702
      %v704 = vor.u32 %v611, %v702
      %v705 = vrot.slane %v622, 1
      %v706 = vsel %vm678, %v704, %v705
      %v707 = vor.u32 %v619, %v705
      %v708 = vrot.slane %v630, 1
      %v709 = vsel %vm678, %v707, %v708
      %v710 = vor.u32 %v627, %v708
      %v711 = vrot.slane %v638, 1
      %v712 = vsel %vm678, %v710, %v711
      %v713 = vor.u32 %v635, %v711
      %v714 = vrot.slane %v646, 1
      %v715 = vsel %vm678, %v713, %v714
      %v716 = vor.u32 %v643, %v714
      %v717 = vrot.slane %v654, 1
      %v718 = vsel %vm678, %v716, %v717
      %v719 = vor.u32 %v651, %v717
      %v720 = vrot.slane %v662, 1
      %v721 = vsel %vm678, %v719, %v720
      %v722 = vor.u32 %v659, %v720
      %v723 = vrot.slane %v670, 1
      %v724 = vsel %vm678, %v722, %v723
      %v725 = vor.u32 %v667, %v723
      %v728 = vunpack.c.l.b16 %v450
      %v729 = vpack.c.b16 %v728, %v728
      %v731 = vshll.u32 %v729, 16
      %v733 = vrot.slane %v731, 1
      %vm735 = vcmask 1047552
      %vm736 = vmand %vm735, %vm678
      %v737 = vsel %vm736, %v725, %v733
      %v740 = vunpack.c.l.b16 %v453
      %v741 = vunpack.c.l.b16 %v454
      %v742 = vpack.c.b16 %v741, %v740
      %vm744 = vcmask 130048
      %v745 = vsel %vm744, %v530, 0
      %v747 = vsel %vm744, %v531, 0
      %v749 = vsel %vm744, %v532, 0
      %v751 = vsel %vm744, %v533, 0
      %v753 = vsel %vm744, %v534, 0
      %v755 = vsel %vm744, %v535, 0
      %v757 = vsel %vm744, %v536, 0
      %v759 = vsel %vm744, %v537, 0
      %v761 = vsel %vm744, %v538, 0
      %v763 = vsel %vm744, %v539, 0
      %v765 = vsel %vm744, %v540, 0
      %v767 = vsel %vm744, %v541, 0
      %v769 = vsel %vm744, %v542, 0
      %v771 = vsel %vm744, %v543, 0
      %v773 = vsel %vm744, %v544, 0
      %v775 = vsel %vm744, %v545, 0
      %777 = vmatprep.subr.bf16.mxu0 0
      %778 = vmatpush1.bf16.msra.mxu0 %v742
      %779 = vmatprep.subr.bf16.mxu0 0
      %780 = vmatpush1.bf16.msra.mxu0 0
      %781 = vmatprep.subr.bf16.mxu0 0
      %782 = vmatpush1.bf16.msra.mxu0 0
      %783 = vmatprep.subr.bf16.mxu0 0
      %784 = vmatpush1.bf16.msra.mxu0 0
      %785 = vmatprep.subr.bf16.mxu0 0
      %786 = vmatpush1.bf16.msra.mxu0 0
      %787 = vmatprep.subr.bf16.mxu0 0
      %788 = vmatpush1.bf16.msra.mxu0 0
      %789 = vmatprep.subr.bf16.mxu0 0
      %790 = vmatpush1.bf16.msra.mxu0 0
      %791 = vmatprep.subr.bf16.mxu0 0
      %792 = vmatpush1.bf16.msra.mxu0 0
      %793 = vmatprep.subr.bf16.mxu0 0
      %794 = vmatpush1.bf16.msra.mxu0 0
      %795 = vmatprep.subr.bf16.mxu0 0
      %796 = vmatpush1.bf16.msra.mxu0 0
      %797 = vmatprep.subr.bf16.mxu0 0
      %798 = vmatpush1.bf16.msra.mxu0 0
      %799 = vmatprep.subr.bf16.mxu0 0
      %800 = vmatpush1.bf16.msra.mxu0 0
      %801 = vmatprep.subr.bf16.mxu0 0
      %802 = vmatpush1.bf16.msra.mxu0 0
      %803 = vmatprep.subr.bf16.mxu0 0
      %804 = vmatpush1.bf16.msra.mxu0 0
      %805 = vmatprep.subr.bf16.mxu0 0
      %806 = vmatpush1.bf16.msra.mxu0 0
      %807 = vmatprep.subr.bf16.mxu0 0
      %808 = vmatpush1.bf16.msra.mxu0 0
      %809 = vmatprep.mubr.bf16.mxu0 0
      %810 = vmatmul.mubr.bf16.gmra.mrb[0].mxu0 %v745
      %v811 = vpop.f32.mrb[0].mxu0
      %v812 = vadd.f32 0.0, %v811
      %v813 = vpop.f32.mrb[0].mxu0
      %v814 = vpop.f32.mrb[0].mxu0
      %v815 = vadd.f32 0.0, %v814
      %v816 = vpop.f32.mrb[0].mxu0
      %817 = vmatprep.mubr.bf16.mxu0 0
      %818 = vmatmul.mubr.bf16.gmra.mrb[0].mxu0 %v747
      %v819 = vpop.f32.mrb[0].mxu0
      %v820 = vadd.f32 0.0, %v819
      %v821 = vpop.f32.mrb[0].mxu0
      %v822 = vpop.f32.mrb[0].mxu0
      %v823 = vadd.f32 0.0, %v822
      %v824 = vpop.f32.mrb[0].mxu0
      %825 = vmatprep.mubr.bf16.mxu0 0
      %826 = vmatmul.mubr.bf16.gmra.mrb[0].mxu0 %v749
      %v827 = vpop.f32.mrb[0].mxu0
      %v828 = vadd.f32 0.0, %v827
      %v829 = vpop.f32.mrb[0].mxu0
      %v830 = vpop.f32.mrb[0].mxu0
      %v831 = vadd.f32 0.0, %v830
      %v832 = vpop.f32.mrb[0].mxu0
      %833 = vmatprep.mubr.bf16.mxu0 0
      %834 = vmatmul.mubr.bf16.gmra.mrb[0].mxu0 %v751
      %v835 = vpop.f32.mrb[0].mxu0
      %v836 = vadd.f32 0.0, %v835
      %v837 = vpop.f32.mrb[0].mxu0
      %v838 = vpop.f32.mrb[0].mxu0
      %v839 = vadd.f32 0.0, %v838
      %v840 = vpop.f32.mrb[0].mxu0
      %841 = vmatprep.mubr.bf16.mxu0 0
      %842 = vmatmul.mubr.bf16.gmra.mrb[0].mxu0 %v753
      %v843 = vpop.f32.mrb[0].mxu0
      %v844 = vadd.f32 0.0, %v843
      %v845 = vpop.f32.mrb[0].mxu0
      %v846 = vpop.f32.mrb[0].mxu0
      %v847 = vadd.f32 0.0, %v846
      %v848 = vpop.f32.mrb[0].mxu0
      %849 = vmatprep.mubr.bf16.mxu0 0
      %850 = vmatmul.mubr.bf16.gmra.mrb[0].mxu0 %v755
      %v851 = vpop.f32.mrb[0].mxu0
      %v852 = vadd.f32 0.0, %v851
      %v853 = vpop.f32.mrb[0].mxu0
      %v854 = vpop.f32.mrb[0].mxu0
      %v855 = vadd.f32 0.0, %v854
      %v856 = vpop.f32.mrb[0].mxu0
      %857 = vmatprep.mubr.bf16.mxu0 0
      %858 = vmatmul.mubr.bf16.gmra.mrb[0].mxu0 %v757
      %v859 = vpop.f32.mrb[0].mxu0
      %v860 = vadd.f32 0.0, %v859
      %v861 = vpop.f32.mrb[0].mxu0
      %v862 = vpop.f32.mrb[0].mxu0
      %v863 = vadd.f32 0.0, %v862
      %v864 = vpop.f32.mrb[0].mxu0
      %865 = vmatprep.mubr.bf16.mxu0 0
      %866 = vmatmul.mubr.bf16.gmra.mrb[0].mxu0 %v759
      %v867 = vpop.f32.mrb[0].mxu0
      %v868 = vadd.f32 0.0, %v867
      %v869 = vpop.f32.mrb[0].mxu0
      %v870 = vpop.f32.mrb[0].mxu0
      %v871 = vadd.f32 0.0, %v870
      %v872 = vpop.f32.mrb[0].mxu0
      %873 = vmatprep.mubr.bf16.mxu0 0
      %874 = vmatmul.mubr.bf16.gmra.mrb[0].mxu0 %v761
      %v875 = vpop.f32.mrb[0].mxu0
      %v876 = vadd.f32 0.0, %v875
      %v877 = vpop.f32.mrb[0].mxu0
      %v878 = vpop.f32.mrb[0].mxu0
      %v879 = vadd.f32 0.0, %v878
      %v880 = vpop.f32.mrb[0].mxu0
      %881 = vmatprep.mubr.bf16.mxu0 0
      %882 = vmatmul.mubr.bf16.gmra.mrb[0].mxu0 %v763
      %v883 = vpop.f32.mrb[0].mxu0
      %v884 = vadd.f32 0.0, %v883
      %v885 = vpop.f32.mrb[0].mxu0
      %v886 = vpop.f32.mrb[0].mxu0
      %v887 = vadd.f32 0.0, %v886
      %v888 = vpop.f32.mrb[0].mxu0
      %889 = vmatprep.mubr.bf16.mxu0 0
      %890 = vmatmul.mubr.bf16.gmra.mrb[0].mxu0 %v765
      %v891 = vpop.f32.mrb[0].mxu0
      %v892 = vadd.f32 0.0, %v891
      %v893 = vpop.f32.mrb[0].mxu0
      %v894 = vpop.f32.mrb[0].mxu0
      %v895 = vadd.f32 0.0, %v894
      %v896 = vpop.f32.mrb[0].mxu0
      %897 = vmatprep.mubr.bf16.mxu0 0
      %898 = vmatmul.mubr.bf16.gmra.mrb[0].mxu0 %v767
      %v899 = vpop.f32.mrb[0].mxu0
      %v900 = vadd.f32 0.0, %v899
      %v901 = vpop.f32.mrb[0].mxu0
      %v902 = vpop.f32.mrb[0].mxu0
      %v903 = vadd.f32 0.0, %v902
      %v904 = vpop.f32.mrb[0].mxu0
      %905 = vmatprep.mubr.bf16.mxu0 0
      %906 = vmatmul.mubr.bf16.gmra.mrb[0].mxu0 %v769
      %v907 = vpop.f32.mrb[0].mxu0
      %v908 = vadd.f32 0.0, %v907
      %v909 = vpop.f32.mrb[0].mxu0
      %v910 = vpop.f32.mrb[0].mxu0
      %v911 = vadd.f32 0.0, %v910
      %v912 = vpop.f32.mrb[0].mxu0
      %913 = vmatprep.mubr.bf16.mxu0 0
      %914 = vmatmul.mubr.bf16.gmra.mrb[0].mxu0 %v771
      %v915 = vpop.f32.mrb[0].mxu0
      %v916 = vadd.f32 0.0, %v915
      %v917 = vpop.f32.mrb[0].mxu0
      %v918 = vpop.f32.mrb[0].mxu0
      %v919 = vadd.f32 0.0, %v918
      %v920 = vpop.f32.mrb[0].mxu0
      %921 = vmatprep.mubr.bf16.mxu0 0
      %922 = vmatmul.mubr.bf16.gmra.mrb[0].mxu0 %v773
      %v923 = vpop.f32.mrb[0].mxu0
      %v924 = vadd.f32 0.0, %v923
      %v925 = vpop.f32.mrb[0].mxu0
      %v926 = vpop.f32.mrb[0].mxu0
      %v927 = vadd.f32 0.0, %v926
      %v928 = vpop.f32.mrb[0].mxu0
      %929 = vmatprep.mubr.bf16.mxu0 0
      %930 = vmatmul.mubr.bf16.gmra.mrb[0].mxu0 %v775
      %v931 = vpop.f32.mrb[0].mxu0
      %v932 = vadd.f32 0.0, %v931
      %v933 = vpop.f32.mrb[0].mxu0
      %v934 = vpop.f32.mrb[0].mxu0
      %v935 = vadd.f32 0.0, %v934
      %v936 = vpop.f32.mrb[0].mxu0
      %937 = vdwg.mxu0
      %v940 = vunpack.c.l.b16 %v451
      %v941 = vunpack.c.l.b16 %v452
      %v942 = vpack.c.b16 %v941, %v940
      %v945 = vsel %vm744, %v677, 0
      %v948 = vsel %vm744, %v561, 0
      %v951 = vsel %vm744, %v569, 0
      %v954 = vsel %vm744, %v577, 0
      %v957 = vsel %vm744, %v585, 0
      %v960 = vsel %vm744, %v593, 0
      %v963 = vsel %vm744, %v601, 0
      %v966 = vsel %vm744, %v609, 0
      %v969 = vsel %vm744, %v617, 0
      %v972 = vsel %vm744, %v625, 0
      %v975 = vsel %vm744, %v633, 0
      %v978 = vsel %vm744, %v641, 0
      %v981 = vsel %vm744, %v649, 0
      %v984 = vsel %vm744, %v657, 0
      %v987 = vsel %vm744, %v665, 0
      %v990 = vsel %vm744, %v673, 0
      %992 = vmatprep.subr.bf16.mxu0 0
      %993 = vmatpush1.bf16.msra.mxu0 %v942
      %994 = vmatprep.subr.bf16.mxu0 0
      %995 = vmatpush1.bf16.msra.mxu0 0
      %996 = vmatprep.subr.bf16.mxu0 0
      %997 = vmatpush1.bf16.msra.mxu0 0
      %998 = vmatprep.subr.bf16.mxu0 0
      %999 = vmatpush1.bf16.msra.mxu0 0
      %1000 = vmatprep.subr.bf16.mxu0 0
      %1001 = vmatpush1.bf16.msra.mxu0 0
      %1002 = vmatprep.subr.bf16.mxu0 0
      %1003 = vmatpush1.bf16.msra.mxu0 0
      %1004 = vmatprep.subr.bf16.mxu0 0
      %1005 = vmatpush1.bf16.msra.mxu0 0
      %1006 = vmatprep.subr.bf16.mxu0 0
      %1007 = vmatpush1.bf16.msra.mxu0 0
      %1008 = vmatprep.subr.bf16.mxu0 0
      %1009 = vmatpush1.bf16.msra.mxu0 0
      %1010 = vmatprep.subr.bf16.mxu0 0
      %1011 = vmatpush1.bf16.msra.mxu0 0
      %1012 = vmatprep.subr.bf16.mxu0 0
      %1013 = vmatpush1.bf16.msra.mxu0 0
      %1014 = vmatprep.subr.bf16.mxu0 0
      %1015 = vmatpush1.bf16.msra.mxu0 0
      %1016 = vmatprep.subr.bf16.mxu0 0
      %1017 = vmatpush1.bf16.msra.mxu0 0
      %1018 = vmatprep.subr.bf16.mxu0 0
      %1019 = vmatpush1.bf16.msra.mxu0 0
      %1020 = vmatprep.subr.bf16.mxu0 0
      %1021 = vmatpush1.bf16.msra.mxu0 0
      %1022 = vmatprep.subr.bf16.mxu0 0
      %1023 = vmatpush1.bf16.msra.mxu0 0
      %1024 = vmatprep.mubr.bf16.mxu0 0
      %1025 = vmatmul.mubr.bf16.gmra.mrb[0].mxu0 %v945
      %v1026 = vpop.f32.mrb[0].mxu0
      %v1027 = vadd.f32 %v812, %v1026
      %v1028 = vpop.f32.mrb[0].mxu0
      %v1029 = vpop.f32.mrb[0].mxu0
      %v1030 = vadd.f32 %v815, %v1029
      %v1031 = vpop.f32.mrb[0].mxu0
      %1032 = vmatprep.mubr.bf16.mxu0 0
      %1033 = vmatmul.mubr.bf16.gmra.mrb[0].mxu0 %v948
      %v1034 = vpop.f32.mrb[0].mxu0
      %v1035 = vadd.f32 %v820, %v1034
      %v1036 = vpop.f32.mrb[0].mxu0
      %v1037 = vpop.f32.mrb[0].mxu0
      %v1038 = vadd.f32 %v823, %v1037
      %v1039 = vpop.f32.mrb[0].mxu0
      %1040 = vmatprep.mubr.bf16.mxu0 0
      %1041 = vmatmul.mubr.bf16.gmra.mrb[0].mxu0 %v951
      %v1042 = vpop.f32.mrb[0].mxu0
      %v1043 = vadd.f32 %v828, %v1042
      %v1044 = vpop.f32.mrb[0].mxu0
      %v1045 = vpop.f32.mrb[0].mxu0
      %v1046 = vadd.f32 %v831, %v1045
      %v1047 = vpop.f32.mrb[0].mxu0
      %1048 = vmatprep.mubr.bf16.mxu0 0
      %1049 = vmatmul.mubr.bf16.gmra.mrb[0].mxu0 %v954
      %v1050 = vpop.f32.mrb[0].mxu0
      %v1051 = vadd.f32 %v836, %v1050
      %v1052 = vpop.f32.mrb[0].mxu0
      %v1053 = vpop.f32.mrb[0].mxu0
      %v1054 = vadd.f32 %v839, %v1053
      %v1055 = vpop.f32.mrb[0].mxu0
      %1056 = vmatprep.mubr.bf16.mxu0 0
      %1057 = vmatmul.mubr.bf16.gmra.mrb[0].mxu0 %v957
      %v1058 = vpop.f32.mrb[0].mxu0
      %v1059 = vadd.f32 %v844, %v1058
      %v1060 = vpop.f32.mrb[0].mxu0
      %v1061 = vpop.f32.mrb[0].mxu0
      %v1062 = vadd.f32 %v847, %v1061
      %v1063 = vpop.f32.mrb[0].mxu0
      %1064 = vmatprep.mubr.bf16.mxu0 0
      %1065 = vmatmul.mubr.bf16.gmra.mrb[0].mxu0 %v960
      %v1066 = vpop.f32.mrb[0].mxu0
      %v1067 = vadd.f32 %v852, %v1066
      %v1068 = vpop.f32.mrb[0].mxu0
      %v1069 = vpop.f32.mrb[0].mxu0
      %v1070 = vadd.f32 %v855, %v1069
      %v1071 = vpop.f32.mrb[0].mxu0
      %1072 = vmatprep.mubr.bf16.mxu0 0
      %1073 = vmatmul.mubr.bf16.gmra.mrb[0].mxu0 %v963
      %v1074 = vpop.f32.mrb[0].mxu0
      %v1075 = vadd.f32 %v860, %v1074
      %v1076 = vpop.f32.mrb[0].mxu0
      %v1077 = vpop.f32.mrb[0].mxu0
      %v1078 = vadd.f32 %v863, %v1077
      %v1079 = vpop.f32.mrb[0].mxu0
      %1080 = vmatprep.mubr.bf16.mxu0 0
      %1081 = vmatmul.mubr.bf16.gmra.mrb[0].mxu0 %v966
      %v1082 = vpop.f32.mrb[0].mxu0
      %v1083 = vadd.f32 %v868, %v1082
      %v1084 = vpop.f32.mrb[0].mxu0
      %v1085 = vpop.f32.mrb[0].mxu0
      %v1086 = vadd.f32 %v871, %v1085
      %v1087 = vpop.f32.mrb[0].mxu0
      %1088 = vmatprep.mubr.bf16.mxu0 0
      %1089 = vmatmul.mubr.bf16.gmra.mrb[0].mxu0 %v969
      %v1090 = vpop.f32.mrb[0].mxu0
      %v1091 = vadd.f32 %v876, %v1090
      %v1092 = vpop.f32.mrb[0].mxu0
      %v1093 = vpop.f32.mrb[0].mxu0
      %v1094 = vadd.f32 %v879, %v1093
      %v1095 = vpop.f32.mrb[0].mxu0
      %1096 = vmatprep.mubr.bf16.mxu0 0
      %1097 = vmatmul.mubr.bf16.gmra.mrb[0].mxu0 %v972
      %v1098 = vpop.f32.mrb[0].mxu0
      %v1099 = vadd.f32 %v884, %v1098
      %v1100 = vpop.f32.mrb[0].mxu0
      %v1101 = vpop.f32.mrb[0].mxu0
      %v1102 = vadd.f32 %v887, %v1101
      %v1103 = vpop.f32.mrb[0].mxu0
      %1104 = vmatprep.mubr.bf16.mxu0 0
      %1105 = vmatmul.mubr.bf16.gmra.mrb[0].mxu0 %v975
      %v1106 = vpop.f32.mrb[0].mxu0
      %v1107 = vadd.f32 %v892, %v1106
      %v1108 = vpop.f32.mrb[0].mxu0
      %v1109 = vpop.f32.mrb[0].mxu0
      %v1110 = vadd.f32 %v895, %v1109
      %v1111 = vpop.f32.mrb[0].mxu0
      %1112 = vmatprep.mubr.bf16.mxu0 0
      %1113 = vmatmul.mubr.bf16.gmra.mrb[0].mxu0 %v978
      %v1114 = vpop.f32.mrb[0].mxu0
      %v1115 = vadd.f32 %v900, %v1114
      %v1116 = vpop.f32.mrb[0].mxu0
      %v1117 = vpop.f32.mrb[0].mxu0
      %v1118 = vadd.f32 %v903, %v1117
      %v1119 = vpop.f32.mrb[0].mxu0
      %1120 = vmatprep.mubr.bf16.mxu0 0
      %1121 = vmatmul.mubr.bf16.gmra.mrb[0].mxu0 %v981
      %v1122 = vpop.f32.mrb[0].mxu0
      %v1123 = vadd.f32 %v908, %v1122
      %v1124 = vpop.f32.mrb[0].mxu0
      %v1125 = vpop.f32.mrb[0].mxu0
      %v1126 = vadd.f32 %v911, %v1125
      %v1127 = vpop.f32.mrb[0].mxu0
      %1128 = vmatprep.mubr.bf16.mxu0 0
      %1129 = vmatmul.mubr.bf16.gmra.mrb[0].mxu0 %v984
      %v1130 = vpop.f32.mrb[0].mxu0
      %v1131 = vadd.f32 %v916, %v1130
      %v1132 = vpop.f32.mrb[0].mxu0
      %v1133 = vpop.f32.mrb[0].mxu0
      %v1134 = vadd.f32 %v919, %v1133
      %v1135 = vpop.f32.mrb[0].mxu0
      %1136 = vmatprep.mubr.bf16.mxu0 0
      %1137 = vmatmul.mubr.bf16.gmra.mrb[0].mxu0 %v987
      %v1138 = vpop.f32.mrb[0].mxu0
      %v1139 = vadd.f32 %v924, %v1138
      %v1140 = vpop.f32.mrb[0].mxu0
      %v1141 = vpop.f32.mrb[0].mxu0
      %v1142 = vadd.f32 %v927, %v1141
      %v1143 = vpop.f32.mrb[0].mxu0
      %1144 = vmatprep.mubr.bf16.mxu0 0
      %1145 = vmatmul.mubr.bf16.gmra.mrb[0].mxu0 %v990
      %v1146 = vpop.f32.mrb[0].mxu0
      %v1147 = vadd.f32 %v932, %v1146
      %v1148 = vpop.f32.mrb[0].mxu0
      %v1149 = vpop.f32.mrb[0].mxu0
      %v1150 = vadd.f32 %v935, %v1149
      %v1151 = vpop.f32.mrb[0].mxu0
      %1152 = vdwg.mxu0
      %v1155 = vunpack.c.l.b16 %v455
      %v1156 = vunpack.c.l.b16 %v456
      %v1157 = vpack.c.b16 %v1156, %v1155
      %v1160 = vsel %vm744, %v682, 0
      %v1163 = vsel %vm744, %v685, 0
      %v1166 = vsel %vm744, %v688, 0
      %v1169 = vsel %vm744, %v691, 0
      %v1172 = vsel %vm744, %v694, 0
      %v1175 = vsel %vm744, %v697, 0
      %v1178 = vsel %vm744, %v700, 0
      %v1181 = vsel %vm744, %v703, 0
      %v1184 = vsel %vm744, %v706, 0
      %v1187 = vsel %vm744, %v709, 0
      %v1190 = vsel %vm744, %v712, 0
      %v1193 = vsel %vm744, %v715, 0
      %v1196 = vsel %vm744, %v718, 0
      %v1199 = vsel %vm744, %v721, 0
      %v1202 = vsel %vm744, %v724, 0
      %v1205 = vsel %vm744, %v737, 0
      %1207 = vmatprep.subr.bf16.mxu0 0
      %1208 = vmatpush1.bf16.msra.mxu0 %v1157
      %1209 = vmatprep.subr.bf16.mxu0 0
      %1210 = vmatpush1.bf16.msra.mxu0 0
      %1211 = vmatprep.subr.bf16.mxu0 0
      %1212 = vmatpush1.bf16.msra.mxu0 0
      %1213 = vmatprep.subr.bf16.mxu0 0
      %1214 = vmatpush1.bf16.msra.mxu0 0
      %1215 = vmatprep.subr.bf16.mxu0 0
      %1216 = vmatpush1.bf16.msra.mxu0 0
      %1217 = vmatprep.subr.bf16.mxu0 0
      %1218 = vmatpush1.bf16.msra.mxu0 0
      %1219 = vmatprep.subr.bf16.mxu0 0
      %1220 = vmatpush1.bf16.msra.mxu0 0
      %1221 = vmatprep.subr.bf16.mxu0 0
      %1222 = vmatpush1.bf16.msra.mxu0 0
      %1223 = vmatprep.subr.bf16.mxu0 0
      %1224 = vmatpush1.bf16.msra.mxu0 0
      %1225 = vmatprep.subr.bf16.mxu0 0
      %1226 = vmatpush1.bf16.msra.mxu0 0
      %1227 = vmatprep.subr.bf16.mxu0 0
      %1228 = vmatpush1.bf16.msra.mxu0 0
      %1229 = vmatprep.subr.bf16.mxu0 0
      %1230 = vmatpush1.bf16.msra.mxu0 0
      %1231 = vmatprep.subr.bf16.mxu0 0
      %1232 = vmatpush1.bf16.msra.mxu0 0
      %1233 = vmatprep.subr.bf16.mxu0 0
      %1234 = vmatpush1.bf16.msra.mxu0 0
      %1235 = vmatprep.subr.bf16.mxu0 0
      %1236 = vmatpush1.bf16.msra.mxu0 0
      %1237 = vmatprep.subr.bf16.mxu0 0
      %1238 = vmatpush1.bf16.msra.mxu0 0
      %1239 = vmatprep.mubr.bf16.mxu0 0
      %1240 = vmatmul.mubr.bf16.gmra.mrb[0].mxu0 %v1160
      %v1241 = vpop.f32.mrb[0].mxu0
      %v1242 = vadd.f32 0.0, %v1241
      %v1243 = vpop.f32.mrb[0].mxu0
      %v1244 = vpop.f32.mrb[0].mxu0
      %v1245 = vadd.f32 0.0, %v1244
      %v1246 = vpop.f32.mrb[0].mxu0
      %1247 = vmatprep.mubr.bf16.mxu0 0
      %1248 = vmatmul.mubr.bf16.gmra.mrb[0].mxu0 %v1163
      %v1249 = vpop.f32.mrb[0].mxu0
      %v1250 = vadd.f32 0.0, %v1249
      %v1251 = vpop.f32.mrb[0].mxu0
      %v1252 = vpop.f32.mrb[0].mxu0
      %v1253 = vadd.f32 0.0, %v1252
      %v1254 = vpop.f32.mrb[0].mxu0
      %1255 = vmatprep.mubr.bf16.mxu0 0
      %1256 = vmatmul.mubr.bf16.gmra.mrb[0].mxu0 %v1166
      %v1257 = vpop.f32.mrb[0].mxu0
      %v1258 = vadd.f32 0.0, %v1257
      %v1259 = vpop.f32.mrb[0].mxu0
      %v1260 = vpop.f32.mrb[0].mxu0
      %v1261 = vadd.f32 0.0, %v1260
      %v1262 = vpop.f32.mrb[0].mxu0
      %1263 = vmatprep.mubr.bf16.mxu0 0
      %1264 = vmatmul.mubr.bf16.gmra.mrb[0].mxu0 %v1169
      %v1265 = vpop.f32.mrb[0].mxu0
      %v1266 = vadd.f32 0.0, %v1265
      %v1267 = vpop.f32.mrb[0].mxu0
      %v1268 = vpop.f32.mrb[0].mxu0
      %v1269 = vadd.f32 0.0, %v1268
      %v1270 = vpop.f32.mrb[0].mxu0
      %1271 = vmatprep.mubr.bf16.mxu0 0
      %1272 = vmatmul.mubr.bf16.gmra.mrb[0].mxu0 %v1172
      %v1273 = vpop.f32.mrb[0].mxu0
      %v1274 = vadd.f32 0.0, %v1273
      %v1275 = vpop.f32.mrb[0].mxu0
      %v1276 = vpop.f32.mrb[0].mxu0
      %v1277 = vadd.f32 0.0, %v1276
      %v1278 = vpop.f32.mrb[0].mxu0
      %1279 = vmatprep.mubr.bf16.mxu0 0
      %1280 = vmatmul.mubr.bf16.gmra.mrb[0].mxu0 %v1175
      %v1281 = vpop.f32.mrb[0].mxu0
      %v1282 = vadd.f32 0.0, %v1281
      %v1283 = vpop.f32.mrb[0].mxu0
      %v1284 = vpop.f32.mrb[0].mxu0
      %v1285 = vadd.f32 0.0, %v1284
      %v1286 = vpop.f32.mrb[0].mxu0
      %1287 = vmatprep.mubr.bf16.mxu0 0
      %1288 = vmatmul.mubr.bf16.gmra.mrb[0].mxu0 %v1178
      %v1289 = vpop.f32.mrb[0].mxu0
      %v1290 = vadd.f32 0.0, %v1289
      %v1291 = vpop.f32.mrb[0].mxu0
      %v1292 = vpop.f32.mrb[0].mxu0
      %v1293 = vadd.f32 0.0, %v1292
      %v1294 = vpop.f32.mrb[0].mxu0
      %1295 = vmatprep.mubr.bf16.mxu0 0
      %1296 = vmatmul.mubr.bf16.gmra.mrb[0].mxu0 %v1181
      %v1297 = vpop.f32.mrb[0].mxu0
      %v1298 = vadd.f32 0.0, %v1297
      %v1299 = vpop.f32.mrb[0].mxu0
      %v1300 = vpop.f32.mrb[0].mxu0
      %v1301 = vadd.f32 0.0, %v1300
      %v1302 = vpop.f32.mrb[0].mxu0
      %1303 = vmatprep.mubr.bf16.mxu0 0
      %1304 = vmatmul.mubr.bf16.gmra.mrb[0].mxu0 %v1184
      %v1305 = vpop.f32.mrb[0].mxu0
      %v1306 = vadd.f32 0.0, %v1305
      %v1307 = vpop.f32.mrb[0].mxu0
      %v1308 = vpop.f32.mrb[0].mxu0
      %v1309 = vadd.f32 0.0, %v1308
      %v1310 = vpop.f32.mrb[0].mxu0
      %1311 = vmatprep.mubr.bf16.mxu0 0
      %1312 = vmatmul.mubr.bf16.gmra.mrb[0].mxu0 %v1187
      %v1313 = vpop.f32.mrb[0].mxu0
      %v1314 = vadd.f32 0.0, %v1313
      %v1315 = vpop.f32.mrb[0].mxu0
      %v1316 = vpop.f32.mrb[0].mxu0
      %v1317 = vadd.f32 0.0, %v1316
      %v1318 = vpop.f32.mrb[0].mxu0
      %1319 = vmatprep.mubr.bf16.mxu0 0
      %1320 = vmatmul.mubr.bf16.gmra.mrb[0].mxu0 %v1190
      %v1321 = vpop.f32.mrb[0].mxu0
      %v1322 = vadd.f32 0.0, %v1321
      %v1323 = vpop.f32.mrb[0].mxu0
      %v1324 = vpop.f32.mrb[0].mxu0
      %v1325 = vadd.f32 0.0, %v1324
      %v1326 = vpop.f32.mrb[0].mxu0
      %1327 = vmatprep.mubr.bf16.mxu0 0
      %1328 = vmatmul.mubr.bf16.gmra.mrb[0].mxu0 %v1193
      %v1329 = vpop.f32.mrb[0].mxu0
      %v1330 = vadd.f32 0.0, %v1329
      %v1331 = vpop.f32.mrb[0].mxu0
      %v1332 = vpop.f32.mrb[0].mxu0
      %v1333 = vadd.f32 0.0, %v1332
      %v1334 = vpop.f32.mrb[0].mxu0
      %1335 = vmatprep.mubr.bf16.mxu0 0
      %1336 = vmatmul.mubr.bf16.gmra.mrb[0].mxu0 %v1196
      %v1337 = vpop.f32.mrb[0].mxu0
      %v1338 = vadd.f32 0.0, %v1337
      %v1339 = vpop.f32.mrb[0].mxu0
      %v1340 = vpop.f32.mrb[0].mxu0
      %v1341 = vadd.f32 0.0, %v1340
      %v1342 = vpop.f32.mrb[0].mxu0
      %1343 = vmatprep.mubr.bf16.mxu0 0
      %1344 = vmatmul.mubr.bf16.gmra.mrb[0].mxu0 %v1199
      %v1345 = vpop.f32.mrb[0].mxu0
      %v1346 = vadd.f32 0.0, %v1345
      %v1347 = vpop.f32.mrb[0].mxu0
      %v1348 = vpop.f32.mrb[0].mxu0
      %v1349 = vadd.f32 0.0, %v1348
      %v1350 = vpop.f32.mrb[0].mxu0
      %1351 = vmatprep.mubr.bf16.mxu0 0
      %1352 = vmatmul.mubr.bf16.gmra.mrb[0].mxu0 %v1202
      %v1353 = vpop.f32.mrb[0].mxu0
      %v1354 = vadd.f32 0.0, %v1353
      %v1355 = vpop.f32.mrb[0].mxu0
      %v1356 = vpop.f32.mrb[0].mxu0
      %v1357 = vadd.f32 0.0, %v1356
      %v1358 = vpop.f32.mrb[0].mxu0
      %1359 = vmatprep.mubr.bf16.mxu0 0
      %1360 = vmatmul.mubr.bf16.gmra.mrb[0].mxu0 %v1205
      %v1361 = vpop.f32.mrb[0].mxu0
      %v1362 = vadd.f32 0.0, %v1361
      %v1363 = vpop.f32.mrb[0].mxu0
      %v1364 = vpop.f32.mrb[0].mxu0
      %v1365 = vadd.f32 0.0, %v1364
      %v1366 = vpop.f32.mrb[0].mxu0
      %1367 = vdwg.mxu0
      %v1368 = vadd.f32 %v1027, %v1242
      %v1369 = vadd.f32 %v1030, %v1245
      %v1370 = vadd.f32 %v1035, %v1250
      %v1371 = vadd.f32 %v1038, %v1253
      %v1372 = vadd.f32 %v1043, %v1258
      %v1373 = vadd.f32 %v1046, %v1261
      %v1374 = vadd.f32 %v1051, %v1266
      %v1375 = vadd.f32 %v1054, %v1269
      %v1376 = vadd.f32 %v1059, %v1274
      %v1377 = vadd.f32 %v1062, %v1277
      %v1378 = vadd.f32 %v1067, %v1282
      %v1379 = vadd.f32 %v1070, %v1285
      %v1380 = vadd.f32 %v1075, %v1290
      %v1381 = vadd.f32 %v1078, %v1293
      %v1382 = vadd.f32 %v1083, %v1298
      %v1383 = vadd.f32 %v1086, %v1301
      %v1384 = vadd.f32 %v1091, %v1306
      %v1385 = vadd.f32 %v1094, %v1309
      %v1386 = vadd.f32 %v1099, %v1314
      %v1387 = vadd.f32 %v1102, %v1317
      %v1388 = vadd.f32 %v1107, %v1322
      %v1389 = vadd.f32 %v1110, %v1325
      %v1390 = vadd.f32 %v1115, %v1330
      %v1391 = vadd.f32 %v1118, %v1333
      %v1392 = vadd.f32 %v1123, %v1338
      %v1393 = vadd.f32 %v1126, %v1341
      %v1394 = vadd.f32 %v1131, %v1346
      %v1395 = vadd.f32 %v1134, %v1349
      %v1396 = vadd.f32 %v1139, %v1354
      %v1397 = vadd.f32 %v1142, %v1357
      %v1398 = vadd.f32 %v1147, %v1362
      %v1399 = vadd.f32 %v1150, %v1365
      %v1401 = vlaneseq
      %v1402 = vshrl.u32 %v1401, 7
      %v1403 = vsub.s32 0, %v1402
      %v1404 = vrot.slane %v457, %v1403
      %v1406 = vadd.f32 %v1368, %v1404
      %v1407 = vadd.f32 %v1369, %v1404
      %v1408 = vadd.f32 %v1370, %v1404
      %v1409 = vadd.f32 %v1371, %v1404
      %v1410 = vadd.f32 %v1372, %v1404
      %v1411 = vadd.f32 %v1373, %v1404
      %v1412 = vadd.f32 %v1374, %v1404
      %v1413 = vadd.f32 %v1375, %v1404
      %v1414 = vadd.f32 %v1376, %v1404
      %v1415 = vadd.f32 %v1377, %v1404
      %v1416 = vadd.f32 %v1378, %v1404
      %v1417 = vadd.f32 %v1379, %v1404
      %v1418 = vadd.f32 %v1380, %v1404
      %v1419 = vadd.f32 %v1381, %v1404
      %v1420 = vadd.f32 %v1382, %v1404
      %v1421 = vadd.f32 %v1383, %v1404
      %v1422 = vadd.f32 %v1384, %v1404
      %v1423 = vadd.f32 %v1385, %v1404
      %v1424 = vadd.f32 %v1386, %v1404
      %v1425 = vadd.f32 %v1387, %v1404
      %v1426 = vadd.f32 %v1388, %v1404
      %v1427 = vadd.f32 %v1389, %v1404
      %v1428 = vadd.f32 %v1390, %v1404
      %v1429 = vadd.f32 %v1391, %v1404
      %v1430 = vadd.f32 %v1392, %v1404
      %v1431 = vadd.f32 %v1393, %v1404
      %v1432 = vadd.f32 %v1394, %v1404
      %v1433 = vadd.f32 %v1395, %v1404
      %v1434 = vadd.f32 %v1396, %v1404
      %v1435 = vadd.f32 %v1397, %v1404
      %v1436 = vadd.f32 %v1398, %v1404
      %v1437 = vadd.f32 %v1399, %v1404
      %v1438 = vpack.c.bf16 %v1407, %v1406
      %v1439 = vpack.c.bf16 %v1409, %v1408
      %v1440 = vpack.c.bf16 %v1411, %v1410
      %v1441 = vpack.c.bf16 %v1413, %v1412
      %v1442 = vpack.c.bf16 %v1415, %v1414
      %v1443 = vpack.c.bf16 %v1417, %v1416
      %v1444 = vpack.c.bf16 %v1419, %v1418
      %v1445 = vpack.c.bf16 %v1421, %v1420
      %v1446 = vpack.c.bf16 %v1423, %v1422
      %v1447 = vpack.c.bf16 %v1425, %v1424
      %v1448 = vpack.c.bf16 %v1427, %v1426
      %v1449 = vpack.c.bf16 %v1429, %v1428
      %v1450 = vpack.c.bf16 %v1431, %v1430
      %v1451 = vpack.c.bf16 %v1433, %v1432
      %v1452 = vpack.c.bf16 %v1435, %v1434
      %v1453 = vpack.c.bf16 %v1437, %v1436
      %v1470 = vunpack.c.l.b16 %v1438
      %v1471 = vunpack.c.h.b16 %v1438
      %v1472 = vunpack.c.l.b16 %v1439
      %v1473 = vunpack.c.h.b16 %v1439
      %v1474 = vunpack.c.l.b16 %v1440
      %v1475 = vunpack.c.h.b16 %v1440
      %v1476 = vunpack.c.l.b16 %v1441
      %v1477 = vunpack.c.h.b16 %v1441
      %v1478 = vunpack.c.l.b16 %v1442
      %v1479 = vunpack.c.h.b16 %v1442
      %v1480 = vunpack.c.l.b16 %v1443
      %v1481 = vunpack.c.h.b16 %v1443
      %v1482 = vunpack.c.l.b16 %v1444
      %v1483 = vunpack.c.h.b16 %v1444
      %v1484 = vunpack.c.l.b16 %v1445
      %v1485 = vunpack.c.h.b16 %v1445
      %v1486 = vunpack.c.l.b16 %v1446
      %v1487 = vunpack.c.h.b16 %v1446
      %v1488 = vunpack.c.l.b16 %v1447
      %v1489 = vunpack.c.h.b16 %v1447
      %v1490 = vunpack.c.l.b16 %v1448
      %v1491 = vunpack.c.h.b16 %v1448
      %v1492 = vunpack.c.l.b16 %v1449
      %v1493 = vunpack.c.h.b16 %v1449
      %v1494 = vunpack.c.l.b16 %v1450
      %v1495 = vunpack.c.h.b16 %v1450
      %v1496 = vunpack.c.l.b16 %v1451
      %v1497 = vunpack.c.h.b16 %v1451
      %v1498 = vunpack.c.l.b16 %v1452
      %v1499 = vunpack.c.h.b16 %v1452
      %v1500 = vunpack.c.l.b16 %v1453
      %v1501 = vunpack.c.h.b16 %v1453
      %v1502 = vpack.c.b16 %v1470, %v1470
      %v1503 = vpack.c.b16 %v1471, %v1471
      %v1504 = vpack.c.b16 %v1472, %v1472
      %v1505 = vpack.c.b16 %v1473, %v1473
      %v1506 = vpack.c.b16 %v1474, %v1474
      %v1507 = vpack.c.b16 %v1475, %v1475
      %v1508 = vpack.c.b16 %v1476, %v1476
      %v1509 = vpack.c.b16 %v1477, %v1477
      %v1510 = vpack.c.b16 %v1478, %v1478
      %v1511 = vpack.c.b16 %v1479, %v1479
      %v1512 = vpack.c.b16 %v1480, %v1480
      %v1513 = vpack.c.b16 %v1481, %v1481
      %v1514 = vpack.c.b16 %v1482, %v1482
      %v1515 = vpack.c.b16 %v1483, %v1483
      %v1516 = vpack.c.b16 %v1484, %v1484
      %v1517 = vpack.c.b16 %v1485, %v1485
      %v1518 = vpack.c.b16 %v1486, %v1486
      %v1519 = vpack.c.b16 %v1487, %v1487
      %v1520 = vpack.c.b16 %v1488, %v1488
      %v1521 = vpack.c.b16 %v1489, %v1489
      %v1522 = vpack.c.b16 %v1490, %v1490
      %v1523 = vpack.c.b16 %v1491, %v1491
      %v1524 = vpack.c.b16 %v1492, %v1492
      %v1525 = vpack.c.b16 %v1493, %v1493
      %v1526 = vpack.c.b16 %v1494, %v1494
      %v1527 = vpack.c.b16 %v1495, %v1495
      %v1528 = vpack.c.b16 %v1496, %v1496
      %v1529 = vpack.c.b16 %v1497, %v1497
      %v1530 = vpack.c.b16 %v1498, %v1498
      %v1531 = vpack.c.b16 %v1499, %v1499
      %v1532 = vpack.c.b16 %v1500, %v1500
      %v1533 = vpack.c.b16 %v1501, %v1501
      %vm1566 = vcmask 125952
      %1567 = vst.msk [vmem:[%s380] sm:$0xf] %vm1566, %v1502
      %1568 = vst.msk [vmem:[%s380 + $0x4] sm:$0xf] %vm1566, %v1503
      %1569 = vst.msk [vmem:[%s380 + $0x8] sm:$0xf] %vm1566, %v1504
      %1570 = vst.msk [vmem:[%s380 + $0xc] sm:$0xf] %vm1566, %v1505
      %1571 = vst.msk [vmem:[%s380 + $0x10] sm:$0xf] %vm1566, %v1506
      %1572 = vst.msk [vmem:[%s380 + $0x14] sm:$0xf] %vm1566, %v1507
      %1573 = vst.msk [vmem:[%s380 + $0x18] sm:$0xf] %vm1566, %v1508
      %1574 = vst.msk [vmem:[%s380 + $0x1c] sm:$0xf] %vm1566, %v1509
      %1575 = vst.msk [vmem:[%s380 + $0x20] sm:$0xf] %vm1566, %v1510
      %1576 = vst.msk [vmem:[%s380 + $0x24] sm:$0xf] %vm1566, %v1511
      %1577 = vst.msk [vmem:[%s380 + $0x28] sm:$0xf] %vm1566, %v1512
      %1578 = vst.msk [vmem:[%s380 + $0x2c] sm:$0xf] %vm1566, %v1513
      %1579 = vst.msk [vmem:[%s380 + $0x30] sm:$0xf] %vm1566, %v1514
      %1580 = vst.msk [vmem:[%s380 + $0x34] sm:$0xf] %vm1566, %v1515
      %1581 = vst.msk [vmem:[%s380 + $0x38] sm:$0xf] %vm1566, %v1516
      %1582 = vst.msk [vmem:[%s380 + $0x3c] sm:$0xf] %vm1566, %v1517
      %1583 = vst.msk [vmem:[%s380 + $0x40] sm:$0xf] %vm1566, %v1518
      %1584 = vst.msk [vmem:[%s380 + $0x44] sm:$0xf] %vm1566, %v1519
      %1585 = vst.msk [vmem:[%s380 + $0x48] sm:$0xf] %vm1566, %v1520
      %1586 = vst.msk [vmem:[%s380 + $0x4c] sm:$0xf] %vm1566, %v1521
      %1587 = vst.msk [vmem:[%s380 + $0x50] sm:$0xf] %vm1566, %v1522
      %1588 = vst.msk [vmem:[%s380 + $0x54] sm:$0xf] %vm1566, %v1523
      %1589 = vst.msk [vmem:[%s380 + $0x58] sm:$0xf] %vm1566, %v1524
      %1590 = vst.msk [vmem:[%s380 + $0x5c] sm:$0xf] %vm1566, %v1525
      %1591 = vst.msk [vmem:[%s380 + $0x60] sm:$0xf] %vm1566, %v1526
      %1592 = vst.msk [vmem:[%s380 + $0x64] sm:$0xf] %vm1566, %v1527
      %1593 = vst.msk [vmem:[%s380 + $0x68] sm:$0xf] %vm1566, %v1528
      %1594 = vst.msk [vmem:[%s380 + $0x6c] sm:$0xf] %vm1566, %v1529
      %1595 = vst.msk [vmem:[%s380 + $0x70] sm:$0xf] %vm1566, %v1530
      %1596 = vst.msk [vmem:[%s380 + $0x74] sm:$0xf] %vm1566, %v1531
      %1597 = vst.msk [vmem:[%s380 + $0x78] sm:$0xf] %vm1566, %v1532
      %1598 = vst.msk [vmem:[%s380 + $0x7c] sm:$0xf] %vm1566, %v1533
      %s1599 = smul.u32 32, %s21
      %p1600 = scmp.lt.s32.totalorder %s20, 1
      %s1601 = scalar_select %p1600, %s20, 1
      %p1602 = scmp.lt.s32.totalorder %s1599, 31
      %s1603 = scalar_select %p1602, %s1599, 31
      %s1604 = smul.addr %s1601, 32
      %s1605 = sadd.s32 %s1603, %s1604
      %s1606 = smul.addr %s1605, 4
      %s1607 = scalar_lea.vmem %s5, %s1606
      // Predicated region
      $region41: #{rrdbnet_forward.22} parent=39 // pred_check
        %p1608 = pneg %p190
      $region42: #{rrdbnet_forward.22} parent=39 // pred_check_branch
        %1610 = sbr.rel (%p1608) target = $region44
      $region43: #{rrdbnet_forward.22} parent=39 // pred_region
        %s1611 = smul.u32 32, %s21
      $region44: #{rrdbnet_forward.22} parent=39 // pred_fallthru
        _
    $region40: #{rrdbnet_forward.22} parent=5 // pred_fallthru
      _
    %p1612 = scmp.le.s32.totalorder 2, %s11
    // Predicated region
    $region45: #{rrdbnet_forward.22} parent=5 // pred_check
      %p1613 = pneg %p1612
    $region46: #{rrdbnet_forward.22} parent=5 // pred_check_branch
      %1615 = sbr.rel (%p1613) target = $region48
    $region47: #{rrdbnet_forward.22} parent=5 // pred_region
      %s1616 = ssub.s32 %s11, 2
      // Predicated region
      $region49: #{rrdbnet_forward.22} parent=47 // pred_check
        %p1617 = pneg %p196
      $region50: #{rrdbnet_forward.22} parent=47 // pred_check_branch
        %1619 = sbr.rel (%p1617) target = $region52
      $region51: #{rrdbnet_forward.22} parent=47 // pred_region
        %s1620 = smul.u32 32, %s23
        %p1621 = scmp.lt.s32.totalorder %s22, 1
        %s1622 = scalar_select %p1621, %s22, 1
        %p1623 = scmp.lt.s32.totalorder %s1620, 31
        %s1624 = scalar_select %p1623, %s1620, 31
        %s1625 = smul.addr %s1622, 32
        %s1626 = sadd.s32 %s1624, %s1625
        %s1627 = smul.addr %s1626, 4
        %s1628 = scalar_lea.vmem %s5, %s1627
      $region52: #{rrdbnet_forward.22} parent=47 // pred_fallthru
        _
    $region48: #{rrdbnet_forward.22} parent=5 // pred_fallthru
      _
  $region6: #{rrdbnet_forward.22} parent=0 // loop_footer
    %s15 = sadd.s32 1, %s11
  $region7: #{rrdbnet_forward.22} parent=0 // loop_footer_branch
    %10 = sbr.rel target = $region3
  $region8: #{rrdbnet_forward.22} parent=0 // loop_exit
    _

// kernel: rrdbnet_forward.23
$region0: #{rrdbnet_forward.23}
  #allocation0 [shape = 'u32[]', space=smem, size = 0x4, offset = 0x4, fixed_abs, tag = 'smem constant byte address 0x4 - core index']
  #allocation1 [shape = 'u32[144,128]{1,0:T(1,128)}', space=vmem, size = 0x12000, scoped, tag = 'internal scratch']
  %s0 = inlined_call_operand.vmem [shape: f32[841,256], index: 0, kind: input, shape index: {}]
  %s1 = inlined_call_operand.vmem [shape: bf16[2,256,16], index: 1, kind: input, shape index: {}]
  %s2 = inlined_call_operand.vmem [shape: f32[2,841,16], index: 2, kind: output, shape index: {}]
  %s3 = sld [smem:[#allocation0]]
  $region41: #{rrdbnet_forward.23} parent=0
    _
  %s5 = ssub.s32 1, %s3
  %s6 = scalar_select 0, %s5, %s3
  loop: start=0, step=1, limit=4
  $region2: #{rrdbnet_forward.23} parent=0 // loop_pre_header
    _
  $region3: #{rrdbnet_forward.23} parent=0 // loop_header
    %s8 = sphi 0, %s12
    %p9 = scmp.ge.s32.totalorder %s8, 4
    %s16 = sphi 0, %s16
    %s18 = sphi 0, %s16
    %s19 = sphi 0, %s18
    %s33 = sphi 0, %s19
    %s39 = sphi 0, %s41
    %s42 = sphi 0, %s39
    %s43 = sphi 0, %s42
    %s59 = sphi 0, %s43
    %s65 = sphi 0, %s67
    %s68 = sphi 0, %s65
    %s69 = sphi 0, %s68
    %s85 = sphi 0, %s69
  $region4: #{rrdbnet_forward.23} parent=0 // loop_header_branch
    %11 = sbr.rel (%p9) target = $region8
  $region5: #{rrdbnet_forward.23} parent=0 // loop_body
    %s13 = ssub.s32 %s8, 1
    %s14 = ssub.s32 %s8, 2
    %s15 = sadd.s32 %s8, 1
    %s17 = sadd.s32 %s16, 1
    %p20 = scmp.eq.s32.totalorder %s8, 1
    %p21 = scmp.ne.s32.totalorder %s16, %s18
    %p22 = scmp.eq.s32.totalorder %s8, 0
    %p23 = por %p21, %p22
    %p24 = scmp.ne.s32.totalorder %s16, %s18
    %p25 = scmp.eq.s32.totalorder %s13, 1
    %p26 = por %p24, %p25
    %p27 = scmp.ne.s32.totalorder %s18, %s19
    %p28 = scmp.eq.s32.totalorder %s13, 0
    %p29 = por %p27, %p28
    %p30 = scmp.ne.s32.totalorder %s18, %s19
    %p31 = scmp.eq.s32.totalorder %s14, 1
    %p32 = por %p30, %p31
    %p34 = scmp.ne.s32.totalorder %s19, %s33
    %p35 = scmp.eq.s32.totalorder %s14, 0
    %p36 = por %p34, %p35
    %s37 = ssub.s32 %s8, %s15
    %p38 = scmp.eq.s32.totalorder %s37, 0
    %s40 = sadd.s32 %s39, 1
    %s41 = scalar_select %p38, %s39, %s40
    %p44 = pneg %p38
    %p45 = scmp.eq.s32.totalorder %s8, 1
    %p46 = por %p44, %p45
    %p47 = scmp.ne.s32.totalorder %s39, %s42
    %p48 = scmp.eq.s32.totalorder %s8, 0
    %p49 = por %p47, %p48
    %p50 = scmp.ne.s32.totalorder %s39, %s42
    %p51 = scmp.eq.s32.totalorder %s13, 1
    %p52 = por %p50, %p51
    %p53 = scmp.ne.s32.totalorder %s42, %s43
    %p54 = scmp.eq.s32.totalorder %s13, 0
    %p55 = por %p53, %p54
    %p56 = scmp.ne.s32.totalorder %s42, %s43
    %p57 = scmp.eq.s32.totalorder %s14, 1
    %p58 = por %p56, %p57
    %p60 = scmp.ne.s32.totalorder %s43, %s59
    %p61 = scmp.eq.s32.totalorder %s14, 0
    %p62 = por %p60, %p61
    %s63 = ssub.s32 %s8, %s15
    %p64 = scmp.eq.s32.totalorder %s63, 0
    %s66 = sadd.s32 %s65, 1
    %s67 = scalar_select %p64, %s65, %s66
    %p70 = pneg %p64
    %p71 = scmp.eq.s32.totalorder %s8, 1
    %p72 = por %p70, %p71
    %p73 = scmp.ne.s32.totalorder %s65, %s68
    %p74 = scmp.eq.s32.totalorder %s8, 0
    %p75 = por %p73, %p74
    %p76 = scmp.ne.s32.totalorder %s65, %s68
    %p77 = scmp.eq.s32.totalorder %s13, 1
    %p78 = por %p76, %p77
    %p79 = scmp.ne.s32.totalorder %s68, %s69
    %p80 = scmp.eq.s32.totalorder %s13, 0
    %p81 = por %p79, %p80
    %p82 = scmp.ne.s32.totalorder %s68, %s69
    %p83 = scmp.eq.s32.totalorder %s14, 1
    %p84 = por %p82, %p83
    %p86 = scmp.ne.s32.totalorder %s69, %s85
    %p87 = scmp.eq.s32.totalorder %s14, 0
    %p88 = por %p86, %p87
    %p89 = scmp.le.s32.totalorder 1, %s8
    %p90 = scmp.lt.s32.totalorder %s8, 3
    %p91 = pnand %p89, %p90
    %p92 = pneg %p91
    // Predicated region
    $region9: #{rrdbnet_forward.23} parent=5 // pred_check
      _
    $region10: #{rrdbnet_forward.23} parent=5 // pred_check_branch
      %94 = sbr.rel (%p91) target = $region12
    $region11: #{rrdbnet_forward.23} parent=5 // pred_region
      %s95 = ssub.s32 %s8, 1
      // Predicated region
      $region13: #{rrdbnet_forward.23} parent=11 // pred_check
        %p96 = pneg %p29
      $region14: #{rrdbnet_forward.23} parent=11 // pred_check_branch
        %98 = sbr.rel (%p96) target = $region16
      $region15: #{rrdbnet_forward.23} parent=11 // pred_region
        _
      $region16: #{rrdbnet_forward.23} parent=11 // pred_fallthru
        _
    $region12: #{rrdbnet_forward.23} parent=5 // pred_fallthru
      _
    %p99 = scmp.lt.s32.totalorder %s8, 2
    // Predicated region
    $region17: #{rrdbnet_forward.23} parent=5 // pred_check
      %p100 = pneg %p99
    $region18: #{rrdbnet_forward.23} parent=5 // pred_check_branch
      %102 = sbr.rel (%p100) target = $region20
    $region19: #{rrdbnet_forward.23} parent=5 // pred_region
      // Predicated region
      $region21: #{rrdbnet_forward.23} parent=19 // pred_check
        %p103 = pneg %p49
      $region22: #{rrdbnet_forward.23} parent=19 // pred_check_branch
        %105 = sbr.rel (%p103) target = $region24
      $region23: #{rrdbnet_forward.23} parent=19 // pred_region
        %p106 = scmp.lt.s32.totalorder %s8, 1
        %s107 = scalar_select %p106, %s8, 1
        %s108 = smul.addr %s107, 32
        %s109 = smul.addr %s108, 4
        %s110 = scalar_lea.vmem %s1, %s109
      $region24: #{rrdbnet_forward.23} parent=19 // pred_fallthru
        _
    $region20: #{rrdbnet_forward.23} parent=5 // pred_fallthru
      _
    %p111 = scmp.le.s32.totalorder 1, %s8
    %p112 = scmp.lt.s32.totalorder %s8, 3
    %p113 = pnand %p111, %p112
    %p114 = pneg %p113
    // Predicated region
    $region25: #{rrdbnet_forward.23} parent=5 // pred_check
      _
    $region26: #{rrdbnet_forward.23} parent=5 // pred_check_branch
      %116 = sbr.rel (%p113) target = $region28
    $region27: #{rrdbnet_forward.23} parent=5 // pred_region
      %s117 = ssub.s32 %s8, 1
      %p118 = pneg %p29
      %p119 = pneg %p26
      %p120 = scmp.lt.s32.totalorder %s13, 1
      %s121 = scalar_select %p120, %s13, 1
      %s122 = smul.addr %s121, 32
      %s123 = smul.addr %s122, 4
      %s124 = scalar_lea.vmem %s1, %s123
      %p125 = pneg %p55
      %p126 = pneg %p52
      %p127 = pneg %p81
      %p128 = pneg %p78
      %p129 = scmp.lt.s32.totalorder %s13, 1
      %s130 = scalar_select %p129, %s13, 1
      %s131 = smul.addr %s130, 106
      %s132 = smul.addr %s131, 8
      %s133 = scalar_lea.vmem %s2, %s132
      %p134 = scmp.lt.s32.totalorder %s13, 1
      %s135 = scalar_select %p134, %s13, 1
      %s136 = smul.addr %s135, 32
      %s137 = smul.addr %s136, 4
      %s138 = scalar_lea.vmem %s1, %s137
      %p139 = scmp.lt.s32.totalorder %s13, 1
      %s140 = scalar_select %p139, %s13, 1
      %s141 = smul.addr %s140, 106
      %s142 = smul.addr %s141, 8
      %s143 = scalar_lea.vmem %s2, %s142
      %v144 = vld [vmem:[%s138] sm:$0xf]
      %v145 = vld [vmem:[%s138 + $0x4] sm:$0xf]
      %v146 = vld [vmem:[%s138 + $0x8] sm:$0xf]
      %v147 = vld [vmem:[%s138 + $0xc] sm:$0xf]
      %v148 = vld [vmem:[%s138 + $0x10] sm:$0xf]
      %v149 = vld [vmem:[%s138 + $0x14] sm:$0xf]
      %v150 = vld [vmem:[%s138 + $0x18] sm:$0xf]
      %v151 = vld [vmem:[%s138 + $0x1c] sm:$0xf]
      %v152 = vld [vmem:[%s138 + $0x20] sm:$0xf]
      %v153 = vld [vmem:[%s138 + $0x24] sm:$0xf]
      %v154 = vld [vmem:[%s138 + $0x28] sm:$0xf]
      %v155 = vld [vmem:[%s138 + $0x2c] sm:$0xf]
      %v156 = vld [vmem:[%s138 + $0x30] sm:$0xf]
      %v157 = vld [vmem:[%s138 + $0x34] sm:$0xf]
      %v158 = vld [vmem:[%s138 + $0x38] sm:$0xf]
      %v159 = vld [vmem:[%s138 + $0x3c] sm:$0xf]
      %v160 = vld [vmem:[%s138 + $0x40] sm:$0xf]
      %v161 = vld [vmem:[%s138 + $0x44] sm:$0xf]
      %v162 = vld [vmem:[%s138 + $0x48] sm:$0xf]
      %v163 = vld [vmem:[%s138 + $0x4c] sm:$0xf]
      %v164 = vld [vmem:[%s138 + $0x50] sm:$0xf]
      %v165 = vld [vmem:[%s138 + $0x54] sm:$0xf]
      %v166 = vld [vmem:[%s138 + $0x58] sm:$0xf]
      %v167 = vld [vmem:[%s138 + $0x5c] sm:$0xf]
      %v168 = vld [vmem:[%s138 + $0x60] sm:$0xf]
      %v169 = vld [vmem:[%s138 + $0x64] sm:$0xf]
      %v170 = vld [vmem:[%s138 + $0x68] sm:$0xf]
      %v171 = vld [vmem:[%s138 + $0x6c] sm:$0xf]
      %v172 = vld [vmem:[%s138 + $0x70] sm:$0xf]
      %v173 = vld [vmem:[%s138 + $0x74] sm:$0xf]
      %v174 = vld [vmem:[%s138 + $0x78] sm:$0xf]
      %v175 = vld [vmem:[%s138 + $0x7c] sm:$0xf]
      %v176 = vunpack.c.l.bf16 %v144
      %v177 = vunpack.c.l.bf16 %v145
      %v178 = vunpack.c.l.bf16 %v146
      %v179 = vunpack.c.l.bf16 %v147
      %v180 = vunpack.c.l.bf16 %v148
      %v181 = vunpack.c.l.bf16 %v149
      %v182 = vunpack.c.l.bf16 %v150
      %v183 = vunpack.c.l.bf16 %v151
      %v184 = vunpack.c.l.bf16 %v152
      %v185 = vunpack.c.l.bf16 %v153
      %v186 = vunpack.c.l.bf16 %v154
      %v187 = vunpack.c.l.bf16 %v155
      %v188 = vunpack.c.l.bf16 %v156
      %v189 = vunpack.c.l.bf16 %v157
      %v190 = vunpack.c.l.bf16 %v158
      %v191 = vunpack.c.l.bf16 %v159
      %v192 = vunpack.c.l.bf16 %v160
      %v193 = vunpack.c.l.bf16 %v161
      %v194 = vunpack.c.l.bf16 %v162
      %v195 = vunpack.c.l.bf16 %v163
      %v196 = vunpack.c.l.bf16 %v164
      %v197 = vunpack.c.l.bf16 %v165
      %v198 = vunpack.c.l.bf16 %v166
      %v199 = vunpack.c.l.bf16 %v167
      %v200 = vunpack.c.l.bf16 %v168
      %v201 = vunpack.c.l.bf16 %v169
      %v202 = vunpack.c.l.bf16 %v170
      %v203 = vunpack.c.l.bf16 %v171
      %v204 = vunpack.c.l.bf16 %v172
      %v205 = vunpack.c.l.bf16 %v173
      %v206 = vunpack.c.l.bf16 %v174
      %v207 = vunpack.c.l.bf16 %v175
      %v208 = vld [vmem:[%s0] sm:$0xff]
      %v209 = vld [vmem:[%s0 + $0x8] sm:$0xff]
      %v210 = vld [vmem:[%s0 + $0x10] sm:$0xff]
      %v211 = vld [vmem:[%s0 + $0x18] sm:$0xff]
      %v212 = vld [vmem:[%s0 + $0x20] sm:$0xff]
      %v213 = vld [vmem:[%s0 + $0x28] sm:$0xff]
      %v214 = vld [vmem:[%s0 + $0x30] sm:$0xff]
      %v215 = vld [vmem:[%s0 + $0x38] sm:$0xff]
      %v216 = vld [vmem:[%s0 + $0x40] sm:$0xff]
      %v217 = vld [vmem:[%s0 + $0x48] sm:$0xff]
      %v218 = vld [vmem:[%s0 + $0x50] sm:$0xff]
      %v219 = vld [vmem:[%s0 + $0x58] sm:$0xff]
      %v220 = vld [vmem:[%s0 + $0x60] sm:$0xff]
      %v221 = vld [vmem:[%s0 + $0x68] sm:$0xff]
      %v222 = vld [vmem:[%s0 + $0x70] sm:$0xff]
      %v223 = vld [vmem:[%s0 + $0x78] sm:$0xff]
      %v224 = vld [vmem:[%s0 + $0x80] sm:$0xff]
      %v225 = vld [vmem:[%s0 + $0x88] sm:$0xff]
      %v226 = vld [vmem:[%s0 + $0x90] sm:$0xff]
      %v227 = vld [vmem:[%s0 + $0x98] sm:$0xff]
      %v228 = vld [vmem:[%s0 + $0xa0] sm:$0xff]
      %v229 = vld [vmem:[%s0 + $0xa8] sm:$0xff]
      %v230 = vld [vmem:[%s0 + $0xb0] sm:$0xff]
      %v231 = vld [vmem:[%s0 + $0xb8] sm:$0xff]
      %v232 = vld [vmem:[%s0 + $0xc0] sm:$0xff]
      %v233 = vld [vmem:[%s0 + $0xc8] sm:$0xff]
      %v234 = vld [vmem:[%s0 + $0xd0] sm:$0xff]
      %v235 = vld [vmem:[%s0 + $0xd8] sm:$0xff]
      %v236 = vld [vmem:[%s0 + $0xe0] sm:$0xff]
      %v237 = vld [vmem:[%s0 + $0xe8] sm:$0xff]
      %v238 = vld [vmem:[%s0 + $0xf0] sm:$0xff]
      %v239 = vld [vmem:[%s0 + $0xf8] sm:$0xff]
      %v240 = vld [vmem:[%s0 + $0x100] sm:$0xff]
      %v241 = vld [vmem:[%s0 + $0x108] sm:$0xff]
      %v242 = vld [vmem:[%s0 + $0x110] sm:$0xff]
      %v243 = vld [vmem:[%s0 + $0x118] sm:$0xff]
      %v244 = vld [vmem:[%s0 + $0x120] sm:$0xff]
      %v245 = vld [vmem:[%s0 + $0x128] sm:$0xff]
      %v246 = vld [vmem:[%s0 + $0x130] sm:$0xff]
      %v247 = vld [vmem:[%s0 + $0x138] sm:$0xff]
      %v248 = vld [vmem:[%s0 + $0x140] sm:$0xff]
      %v249 = vld [vmem:[%s0 + $0x148] sm:$0xff]
      %v250 = vld [vmem:[%s0 + $0x150] sm:$0xff]
      %v251 = vld [vmem:[%s0 + $0x158] sm:$0xff]
      %v252 = vld [vmem:[%s0 + $0x160] sm:$0xff]
      %v253 = vld [vmem:[%s0 + $0x168] sm:$0xff]
      %v254 = vld [vmem:[%s0 + $0x170] sm:$0xff]
      %v255 = vld [vmem:[%s0 + $0x178] sm:$0xff]
      %v256 = vld [vmem:[%s0 + $0x180] sm:$0xff]
      %v257 = vld [vmem:[%s0 + $0x188] sm:$0xff]
      %v258 = vld [vmem:[%s0 + $0x190] sm:$0xff]
      %v259 = vld [vmem:[%s0 + $0x198] sm:$0xff]
      %v260 = vld [vmem:[%s0 + $0x1a0] sm:$0xff]
      %v261 = vld [vmem:[%s0 + $0x1a8] sm:$0xff]
      %v262 = vld [vmem:[%s0 + $0x1b0] sm:$0xff]
      %v263 = vld [vmem:[%s0 + $0x1b8] sm:$0xff]
      %v264 = vld [vmem:[%s0 + $0x1c0] sm:$0xff]
      %v265 = vld [vmem:[%s0 + $0x1c8] sm:$0xff]
      %v266 = vld [vmem:[%s0 + $0x1d0] sm:$0xff]
      %v267 = vld [vmem:[%s0 + $0x1d8] sm:$0xff]
      %v268 = vld [vmem:[%s0 + $0x1e0] sm:$0xff]
      %v269 = vld [vmem:[%s0 + $0x1e8] sm:$0xff]
      %v270 = vld [vmem:[%s0 + $0x1f0] sm:$0xff]
      %v271 = vld [vmem:[%s0 + $0x1f8] sm:$0xff]
      %v272 = vld [vmem:[%s0 + $0x200] sm:$0xff]
      %v273 = vld [vmem:[%s0 + $0x208] sm:$0xff]
      %v274 = vld [vmem:[%s0 + $0x210] sm:$0xff]
      %v275 = vld [vmem:[%s0 + $0x218] sm:$0xff]
      %v276 = vld [vmem:[%s0 + $0x220] sm:$0xff]
      %v277 = vld [vmem:[%s0 + $0x228] sm:$0xff]
      %v278 = vld [vmem:[%s0 + $0x230] sm:$0xff]
      %v279 = vld [vmem:[%s0 + $0x238] sm:$0xff]
      %v280 = vld [vmem:[%s0 + $0x240] sm:$0xff]
      %v281 = vld [vmem:[%s0 + $0x248] sm:$0xff]
      %v282 = vld [vmem:[%s0 + $0x250] sm:$0xff]
      %v283 = vld [vmem:[%s0 + $0x258] sm:$0xff]
      %v284 = vld [vmem:[%s0 + $0x260] sm:$0xff]
      %v285 = vld [vmem:[%s0 + $0x268] sm:$0xff]
      %v286 = vld [vmem:[%s0 + $0x270] sm:$0xff]
      %v287 = vld [vmem:[%s0 + $0x278] sm:$0xff]
      %v288 = vld [vmem:[%s0 + $0x280] sm:$0xff]
      %v289 = vld [vmem:[%s0 + $0x288] sm:$0xff]
      %v290 = vld [vmem:[%s0 + $0x290] sm:$0xff]
      %v291 = vld [vmem:[%s0 + $0x298] sm:$0xff]
      %v292 = vld [vmem:[%s0 + $0x2a0] sm:$0xff]
      %v293 = vld [vmem:[%s0 + $0x2a8] sm:$0xff]
      %v294 = vld [vmem:[%s0 + $0x2b0] sm:$0xff]
      %v295 = vld [vmem:[%s0 + $0x2b8] sm:$0xff]
      %v296 = vld [vmem:[%s0 + $0x2c0] sm:$0xff]
      %v297 = vld [vmem:[%s0 + $0x2c8] sm:$0xff]
      %v298 = vld [vmem:[%s0 + $0x2d0] sm:$0xff]
      %v299 = vld [vmem:[%s0 + $0x2d8] sm:$0xff]
      %v300 = vld [vmem:[%s0 + $0x2e0] sm:$0xff]
      %v301 = vld [vmem:[%s0 + $0x2e8] sm:$0xff]
      %v302 = vld [vmem:[%s0 + $0x2f0] sm:$0xff]
      %v303 = vld [vmem:[%s0 + $0x2f8] sm:$0xff]
      %v304 = vld [vmem:[%s0 + $0x300] sm:$0xff]
      %v305 = vld [vmem:[%s0 + $0x308] sm:$0xff]
      %v306 = vld [vmem:[%s0 + $0x310] sm:$0xff]
      %v307 = vld [vmem:[%s0 + $0x318] sm:$0xff]
      %v308 = vld [vmem:[%s0 + $0x320] sm:$0xff]
      %v309 = vld [vmem:[%s0 + $0x328] sm:$0xff]
      %v310 = vld [vmem:[%s0 + $0x330] sm:$0xff]
      %v311 = vld [vmem:[%s0 + $0x338] sm:$0xff]
      %v312 = vld [vmem:[%s0 + $0x340] sm:$0xff]
      %v313 = vld [vmem:[%s0 + $0x348] sm:$0xff]
      %v314 = vld [vmem:[%s0 + $0x350] sm:$0xff]
      %v315 = vld [vmem:[%s0 + $0x358] sm:$0xff]
      %v316 = vld [vmem:[%s0 + $0x360] sm:$0xff]
      %v317 = vld [vmem:[%s0 + $0x368] sm:$0xff]
      %v318 = vld [vmem:[%s0 + $0x370] sm:$0xff]
      %v319 = vld [vmem:[%s0 + $0x378] sm:$0xff]
      %v320 = vld [vmem:[%s0 + $0x380] sm:$0xff]
      %v321 = vld [vmem:[%s0 + $0x388] sm:$0xff]
      %v322 = vld [vmem:[%s0 + $0x390] sm:$0xff]
      %v323 = vld [vmem:[%s0 + $0x398] sm:$0xff]
      %v324 = vld [vmem:[%s0 + $0x3a0] sm:$0xff]
      %v325 = vld [vmem:[%s0 + $0x3a8] sm:$0xff]
      %v326 = vld [vmem:[%s0 + $0x3b0] sm:$0xff]
      %v327 = vld [vmem:[%s0 + $0x3b8] sm:$0xff]
      %v328 = vld [vmem:[%s0 + $0x3c0] sm:$0xff]
      %v329 = vld [vmem:[%s0 + $0x3c8] sm:$0xff]
      %v330 = vld [vmem:[%s0 + $0x3d0] sm:$0xff]
      %v331 = vld [vmem:[%s0 + $0x3d8] sm:$0xff]
      %v332 = vld [vmem:[%s0 + $0x3e0] sm:$0xff]
      %v333 = vld [vmem:[%s0 + $0x3e8] sm:$0xff]
      %v334 = vld [vmem:[%s0 + $0x3f0] sm:$0xff]
      %v335 = vld [vmem:[%s0 + $0x3f8] sm:$0xff]
      %v336 = vld [vmem:[%s0 + $0x400] sm:$0xff]
      %v337 = vld [vmem:[%s0 + $0x408] sm:$0xff]
      %v338 = vld [vmem:[%s0 + $0x410] sm:$0xff]
      %v339 = vld [vmem:[%s0 + $0x418] sm:$0xff]
      %v340 = vld [vmem:[%s0 + $0x420] sm:$0xff]
      %v341 = vld [vmem:[%s0 + $0x428] sm:$0xff]
      %v342 = vld [vmem:[%s0 + $0x430] sm:$0xff]
      %v343 = vld [vmem:[%s0 + $0x438] sm:$0xff]
      %v344 = vld [vmem:[%s0 + $0x440] sm:$0xff]
      %v345 = vld [vmem:[%s0 + $0x448] sm:$0xff]
      %v346 = vld [vmem:[%s0 + $0x450] sm:$0xff]
      %v347 = vld [vmem:[%s0 + $0x458] sm:$0xff]
      %v348 = vld [vmem:[%s0 + $0x460] sm:$0xff]
      %v349 = vld [vmem:[%s0 + $0x468] sm:$0xff]
      %v350 = vld [vmem:[%s0 + $0x470] sm:$0xff]
      %v351 = vld [vmem:[%s0 + $0x478] sm:$0xff]
      %v352 = vld [vmem:[%s0 + $0x480] sm:$0xff]
      %v353 = vld [vmem:[%s0 + $0x488] sm:$0xff]
      %v354 = vld [vmem:[%s0 + $0x490] sm:$0xff]
      %v355 = vld [vmem:[%s0 + $0x498] sm:$0xff]
      %v356 = vld [vmem:[%s0 + $0x4a0] sm:$0xff]
      %v357 = vld [vmem:[%s0 + $0x4a8] sm:$0xff]
      %v358 = vld [vmem:[%s0 + $0x4b0] sm:$0xff]
      %v359 = vld [vmem:[%s0 + $0x4b8] sm:$0xff]
      %v360 = vld [vmem:[%s0 + $0x4c0] sm:$0xff]
      %v361 = vld [vmem:[%s0 + $0x4c8] sm:$0xff]
      %v362 = vld [vmem:[%s0 + $0x4d0] sm:$0xff]
      %v363 = vld [vmem:[%s0 + $0x4d8] sm:$0xff]
      %v364 = vld [vmem:[%s0 + $0x4e0] sm:$0xff]
      %v365 = vld [vmem:[%s0 + $0x4e8] sm:$0xff]
      %v366 = vld [vmem:[%s0 + $0x4f0] sm:$0xff]
      %v367 = vld [vmem:[%s0 + $0x4f8] sm:$0xff]
      %v368 = vld [vmem:[%s0 + $0x500] sm:$0xff]
      %v369 = vld [vmem:[%s0 + $0x508] sm:$0xff]
      %v370 = vld [vmem:[%s0 + $0x510] sm:$0xff]
      %v371 = vld [vmem:[%s0 + $0x518] sm:$0xff]
      %v372 = vld [vmem:[%s0 + $0x520] sm:$0xff]
      %v373 = vld [vmem:[%s0 + $0x528] sm:$0xff]
      %v374 = vld [vmem:[%s0 + $0x530] sm:$0xff]
      %v375 = vld [vmem:[%s0 + $0x538] sm:$0xff]
      %v376 = vld [vmem:[%s0 + $0x540] sm:$0xff]
      %v377 = vld [vmem:[%s0 + $0x548] sm:$0xff]
      %v378 = vld [vmem:[%s0 + $0x550] sm:$0xff]
      %v379 = vld [vmem:[%s0 + $0x558] sm:$0xff]
      %v380 = vld [vmem:[%s0 + $0x560] sm:$0xff]
      %v381 = vld [vmem:[%s0 + $0x568] sm:$0xff]
      %v382 = vld [vmem:[%s0 + $0x570] sm:$0xff]
      %v383 = vld [vmem:[%s0 + $0x578] sm:$0xff]
      %v384 = vld [vmem:[%s0 + $0x580] sm:$0xff]
      %v385 = vld [vmem:[%s0 + $0x588] sm:$0xff]
      %v386 = vld [vmem:[%s0 + $0x590] sm:$0xff]
      %v387 = vld [vmem:[%s0 + $0x598] sm:$0xff]
      %v388 = vld [vmem:[%s0 + $0x5a0] sm:$0xff]
      %v389 = vld [vmem:[%s0 + $0x5a8] sm:$0xff]
      %v390 = vld [vmem:[%s0 + $0x5b0] sm:$0xff]
      %v391 = vld [vmem:[%s0 + $0x5b8] sm:$0xff]
      %v392 = vld [vmem:[%s0 + $0x5c0] sm:$0xff]
      %v393 = vld [vmem:[%s0 + $0x5c8] sm:$0xff]
      %v394 = vld [vmem:[%s0 + $0x5d0] sm:$0xff]
      %v395 = vld [vmem:[%s0 + $0x5d8] sm:$0xff]
      %v396 = vld [vmem:[%s0 + $0x5e0] sm:$0xff]
      %v397 = vld [vmem:[%s0 + $0x5e8] sm:$0xff]
      %v398 = vld [vmem:[%s0 + $0x5f0] sm:$0xff]
      %v399 = vld [vmem:[%s0 + $0x5f8] sm:$0xff]
      %v400 = vld [vmem:[%s0 + $0x600] sm:$0xff]
      %v401 = vld [vmem:[%s0 + $0x608] sm:$0xff]
      %v402 = vld [vmem:[%s0 + $0x610] sm:$0xff]
      %v403 = vld [vmem:[%s0 + $0x618] sm:$0xff]
      %v404 = vld [vmem:[%s0 + $0x620] sm:$0xff]
      %v405 = vld [vmem:[%s0 + $0x628] sm:$0xff]
      %v406 = vld [vmem:[%s0 + $0x630] sm:$0xff]
      %v407 = vld [vmem:[%s0 + $0x638] sm:$0xff]
      %v408 = vld [vmem:[%s0 + $0x640] sm:$0xff]
      %v409 = vld [vmem:[%s0 + $0x648] sm:$0xff]
      %v410 = vld [vmem:[%s0 + $0x650] sm:$0xff]
      %v411 = vld [vmem:[%s0 + $0x658] sm:$0xff]
      %v412 = vld [vmem:[%s0 + $0x660] sm:$0xff]
      %v413 = vld [vmem:[%s0 + $0x668] sm:$0xff]
      %v414 = vld [vmem:[%s0 + $0x670] sm:$0xff]
      %v415 = vld [vmem:[%s0 + $0x678] sm:$0xff]
      %v416 = vld [vmem:[%s0 + $0x680] sm:$0xff]
      %v417 = vld [vmem:[%s0 + $0x688] sm:$0xff]
      %v418 = vld [vmem:[%s0 + $0x690] sm:$0x1]
      %v419 = vld [vmem:[%s0 + $0x698] sm:$0x1]
      %420 = vmatprep.subr.mxu0 0.0
      %421 = vmatpush1.msra.mxu0 %v176
      %422 = vmatprep.subr.mxu0 0.0
      %423 = vmatpush1.msra.mxu0 %v177
      %424 = vmatprep.subr.mxu0 0.0
      %425 = vmatpush1.msra.mxu0 %v178
      %426 = vmatprep.subr.mxu0 0.0
      %427 = vmatpush1.msra.mxu0 %v179
      %428 = vmatprep.subr.mxu0 0.0
      %429 = vmatpush1.msra.mxu0 %v180
      %430 = vmatprep.subr.mxu0 0.0
      %431 = vmatpush1.msra.mxu0 %v181
      %432 = vmatprep.subr.mxu0 0.0
      %433 = vmatpush1.msra.mxu0 %v182
      %434 = vmatprep.subr.mxu0 0.0
      %435 = vmatpush1.msra.mxu0 %v183
      %436 = vmatprep.subr.mxu0 0.0
      %437 = vmatpush1.msra.mxu0 %v184
      %438 = vmatprep.subr.mxu0 0.0
      %439 = vmatpush1.msra.mxu0 %v185
      %440 = vmatprep.subr.mxu0 0.0
      %441 = vmatpush1.msra.mxu0 %v186
      %442 = vmatprep.subr.mxu0 0.0
      %443 = vmatpush1.msra.mxu0 %v187
      %444 = vmatprep.subr.mxu0 0.0
      %445 = vmatpush1.msra.mxu0 %v188
      %446 = vmatprep.subr.mxu0 0.0
      %447 = vmatpush1.msra.mxu0 %v189
      %448 = vmatprep.subr.mxu0 0.0
      %449 = vmatpush1.msra.mxu0 %v190
      %450 = vmatprep.subr.mxu0 0.0
      %451 = vmatpush1.msra.mxu0 %v191
      %452 = vmatprep.subr.mxu0 0.0
      %453 = vmatpush1.msra.mxu0 %v192
      %454 = vmatprep.subr.mxu0 0.0
      %455 = vmatpush1.msra.mxu0 %v193
      %456 = vmatprep.subr.mxu0 0.0
      %457 = vmatpush1.msra.mxu0 %v194
      %458 = vmatprep.subr.mxu0 0.0
      %459 = vmatpush1.msra.mxu0 %v195
      %460 = vmatprep.subr.mxu0 0.0
      %461 = vmatpush1.msra.mxu0 %v196
      %462 = vmatprep.subr.mxu0 0.0
      %463 = vmatpush1.msra.mxu0 %v197
      %464 = vmatprep.subr.mxu0 0.0
      %465 = vmatpush1.msra.mxu0 %v198
      %466 = vmatprep.subr.mxu0 0.0
      %467 = vmatpush1.msra.mxu0 %v199
      %468 = vmatprep.subr.mxu0 0.0
      %469 = vmatpush1.msra.mxu0 %v200
      %470 = vmatprep.subr.mxu0 0.0
      %471 = vmatpush1.msra.mxu0 %v201
      %472 = vmatprep.subr.mxu0 0.0
      %473 = vmatpush1.msra.mxu0 %v202
      %474 = vmatprep.subr.mxu0 0.0
      %475 = vmatpush1.msra.mxu0 %v203
      %476 = vmatprep.subr.mxu0 0.0
      %477 = vmatpush1.msra.mxu0 %v204
      %478 = vmatprep.subr.mxu0 0.0
      %479 = vmatpush1.msra.mxu0 %v205
      %480 = vmatprep.subr.mxu0 0.0
      %481 = vmatpush1.msra.mxu0 %v206
      %482 = vmatprep.subr.mxu0 0.0
      %483 = vmatpush1.msra.mxu0 %v207
      %484 = vmatprep.mubr.f32.mxu0 %v209
      %485 = vmatmul.mubr.f32.gmra.mrb[0].mxu0 %v208
      %v486 = vpop.f32.mrb[0].mxu0
      %v487 = vadd.f32 0.0, %v486
      %v488 = vpop.f32.mrb[0].mxu0
      %489 = vmatprep.mubr.f32.mxu0 %v211
      %490 = vmatmul.mubr.f32.gmra.mrb[0].mxu0 %v210
      %v491 = vpop.f32.mrb[0].mxu0
      %v492 = vadd.f32 0.0, %v491
      %v493 = vpop.f32.mrb[0].mxu0
      %494 = vmatprep.mubr.f32.mxu0 %v213
      %495 = vmatmul.mubr.f32.gmra.mrb[0].mxu0 %v212
      %v496 = vpop.f32.mrb[0].mxu0
      %v497 = vadd.f32 0.0, %v496
      %v498 = vpop.f32.mrb[0].mxu0
      %499 = vmatprep.mubr.f32.mxu0 %v215
      %500 = vmatmul.mubr.f32.gmra.mrb[0].mxu0 %v214
      %v501 = vpop.f32.mrb[0].mxu0
      %v502 = vadd.f32 0.0, %v501
      %v503 = vpop.f32.mrb[0].mxu0
      %504 = vmatprep.mubr.f32.mxu0 %v217
      %505 = vmatmul.mubr.f32.gmra.mrb[0].mxu0 %v216
      %v506 = vpop.f32.mrb[0].mxu0
      %v507 = vadd.f32 0.0, %v506
      %v508 = vpop.f32.mrb[0].mxu0
      %509 = vmatprep.mubr.f32.mxu0 %v219
      %510 = vmatmul.mubr.f32.gmra.mrb[0].mxu0 %v218
      %v511 = vpop.f32.mrb[0].mxu0
      %v512 = vadd.f32 0.0, %v511
      %v513 = vpop.f32.mrb[0].mxu0
      %514 = vmatprep.mubr.f32.mxu0 %v221
      %515 = vmatmul.mubr.f32.gmra.mrb[0].mxu0 %v220
      %v516 = vpop.f32.mrb[0].mxu0
      %v517 = vadd.f32 0.0, %v516
      %v518 = vpop.f32.mrb[0].mxu0
      %519 = vmatprep.mubr.f32.mxu0 %v223
      %520 = vmatmul.mubr.f32.gmra.mrb[0].mxu0 %v222
      %v521 = vpop.f32.mrb[0].mxu0
      %v522 = vadd.f32 0.0, %v521
      %v523 = vpop.f32.mrb[0].mxu0
      %524 = vmatprep.mubr.f32.mxu0 %v225
      %525 = vmatmul.mubr.f32.gmra.mrb[0].mxu0 %v224
      %v526 = vpop.f32.mrb[0].mxu0
      %v527 = vadd.f32 0.0, %v526
      %v528 = vpop.f32.mrb[0].mxu0
      %529 = vmatprep.mubr.f32.mxu0 %v227
      %530 = vmatmul.mubr.f32.gmra.mrb[0].mxu0 %v226
      %v531 = vpop.f32.mrb[0].mxu0
      %v532 = vadd.f32 0.0, %v531
      %v533 = vpop.f32.mrb[0].mxu0
      %534 = vmatprep.mubr.f32.mxu0 %v229
      %535 = vmatmul.mubr.f32.gmra.mrb[0].mxu0 %v228
      %v536 = vpop.f32.mrb[0].mxu0
      %v537 = vadd.f32 0.0, %v536
      %v538 = vpop.f32.mrb[0].mxu0
      %539 = vmatprep.mubr.f32.mxu0 %v231
      %540 = vmatmul.mubr.f32.gmra.mrb[0].mxu0 %v230
      %v541 = vpop.f32.mrb[0].mxu0
      %v542 = vadd.f32 0.0, %v541
      %v543 = vpop.f32.mrb[0].mxu0
      %544 = vmatprep.mubr.f32.mxu0 %v233
      %545 = vmatmul.mubr.f32.gmra.mrb[0].mxu0 %v232
      %v546 = vpop.f32.mrb[0].mxu0
      %v547 = vadd.f32 0.0, %v546
      %v548 = vpop.f32.mrb[0].mxu0
      %549 = vmatprep.mubr.f32.mxu0 %v235
      %550 = vmatmul.mubr.f32.gmra.mrb[0].mxu0 %v234
      %v551 = vpop.f32.mrb[0].mxu0
      %v552 = vadd.f32 0.0, %v551
      %v553 = vpop.f32.mrb[0].mxu0
      %554 = vmatprep.mubr.f32.mxu0 %v237
      %555 = vmatmul.mubr.f32.gmra.mrb[0].mxu0 %v236
      %v556 = vpop.f32.mrb[0].mxu0
      %v557 = vadd.f32 0.0, %v556
      %v558 = vpop.f32.mrb[0].mxu0
      %559 = vmatprep.mubr.f32.mxu0 %v239
      %560 = vmatmul.mubr.f32.gmra.mrb[0].mxu0 %v238
      %v561 = vpop.f32.mrb[0].mxu0
      %v562 = vadd.f32 0.0, %v561
      %v563 = vpop.f32.mrb[0].mxu0
      %564 = vmatprep.mubr.f32.mxu0 %v241
      %565 = vmatmul.mubr.f32.gmra.mrb[0].mxu0 %v240
      %v566 = vpop.f32.mrb[0].mxu0
      %v567 = vadd.f32 0.0, %v566
      %v568 = vpop.f32.mrb[0].mxu0
      %569 = vmatprep.mubr.f32.mxu0 %v243
      %570 = vmatmul.mubr.f32.gmra.mrb[0].mxu0 %v242
      %v571 = vpop.f32.mrb[0].mxu0
      %v572 = vadd.f32 0.0, %v571
      %v573 = vpop.f32.mrb[0].mxu0
      %574 = vmatprep.mubr.f32.mxu0 %v245
      %575 = vmatmul.mubr.f32.gmra.mrb[0].mxu0 %v244
      %v576 = vpop.f32.mrb[0].mxu0
      %v577 = vadd.f32 0.0, %v576
      %v578 = vpop.f32.mrb[0].mxu0
      %579 = vmatprep.mubr.f32.mxu0 %v247
      %580 = vmatmul.mubr.f32.gmra.mrb[0].mxu0 %v246
      %v581 = vpop.f32.mrb[0].mxu0
      %v582 = vadd.f32 0.0, %v581
      %v583 = vpop.f32.mrb[0].mxu0
      %584 = vmatprep.mubr.f32.mxu0 %v249
      %585 = vmatmul.mubr.f32.gmra.mrb[0].mxu0 %v248
      %v586 = vpop.f32.mrb[0].mxu0
      %v587 = vadd.f32 0.0, %v586
      %v588 = vpop.f32.mrb[0].mxu0
      %589 = vmatprep.mubr.f32.mxu0 %v251
      %590 = vmatmul.mubr.f32.gmra.mrb[0].mxu0 %v250
      %v591 = vpop.f32.mrb[0].mxu0
      %v592 = vadd.f32 0.0, %v591
      %v593 = vpop.f32.mrb[0].mxu0
      %594 = vmatprep.mubr.f32.mxu0 %v253
      %595 = vmatmul.mubr.f32.gmra.mrb[0].mxu0 %v252
      %v596 = vpop.f32.mrb[0].mxu0
      %v597 = vadd.f32 0.0, %v596
      %v598 = vpop.f32.mrb[0].mxu0
      %599 = vmatprep.mubr.f32.mxu0 %v255
      %600 = vmatmul.mubr.f32.gmra.mrb[0].mxu0 %v254
      %v601 = vpop.f32.mrb[0].mxu0
      %v602 = vadd.f32 0.0, %v601
      %v603 = vpop.f32.mrb[0].mxu0
      %604 = vmatprep.mubr.f32.mxu0 %v257
      %605 = vmatmul.mubr.f32.gmra.mrb[0].mxu0 %v256
      %v606 = vpop.f32.mrb[0].mxu0
      %v607 = vadd.f32 0.0, %v606
      %v608 = vpop.f32.mrb[0].mxu0
      %609 = vmatprep.mubr.f32.mxu0 %v259
      %610 = vmatmul.mubr.f32.gmra.mrb[0].mxu0 %v258
      %v611 = vpop.f32.mrb[0].mxu0
      %v612 = vadd.f32 0.0, %v611
      %v613 = vpop.f32.mrb[0].mxu0
      %614 = vmatprep.mubr.f32.mxu0 %v261
      %615 = vmatmul.mubr.f32.gmra.mrb[0].mxu0 %v260
      %v616 = vpop.f32.mrb[0].mxu0
      %v617 = vadd.f32 0.0, %v616
      %v618 = vpop.f32.mrb[0].mxu0
      %619 = vmatprep.mubr.f32.mxu0 %v263
      %620 = vmatmul.mubr.f32.gmra.mrb[0].mxu0 %v262
      %v621 = vpop.f32.mrb[0].mxu0
      %v622 = vadd.f32 0.0, %v621
      %v623 = vpop.f32.mrb[0].mxu0
      %624 = vmatprep.mubr.f32.mxu0 %v265
      %625 = vmatmul.mubr.f32.gmra.mrb[0].mxu0 %v264
      %v626 = vpop.f32.mrb[0].mxu0
      %v627 = vadd.f32 0.0, %v626
      %v628 = vpop.f32.mrb[0].mxu0
      %629 = vmatprep.mubr.f32.mxu0 %v267
      %630 = vmatmul.mubr.f32.gmra.mrb[0].mxu0 %v266
      %v631 = vpop.f32.mrb[0].mxu0
      %v632 = vadd.f32 0.0, %v631
      %v633 = vpop.f32.mrb[0].mxu0
      %634 = vmatprep.mubr.f32.mxu0 %v269
      %635 = vmatmul.mubr.f32.gmra.mrb[0].mxu0 %v268
      %v636 = vpop.f32.mrb[0].mxu0
      %v637 = vadd.f32 0.0, %v636
      %v638 = vpop.f32.mrb[0].mxu0
      %639 = vmatprep.mubr.f32.mxu0 %v271
      %640 = vmatmul.mubr.f32.gmra.mrb[0].mxu0 %v270
      %v641 = vpop.f32.mrb[0].mxu0
      %v642 = vadd.f32 0.0, %v641
      %v643 = vpop.f32.mrb[0].mxu0
      %644 = vmatprep.mubr.f32.mxu0 %v273
      %645 = vmatmul.mubr.f32.gmra.mrb[0].mxu0 %v272
      %v646 = vpop.f32.mrb[0].mxu0
      %v647 = vadd.f32 0.0, %v646
      %v648 = vpop.f32.mrb[0].mxu0
      %649 = vmatprep.mubr.f32.mxu0 %v275
      %650 = vmatmul.mubr.f32.gmra.mrb[0].mxu0 %v274
      %v651 = vpop.f32.mrb[0].mxu0
      %v652 = vadd.f32 0.0, %v651
      %v653 = vpop.f32.mrb[0].mxu0
      %654 = vmatprep.mubr.f32.mxu0 %v277
      %655 = vmatmul.mubr.f32.gmra.mrb[0].mxu0 %v276
      %v656 = vpop.f32.mrb[0].mxu0
      %v657 = vadd.f32 0.0, %v656
      %v658 = vpop.f32.mrb[0].mxu0
      %659 = vmatprep.mubr.f32.mxu0 %v279
      %660 = vmatmul.mubr.f32.gmra.mrb[0].mxu0 %v278
      %v661 = vpop.f32.mrb[0].mxu0
      %v662 = vadd.f32 0.0, %v661
      %v663 = vpop.f32.mrb[0].mxu0
      %664 = vmatprep.mubr.f32.mxu0 %v281
      %665 = vmatmul.mubr.f32.gmra.mrb[0].mxu0 %v280
      %v666 = vpop.f32.mrb[0].mxu0
      %v667 = vadd.f32 0.0, %v666
      %v668 = vpop.f32.mrb[0].mxu0
      %669 = vmatprep.mubr.f32.mxu0 %v283
      %670 = vmatmul.mubr.f32.gmra.mrb[0].mxu0 %v282
      %v671 = vpop.f32.mrb[0].mxu0
      %v672 = vadd.f32 0.0, %v671
      %v673 = vpop.f32.mrb[0].mxu0
      %674 = vmatprep.mubr.f32.mxu0 %v285
      %675 = vmatmul.mubr.f32.gmra.mrb[0].mxu0 %v284
      %v676 = vpop.f32.mrb[0].mxu0
      %v677 = vadd.f32 0.0, %v676
      %v678 = vpop.f32.mrb[0].mxu0
      %679 = vmatprep.mubr.f32.mxu0 %v287
      %680 = vmatmul.mubr.f32.gmra.mrb[0].mxu0 %v286
      %v681 = vpop.f32.mrb[0].mxu0
      %v682 = vadd.f32 0.0, %v681
      %v683 = vpop.f32.mrb[0].mxu0
      %684 = vmatprep.mubr.f32.mxu0 %v289
      %685 = vmatmul.mubr.f32.gmra.mrb[0].mxu0 %v288
      %v686 = vpop.f32.mrb[0].mxu0
      %v687 = vadd.f32 0.0, %v686
      %v688 = vpop.f32.mrb[0].mxu0
      %689 = vmatprep.mubr.f32.mxu0 %v291
      %690 = vmatmul.mubr.f32.gmra.mrb[0].mxu0 %v290
      %v691 = vpop.f32.mrb[0].mxu0
      %v692 = vadd.f32 0.0, %v691
      %v693 = vpop.f32.mrb[0].mxu0
      %694 = vmatprep.mubr.f32.mxu0 %v293
      %695 = vmatmul.mubr.f32.gmra.mrb[0].mxu0 %v292
      %v696 = vpop.f32.mrb[0].mxu0
      %v697 = vadd.f32 0.0, %v696
      %v698 = vpop.f32.mrb[0].mxu0
      %699 = vmatprep.mubr.f32.mxu0 %v295
      %700 = vmatmul.mubr.f32.gmra.mrb[0].mxu0 %v294
      %v701 = vpop.f32.mrb[0].mxu0
      %v702 = vadd.f32 0.0, %v701
      %v703 = vpop.f32.mrb[0].mxu0
      %704 = vmatprep.mubr.f32.mxu0 %v297
      %705 = vmatmul.mubr.f32.gmra.mrb[0].mxu0 %v296
      %v706 = vpop.f32.mrb[0].mxu0
      %v707 = vadd.f32 0.0, %v706
      %v708 = vpop.f32.mrb[0].mxu0
      %709 = vmatprep.mubr.f32.mxu0 %v299
      %710 = vmatmul.mubr.f32.gmra.mrb[0].mxu0 %v298
      %v711 = vpop.f32.mrb[0].mxu0
      %v712 = vadd.f32 0.0, %v711
      %v713 = vpop.f32.mrb[0].mxu0
      %714 = vmatprep.mubr.f32.mxu0 %v301
      %715 = vmatmul.mubr.f32.gmra.mrb[0].mxu0 %v300
      %v716 = vpop.f32.mrb[0].mxu0
      %v717 = vadd.f32 0.0, %v716
      %v718 = vpop.f32.mrb[0].mxu0
      %719 = vmatprep.mubr.f32.mxu0 %v303
      %720 = vmatmul.mubr.f32.gmra.mrb[0].mxu0 %v302
      %v721 = vpop.f32.mrb[0].mxu0
      %v722 = vadd.f32 0.0, %v721
      %v723 = vpop.f32.mrb[0].mxu0
      %724 = vmatprep.mubr.f32.mxu0 %v305
      %725 = vmatmul.mubr.f32.gmra.mrb[0].mxu0 %v304
      %v726 = vpop.f32.mrb[0].mxu0
      %v727 = vadd.f32 0.0, %v726
      %v728 = vpop.f32.mrb[0].mxu0
      %729 = vmatprep.mubr.f32.mxu0 %v307
      %730 = vmatmul.mubr.f32.gmra.mrb[0].mxu0 %v306
      %v731 = vpop.f32.mrb[0].mxu0
      %v732 = vadd.f32 0.0, %v731
      %v733 = vpop.f32.mrb[0].mxu0
      %734 = vmatprep.mubr.f32.mxu0 %v309
      %735 = vmatmul.mubr.f32.gmra.mrb[0].mxu0 %v308
      %v736 = vpop.f32.mrb[0].mxu0
      %v737 = vadd.f32 0.0, %v736
      %v738 = vpop.f32.mrb[0].mxu0
      %739 = vmatprep.mubr.f32.mxu0 %v311
      %740 = vmatmul.mubr.f32.gmra.mrb[0].mxu0 %v310
      %v741 = vpop.f32.mrb[0].mxu0
      %v742 = vadd.f32 0.0, %v741
      %v743 = vpop.f32.mrb[0].mxu0
      %744 = vmatprep.mubr.f32.mxu0 %v313
      %745 = vmatmul.mubr.f32.gmra.mrb[0].mxu0 %v312
      %v746 = vpop.f32.mrb[0].mxu0
      %v747 = vadd.f32 0.0, %v746
      %v748 = vpop.f32.mrb[0].mxu0
      %749 = vmatprep.mubr.f32.mxu0 %v315
      %750 = vmatmul.mubr.f32.gmra.mrb[0].mxu0 %v314
      %v751 = vpop.f32.mrb[0].mxu0
      %v752 = vadd.f32 0.0, %v751
      %v753 = vpop.f32.mrb[0].mxu0
      %754 = vmatprep.mubr.f32.mxu0 %v317
      %755 = vmatmul.mubr.f32.gmra.mrb[0].mxu0 %v316
      %v756 = vpop.f32.mrb[0].mxu0
      %v757 = vadd.f32 0.0, %v756
      %v758 = vpop.f32.mrb[0].mxu0
      %759 = vmatprep.mubr.f32.mxu0 %v319
      %760 = vmatmul.mubr.f32.gmra.mrb[0].mxu0 %v318
      %v761 = vpop.f32.mrb[0].mxu0
      %v762 = vadd.f32 0.0, %v761
      %v763 = vpop.f32.mrb[0].mxu0
      %764 = vmatprep.mubr.f32.mxu0 %v321
      %765 = vmatmul.mubr.f32.gmra.mrb[0].mxu0 %v320
      %v766 = vpop.f32.mrb[0].mxu0
      %v767 = vadd.f32 0.0, %v766
      %v768 = vpop.f32.mrb[0].mxu0
      %769 = vmatprep.mubr.f32.mxu0 %v323
      %770 = vmatmul.mubr.f32.gmra.mrb[0].mxu0 %v322
      %v771 = vpop.f32.mrb[0].mxu0
      %v772 = vadd.f32 0.0, %v771
      %v773 = vpop.f32.mrb[0].mxu0
      %774 = vmatprep.mubr.f32.mxu0 %v325
      %775 = vmatmul.mubr.f32.gmra.mrb[0].mxu0 %v324
      %v776 = vpop.f32.mrb[0].mxu0
      %v777 = vadd.f32 0.0, %v776
      %v778 = vpop.f32.mrb[0].mxu0
      %779 = vmatprep.mubr.f32.mxu0 %v327
      %780 = vmatmul.mubr.f32.gmra.mrb[0].mxu0 %v326
      %v781 = vpop.f32.mrb[0].mxu0
      %v782 = vadd.f32 0.0, %v781
      %v783 = vpop.f32.mrb[0].mxu0
      %784 = vmatprep.mubr.f32.mxu0 %v329
      %785 = vmatmul.mubr.f32.gmra.mrb[0].mxu0 %v328
      %v786 = vpop.f32.mrb[0].mxu0
      %v787 = vadd.f32 0.0, %v786
      %v788 = vpop.f32.mrb[0].mxu0
      %789 = vmatprep.mubr.f32.mxu0 %v331
      %790 = vmatmul.mubr.f32.gmra.mrb[0].mxu0 %v330
      %v791 = vpop.f32.mrb[0].mxu0
      %v792 = vadd.f32 0.0, %v791
      %v793 = vpop.f32.mrb[0].mxu0
      %794 = vmatprep.mubr.f32.mxu0 %v333
      %795 = vmatmul.mubr.f32.gmra.mrb[0].mxu0 %v332
      %v796 = vpop.f32.mrb[0].mxu0
      %v797 = vadd.f32 0.0, %v796
      %v798 = vpop.f32.mrb[0].mxu0
      %799 = vmatprep.mubr.f32.mxu0 %v335
      %800 = vmatmul.mubr.f32.gmra.mrb[0].mxu0 %v334
      %v801 = vpop.f32.mrb[0].mxu0
      %v802 = vadd.f32 0.0, %v801
      %v803 = vpop.f32.mrb[0].mxu0
      %804 = vmatprep.mubr.f32.mxu0 %v337
      %805 = vmatmul.mubr.f32.gmra.mrb[0].mxu0 %v336
      %v806 = vpop.f32.mrb[0].mxu0
      %v807 = vadd.f32 0.0, %v806
      %v808 = vpop.f32.mrb[0].mxu0
      %809 = vmatprep.mubr.f32.mxu0 %v339
      %810 = vmatmul.mubr.f32.gmra.mrb[0].mxu0 %v338
      %v811 = vpop.f32.mrb[0].mxu0
      %v812 = vadd.f32 0.0, %v811
      %v813 = vpop.f32.mrb[0].mxu0
      %814 = vmatprep.mubr.f32.mxu0 %v341
      %815 = vmatmul.mubr.f32.gmra.mrb[0].mxu0 %v340
      %v816 = vpop.f32.mrb[0].mxu0
      %v817 = vadd.f32 0.0, %v816
      %v818 = vpop.f32.mrb[0].mxu0
      %819 = vmatprep.mubr.f32.mxu0 %v343
      %820 = vmatmul.mubr.f32.gmra.mrb[0].mxu0 %v342
      %v821 = vpop.f32.mrb[0].mxu0
      %v822 = vadd.f32 0.0, %v821
      %v823 = vpop.f32.mrb[0].mxu0
      %824 = vmatprep.mubr.f32.mxu0 %v345
      %825 = vmatmul.mubr.f32.gmra.mrb[0].mxu0 %v344
      %v826 = vpop.f32.mrb[0].mxu0
      %v827 = vadd.f32 0.0, %v826
      %v828 = vpop.f32.mrb[0].mxu0
      %829 = vmatprep.mubr.f32.mxu0 %v347
      %830 = vmatmul.mubr.f32.gmra.mrb[0].mxu0 %v346
      %v831 = vpop.f32.mrb[0].mxu0
      %v832 = vadd.f32 0.0, %v831
      %v833 = vpop.f32.mrb[0].mxu0
      %834 = vmatprep.mubr.f32.mxu0 %v349
      %835 = vmatmul.mubr.f32.gmra.mrb[0].mxu0 %v348
      %v836 = vpop.f32.mrb[0].mxu0
      %v837 = vadd.f32 0.0, %v836
      %v838 = vpop.f32.mrb[0].mxu0
      %839 = vmatprep.mubr.f32.mxu0 %v351
      %840 = vmatmul.mubr.f32.gmra.mrb[0].mxu0 %v350
      %v841 = vpop.f32.mrb[0].mxu0
      %v842 = vadd.f32 0.0, %v841
      %v843 = vpop.f32.mrb[0].mxu0
      %844 = vmatprep.mubr.f32.mxu0 %v353
      %845 = vmatmul.mubr.f32.gmra.mrb[0].mxu0 %v352
      %v846 = vpop.f32.mrb[0].mxu0
      %v847 = vadd.f32 0.0, %v846
      %v848 = vpop.f32.mrb[0].mxu0
      %849 = vmatprep.mubr.f32.mxu0 %v355
      %850 = vmatmul.mubr.f32.gmra.mrb[0].mxu0 %v354
      %v851 = vpop.f32.mrb[0].mxu0
      %v852 = vadd.f32 0.0, %v851
      %v853 = vpop.f32.mrb[0].mxu0
      %854 = vmatprep.mubr.f32.mxu0 %v357
      %855 = vmatmul.mubr.f32.gmra.mrb[0].mxu0 %v356
      %v856 = vpop.f32.mrb[0].mxu0
      %v857 = vadd.f32 0.0, %v856
      %v858 = vpop.f32.mrb[0].mxu0
      %859 = vmatprep.mubr.f32.mxu0 %v359
      %860 = vmatmul.mubr.f32.gmra.mrb[0].mxu0 %v358
      %v861 = vpop.f32.mrb[0].mxu0
      %v862 = vadd.f32 0.0, %v861
      %v863 = vpop.f32.mrb[0].mxu0
      %864 = vmatprep.mubr.f32.mxu0 %v361
      %865 = vmatmul.mubr.f32.gmra.mrb[0].mxu0 %v360
      %v866 = vpop.f32.mrb[0].mxu0
      %v867 = vadd.f32 0.0, %v866
      %v868 = vpop.f32.mrb[0].mxu0
      %869 = vmatprep.mubr.f32.mxu0 %v363
      %870 = vmatmul.mubr.f32.gmra.mrb[0].mxu0 %v362
      %v871 = vpop.f32.mrb[0].mxu0
      %v872 = vadd.f32 0.0, %v871
      %v873 = vpop.f32.mrb[0].mxu0
      %874 = vmatprep.mubr.f32.mxu0 %v365
      %875 = vmatmul.mubr.f32.gmra.mrb[0].mxu0 %v364
      %v876 = vpop.f32.mrb[0].mxu0
      %v877 = vadd.f32 0.0, %v876
      %v878 = vpop.f32.mrb[0].mxu0
      %879 = vmatprep.mubr.f32.mxu0 %v367
      %880 = vmatmul.mubr.f32.gmra.mrb[0].mxu0 %v366
      %v881 = vpop.f32.mrb[0].mxu0
      %v882 = vadd.f32 0.0, %v881
      %v883 = vpop.f32.mrb[0].mxu0
      %884 = vmatprep.mubr.f32.mxu0 %v369
      %885 = vmatmul.mubr.f32.gmra.mrb[0].mxu0 %v368
      %v886 = vpop.f32.mrb[0].mxu0
      %v887 = vadd.f32 0.0, %v886
      %v888 = vpop.f32.mrb[0].mxu0
      %889 = vmatprep.mubr.f32.mxu0 %v371
      %890 = vmatmul.mubr.f32.gmra.mrb[0].mxu0 %v370
      %v891 = vpop.f32.mrb[0].mxu0
      %v892 = vadd.f32 0.0, %v891
      %v893 = vpop.f32.mrb[0].mxu0
      %894 = vmatprep.mubr.f32.mxu0 %v373
      %895 = vmatmul.mubr.f32.gmra.mrb[0].mxu0 %v372
      %v896 = vpop.f32.mrb[0].mxu0
      %v897 = vadd.f32 0.0, %v896
      %v898 = vpop.f32.mrb[0].mxu0
      %899 = vmatprep.mubr.f32.mxu0 %v375
      %900 = vmatmul.mubr.f32.gmra.mrb[0].mxu0 %v374
      %v901 = vpop.f32.mrb[0].mxu0
      %v902 = vadd.f32 0.0, %v901
      %v903 = vpop.f32.mrb[0].mxu0
      %904 = vmatprep.mubr.f32.mxu0 %v377
      %905 = vmatmul.mubr.f32.gmra.mrb[0].mxu0 %v376
      %v906 = vpop.f32.mrb[0].mxu0
      %v907 = vadd.f32 0.0, %v906
      %v908 = vpop.f32.mrb[0].mxu0
      %909 = vmatprep.mubr.f32.mxu0 %v379
      %910 = vmatmul.mubr.f32.gmra.mrb[0].mxu0 %v378
      %v911 = vpop.f32.mrb[0].mxu0
      %v912 = vadd.f32 0.0, %v911
      %v913 = vpop.f32.mrb[0].mxu0
      %914 = vmatprep.mubr.f32.mxu0 %v381
      %915 = vmatmul.mubr.f32.gmra.mrb[0].mxu0 %v380
      %v916 = vpop.f32.mrb[0].mxu0
      %v917 = vadd.f32 0.0, %v916
      %v918 = vpop.f32.mrb[0].mxu0
      %919 = vmatprep.mubr.f32.mxu0 %v383
      %920 = vmatmul.mubr.f32.gmra.mrb[0].mxu0 %v382
      %v921 = vpop.f32.mrb[0].mxu0
      %v922 = vadd.f32 0.0, %v921
      %v923 = vpop.f32.mrb[0].mxu0
      %924 = vmatprep.mubr.f32.mxu0 %v385
      %925 = vmatmul.mubr.f32.gmra.mrb[0].mxu0 %v384
      %v926 = vpop.f32.mrb[0].mxu0
      %v927 = vadd.f32 0.0, %v926
      %v928 = vpop.f32.mrb[0].mxu0
      %929 = vmatprep.mubr.f32.mxu0 %v387
      %930 = vmatmul.mubr.f32.gmra.mrb[0].mxu0 %v386
      %v931 = vpop.f32.mrb[0].mxu0
      %v932 = vadd.f32 0.0, %v931
      %v933 = vpop.f32.mrb[0].mxu0
      %934 = vmatprep.mubr.f32.mxu0 %v389
      %935 = vmatmul.mubr.f32.gmra.mrb[0].mxu0 %v388
      %v936 = vpop.f32.mrb[0].mxu0
      %v937 = vadd.f32 0.0, %v936
      %v938 = vpop.f32.mrb[0].mxu0
      %939 = vmatprep.mubr.f32.mxu0 %v391
      %940 = vmatmul.mubr.f32.gmra.mrb[0].mxu0 %v390
      %v941 = vpop.f32.mrb[0].mxu0
      %v942 = vadd.f32 0.0, %v941
      %v943 = vpop.f32.mrb[0].mxu0
      %944 = vmatprep.mubr.f32.mxu0 %v393
      %945 = vmatmul.mubr.f32.gmra.mrb[0].mxu0 %v392
      %v946 = vpop.f32.mrb[0].mxu0
      %v947 = vadd.f32 0.0, %v946
      %v948 = vpop.f32.mrb[0].mxu0
      %949 = vmatprep.mubr.f32.mxu0 %v395
      %950 = vmatmul.mubr.f32.gmra.mrb[0].mxu0 %v394
      %v951 = vpop.f32.mrb[0].mxu0
      %v952 = vadd.f32 0.0, %v951
      %v953 = vpop.f32.mrb[0].mxu0
      %954 = vmatprep.mubr.f32.mxu0 %v397
      %955 = vmatmul.mubr.f32.gmra.mrb[0].mxu0 %v396
      %v956 = vpop.f32.mrb[0].mxu0
      %v957 = vadd.f32 0.0, %v956
      %v958 = vpop.f32.mrb[0].mxu0
      %959 = vmatprep.mubr.f32.mxu0 %v399
      %960 = vmatmul.mubr.f32.gmra.mrb[0].mxu0 %v398
      %v961 = vpop.f32.mrb[0].mxu0
      %v962 = vadd.f32 0.0, %v961
      %v963 = vpop.f32.mrb[0].mxu0
      %964 = vmatprep.mubr.f32.mxu0 %v401
      %965 = vmatmul.mubr.f32.gmra.mrb[0].mxu0 %v400
      %v966 = vpop.f32.mrb[0].mxu0
      %v967 = vadd.f32 0.0, %v966
      %v968 = vpop.f32.mrb[0].mxu0
      %969 = vmatprep.mubr.f32.mxu0 %v403
      %970 = vmatmul.mubr.f32.gmra.mrb[0].mxu0 %v402
      %v971 = vpop.f32.mrb[0].mxu0
      %v972 = vadd.f32 0.0, %v971
      %v973 = vpop.f32.mrb[0].mxu0
      %974 = vmatprep.mubr.f32.mxu0 %v405
      %975 = vmatmul.mubr.f32.gmra.mrb[0].mxu0 %v404
      %v976 = vpop.f32.mrb[0].mxu0
      %v977 = vadd.f32 0.0, %v976
      %v978 = vpop.f32.mrb[0].mxu0
      %979 = vmatprep.mubr.f32.mxu0 %v407
      %980 = vmatmul.mubr.f32.gmra.mrb[0].mxu0 %v406
      %v981 = vpop.f32.mrb[0].mxu0
      %v982 = vadd.f32 0.0, %v981
      %v983 = vpop.f32.mrb[0].mxu0
      %984 = vmatprep.mubr.f32.mxu0 %v409
      %985 = vmatmul.mubr.f32.gmra.mrb[0].mxu0 %v408
      %v986 = vpop.f32.mrb[0].mxu0
      %v987 = vadd.f32 0.0, %v986
      %v988 = vpop.f32.mrb[0].mxu0
      %989 = vmatprep.mubr.f32.mxu0 %v411
      %990 = vmatmul.mubr.f32.gmra.mrb[0].mxu0 %v410
      %v991 = vpop.f32.mrb[0].mxu0
      %v992 = vadd.f32 0.0, %v991
      %v993 = vpop.f32.mrb[0].mxu0
      %994 = vmatprep.mubr.f32.mxu0 %v413
      %995 = vmatmul.mubr.f32.gmra.mrb[0].mxu0 %v412
      %v996 = vpop.f32.mrb[0].mxu0
      %v997 = vadd.f32 0.0, %v996
      %v998 = vpop.f32.mrb[0].mxu0
      %999 = vmatprep.mubr.f32.mxu0 %v415
      %1000 = vmatmul.mubr.f32.gmra.mrb[0].mxu0 %v414
      %v1001 = vpop.f32.mrb[0].mxu0
      %v1002 = vadd.f32 0.0, %v1001
      %v1003 = vpop.f32.mrb[0].mxu0
      %1004 = vmatprep.mubr.f32.mxu0 %v417
      %1005 = vmatmul.mubr.f32.gmra.mrb[0].mxu0 %v416
      %v1006 = vpop.f32.mrb[0].mxu0
      %v1007 = vadd.f32 0.0, %v1006
      %v1008 = vpop.f32.mrb[0].mxu0
      %1009 = vmatprep.mubr.f32.mxu0 %v419
      %1010 = vmatmul.mubr.f32.gmra.mrb[0].mxu0 %v418
      %v1011 = vpop.f32.mrb[0].mxu0
      %v1012 = vadd.f32 0.0, %v1011
      %v1013 = vpop.f32.mrb[0].mxu0
      %1014 = vdwg.mxu0
      %vm1015 = vcmask 130048
      %1016 = vst.msk [vmem:[%s143] sm:$0xff] %vm1015, %v487
      %1017 = vst.msk [vmem:[%s143 + $0x8] sm:$0xff] %vm1015, %v492
      %1018 = vst.msk [vmem:[%s143 + $0x10] sm:$0xff] %vm1015, %v497
      %1019 = vst.msk [vmem:[%s143 + $0x18] sm:$0xff] %vm1015, %v502
      %1020 = vst.msk [vmem:[%s143 + $0x20] sm:$0xff] %vm1015, %v507
      %1021 = vst.msk [vmem:[%s143 + $0x28] sm:$0xff] %vm1015, %v512
      %1022 = vst.msk [vmem:[%s143 + $0x30] sm:$0xff] %vm1015, %v517
      %1023 = vst.msk [vmem:[%s143 + $0x38] sm:$0xff] %vm1015, %v522
      %1024 = vst.msk [vmem:[%s143 + $0x40] sm:$0xff] %vm1015, %v527
      %1025 = vst.msk [vmem:[%s143 + $0x48] sm:$0xff] %vm1015, %v532
      %1026 = vst.msk [vmem:[%s143 + $0x50] sm:$0xff] %vm1015, %v537
      %1027 = vst.msk [vmem:[%s143 + $0x58] sm:$0xff] %vm1015, %v542
      %1028 = vst.msk [vmem:[%s143 + $0x60] sm:$0xff] %vm1015, %v547
      %1029 = vst.msk [vmem:[%s143 + $0x68] sm:$0xff] %vm1015, %v552
      %1030 = vst.msk [vmem:[%s143 + $0x70] sm:$0xff] %vm1015, %v557
      %1031 = vst.msk [vmem:[%s143 + $0x78] sm:$0xff] %vm1015, %v562
      %1032 = vst.msk [vmem:[%s143 + $0x80] sm:$0xff] %vm1015, %v567
      %1033 = vst.msk [vmem:[%s143 + $0x88] sm:$0xff] %vm1015, %v572
      %1034 = vst.msk [vmem:[%s143 + $0x90] sm:$0xff] %vm1015, %v577
      %1035 = vst.msk [vmem:[%s143 + $0x98] sm:$0xff] %vm1015, %v582
      %1036 = vst.msk [vmem:[%s143 + $0xa0] sm:$0xff] %vm1015, %v587
      %1037 = vst.msk [vmem:[%s143 + $0xa8] sm:$0xff] %vm1015, %v592
      %1038 = vst.msk [vmem:[%s143 + $0xb0] sm:$0xff] %vm1015, %v597
      %1039 = vst.msk [vmem:[%s143 + $0xb8] sm:$0xff] %vm1015, %v602
      %1040 = vst.msk [vmem:[%s143 + $0xc0] sm:$0xff] %vm1015, %v607
      %1041 = vst.msk [vmem:[%s143 + $0xc8] sm:$0xff] %vm1015, %v612
      %1042 = vst.msk [vmem:[%s143 + $0xd0] sm:$0xff] %vm1015, %v617
      %1043 = vst.msk [vmem:[%s143 + $0xd8] sm:$0xff] %vm1015, %v622
      %1044 = vst.msk [vmem:[%s143 + $0xe0] sm:$0xff] %vm1015, %v627
      %1045 = vst.msk [vmem:[%s143 + $0xe8] sm:$0xff] %vm1015, %v632
      %1046 = vst.msk [vmem:[%s143 + $0xf0] sm:$0xff] %vm1015, %v637
      %1047 = vst.msk [vmem:[%s143 + $0xf8] sm:$0xff] %vm1015, %v642
      %1048 = vst.msk [vmem:[%s143 + $0x100] sm:$0xff] %vm1015, %v647
      %1049 = vst.msk [vmem:[%s143 + $0x108] sm:$0xff] %vm1015, %v652
      %1050 = vst.msk [vmem:[%s143 + $0x110] sm:$0xff] %vm1015, %v657
      %1051 = vst.msk [vmem:[%s143 + $0x118] sm:$0xff] %vm1015, %v662
      %1052 = vst.msk [vmem:[%s143 + $0x120] sm:$0xff] %vm1015, %v667
      %1053 = vst.msk [vmem:[%s143 + $0x128] sm:$0xff] %vm1015, %v672
      %1054 = vst.msk [vmem:[%s143 + $0x130] sm:$0xff] %vm1015, %v677
      %1055 = vst.msk [vmem:[%s143 + $0x138] sm:$0xff] %vm1015, %v682
      %1056 = vst.msk [vmem:[%s143 + $0x140] sm:$0xff] %vm1015, %v687
      %1057 = vst.msk [vmem:[%s143 + $0x148] sm:$0xff] %vm1015, %v692
      %1058 = vst.msk [vmem:[%s143 + $0x150] sm:$0xff] %vm1015, %v697
      %1059 = vst.msk [vmem:[%s143 + $0x158] sm:$0xff] %vm1015, %v702
      %1060 = vst.msk [vmem:[%s143 + $0x160] sm:$0xff] %vm1015, %v707
      %1061 = vst.msk [vmem:[%s143 + $0x168] sm:$0xff] %vm1015, %v712
      %1062 = vst.msk [vmem:[%s143 + $0x170] sm:$0xff] %vm1015, %v717
      %1063 = vst.msk [vmem:[%s143 + $0x178] sm:$0xff] %vm1015, %v722
      %1064 = vst.msk [vmem:[%s143 + $0x180] sm:$0xff] %vm1015, %v727
      %1065 = vst.msk [vmem:[%s143 + $0x188] sm:$0xff] %vm1015, %v732
      %1066 = vst.msk [vmem:[%s143 + $0x190] sm:$0xff] %vm1015, %v737
      %1067 = vst.msk [vmem:[%s143 + $0x198] sm:$0xff] %vm1015, %v742
      %1068 = vst.msk [vmem:[%s143 + $0x1a0] sm:$0xff] %vm1015, %v747
      %1069 = vst.msk [vmem:[%s143 + $0x1a8] sm:$0xff] %vm1015, %v752
      %1070 = vst.msk [vmem:[%s143 + $0x1b0] sm:$0xff] %vm1015, %v757
      %1071 = vst.msk [vmem:[%s143 + $0x1b8] sm:$0xff] %vm1015, %v762
      %1072 = vst.msk [vmem:[%s143 + $0x1c0] sm:$0xff] %vm1015, %v767
      %1073 = vst.msk [vmem:[%s143 + $0x1c8] sm:$0xff] %vm1015, %v772
      %1074 = vst.msk [vmem:[%s143 + $0x1d0] sm:$0xff] %vm1015, %v777
      %1075 = vst.msk [vmem:[%s143 + $0x1d8] sm:$0xff] %vm1015, %v782
      %1076 = vst.msk [vmem:[%s143 + $0x1e0] sm:$0xff] %vm1015, %v787
      %1077 = vst.msk [vmem:[%s143 + $0x1e8] sm:$0xff] %vm1015, %v792
      %1078 = vst.msk [vmem:[%s143 + $0x1f0] sm:$0xff] %vm1015, %v797
      %1079 = vst.msk [vmem:[%s143 + $0x1f8] sm:$0xff] %vm1015, %v802
      %1080 = vst.msk [vmem:[%s143 + $0x200] sm:$0xff] %vm1015, %v807
      %1081 = vst.msk [vmem:[%s143 + $0x208] sm:$0xff] %vm1015, %v812
      %1082 = vst.msk [vmem:[%s143 + $0x210] sm:$0xff] %vm1015, %v817
      %1083 = vst.msk [vmem:[%s143 + $0x218] sm:$0xff] %vm1015, %v822
      %1084 = vst.msk [vmem:[%s143 + $0x220] sm:$0xff] %vm1015, %v827
      %1085 = vst.msk [vmem:[%s143 + $0x228] sm:$0xff] %vm1015, %v832
      %1086 = vst.msk [vmem:[%s143 + $0x230] sm:$0xff] %vm1015, %v837
      %1087 = vst.msk [vmem:[%s143 + $0x238] sm:$0xff] %vm1015, %v842
      %1088 = vst.msk [vmem:[%s143 + $0x240] sm:$0xff] %vm1015, %v847
      %1089 = vst.msk [vmem:[%s143 + $0x248] sm:$0xff] %vm1015, %v852
      %1090 = vst.msk [vmem:[%s143 + $0x250] sm:$0xff] %vm1015, %v857
      %1091 = vst.msk [vmem:[%s143 + $0x258] sm:$0xff] %vm1015, %v862
      %1092 = vst.msk [vmem:[%s143 + $0x260] sm:$0xff] %vm1015, %v867
      %1093 = vst.msk [vmem:[%s143 + $0x268] sm:$0xff] %vm1015, %v872
      %1094 = vst.msk [vmem:[%s143 + $0x270] sm:$0xff] %vm1015, %v877
      %1095 = vst.msk [vmem:[%s143 + $0x278] sm:$0xff] %vm1015, %v882
      %1096 = vst.msk [vmem:[%s143 + $0x280] sm:$0xff] %vm1015, %v887
      %1097 = vst.msk [vmem:[%s143 + $0x288] sm:$0xff] %vm1015, %v892
      %1098 = vst.msk [vmem:[%s143 + $0x290] sm:$0xff] %vm1015, %v897
      %1099 = vst.msk [vmem:[%s143 + $0x298] sm:$0xff] %vm1015, %v902
      %1100 = vst.msk [vmem:[%s143 + $0x2a0] sm:$0xff] %vm1015, %v907
      %1101 = vst.msk [vmem:[%s143 + $0x2a8] sm:$0xff] %vm1015, %v912
      %1102 = vst.msk [vmem:[%s143 + $0x2b0] sm:$0xff] %vm1015, %v917
      %1103 = vst.msk [vmem:[%s143 + $0x2b8] sm:$0xff] %vm1015, %v922
      %1104 = vst.msk [vmem:[%s143 + $0x2c0] sm:$0xff] %vm1015, %v927
      %1105 = vst.msk [vmem:[%s143 + $0x2c8] sm:$0xff] %vm1015, %v932
      %1106 = vst.msk [vmem:[%s143 + $0x2d0] sm:$0xff] %vm1015, %v937
      %1107 = vst.msk [vmem:[%s143 + $0x2d8] sm:$0xff] %vm1015, %v942
      %1108 = vst.msk [vmem:[%s143 + $0x2e0] sm:$0xff] %vm1015, %v947
      %1109 = vst.msk [vmem:[%s143 + $0x2e8] sm:$0xff] %vm1015, %v952
      %1110 = vst.msk [vmem:[%s143 + $0x2f0] sm:$0xff] %vm1015, %v957
      %1111 = vst.msk [vmem:[%s143 + $0x2f8] sm:$0xff] %vm1015, %v962
      %1112 = vst.msk [vmem:[%s143 + $0x300] sm:$0xff] %vm1015, %v967
      %1113 = vst.msk [vmem:[%s143 + $0x308] sm:$0xff] %vm1015, %v972
      %1114 = vst.msk [vmem:[%s143 + $0x310] sm:$0xff] %vm1015, %v977
      %1115 = vst.msk [vmem:[%s143 + $0x318] sm:$0xff] %vm1015, %v982
      %1116 = vst.msk [vmem:[%s143 + $0x320] sm:$0xff] %vm1015, %v987
      %1117 = vst.msk [vmem:[%s143 + $0x328] sm:$0xff] %vm1015, %v992
      %1118 = vst.msk [vmem:[%s143 + $0x330] sm:$0xff] %vm1015, %v997
      %1119 = vst.msk [vmem:[%s143 + $0x338] sm:$0xff] %vm1015, %v1002
      %1120 = vst.msk [vmem:[%s143 + $0x340] sm:$0xff] %vm1015, %v1007
      %vm1121 = vcmask 122880
      %1122 = vst.msk [vmem:[%s143 + $0x348] sm:$0x1] %vm1121, %v1012
      %p1123 = scmp.lt.s32.totalorder %s13, 1
      %s1124 = scalar_select %p1123, %s13, 1
      %s1125 = smul.addr %s1124, 106
      %s1126 = smul.addr %s1125, 8
      %s1127 = scalar_lea.vmem %s2, %s1126
      // Predicated region
      $region29: #{rrdbnet_forward.23} parent=27 // pred_check
        %p1128 = pneg %p78
      $region30: #{rrdbnet_forward.23} parent=27 // pred_check_branch
        %1130 = sbr.rel (%p1128) target = $region32
      $region31: #{rrdbnet_forward.23} parent=27 // pred_region
        _
      $region32: #{rrdbnet_forward.23} parent=27 // pred_fallthru
        _
    $region28: #{rrdbnet_forward.23} parent=5 // pred_fallthru
      _
    %p1131 = scmp.le.s32.totalorder 2, %s8
    // Predicated region
    $region33: #{rrdbnet_forward.23} parent=5 // pred_check
      %p1132 = pneg %p1131
    $region34: #{rrdbnet_forward.23} parent=5 // pred_check_branch
      %1134 = sbr.rel (%p1132) target = $region36
    $region35: #{rrdbnet_forward.23} parent=5 // pred_region
      %s1135 = ssub.s32 %s8, 2
      // Predicated region
      $region37: #{rrdbnet_forward.23} parent=35 // pred_check
        %p1136 = pneg %p84
      $region38: #{rrdbnet_forward.23} parent=35 // pred_check_branch
        %1138 = sbr.rel (%p1136) target = $region40
      $region39: #{rrdbnet_forward.23} parent=35 // pred_region
        %p1139 = scmp.lt.s32.totalorder %s14, 1
        %s1140 = scalar_select %p1139, %s14, 1
        %s1141 = smul.addr %s1140, 106
        %s1142 = smul.addr %s1141, 8
        %s1143 = scalar_lea.vmem %s2, %s1142
      $region40: #{rrdbnet_forward.23} parent=35 // pred_fallthru
        _
    $region36: #{rrdbnet_forward.23} parent=5 // pred_fallthru
      _
  $region6: #{rrdbnet_forward.23} parent=0 // loop_footer
    %s12 = sadd.s32 1, %s8
  $region7: #{rrdbnet_forward.23} parent=0 // loop_footer_branch
    %7 = sbr.rel target = $region3
  $region8: #{rrdbnet_forward.23} parent=0 // loop_exit
    _

</llo_original>
